<compile_context>
chip_gen: v7x
topology: tpu7x:2x2x1
jax: 0.10.0
libtpu: 0.0.40
codegen_flags: <defaults>
</compile_context>

<pallas_src>
import math

import jax
import jax.numpy as jnp
import numpy as np
from jax import lax
from jax.experimental import pallas as pl
from jax.experimental.pallas import tpu as pltpu


def _pick_tile_h(H, W, N, target_bytes=8 << 20):
    """Largest multiple-of-8 divisor of H whose output block (2N*TH*W*4B) fits target."""
    if H % 8 != 0:
        return H  # full-H block satisfies the "equal full dim" rule
    cands = [d for d in range(8, H + 1, 8) if H % d == 0]
    fitting = [d for d in cands if 2 * N * d * W * 4 <= target_bytes]
    return max(fitting) if fitting else min(cands)


def _make_nomask_kernel(y_scale, x_scale):
    """mask=None kernel: embeds generated in-kernel, sin factorized over rank-1 structure."""

    def kernel(inv_ref, ph_ref, out_ref):
        # inv_ref : (N, 1, 1)      f32   1 / dim_t
        # ph_ref  : (N, 1, 1)      f32   (k % 2) * pi/2   (cos(x) == sin(x + pi/2))
        # out_ref : (1, 2N, TH, W) f32/bf16   NCHW layout, W on the lane axis
        _, two_n, th, w = out_ref.shape
        n = two_n // 2
        inv = inv_ref[...]                                          # (N, 1, 1)
        ph = ph_ref[...]                                            # (N, 1, 1)

        # y_embed for this H-tile: (h_global + 1) * y_scale; x_embed: (w + 1) * x_scale.
        h_base = (pl.program_id(0) * th + 1).astype(jnp.float32)
        row = lax.broadcasted_iota(jnp.int32, (1, th, 1), 1).astype(jnp.float32)
        col = lax.broadcasted_iota(jnp.int32, (1, 1, w), 2).astype(jnp.float32)
        y = (row + h_base) * y_scale                                # (1, TH, 1)
        x = (col + 1.0) * x_scale                                   # (1, 1, W)

        # Factorized transcendentals: only (N,TH,1) + (N,1,W) sins, broadcast at store.
        sin_y = jnp.sin(y * inv + ph)                               # (N, TH, 1)
        sin_x = jnp.sin(x * inv + ph)                               # (N, 1, W)
        out_ref[0, pl.ds(0, n)] = jnp.broadcast_to(sin_y, (n, th, w)).astype(out_ref.dtype)
        out_ref[0, pl.ds(n, n)] = jnp.broadcast_to(sin_x, (n, th, w)).astype(out_ref.dtype)

    return kernel


def _masked_kernel(y_ref, x_ref, inv_ref, ph_ref, out_ref):
    # General path (explicit mask): y/x embeds are full rank (B,H,W) so no factorization.
    # y_ref, x_ref : (1, TH, W) f32 precomputed (and pre-normalized) embeds
    n = inv_ref.shape[0]
    inv = inv_ref[...]                                              # (N, 1, 1)
    ph = ph_ref[...]                                                # (N, 1, 1)
    out_ref[0, pl.ds(0, n)] = jnp.sin(y_ref[...] * inv + ph).astype(out_ref.dtype)
    out_ref[0, pl.ds(n, n)] = jnp.sin(x_ref[...] * inv + ph).astype(out_ref.dtype)


def position_embedding_sine(x, mask=None, *, num_pos_feats=64, temperature=10000,
                            normalize=False, scale=None, out_dtype=jnp.float32):
    """x: (B, C, H, W) NCHW (only its shape is used). Returns (B, 2*num_pos_feats, H, W)."""
    if scale is not None and normalize is False:
        raise ValueError("normalize should be True if scale is passed")
    if scale is None:
        scale = 2 * math.pi

    B, _, H, W = x.shape
    N = num_pos_feats

    # dim_t[k] = temperature ** (2*(k//2)/N);  out[k] = sin if k even else cos.
    k = jnp.arange(N, dtype=jnp.float32)
    dim_t = temperature ** (2.0 * jnp.floor(k / 2.0) / N)
    inv_dim_t = (1.0 / dim_t).reshape(N, 1, 1)
    phase = ((jnp.arange(N) % 2).astype(jnp.float32) * (math.pi / 2.0)).reshape(N, 1, 1)

    TH = _pick_tile_h(H, W, N)
    cparams = pltpu.CompilerParams(
        dimension_semantics=("parallel",) * (1 if mask is None else 2),
        vmem_limit_bytes=32 * 1024 * 1024)

    if mask is None:
        # Batch independent: compute once (batch dim 1), broadcast over B in the wrapper.
        y_scale = float(scale) / (H + 1e-6) if normalize else 1.0
        x_scale = float(scale) / (W + 1e-6) if normalize else 1.0
        pos = pl.pallas_call(
            _make_nomask_kernel(y_scale, x_scale),
            out_shape=jax.ShapeDtypeStruct((1, 2 * N, H, W), out_dtype),
            grid=(H // TH,),
            in_specs=[
                pl.BlockSpec((N, 1, 1), lambda h: (0, 0, 0)),
                pl.BlockSpec((N, 1, 1), lambda h: (0, 0, 0)),
            ],
            out_specs=pl.BlockSpec((1, 2 * N, TH, W), lambda h: (0, 0, h, 0)),
            compiler_params=cparams,
        )(inv_dim_t, phase)
        return jnp.broadcast_to(pos, (B, 2 * N, H, W))

    # Real boolean mask: cumsum / normalize on tiny (B,H,W) arrays in the wrapper.
    not_mask = 1.0 - mask.astype(jnp.float32)
    y_embed = jnp.cumsum(not_mask, axis=1)
    x_embed = jnp.cumsum(not_mask, axis=2)
    if normalize:
        eps = 1e-06
        y_embed = y_embed / (y_embed[:, -1:, :] + eps) * scale
        x_embed = x_embed / (x_embed[:, :, -1:] + eps) * scale

    return pl.pallas_call(
        _masked_kernel,
        out_shape=jax.ShapeDtypeStruct((B, 2 * N, H, W), out_dtype),
        grid=(B, H // TH),
        in_specs=[
            pl.BlockSpec((1, TH, W), lambda b, h: (b, h, 0)),
            pl.BlockSpec((1, TH, W), lambda b, h: (b, h, 0)),
            pl.BlockSpec((N, 1, 1), lambda b, h: (0, 0, 0)),
            pl.BlockSpec((N, 1, 1), lambda b, h: (0, 0, 0)),
        ],
        out_specs=pl.BlockSpec((1, 2 * N, TH, W), lambda b, h: (b, 0, h, 0)),
        compiler_params=cparams,
    )(y_embed, x_embed, inv_dim_t, phase)


def _reference(x, mask, num_pos_feats, temperature, normalize, scale):
    """Pure-JAX mirror of the PyTorch forward for verification."""
    if scale is None:
        scale = 2 * math.pi
    B, _, H, W = x.shape
    if mask is None:
        mask = jnp.zeros((B, H, W), dtype=bool)
    not_mask = (~mask).astype(jnp.float32)
    y_embed = jnp.cumsum(not_mask, axis=1)
    x_embed = jnp.cumsum(not_mask, axis=2)
    if normalize:
        eps = 1e-06
        y_embed = y_embed / (y_embed[:, -1:, :] + eps) * scale
        x_embed = x_embed / (x_embed[:, :, -1:] + eps) * scale
    k = jnp.arange(num_pos_feats, dtype=jnp.float32)
    dim_t = temperature ** (2.0 * jnp.floor(k / 2.0) / num_pos_feats)
    pos_x = x_embed[:, :, :, None] / dim_t
    pos_y = y_embed[:, :, :, None] / dim_t
    pos_x = jnp.stack([jnp.sin(pos_x[..., 0::2]), jnp.cos(pos_x[..., 1::2])],
                      axis=4).reshape(B, H, W, -1)
    pos_y = jnp.stack([jnp.sin(pos_y[..., 0::2]), jnp.cos(pos_y[..., 1::2])],
                      axis=4).reshape(B, H, W, -1)
    pos = jnp.concatenate([pos_y, pos_x], axis=3)
    return jnp.transpose(pos, (0, 3, 1, 2))


if __name__ == "__main__":
    key = jax.random.PRNGKey(0)
    B, C, H, W = 2, 4, 16, 16
    num_pos_feats = 32          # -> output channels = 64
    x = jax.random.normal(key, (B, C, H, W), dtype=jnp.float32)

    # 1) mask=None, normalize=False  (factorized, batch-deduplicated path)
    out = position_embedding_sine(x, mask=None, num_pos_feats=num_pos_feats,
                                  temperature=10000, normalize=False)
    out = jax.block_until_ready(out)
    ref = _reference(x, None, num_pos_feats, 10000, False, None)
    assert out.shape == (B, 2 * num_pos_feats, H, W), out.shape
    assert np.allclose(np.asarray(out), np.asarray(ref), atol=2e-5, rtol=1e-5)

    # 2) mask=None, normalize=True (default scale = 2*pi)
    out_n = position_embedding_sine(x, mask=None, num_pos_feats=num_pos_feats,
                                    temperature=10000, normalize=True)
    out_n = jax.block_until_ready(out_n)
    ref_n = _reference(x, None, num_pos_feats, 10000, True, None)
    assert np.allclose(np.asarray(out_n), np.asarray(ref_n), atol=2e-5, rtol=1e-5)

    # 3) real boolean mask path (cumsum computed in the wrapper), normalize=True
    mask = jax.random.bernoulli(jax.random.PRNGKey(1), 0.3, (B, H, W))
    out_m = position_embedding_sine(x, mask=mask, num_pos_feats=num_pos_feats,
                                    temperature=10000, normalize=True)
    out_m = jax.block_until_ready(out_m)
    ref_m = _reference(x, mask, num_pos_feats, 10000, True, None)
    assert np.allclose(np.asarray(out_m), np.asarray(ref_m), atol=2e-5, rtol=1e-5)

    print("KERNEL_OK")
</pallas_src>

<mosaic_0001>
module attributes {stable_mosaic.version = 11 : i64} {
  func.func @kernel(%arg0: i32, %arg1: memref<32x1x1xf32, #tpu.memory_space<vmem>>, %arg2: memref<32x1x1xf32, #tpu.memory_space<vmem>>, %arg3: memref<1x64x16x16xf32, #tpu.memory_space<vmem>>) attributes {dimension_semantics = [#tpu.dimension_semantics<parallel>], iteration_bounds = array<i64: 1>, scalar_prefetch = 0 : i64, scratch_operands = 0 : i64, tpu.core_type = #tpu.core_type<tc>, window_params = [{pipeline_mode = #tpu.pipeline_mode<synchronous>, transform_indices = @transform_0, window_bounds = array<i64: 32, 1, 1>}, {pipeline_mode = #tpu.pipeline_mode<synchronous>, transform_indices = @transform_1, window_bounds = array<i64: 32, 1, 1>}, {transform_indices = @transform_2, window_bounds = array<i64: 1, 64, 16, 16>}]} {
    %c0 = arith.constant 0 : index
    %c0_0 = arith.constant 0 : index
    %c0_1 = arith.constant 0 : index
    %0 = vector.load %arg1[%c0, %c0_0, %c0_1] : memref<32x1x1xf32, #tpu.memory_space<vmem>>, vector<32x1x1xf32>
    %c0_2 = arith.constant 0 : index
    %c0_3 = arith.constant 0 : index
    %c0_4 = arith.constant 0 : index
    %1 = vector.load %arg2[%c0_2, %c0_3, %c0_4] : memref<32x1x1xf32, #tpu.memory_space<vmem>>, vector<32x1x1xf32>
    %c16_i32 = arith.constant 16 : i32
    %2 = arith.muli %arg0, %c16_i32 : i32
    %c1_i32 = arith.constant 1 : i32
    %3 = arith.addi %2, %c1_i32 : i32
    %4 = arith.sitofp %3 : i32 to f32
    %5 = tpu.iota {dimensions = array<i32: 1>} : vector<1x16x1xi32>
    %6 = arith.sitofp %5 : vector<1x16x1xi32> to vector<1x16x1xf32>
    %7 = tpu.iota {dimensions = array<i32: 2>} : vector<1x1x16xi32>
    %8 = arith.sitofp %7 : vector<1x1x16xi32> to vector<1x1x16xf32>
    %9 = vector.broadcast %4 : f32 to vector<1x16x1xf32>
    %10 = arith.addf %6, %9 : vector<1x16x1xf32>
    %cst = arith.constant 1.000000e+00 : f32
    %11 = vector.broadcast %cst : f32 to vector<1x16x1xf32>
    %12 = arith.mulf %10, %11 : vector<1x16x1xf32>
    %cst_5 = arith.constant 1.000000e+00 : f32
    %13 = vector.broadcast %cst_5 : f32 to vector<1x1x16xf32>
    %14 = arith.addf %8, %13 : vector<1x1x16xf32>
    %cst_6 = arith.constant 1.000000e+00 : f32
    %15 = vector.broadcast %cst_6 : f32 to vector<1x1x16xf32>
    %16 = arith.mulf %14, %15 : vector<1x1x16xf32>
    %17 = vector.broadcast %12 : vector<1x16x1xf32> to vector<32x16x1xf32>
    %18 = vector.broadcast %0 : vector<32x1x1xf32> to vector<32x16x1xf32>
    %19 = arith.mulf %17, %18 : vector<32x16x1xf32>
    %20 = vector.broadcast %1 : vector<32x1x1xf32> to vector<32x16x1xf32>
    %21 = arith.addf %19, %20 : vector<32x16x1xf32>
    %22 = math.sin %21 : vector<32x16x1xf32>
    %23 = vector.broadcast %16 : vector<1x1x16xf32> to vector<32x1x16xf32>
    %24 = vector.broadcast %0 : vector<32x1x1xf32> to vector<32x1x16xf32>
    %25 = arith.mulf %23, %24 : vector<32x1x16xf32>
    %26 = vector.broadcast %1 : vector<32x1x1xf32> to vector<32x1x16xf32>
    %27 = arith.addf %25, %26 : vector<32x1x16xf32>
    %28 = math.sin %27 : vector<32x1x16xf32>
    %29 = vector.shape_cast %22 : vector<32x16x1xf32> to vector<32x16x1xf32>
    %30 = vector.broadcast %29 : vector<32x16x1xf32> to vector<32x16x16xf32>
    %c0_7 = arith.constant 0 : index
    %c0_8 = arith.constant 0 : index
    %c0_9 = arith.constant 0 : index
    %c0_10 = arith.constant 0 : index
    %31 = vector.load %arg3[%c0_7, %c0_8, %c0_9, %c0_10] : memref<1x64x16x16xf32, #tpu.memory_space<vmem>>, vector<1x32x16x16xf32>
    %32 = vector.shape_cast %31 : vector<1x32x16x16xf32> to vector<32x16x16xf32>
    %33 = vector.shape_cast %30 : vector<32x16x16xf32> to vector<1x32x16x16xf32>
    tpu.vector_store %arg3[%c0_7, %c0_8, %c0_9, %c0_10], %33 {strides = array<i32>} : memref<1x64x16x16xf32, #tpu.memory_space<vmem>>, vector<1x32x16x16xf32>,
    %34 = vector.shape_cast %28 : vector<32x1x16xf32> to vector<32x1x16xf32>
    %35 = vector.broadcast %34 : vector<32x1x16xf32> to vector<32x16x16xf32>
    %c0_11 = arith.constant 0 : index
    %c32 = arith.constant 32 : index
    %c0_12 = arith.constant 0 : index
    %c0_13 = arith.constant 0 : index
    %36 = vector.load %arg3[%c0_11, %c32, %c0_12, %c0_13] : memref<1x64x16x16xf32, #tpu.memory_space<vmem>>, vector<1x32x16x16xf32>
    %37 = vector.shape_cast %36 : vector<1x32x16x16xf32> to vector<32x16x16xf32>
    %38 = vector.shape_cast %35 : vector<32x16x16xf32> to vector<1x32x16x16xf32>
    tpu.vector_store %arg3[%c0_11, %c32, %c0_12, %c0_13], %38 {strides = array<i32>} : memref<1x64x16x16xf32, #tpu.memory_space<vmem>>, vector<1x32x16x16xf32>,
    return
  }
  func.func @transform_0(%arg0: i32) -> (i32, i32, i32) {
    %c0_i32 = arith.constant 0 : i32
    %c0_i32_0 = arith.constant 0 : i32
    %c0_i32_1 = arith.constant 0 : i32
    %c0_i32_2 = arith.constant 0 : i32
    return %c0_i32, %c0_i32_0, %c0_i32_1 : i32, i32, i32
  }
  func.func @transform_1(%arg0: i32) -> (i32, i32, i32) {
    %c0_i32 = arith.constant 0 : i32
    %c0_i32_0 = arith.constant 0 : i32
    %c0_i32_1 = arith.constant 0 : i32
    %c0_i32_2 = arith.constant 0 : i32
    return %c0_i32, %c0_i32_0, %c0_i32_1 : i32, i32, i32
  }
  func.func @transform_2(%arg0: i32) -> (i32, i32, i32, i32) {
    %c0_i32 = arith.constant 0 : i32
    %c0_i32_0 = arith.constant 0 : i32
    %c0_i32_1 = arith.constant 0 : i32
    %c0_i32_2 = arith.constant 0 : i32
    return %c0_i32, %c0_i32_0, %arg0, %c0_i32_1 : i32, i32, i32, i32
  }
}

</mosaic_0001>

<llo_original>
// kernel: tpu_custom_call.1
$region0: #{tpu_custom_call.1}
  #allocation0 [shape = 'u32[]', space=smem, size = 0x4, offset = 0x4, fixed_abs, tag = 'smem constant byte address 0x4 - core index']
  #allocation1 [shape = 'u32[144,128]{1,0:T(1,128)}', space=vmem, size = 0x12000, scoped, tag = 'internal scratch']
  %s0 = inlined_call_operand.vmem [shape: f32[32,1,1], index: 0, kind: input, shape index: {}]
  %s1 = inlined_call_operand.vmem [shape: f32[32,1,1], index: 1, kind: input, shape index: {}]
  %s2 = inlined_call_operand.vmem [shape: f32[1,64,16,16], index: 2, kind: output, shape index: {}]
  %s3 = sld [smem:[#allocation0]]
  $region18: #{tpu_custom_call.1} parent=0
    _
  %s5 = ssub.s32 1, %s3
  %s6 = scalar_select 0, %s5, %s3
  // Predicated region
  $region2: #{tpu_custom_call.1} parent=0 // pred_check
    _
  $region3: #{tpu_custom_call.1} parent=0 // pred_check_branch
    %8 = sbr.rel (0) target = $region5
  $region4: #{tpu_custom_call.1} parent=0 // pred_region
    _
  $region5: #{tpu_custom_call.1} parent=0 // pred_fallthru
    _
  // Predicated region
  $region6: #{tpu_custom_call.1} parent=0 // pred_check
    _
  $region7: #{tpu_custom_call.1} parent=0 // pred_check_branch
    %10 = sbr.rel (0) target = $region9
  $region8: #{tpu_custom_call.1} parent=0 // pred_region
    _
  $region9: #{tpu_custom_call.1} parent=0 // pred_fallthru
    _
  %v11 = vld [vmem:[%s0] sm:$0x1]
  %v12 = vld [vmem:[%s0 + $0x1] sm:$0x1]
  %v13 = vld [vmem:[%s0 + $0x2] sm:$0x1]
  %v14 = vld [vmem:[%s0 + $0x3] sm:$0x1]
  %v15 = vld [vmem:[%s0 + $0x4] sm:$0x1]
  %v16 = vld [vmem:[%s0 + $0x5] sm:$0x1]
  %v17 = vld [vmem:[%s0 + $0x6] sm:$0x1]
  %v18 = vld [vmem:[%s0 + $0x7] sm:$0x1]
  %v19 = vld [vmem:[%s0 + $0x8] sm:$0x1]
  %v20 = vld [vmem:[%s0 + $0x9] sm:$0x1]
  %v21 = vld [vmem:[%s0 + $0xa] sm:$0x1]
  %v22 = vld [vmem:[%s0 + $0xb] sm:$0x1]
  %v23 = vld [vmem:[%s0 + $0xc] sm:$0x1]
  %v24 = vld [vmem:[%s0 + $0xd] sm:$0x1]
  %v25 = vld [vmem:[%s0 + $0xe] sm:$0x1]
  %v26 = vld [vmem:[%s0 + $0xf] sm:$0x1]
  %v27 = vld [vmem:[%s0 + $0x10] sm:$0x1]
  %v28 = vld [vmem:[%s0 + $0x11] sm:$0x1]
  %v29 = vld [vmem:[%s0 + $0x12] sm:$0x1]
  %v30 = vld [vmem:[%s0 + $0x13] sm:$0x1]
  %v31 = vld [vmem:[%s0 + $0x14] sm:$0x1]
  %v32 = vld [vmem:[%s0 + $0x15] sm:$0x1]
  %v33 = vld [vmem:[%s0 + $0x16] sm:$0x1]
  %v34 = vld [vmem:[%s0 + $0x17] sm:$0x1]
  %v35 = vld [vmem:[%s0 + $0x18] sm:$0x1]
  %v36 = vld [vmem:[%s0 + $0x19] sm:$0x1]
  %v37 = vld [vmem:[%s0 + $0x1a] sm:$0x1]
  %v38 = vld [vmem:[%s0 + $0x1b] sm:$0x1]
  %v39 = vld [vmem:[%s0 + $0x1c] sm:$0x1]
  %v40 = vld [vmem:[%s0 + $0x1d] sm:$0x1]
  %v41 = vld [vmem:[%s0 + $0x1e] sm:$0x1]
  %v42 = vld [vmem:[%s0 + $0x1f] sm:$0x1]
  %v43 = vld [vmem:[%s1] sm:$0x1]
  %v44 = vld [vmem:[%s1 + $0x1] sm:$0x1]
  %v45 = vld [vmem:[%s1 + $0x2] sm:$0x1]
  %v46 = vld [vmem:[%s1 + $0x3] sm:$0x1]
  %v47 = vld [vmem:[%s1 + $0x4] sm:$0x1]
  %v48 = vld [vmem:[%s1 + $0x5] sm:$0x1]
  %v49 = vld [vmem:[%s1 + $0x6] sm:$0x1]
  %v50 = vld [vmem:[%s1 + $0x7] sm:$0x1]
  %v51 = vld [vmem:[%s1 + $0x8] sm:$0x1]
  %v52 = vld [vmem:[%s1 + $0x9] sm:$0x1]
  %v53 = vld [vmem:[%s1 + $0xa] sm:$0x1]
  %v54 = vld [vmem:[%s1 + $0xb] sm:$0x1]
  %v55 = vld [vmem:[%s1 + $0xc] sm:$0x1]
  %v56 = vld [vmem:[%s1 + $0xd] sm:$0x1]
  %v57 = vld [vmem:[%s1 + $0xe] sm:$0x1]
  %v58 = vld [vmem:[%s1 + $0xf] sm:$0x1]
  %v59 = vld [vmem:[%s1 + $0x10] sm:$0x1]
  %v60 = vld [vmem:[%s1 + $0x11] sm:$0x1]
  %v61 = vld [vmem:[%s1 + $0x12] sm:$0x1]
  %v62 = vld [vmem:[%s1 + $0x13] sm:$0x1]
  %v63 = vld [vmem:[%s1 + $0x14] sm:$0x1]
  %v64 = vld [vmem:[%s1 + $0x15] sm:$0x1]
  %v65 = vld [vmem:[%s1 + $0x16] sm:$0x1]
  %v66 = vld [vmem:[%s1 + $0x17] sm:$0x1]
  %v67 = vld [vmem:[%s1 + $0x18] sm:$0x1]
  %v68 = vld [vmem:[%s1 + $0x19] sm:$0x1]
  %v69 = vld [vmem:[%s1 + $0x1a] sm:$0x1]
  %v70 = vld [vmem:[%s1 + $0x1b] sm:$0x1]
  %v71 = vld [vmem:[%s1 + $0x1c] sm:$0x1]
  %v72 = vld [vmem:[%s1 + $0x1d] sm:$0x1]
  %v73 = vld [vmem:[%s1 + $0x1e] sm:$0x1]
  %v74 = vld [vmem:[%s1 + $0x1f] sm:$0x1]
  %s75 = smul.u32 0, 16
  %s76 = sadd.s32 %s75, 1
  %s77 = scvt.s32.f32 %s76
  %v78 = vlaneseq
  %v79 = vshrl.u32 %v78, 7
  %v80 = vadd.s32 %v79, 8
  %v81 = vcvt.s32.f32 %v79
  %v82 = vcvt.s32.f32 %v80
  %v83 = vlaneseq
  %v84 = vand.u32 %v83, 127
  %v85 = vcvt.s32.f32 %v84
  %v86 = vstv %s77
  %v87 = vadd.f32 %v81, %v86
  %v88 = vadd.f32 %v82, %v86
  %v89 = vadd.f32 %v85, 1.0
  %v122 = vlaneseq
  %v123 = vshrl.u32 %v122, 7
  %v124 = vsub.s32 0, %v123
  %v125 = vrot.slane %v11, %v124
  %v126 = vlaneseq
  %v127 = vshrl.u32 %v126, 7
  %v128 = vsub.s32 0, %v127
  %v129 = vrot.slane %v12, %v128
  %v130 = vlaneseq
  %v131 = vshrl.u32 %v130, 7
  %v132 = vsub.s32 0, %v131
  %v133 = vrot.slane %v13, %v132
  %v134 = vlaneseq
  %v135 = vshrl.u32 %v134, 7
  %v136 = vsub.s32 0, %v135
  %v137 = vrot.slane %v14, %v136
  %v138 = vlaneseq
  %v139 = vshrl.u32 %v138, 7
  %v140 = vsub.s32 0, %v139
  %v141 = vrot.slane %v15, %v140
  %v142 = vlaneseq
  %v143 = vshrl.u32 %v142, 7
  %v144 = vsub.s32 0, %v143
  %v145 = vrot.slane %v16, %v144
  %v146 = vlaneseq
  %v147 = vshrl.u32 %v146, 7
  %v148 = vsub.s32 0, %v147
  %v149 = vrot.slane %v17, %v148
  %v150 = vlaneseq
  %v151 = vshrl.u32 %v150, 7
  %v152 = vsub.s32 0, %v151
  %v153 = vrot.slane %v18, %v152
  %v154 = vlaneseq
  %v155 = vshrl.u32 %v154, 7
  %v156 = vsub.s32 0, %v155
  %v157 = vrot.slane %v19, %v156
  %v158 = vlaneseq
  %v159 = vshrl.u32 %v158, 7
  %v160 = vsub.s32 0, %v159
  %v161 = vrot.slane %v20, %v160
  %v162 = vlaneseq
  %v163 = vshrl.u32 %v162, 7
  %v164 = vsub.s32 0, %v163
  %v165 = vrot.slane %v21, %v164
  %v166 = vlaneseq
  %v167 = vshrl.u32 %v166, 7
  %v168 = vsub.s32 0, %v167
  %v169 = vrot.slane %v22, %v168
  %v170 = vlaneseq
  %v171 = vshrl.u32 %v170, 7
  %v172 = vsub.s32 0, %v171
  %v173 = vrot.slane %v23, %v172
  %v174 = vlaneseq
  %v175 = vshrl.u32 %v174, 7
  %v176 = vsub.s32 0, %v175
  %v177 = vrot.slane %v24, %v176
  %v178 = vlaneseq
  %v179 = vshrl.u32 %v178, 7
  %v180 = vsub.s32 0, %v179
  %v181 = vrot.slane %v25, %v180
  %v182 = vlaneseq
  %v183 = vshrl.u32 %v182, 7
  %v184 = vsub.s32 0, %v183
  %v185 = vrot.slane %v26, %v184
  %v186 = vlaneseq
  %v187 = vshrl.u32 %v186, 7
  %v188 = vsub.s32 0, %v187
  %v189 = vrot.slane %v27, %v188
  %v190 = vlaneseq
  %v191 = vshrl.u32 %v190, 7
  %v192 = vsub.s32 0, %v191
  %v193 = vrot.slane %v28, %v192
  %v194 = vlaneseq
  %v195 = vshrl.u32 %v194, 7
  %v196 = vsub.s32 0, %v195
  %v197 = vrot.slane %v29, %v196
  %v198 = vlaneseq
  %v199 = vshrl.u32 %v198, 7
  %v200 = vsub.s32 0, %v199
  %v201 = vrot.slane %v30, %v200
  %v202 = vlaneseq
  %v203 = vshrl.u32 %v202, 7
  %v204 = vsub.s32 0, %v203
  %v205 = vrot.slane %v31, %v204
  %v206 = vlaneseq
  %v207 = vshrl.u32 %v206, 7
  %v208 = vsub.s32 0, %v207
  %v209 = vrot.slane %v32, %v208
  %v210 = vlaneseq
  %v211 = vshrl.u32 %v210, 7
  %v212 = vsub.s32 0, %v211
  %v213 = vrot.slane %v33, %v212
  %v214 = vlaneseq
  %v215 = vshrl.u32 %v214, 7
  %v216 = vsub.s32 0, %v215
  %v217 = vrot.slane %v34, %v216
  %v218 = vlaneseq
  %v219 = vshrl.u32 %v218, 7
  %v220 = vsub.s32 0, %v219
  %v221 = vrot.slane %v35, %v220
  %v222 = vlaneseq
  %v223 = vshrl.u32 %v222, 7
  %v224 = vsub.s32 0, %v223
  %v225 = vrot.slane %v36, %v224
  %v226 = vlaneseq
  %v227 = vshrl.u32 %v226, 7
  %v228 = vsub.s32 0, %v227
  %v229 = vrot.slane %v37, %v228
  %v230 = vlaneseq
  %v231 = vshrl.u32 %v230, 7
  %v232 = vsub.s32 0, %v231
  %v233 = vrot.slane %v38, %v232
  %v234 = vlaneseq
  %v235 = vshrl.u32 %v234, 7
  %v236 = vsub.s32 0, %v235
  %v237 = vrot.slane %v39, %v236
  %v238 = vlaneseq
  %v239 = vshrl.u32 %v238, 7
  %v240 = vsub.s32 0, %v239
  %v241 = vrot.slane %v40, %v240
  %v242 = vlaneseq
  %v243 = vshrl.u32 %v242, 7
  %v244 = vsub.s32 0, %v243
  %v245 = vrot.slane %v41, %v244
  %v246 = vlaneseq
  %v247 = vshrl.u32 %v246, 7
  %v248 = vsub.s32 0, %v247
  %v249 = vrot.slane %v42, %v248
  %v282 = vmul.f32 %v87, %v125
  %v283 = vmul.f32 %v88, %v125
  %v284 = vmul.f32 %v87, %v129
  %v285 = vmul.f32 %v88, %v129
  %v286 = vmul.f32 %v87, %v133
  %v287 = vmul.f32 %v88, %v133
  %v288 = vmul.f32 %v87, %v137
  %v289 = vmul.f32 %v88, %v137
  %v290 = vmul.f32 %v87, %v141
  %v291 = vmul.f32 %v88, %v141
  %v292 = vmul.f32 %v87, %v145
  %v293 = vmul.f32 %v88, %v145
  %v294 = vmul.f32 %v87, %v149
  %v295 = vmul.f32 %v88, %v149
  %v296 = vmul.f32 %v87, %v153
  %v297 = vmul.f32 %v88, %v153
  %v298 = vmul.f32 %v87, %v157
  %v299 = vmul.f32 %v88, %v157
  %v300 = vmul.f32 %v87, %v161
  %v301 = vmul.f32 %v88, %v161
  %v302 = vmul.f32 %v87, %v165
  %v303 = vmul.f32 %v88, %v165
  %v304 = vmul.f32 %v87, %v169
  %v305 = vmul.f32 %v88, %v169
  %v306 = vmul.f32 %v87, %v173
  %v307 = vmul.f32 %v88, %v173
  %v308 = vmul.f32 %v87, %v177
  %v309 = vmul.f32 %v88, %v177
  %v310 = vmul.f32 %v87, %v181
  %v311 = vmul.f32 %v88, %v181
  %v312 = vmul.f32 %v87, %v185
  %v313 = vmul.f32 %v88, %v185
  %v314 = vmul.f32 %v87, %v189
  %v315 = vmul.f32 %v88, %v189
  %v316 = vmul.f32 %v87, %v193
  %v317 = vmul.f32 %v88, %v193
  %v318 = vmul.f32 %v87, %v197
  %v319 = vmul.f32 %v88, %v197
  %v320 = vmul.f32 %v87, %v201
  %v321 = vmul.f32 %v88, %v201
  %v322 = vmul.f32 %v87, %v205
  %v323 = vmul.f32 %v88, %v205
  %v324 = vmul.f32 %v87, %v209
  %v325 = vmul.f32 %v88, %v209
  %v326 = vmul.f32 %v87, %v213
  %v327 = vmul.f32 %v88, %v213
  %v328 = vmul.f32 %v87, %v217
  %v329 = vmul.f32 %v88, %v217
  %v330 = vmul.f32 %v87, %v221
  %v331 = vmul.f32 %v88, %v221
  %v332 = vmul.f32 %v87, %v225
  %v333 = vmul.f32 %v88, %v225
  %v334 = vmul.f32 %v87, %v229
  %v335 = vmul.f32 %v88, %v229
  %v336 = vmul.f32 %v87, %v233
  %v337 = vmul.f32 %v88, %v233
  %v338 = vmul.f32 %v87, %v237
  %v339 = vmul.f32 %v88, %v237
  %v340 = vmul.f32 %v87, %v241
  %v341 = vmul.f32 %v88, %v241
  %v342 = vmul.f32 %v87, %v245
  %v343 = vmul.f32 %v88, %v245
  %v344 = vmul.f32 %v87, %v249
  %v345 = vmul.f32 %v88, %v249
  %v378 = vlaneseq
  %v379 = vshrl.u32 %v378, 7
  %v380 = vsub.s32 0, %v379
  %v381 = vrot.slane %v43, %v380
  %v382 = vlaneseq
  %v383 = vshrl.u32 %v382, 7
  %v384 = vsub.s32 0, %v383
  %v385 = vrot.slane %v44, %v384
  %v386 = vlaneseq
  %v387 = vshrl.u32 %v386, 7
  %v388 = vsub.s32 0, %v387
  %v389 = vrot.slane %v45, %v388
  %v390 = vlaneseq
  %v391 = vshrl.u32 %v390, 7
  %v392 = vsub.s32 0, %v391
  %v393 = vrot.slane %v46, %v392
  %v394 = vlaneseq
  %v395 = vshrl.u32 %v394, 7
  %v396 = vsub.s32 0, %v395
  %v397 = vrot.slane %v47, %v396
  %v398 = vlaneseq
  %v399 = vshrl.u32 %v398, 7
  %v400 = vsub.s32 0, %v399
  %v401 = vrot.slane %v48, %v400
  %v402 = vlaneseq
  %v403 = vshrl.u32 %v402, 7
  %v404 = vsub.s32 0, %v403
  %v405 = vrot.slane %v49, %v404
  %v406 = vlaneseq
  %v407 = vshrl.u32 %v406, 7
  %v408 = vsub.s32 0, %v407
  %v409 = vrot.slane %v50, %v408
  %v410 = vlaneseq
  %v411 = vshrl.u32 %v410, 7
  %v412 = vsub.s32 0, %v411
  %v413 = vrot.slane %v51, %v412
  %v414 = vlaneseq
  %v415 = vshrl.u32 %v414, 7
  %v416 = vsub.s32 0, %v415
  %v417 = vrot.slane %v52, %v416
  %v418 = vlaneseq
  %v419 = vshrl.u32 %v418, 7
  %v420 = vsub.s32 0, %v419
  %v421 = vrot.slane %v53, %v420
  %v422 = vlaneseq
  %v423 = vshrl.u32 %v422, 7
  %v424 = vsub.s32 0, %v423
  %v425 = vrot.slane %v54, %v424
  %v426 = vlaneseq
  %v427 = vshrl.u32 %v426, 7
  %v428 = vsub.s32 0, %v427
  %v429 = vrot.slane %v55, %v428
  %v430 = vlaneseq
  %v431 = vshrl.u32 %v430, 7
  %v432 = vsub.s32 0, %v431
  %v433 = vrot.slane %v56, %v432
  %v434 = vlaneseq
  %v435 = vshrl.u32 %v434, 7
  %v436 = vsub.s32 0, %v435
  %v437 = vrot.slane %v57, %v436
  %v438 = vlaneseq
  %v439 = vshrl.u32 %v438, 7
  %v440 = vsub.s32 0, %v439
  %v441 = vrot.slane %v58, %v440
  %v442 = vlaneseq
  %v443 = vshrl.u32 %v442, 7
  %v444 = vsub.s32 0, %v443
  %v445 = vrot.slane %v59, %v444
  %v446 = vlaneseq
  %v447 = vshrl.u32 %v446, 7
  %v448 = vsub.s32 0, %v447
  %v449 = vrot.slane %v60, %v448
  %v450 = vlaneseq
  %v451 = vshrl.u32 %v450, 7
  %v452 = vsub.s32 0, %v451
  %v453 = vrot.slane %v61, %v452
  %v454 = vlaneseq
  %v455 = vshrl.u32 %v454, 7
  %v456 = vsub.s32 0, %v455
  %v457 = vrot.slane %v62, %v456
  %v458 = vlaneseq
  %v459 = vshrl.u32 %v458, 7
  %v460 = vsub.s32 0, %v459
  %v461 = vrot.slane %v63, %v460
  %v462 = vlaneseq
  %v463 = vshrl.u32 %v462, 7
  %v464 = vsub.s32 0, %v463
  %v465 = vrot.slane %v64, %v464
  %v466 = vlaneseq
  %v467 = vshrl.u32 %v466, 7
  %v468 = vsub.s32 0, %v467
  %v469 = vrot.slane %v65, %v468
  %v470 = vlaneseq
  %v471 = vshrl.u32 %v470, 7
  %v472 = vsub.s32 0, %v471
  %v473 = vrot.slane %v66, %v472
  %v474 = vlaneseq
  %v475 = vshrl.u32 %v474, 7
  %v476 = vsub.s32 0, %v475
  %v477 = vrot.slane %v67, %v476
  %v478 = vlaneseq
  %v479 = vshrl.u32 %v478, 7
  %v480 = vsub.s32 0, %v479
  %v481 = vrot.slane %v68, %v480
  %v482 = vlaneseq
  %v483 = vshrl.u32 %v482, 7
  %v484 = vsub.s32 0, %v483
  %v485 = vrot.slane %v69, %v484
  %v486 = vlaneseq
  %v487 = vshrl.u32 %v486, 7
  %v488 = vsub.s32 0, %v487
  %v489 = vrot.slane %v70, %v488
  %v490 = vlaneseq
  %v491 = vshrl.u32 %v490, 7
  %v492 = vsub.s32 0, %v491
  %v493 = vrot.slane %v71, %v492
  %v494 = vlaneseq
  %v495 = vshrl.u32 %v494, 7
  %v496 = vsub.s32 0, %v495
  %v497 = vrot.slane %v72, %v496
  %v498 = vlaneseq
  %v499 = vshrl.u32 %v498, 7
  %v500 = vsub.s32 0, %v499
  %v501 = vrot.slane %v73, %v500
  %v502 = vlaneseq
  %v503 = vshrl.u32 %v502, 7
  %v504 = vsub.s32 0, %v503
  %v505 = vrot.slane %v74, %v504
  %v538 = vadd.f32 %v282, %v381
  %v539 = vadd.f32 %v283, %v381
  %v540 = vadd.f32 %v284, %v385
  %v541 = vadd.f32 %v285, %v385
  %v542 = vadd.f32 %v286, %v389
  %v543 = vadd.f32 %v287, %v389
  %v544 = vadd.f32 %v288, %v393
  %v545 = vadd.f32 %v289, %v393
  %v546 = vadd.f32 %v290, %v397
  %v547 = vadd.f32 %v291, %v397
  %v548 = vadd.f32 %v292, %v401
  %v549 = vadd.f32 %v293, %v401
  %v550 = vadd.f32 %v294, %v405
  %v551 = vadd.f32 %v295, %v405
  %v552 = vadd.f32 %v296, %v409
  %v553 = vadd.f32 %v297, %v409
  %v554 = vadd.f32 %v298, %v413
  %v555 = vadd.f32 %v299, %v413
  %v556 = vadd.f32 %v300, %v417
  %v557 = vadd.f32 %v301, %v417
  %v558 = vadd.f32 %v302, %v421
  %v559 = vadd.f32 %v303, %v421
  %v560 = vadd.f32 %v304, %v425
  %v561 = vadd.f32 %v305, %v425
  %v562 = vadd.f32 %v306, %v429
  %v563 = vadd.f32 %v307, %v429
  %v564 = vadd.f32 %v308, %v433
  %v565 = vadd.f32 %v309, %v433
  %v566 = vadd.f32 %v310, %v437
  %v567 = vadd.f32 %v311, %v437
  %v568 = vadd.f32 %v312, %v441
  %v569 = vadd.f32 %v313, %v441
  %v570 = vadd.f32 %v314, %v445
  %v571 = vadd.f32 %v315, %v445
  %v572 = vadd.f32 %v316, %v449
  %v573 = vadd.f32 %v317, %v449
  %v574 = vadd.f32 %v318, %v453
  %v575 = vadd.f32 %v319, %v453
  %v576 = vadd.f32 %v320, %v457
  %v577 = vadd.f32 %v321, %v457
  %v578 = vadd.f32 %v322, %v461
  %v579 = vadd.f32 %v323, %v461
  %v580 = vadd.f32 %v324, %v465
  %v581 = vadd.f32 %v325, %v465
  %v582 = vadd.f32 %v326, %v469
  %v583 = vadd.f32 %v327, %v469
  %v584 = vadd.f32 %v328, %v473
  %v585 = vadd.f32 %v329, %v473
  %v586 = vadd.f32 %v330, %v477
  %v587 = vadd.f32 %v331, %v477
  %v588 = vadd.f32 %v332, %v481
  %v589 = vadd.f32 %v333, %v481
  %v590 = vadd.f32 %v334, %v485
  %v591 = vadd.f32 %v335, %v485
  %v592 = vadd.f32 %v336, %v489
  %v593 = vadd.f32 %v337, %v489
  %v594 = vadd.f32 %v338, %v493
  %v595 = vadd.f32 %v339, %v493
  %v596 = vadd.f32 %v340, %v497
  %v597 = vadd.f32 %v341, %v497
  %v598 = vadd.f32 %v342, %v501
  %v599 = vadd.f32 %v343, %v501
  %v600 = vadd.f32 %v344, %v505
  %v601 = vadd.f32 %v345, %v505
  %v602 = vand.u32 2147483647, %v538
  %vm603 = vcmp.le.f32.partialorder %v602, 0.7853982
  %vm604 = vcmp.lt.s32.totalorder %v538, 0
  %v605 = vand.u32 %v538, 2139095040
  %v606 = vshrl.u32 %v605, 23
  %v607 = vsub.s32 %v606, 127
  %v608 = vand.u32 2147483647, %v538
  %v609 = vand.u32 %v608, 8388607
  %v610 = vor.u32 %v609, 8388608
  %v611 = vsub.s32 0, %v610
  %v612 = vadd.s32 %v607, 1
  %vm613 = vcmp.gt.s32.totalorder %v612, 0
  %v614 = vsel %vm613, %v612, 0
  %v615 = vshrl.u32 %v614, 5
  %v616 = vand.u32 %v614, 31
  %v617 = vsub.s32 32, %v616
  %v618 = vshrl.u32 683565275, %v617
  %v619 = vshll.u32 683565275, %v616
  %v620 = vshrl.u32 2475754826, %v617
  %v621 = vor.u32 %v619, %v620
  %v622 = vshll.u32 2475754826, %v616
  %v623 = vshrl.u32 2131351028, %v617
  %v624 = vor.u32 %v622, %v623
  %v625 = vshll.u32 2131351028, %v616
  %v626 = vshrl.u32 2102212464, %v617
  %v627 = vor.u32 %v625, %v626
  %v628 = vshll.u32 2102212464, %v616
  %v629 = vshrl.u32 920167782, %v617
  %v630 = vor.u32 %v628, %v629
  %v631 = vshll.u32 920167782, %v616
  %v632 = vshrl.u32 1326507024, %v617
  %v633 = vor.u32 %v631, %v632
  %vm634 = vcmp.lt.s32.totalorder %v615, 1
  %vm635 = vcmp.lt.s32.totalorder %v615, 2
  %vm636 = vcmp.lt.s32.totalorder %v615, 3
  %vm637 = vcmp.lt.s32.totalorder %v615, 4
  %v638 = vsel %vm634, %v618, %v621
  %v639 = vsel %vm637, %v627, 2102212464
  %v640 = vsel %vm636, %v624, %v639
  %v641 = vsel %vm635, %v638, %v640
  %v642 = vsel %vm634, %v621, %v624
  %v643 = vsel %vm637, %v630, 920167782
  %v644 = vsel %vm636, %v627, %v643
  %v645 = vsel %vm635, %v642, %v644
  %v646 = vsel %vm634, %v624, %v627
  %v647 = vsel %vm637, %v633, 1326507024
  %v648 = vsel %vm636, %v630, %v647
  %v649 = vsel %vm635, %v646, %v648
  %v650 = vshll.u32 %v610, 8
  %v651 = vmul.u32.u64.compose %v650, %v649
  %v652 = vextract.low.u32 %v651
  %v653 = vextract.high.u32 %v651
  %v654 = vmul.u32.u64.compose %v650, %v645
  %v655 = vextract.low.u32 %v654
  %v656 = vextract.high.u32 %v654
  %v657 = vmul.u32 %v650, %v641
  %v658 = vadd.s32 %v653, %v655
  %vm659 = vc.u32 %v653, %v655
  %v660 = vadd.s32 %v656, 1
  %v661 = vsel %vm659, %v660, %v656
  %v662 = vadd.s32 %v657, %v661
  %v663 = vadd.s32 %v662, 536870912
  %v664 = vshrl.u32 %v663, 30
  %v665 = vshll.u32 %v664, 30
  %v666 = vsub.s32 %v662, %v665
  %vm667 = vcmp.lt.s32.totalorder %v666, 0
  %v668 = vsub.s32 0, %v666
  %v669 = vsel %vm667, %v668, %v666
  %v670 = vclz %v669
  %v671 = vsub.s32 %v670, 2
  %vm672 = vcmp.gt.s32.totalorder 0, %v671
  %v673 = vsel %vm672, 0, %v671
  %v674 = vsub.s32 32, %v673
  %v675 = vshll.u32 %v666, %v673
  %v676 = vshrl.u32 %v658, %v674
  %v677 = vor.u32 %v675, %v676
  %v678 = vsub.s32 4294967266, %v673
  %v679 = vadd.s32 %v678, 127
  %v680 = vshll.u32 %v679, 23
  %v681 = vor.u32 4788187, %v680
  %v682 = vand.u32 2147483647, %v681
  %v684 = vcvt.s32.f32 %v677
  %v685 = vmul.f32 %v684, %v682
  %v686 = vxor.u32 %v685, 2147483648
  %v687 = vsel %vm604, %v686, %v685
  %v688 = vsub.s32 4, %v664
  %v689 = vsel %vm604, %v688, %v664
  %v690 = vsel %vm603, %v538, %v687
  %v691 = vsel %vm603, 0, %v689
  %v692 = vcosq.f32.pop %v690
  %v693 = vsinq.f32.pop %v690
  %vm694 = vweird.f32 %v538
  %v695 = vadd.s32 %v691, 3
  %v696 = vand.u32 %v695, 3
  %vm697 = vcmp.lt.s32.totalorder %v696, 2
  %vm698 = vcmp.eq.s32.totalorder %v696, 0
  %v699 = vxor.u32 %v693, 2147483648
  %v700 = vsel %vm698, %v692, %v699
  %vm701 = vcmp.eq.s32.totalorder %v696, 2
  %v702 = vxor.u32 %v692, 2147483648
  %v703 = vsel %vm701, %v702, %v693
  %v704 = vsel %vm697, %v700, %v703
  %v705 = vsel %vm694, nan, %v704
  %v706 = vand.u32 2147483647, %v539
  %vm707 = vcmp.le.f32.partialorder %v706, 0.7853982
  %vm708 = vcmp.lt.s32.totalorder %v539, 0
  %v709 = vand.u32 %v539, 2139095040
  %v710 = vshrl.u32 %v709, 23
  %v711 = vsub.s32 %v710, 127
  %v712 = vand.u32 2147483647, %v539
  %v713 = vand.u32 %v712, 8388607
  %v714 = vor.u32 %v713, 8388608
  %v715 = vsub.s32 0, %v714
  %v716 = vadd.s32 %v711, 1
  %vm717 = vcmp.gt.s32.totalorder %v716, 0
  %v718 = vsel %vm717, %v716, 0
  %v719 = vshrl.u32 %v718, 5
  %v720 = vand.u32 %v718, 31
  %v721 = vsub.s32 32, %v720
  %v722 = vshrl.u32 683565275, %v721
  %v723 = vshll.u32 683565275, %v720
  %v724 = vshrl.u32 2475754826, %v721
  %v725 = vor.u32 %v723, %v724
  %v726 = vshll.u32 2475754826, %v720
  %v727 = vshrl.u32 2131351028, %v721
  %v728 = vor.u32 %v726, %v727
  %v729 = vshll.u32 2131351028, %v720
  %v730 = vshrl.u32 2102212464, %v721
  %v731 = vor.u32 %v729, %v730
  %v732 = vshll.u32 2102212464, %v720
  %v733 = vshrl.u32 920167782, %v721
  %v734 = vor.u32 %v732, %v733
  %v735 = vshll.u32 920167782, %v720
  %v736 = vshrl.u32 1326507024, %v721
  %v737 = vor.u32 %v735, %v736
  %vm738 = vcmp.lt.s32.totalorder %v719, 1
  %vm739 = vcmp.lt.s32.totalorder %v719, 2
  %vm740 = vcmp.lt.s32.totalorder %v719, 3
  %vm741 = vcmp.lt.s32.totalorder %v719, 4
  %v742 = vsel %vm738, %v722, %v725
  %v743 = vsel %vm741, %v731, 2102212464
  %v744 = vsel %vm740, %v728, %v743
  %v745 = vsel %vm739, %v742, %v744
  %v746 = vsel %vm738, %v725, %v728
  %v747 = vsel %vm741, %v734, 920167782
  %v748 = vsel %vm740, %v731, %v747
  %v749 = vsel %vm739, %v746, %v748
  %v750 = vsel %vm738, %v728, %v731
  %v751 = vsel %vm741, %v737, 1326507024
  %v752 = vsel %vm740, %v734, %v751
  %v753 = vsel %vm739, %v750, %v752
  %v754 = vshll.u32 %v714, 8
  %v755 = vmul.u32.u64.compose %v754, %v753
  %v756 = vextract.low.u32 %v755
  %v757 = vextract.high.u32 %v755
  %v758 = vmul.u32.u64.compose %v754, %v749
  %v759 = vextract.low.u32 %v758
  %v760 = vextract.high.u32 %v758
  %v761 = vmul.u32 %v754, %v745
  %v762 = vadd.s32 %v757, %v759
  %vm763 = vc.u32 %v757, %v759
  %v764 = vadd.s32 %v760, 1
  %v765 = vsel %vm763, %v764, %v760
  %v766 = vadd.s32 %v761, %v765
  %v767 = vadd.s32 %v766, 536870912
  %v768 = vshrl.u32 %v767, 30
  %v769 = vshll.u32 %v768, 30
  %v770 = vsub.s32 %v766, %v769
  %vm771 = vcmp.lt.s32.totalorder %v770, 0
  %v772 = vsub.s32 0, %v770
  %v773 = vsel %vm771, %v772, %v770
  %v774 = vclz %v773
  %v775 = vsub.s32 %v774, 2
  %vm776 = vcmp.gt.s32.totalorder 0, %v775
  %v777 = vsel %vm776, 0, %v775
  %v778 = vsub.s32 32, %v777
  %v779 = vshll.u32 %v770, %v777
  %v780 = vshrl.u32 %v762, %v778
  %v781 = vor.u32 %v779, %v780
  %v782 = vsub.s32 4294967266, %v777
  %v783 = vadd.s32 %v782, 127
  %v784 = vshll.u32 %v783, 23
  %v785 = vor.u32 4788187, %v784
  %v786 = vand.u32 2147483647, %v785
  %v788 = vcvt.s32.f32 %v781
  %v789 = vmul.f32 %v788, %v786
  %v790 = vxor.u32 %v789, 2147483648
  %v791 = vsel %vm708, %v790, %v789
  %v792 = vsub.s32 4, %v768
  %v793 = vsel %vm708, %v792, %v768
  %v794 = vsel %vm707, %v539, %v791
  %v795 = vsel %vm707, 0, %v793
  %v796 = vcosq.f32.pop %v794
  %v797 = vsinq.f32.pop %v794
  %vm798 = vweird.f32 %v539
  %v799 = vadd.s32 %v795, 3
  %v800 = vand.u32 %v799, 3
  %vm801 = vcmp.lt.s32.totalorder %v800, 2
  %vm802 = vcmp.eq.s32.totalorder %v800, 0
  %v803 = vxor.u32 %v797, 2147483648
  %v804 = vsel %vm802, %v796, %v803
  %vm805 = vcmp.eq.s32.totalorder %v800, 2
  %v806 = vxor.u32 %v796, 2147483648
  %v807 = vsel %vm805, %v806, %v797
  %v808 = vsel %vm801, %v804, %v807
  %v809 = vsel %vm798, nan, %v808
  %v810 = vand.u32 2147483647, %v540
  %vm811 = vcmp.le.f32.partialorder %v810, 0.7853982
  %vm812 = vcmp.lt.s32.totalorder %v540, 0
  %v813 = vand.u32 %v540, 2139095040
  %v814 = vshrl.u32 %v813, 23
  %v815 = vsub.s32 %v814, 127
  %v816 = vand.u32 2147483647, %v540
  %v817 = vand.u32 %v816, 8388607
  %v818 = vor.u32 %v817, 8388608
  %v819 = vsub.s32 0, %v818
  %v820 = vadd.s32 %v815, 1
  %vm821 = vcmp.gt.s32.totalorder %v820, 0
  %v822 = vsel %vm821, %v820, 0
  %v823 = vshrl.u32 %v822, 5
  %v824 = vand.u32 %v822, 31
  %v825 = vsub.s32 32, %v824
  %v826 = vshrl.u32 683565275, %v825
  %v827 = vshll.u32 683565275, %v824
  %v828 = vshrl.u32 2475754826, %v825
  %v829 = vor.u32 %v827, %v828
  %v830 = vshll.u32 2475754826, %v824
  %v831 = vshrl.u32 2131351028, %v825
  %v832 = vor.u32 %v830, %v831
  %v833 = vshll.u32 2131351028, %v824
  %v834 = vshrl.u32 2102212464, %v825
  %v835 = vor.u32 %v833, %v834
  %v836 = vshll.u32 2102212464, %v824
  %v837 = vshrl.u32 920167782, %v825
  %v838 = vor.u32 %v836, %v837
  %v839 = vshll.u32 920167782, %v824
  %v840 = vshrl.u32 1326507024, %v825
  %v841 = vor.u32 %v839, %v840
  %vm842 = vcmp.lt.s32.totalorder %v823, 1
  %vm843 = vcmp.lt.s32.totalorder %v823, 2
  %vm844 = vcmp.lt.s32.totalorder %v823, 3
  %vm845 = vcmp.lt.s32.totalorder %v823, 4
  %v846 = vsel %vm842, %v826, %v829
  %v847 = vsel %vm845, %v835, 2102212464
  %v848 = vsel %vm844, %v832, %v847
  %v849 = vsel %vm843, %v846, %v848
  %v850 = vsel %vm842, %v829, %v832
  %v851 = vsel %vm845, %v838, 920167782
  %v852 = vsel %vm844, %v835, %v851
  %v853 = vsel %vm843, %v850, %v852
  %v854 = vsel %vm842, %v832, %v835
  %v855 = vsel %vm845, %v841, 1326507024
  %v856 = vsel %vm844, %v838, %v855
  %v857 = vsel %vm843, %v854, %v856
  %v858 = vshll.u32 %v818, 8
  %v859 = vmul.u32.u64.compose %v858, %v857
  %v860 = vextract.low.u32 %v859
  %v861 = vextract.high.u32 %v859
  %v862 = vmul.u32.u64.compose %v858, %v853
  %v863 = vextract.low.u32 %v862
  %v864 = vextract.high.u32 %v862
  %v865 = vmul.u32 %v858, %v849
  %v866 = vadd.s32 %v861, %v863
  %vm867 = vc.u32 %v861, %v863
  %v868 = vadd.s32 %v864, 1
  %v869 = vsel %vm867, %v868, %v864
  %v870 = vadd.s32 %v865, %v869
  %v871 = vadd.s32 %v870, 536870912
  %v872 = vshrl.u32 %v871, 30
  %v873 = vshll.u32 %v872, 30
  %v874 = vsub.s32 %v870, %v873
  %vm875 = vcmp.lt.s32.totalorder %v874, 0
  %v876 = vsub.s32 0, %v874
  %v877 = vsel %vm875, %v876, %v874
  %v878 = vclz %v877
  %v879 = vsub.s32 %v878, 2
  %vm880 = vcmp.gt.s32.totalorder 0, %v879
  %v881 = vsel %vm880, 0, %v879
  %v882 = vsub.s32 32, %v881
  %v883 = vshll.u32 %v874, %v881
  %v884 = vshrl.u32 %v866, %v882
  %v885 = vor.u32 %v883, %v884
  %v886 = vsub.s32 4294967266, %v881
  %v887 = vadd.s32 %v886, 127
  %v888 = vshll.u32 %v887, 23
  %v889 = vor.u32 4788187, %v888
  %v890 = vand.u32 2147483647, %v889
  %v892 = vcvt.s32.f32 %v885
  %v893 = vmul.f32 %v892, %v890
  %v894 = vxor.u32 %v893, 2147483648
  %v895 = vsel %vm812, %v894, %v893
  %v896 = vsub.s32 4, %v872
  %v897 = vsel %vm812, %v896, %v872
  %v898 = vsel %vm811, %v540, %v895
  %v899 = vsel %vm811, 0, %v897
  %v900 = vcosq.f32.pop %v898
  %v901 = vsinq.f32.pop %v898
  %vm902 = vweird.f32 %v540
  %v903 = vadd.s32 %v899, 3
  %v904 = vand.u32 %v903, 3
  %vm905 = vcmp.lt.s32.totalorder %v904, 2
  %vm906 = vcmp.eq.s32.totalorder %v904, 0
  %v907 = vxor.u32 %v901, 2147483648
  %v908 = vsel %vm906, %v900, %v907
  %vm909 = vcmp.eq.s32.totalorder %v904, 2
  %v910 = vxor.u32 %v900, 2147483648
  %v911 = vsel %vm909, %v910, %v901
  %v912 = vsel %vm905, %v908, %v911
  %v913 = vsel %vm902, nan, %v912
  %v914 = vand.u32 2147483647, %v541
  %vm915 = vcmp.le.f32.partialorder %v914, 0.7853982
  %vm916 = vcmp.lt.s32.totalorder %v541, 0
  %v917 = vand.u32 %v541, 2139095040
  %v918 = vshrl.u32 %v917, 23
  %v919 = vsub.s32 %v918, 127
  %v920 = vand.u32 2147483647, %v541
  %v921 = vand.u32 %v920, 8388607
  %v922 = vor.u32 %v921, 8388608
  %v923 = vsub.s32 0, %v922
  %v924 = vadd.s32 %v919, 1
  %vm925 = vcmp.gt.s32.totalorder %v924, 0
  %v926 = vsel %vm925, %v924, 0
  %v927 = vshrl.u32 %v926, 5
  %v928 = vand.u32 %v926, 31
  %v929 = vsub.s32 32, %v928
  %v930 = vshrl.u32 683565275, %v929
  %v931 = vshll.u32 683565275, %v928
  %v932 = vshrl.u32 2475754826, %v929
  %v933 = vor.u32 %v931, %v932
  %v934 = vshll.u32 2475754826, %v928
  %v935 = vshrl.u32 2131351028, %v929
  %v936 = vor.u32 %v934, %v935
  %v937 = vshll.u32 2131351028, %v928
  %v938 = vshrl.u32 2102212464, %v929
  %v939 = vor.u32 %v937, %v938
  %v940 = vshll.u32 2102212464, %v928
  %v941 = vshrl.u32 920167782, %v929
  %v942 = vor.u32 %v940, %v941
  %v943 = vshll.u32 920167782, %v928
  %v944 = vshrl.u32 1326507024, %v929
  %v945 = vor.u32 %v943, %v944
  %vm946 = vcmp.lt.s32.totalorder %v927, 1
  %vm947 = vcmp.lt.s32.totalorder %v927, 2
  %vm948 = vcmp.lt.s32.totalorder %v927, 3
  %vm949 = vcmp.lt.s32.totalorder %v927, 4
  %v950 = vsel %vm946, %v930, %v933
  %v951 = vsel %vm949, %v939, 2102212464
  %v952 = vsel %vm948, %v936, %v951
  %v953 = vsel %vm947, %v950, %v952
  %v954 = vsel %vm946, %v933, %v936
  %v955 = vsel %vm949, %v942, 920167782
  %v956 = vsel %vm948, %v939, %v955
  %v957 = vsel %vm947, %v954, %v956
  %v958 = vsel %vm946, %v936, %v939
  %v959 = vsel %vm949, %v945, 1326507024
  %v960 = vsel %vm948, %v942, %v959
  %v961 = vsel %vm947, %v958, %v960
  %v962 = vshll.u32 %v922, 8
  %v963 = vmul.u32.u64.compose %v962, %v961
  %v964 = vextract.low.u32 %v963
  %v965 = vextract.high.u32 %v963
  %v966 = vmul.u32.u64.compose %v962, %v957
  %v967 = vextract.low.u32 %v966
  %v968 = vextract.high.u32 %v966
  %v969 = vmul.u32 %v962, %v953
  %v970 = vadd.s32 %v965, %v967
  %vm971 = vc.u32 %v965, %v967
  %v972 = vadd.s32 %v968, 1
  %v973 = vsel %vm971, %v972, %v968
  %v974 = vadd.s32 %v969, %v973
  %v975 = vadd.s32 %v974, 536870912
  %v976 = vshrl.u32 %v975, 30
  %v977 = vshll.u32 %v976, 30
  %v978 = vsub.s32 %v974, %v977
  %vm979 = vcmp.lt.s32.totalorder %v978, 0
  %v980 = vsub.s32 0, %v978
  %v981 = vsel %vm979, %v980, %v978
  %v982 = vclz %v981
  %v983 = vsub.s32 %v982, 2
  %vm984 = vcmp.gt.s32.totalorder 0, %v983
  %v985 = vsel %vm984, 0, %v983
  %v986 = vsub.s32 32, %v985
  %v987 = vshll.u32 %v978, %v985
  %v988 = vshrl.u32 %v970, %v986
  %v989 = vor.u32 %v987, %v988
  %v990 = vsub.s32 4294967266, %v985
  %v991 = vadd.s32 %v990, 127
  %v992 = vshll.u32 %v991, 23
  %v993 = vor.u32 4788187, %v992
  %v994 = vand.u32 2147483647, %v993
  %v996 = vcvt.s32.f32 %v989
  %v997 = vmul.f32 %v996, %v994
  %v998 = vxor.u32 %v997, 2147483648
  %v999 = vsel %vm916, %v998, %v997
  %v1000 = vsub.s32 4, %v976
  %v1001 = vsel %vm916, %v1000, %v976
  %v1002 = vsel %vm915, %v541, %v999
  %v1003 = vsel %vm915, 0, %v1001
  %v1004 = vcosq.f32.pop %v1002
  %v1005 = vsinq.f32.pop %v1002
  %vm1006 = vweird.f32 %v541
  %v1007 = vadd.s32 %v1003, 3
  %v1008 = vand.u32 %v1007, 3
  %vm1009 = vcmp.lt.s32.totalorder %v1008, 2
  %vm1010 = vcmp.eq.s32.totalorder %v1008, 0
  %v1011 = vxor.u32 %v1005, 2147483648
  %v1012 = vsel %vm1010, %v1004, %v1011
  %vm1013 = vcmp.eq.s32.totalorder %v1008, 2
  %v1014 = vxor.u32 %v1004, 2147483648
  %v1015 = vsel %vm1013, %v1014, %v1005
  %v1016 = vsel %vm1009, %v1012, %v1015
  %v1017 = vsel %vm1006, nan, %v1016
  %v1018 = vand.u32 2147483647, %v542
  %vm1019 = vcmp.le.f32.partialorder %v1018, 0.7853982
  %vm1020 = vcmp.lt.s32.totalorder %v542, 0
  %v1021 = vand.u32 %v542, 2139095040
  %v1022 = vshrl.u32 %v1021, 23
  %v1023 = vsub.s32 %v1022, 127
  %v1024 = vand.u32 2147483647, %v542
  %v1025 = vand.u32 %v1024, 8388607
  %v1026 = vor.u32 %v1025, 8388608
  %v1027 = vsub.s32 0, %v1026
  %v1028 = vadd.s32 %v1023, 1
  %vm1029 = vcmp.gt.s32.totalorder %v1028, 0
  %v1030 = vsel %vm1029, %v1028, 0
  %v1031 = vshrl.u32 %v1030, 5
  %v1032 = vand.u32 %v1030, 31
  %v1033 = vsub.s32 32, %v1032
  %v1034 = vshrl.u32 683565275, %v1033
  %v1035 = vshll.u32 683565275, %v1032
  %v1036 = vshrl.u32 2475754826, %v1033
  %v1037 = vor.u32 %v1035, %v1036
  %v1038 = vshll.u32 2475754826, %v1032
  %v1039 = vshrl.u32 2131351028, %v1033
  %v1040 = vor.u32 %v1038, %v1039
  %v1041 = vshll.u32 2131351028, %v1032
  %v1042 = vshrl.u32 2102212464, %v1033
  %v1043 = vor.u32 %v1041, %v1042
  %v1044 = vshll.u32 2102212464, %v1032
  %v1045 = vshrl.u32 920167782, %v1033
  %v1046 = vor.u32 %v1044, %v1045
  %v1047 = vshll.u32 920167782, %v1032
  %v1048 = vshrl.u32 1326507024, %v1033
  %v1049 = vor.u32 %v1047, %v1048
  %vm1050 = vcmp.lt.s32.totalorder %v1031, 1
  %vm1051 = vcmp.lt.s32.totalorder %v1031, 2
  %vm1052 = vcmp.lt.s32.totalorder %v1031, 3
  %vm1053 = vcmp.lt.s32.totalorder %v1031, 4
  %v1054 = vsel %vm1050, %v1034, %v1037
  %v1055 = vsel %vm1053, %v1043, 2102212464
  %v1056 = vsel %vm1052, %v1040, %v1055
  %v1057 = vsel %vm1051, %v1054, %v1056
  %v1058 = vsel %vm1050, %v1037, %v1040
  %v1059 = vsel %vm1053, %v1046, 920167782
  %v1060 = vsel %vm1052, %v1043, %v1059
  %v1061 = vsel %vm1051, %v1058, %v1060
  %v1062 = vsel %vm1050, %v1040, %v1043
  %v1063 = vsel %vm1053, %v1049, 1326507024
  %v1064 = vsel %vm1052, %v1046, %v1063
  %v1065 = vsel %vm1051, %v1062, %v1064
  %v1066 = vshll.u32 %v1026, 8
  %v1067 = vmul.u32.u64.compose %v1066, %v1065
  %v1068 = vextract.low.u32 %v1067
  %v1069 = vextract.high.u32 %v1067
  %v1070 = vmul.u32.u64.compose %v1066, %v1061
  %v1071 = vextract.low.u32 %v1070
  %v1072 = vextract.high.u32 %v1070
  %v1073 = vmul.u32 %v1066, %v1057
  %v1074 = vadd.s32 %v1069, %v1071
  %vm1075 = vc.u32 %v1069, %v1071
  %v1076 = vadd.s32 %v1072, 1
  %v1077 = vsel %vm1075, %v1076, %v1072
  %v1078 = vadd.s32 %v1073, %v1077
  %v1079 = vadd.s32 %v1078, 536870912
  %v1080 = vshrl.u32 %v1079, 30
  %v1081 = vshll.u32 %v1080, 30
  %v1082 = vsub.s32 %v1078, %v1081
  %vm1083 = vcmp.lt.s32.totalorder %v1082, 0
  %v1084 = vsub.s32 0, %v1082
  %v1085 = vsel %vm1083, %v1084, %v1082
  %v1086 = vclz %v1085
  %v1087 = vsub.s32 %v1086, 2
  %vm1088 = vcmp.gt.s32.totalorder 0, %v1087
  %v1089 = vsel %vm1088, 0, %v1087
  %v1090 = vsub.s32 32, %v1089
  %v1091 = vshll.u32 %v1082, %v1089
  %v1092 = vshrl.u32 %v1074, %v1090
  %v1093 = vor.u32 %v1091, %v1092
  %v1094 = vsub.s32 4294967266, %v1089
  %v1095 = vadd.s32 %v1094, 127
  %v1096 = vshll.u32 %v1095, 23
  %v1097 = vor.u32 4788187, %v1096
  %v1098 = vand.u32 2147483647, %v1097
  %v1100 = vcvt.s32.f32 %v1093
  %v1101 = vmul.f32 %v1100, %v1098
  %v1102 = vxor.u32 %v1101, 2147483648
  %v1103 = vsel %vm1020, %v1102, %v1101
  %v1104 = vsub.s32 4, %v1080
  %v1105 = vsel %vm1020, %v1104, %v1080
  %v1106 = vsel %vm1019, %v542, %v1103
  %v1107 = vsel %vm1019, 0, %v1105
  %v1108 = vcosq.f32.pop %v1106
  %v1109 = vsinq.f32.pop %v1106
  %vm1110 = vweird.f32 %v542
  %v1111 = vadd.s32 %v1107, 3
  %v1112 = vand.u32 %v1111, 3
  %vm1113 = vcmp.lt.s32.totalorder %v1112, 2
  %vm1114 = vcmp.eq.s32.totalorder %v1112, 0
  %v1115 = vxor.u32 %v1109, 2147483648
  %v1116 = vsel %vm1114, %v1108, %v1115
  %vm1117 = vcmp.eq.s32.totalorder %v1112, 2
  %v1118 = vxor.u32 %v1108, 2147483648
  %v1119 = vsel %vm1117, %v1118, %v1109
  %v1120 = vsel %vm1113, %v1116, %v1119
  %v1121 = vsel %vm1110, nan, %v1120
  %v1122 = vand.u32 2147483647, %v543
  %vm1123 = vcmp.le.f32.partialorder %v1122, 0.7853982
  %vm1124 = vcmp.lt.s32.totalorder %v543, 0
  %v1125 = vand.u32 %v543, 2139095040
  %v1126 = vshrl.u32 %v1125, 23
  %v1127 = vsub.s32 %v1126, 127
  %v1128 = vand.u32 2147483647, %v543
  %v1129 = vand.u32 %v1128, 8388607
  %v1130 = vor.u32 %v1129, 8388608
  %v1131 = vsub.s32 0, %v1130
  %v1132 = vadd.s32 %v1127, 1
  %vm1133 = vcmp.gt.s32.totalorder %v1132, 0
  %v1134 = vsel %vm1133, %v1132, 0
  %v1135 = vshrl.u32 %v1134, 5
  %v1136 = vand.u32 %v1134, 31
  %v1137 = vsub.s32 32, %v1136
  %v1138 = vshrl.u32 683565275, %v1137
  %v1139 = vshll.u32 683565275, %v1136
  %v1140 = vshrl.u32 2475754826, %v1137
  %v1141 = vor.u32 %v1139, %v1140
  %v1142 = vshll.u32 2475754826, %v1136
  %v1143 = vshrl.u32 2131351028, %v1137
  %v1144 = vor.u32 %v1142, %v1143
  %v1145 = vshll.u32 2131351028, %v1136
  %v1146 = vshrl.u32 2102212464, %v1137
  %v1147 = vor.u32 %v1145, %v1146
  %v1148 = vshll.u32 2102212464, %v1136
  %v1149 = vshrl.u32 920167782, %v1137
  %v1150 = vor.u32 %v1148, %v1149
  %v1151 = vshll.u32 920167782, %v1136
  %v1152 = vshrl.u32 1326507024, %v1137
  %v1153 = vor.u32 %v1151, %v1152
  %vm1154 = vcmp.lt.s32.totalorder %v1135, 1
  %vm1155 = vcmp.lt.s32.totalorder %v1135, 2
  %vm1156 = vcmp.lt.s32.totalorder %v1135, 3
  %vm1157 = vcmp.lt.s32.totalorder %v1135, 4
  %v1158 = vsel %vm1154, %v1138, %v1141
  %v1159 = vsel %vm1157, %v1147, 2102212464
  %v1160 = vsel %vm1156, %v1144, %v1159
  %v1161 = vsel %vm1155, %v1158, %v1160
  %v1162 = vsel %vm1154, %v1141, %v1144
  %v1163 = vsel %vm1157, %v1150, 920167782
  %v1164 = vsel %vm1156, %v1147, %v1163
  %v1165 = vsel %vm1155, %v1162, %v1164
  %v1166 = vsel %vm1154, %v1144, %v1147
  %v1167 = vsel %vm1157, %v1153, 1326507024
  %v1168 = vsel %vm1156, %v1150, %v1167
  %v1169 = vsel %vm1155, %v1166, %v1168
  %v1170 = vshll.u32 %v1130, 8
  %v1171 = vmul.u32.u64.compose %v1170, %v1169
  %v1172 = vextract.low.u32 %v1171
  %v1173 = vextract.high.u32 %v1171
  %v1174 = vmul.u32.u64.compose %v1170, %v1165
  %v1175 = vextract.low.u32 %v1174
  %v1176 = vextract.high.u32 %v1174
  %v1177 = vmul.u32 %v1170, %v1161
  %v1178 = vadd.s32 %v1173, %v1175
  %vm1179 = vc.u32 %v1173, %v1175
  %v1180 = vadd.s32 %v1176, 1
  %v1181 = vsel %vm1179, %v1180, %v1176
  %v1182 = vadd.s32 %v1177, %v1181
  %v1183 = vadd.s32 %v1182, 536870912
  %v1184 = vshrl.u32 %v1183, 30
  %v1185 = vshll.u32 %v1184, 30
  %v1186 = vsub.s32 %v1182, %v1185
  %vm1187 = vcmp.lt.s32.totalorder %v1186, 0
  %v1188 = vsub.s32 0, %v1186
  %v1189 = vsel %vm1187, %v1188, %v1186
  %v1190 = vclz %v1189
  %v1191 = vsub.s32 %v1190, 2
  %vm1192 = vcmp.gt.s32.totalorder 0, %v1191
  %v1193 = vsel %vm1192, 0, %v1191
  %v1194 = vsub.s32 32, %v1193
  %v1195 = vshll.u32 %v1186, %v1193
  %v1196 = vshrl.u32 %v1178, %v1194
  %v1197 = vor.u32 %v1195, %v1196
  %v1198 = vsub.s32 4294967266, %v1193
  %v1199 = vadd.s32 %v1198, 127
  %v1200 = vshll.u32 %v1199, 23
  %v1201 = vor.u32 4788187, %v1200
  %v1202 = vand.u32 2147483647, %v1201
  %v1204 = vcvt.s32.f32 %v1197
  %v1205 = vmul.f32 %v1204, %v1202
  %v1206 = vxor.u32 %v1205, 2147483648
  %v1207 = vsel %vm1124, %v1206, %v1205
  %v1208 = vsub.s32 4, %v1184
  %v1209 = vsel %vm1124, %v1208, %v1184
  %v1210 = vsel %vm1123, %v543, %v1207
  %v1211 = vsel %vm1123, 0, %v1209
  %v1212 = vcosq.f32.pop %v1210
  %v1213 = vsinq.f32.pop %v1210
  %vm1214 = vweird.f32 %v543
  %v1215 = vadd.s32 %v1211, 3
  %v1216 = vand.u32 %v1215, 3
  %vm1217 = vcmp.lt.s32.totalorder %v1216, 2
  %vm1218 = vcmp.eq.s32.totalorder %v1216, 0
  %v1219 = vxor.u32 %v1213, 2147483648
  %v1220 = vsel %vm1218, %v1212, %v1219
  %vm1221 = vcmp.eq.s32.totalorder %v1216, 2
  %v1222 = vxor.u32 %v1212, 2147483648
  %v1223 = vsel %vm1221, %v1222, %v1213
  %v1224 = vsel %vm1217, %v1220, %v1223
  %v1225 = vsel %vm1214, nan, %v1224
  %v1226 = vand.u32 2147483647, %v544
  %vm1227 = vcmp.le.f32.partialorder %v1226, 0.7853982
  %vm1228 = vcmp.lt.s32.totalorder %v544, 0
  %v1229 = vand.u32 %v544, 2139095040
  %v1230 = vshrl.u32 %v1229, 23
  %v1231 = vsub.s32 %v1230, 127
  %v1232 = vand.u32 2147483647, %v544
  %v1233 = vand.u32 %v1232, 8388607
  %v1234 = vor.u32 %v1233, 8388608
  %v1235 = vsub.s32 0, %v1234
  %v1236 = vadd.s32 %v1231, 1
  %vm1237 = vcmp.gt.s32.totalorder %v1236, 0
  %v1238 = vsel %vm1237, %v1236, 0
  %v1239 = vshrl.u32 %v1238, 5
  %v1240 = vand.u32 %v1238, 31
  %v1241 = vsub.s32 32, %v1240
  %v1242 = vshrl.u32 683565275, %v1241
  %v1243 = vshll.u32 683565275, %v1240
  %v1244 = vshrl.u32 2475754826, %v1241
  %v1245 = vor.u32 %v1243, %v1244
  %v1246 = vshll.u32 2475754826, %v1240
  %v1247 = vshrl.u32 2131351028, %v1241
  %v1248 = vor.u32 %v1246, %v1247
  %v1249 = vshll.u32 2131351028, %v1240
  %v1250 = vshrl.u32 2102212464, %v1241
  %v1251 = vor.u32 %v1249, %v1250
  %v1252 = vshll.u32 2102212464, %v1240
  %v1253 = vshrl.u32 920167782, %v1241
  %v1254 = vor.u32 %v1252, %v1253
  %v1255 = vshll.u32 920167782, %v1240
  %v1256 = vshrl.u32 1326507024, %v1241
  %v1257 = vor.u32 %v1255, %v1256
  %vm1258 = vcmp.lt.s32.totalorder %v1239, 1
  %vm1259 = vcmp.lt.s32.totalorder %v1239, 2
  %vm1260 = vcmp.lt.s32.totalorder %v1239, 3
  %vm1261 = vcmp.lt.s32.totalorder %v1239, 4
  %v1262 = vsel %vm1258, %v1242, %v1245
  %v1263 = vsel %vm1261, %v1251, 2102212464
  %v1264 = vsel %vm1260, %v1248, %v1263
  %v1265 = vsel %vm1259, %v1262, %v1264
  %v1266 = vsel %vm1258, %v1245, %v1248
  %v1267 = vsel %vm1261, %v1254, 920167782
  %v1268 = vsel %vm1260, %v1251, %v1267
  %v1269 = vsel %vm1259, %v1266, %v1268
  %v1270 = vsel %vm1258, %v1248, %v1251
  %v1271 = vsel %vm1261, %v1257, 1326507024
  %v1272 = vsel %vm1260, %v1254, %v1271
  %v1273 = vsel %vm1259, %v1270, %v1272
  %v1274 = vshll.u32 %v1234, 8
  %v1275 = vmul.u32.u64.compose %v1274, %v1273
  %v1276 = vextract.low.u32 %v1275
  %v1277 = vextract.high.u32 %v1275
  %v1278 = vmul.u32.u64.compose %v1274, %v1269
  %v1279 = vextract.low.u32 %v1278
  %v1280 = vextract.high.u32 %v1278
  %v1281 = vmul.u32 %v1274, %v1265
  %v1282 = vadd.s32 %v1277, %v1279
  %vm1283 = vc.u32 %v1277, %v1279
  %v1284 = vadd.s32 %v1280, 1
  %v1285 = vsel %vm1283, %v1284, %v1280
  %v1286 = vadd.s32 %v1281, %v1285
  %v1287 = vadd.s32 %v1286, 536870912
  %v1288 = vshrl.u32 %v1287, 30
  %v1289 = vshll.u32 %v1288, 30
  %v1290 = vsub.s32 %v1286, %v1289
  %vm1291 = vcmp.lt.s32.totalorder %v1290, 0
  %v1292 = vsub.s32 0, %v1290
  %v1293 = vsel %vm1291, %v1292, %v1290
  %v1294 = vclz %v1293
  %v1295 = vsub.s32 %v1294, 2
  %vm1296 = vcmp.gt.s32.totalorder 0, %v1295
  %v1297 = vsel %vm1296, 0, %v1295
  %v1298 = vsub.s32 32, %v1297
  %v1299 = vshll.u32 %v1290, %v1297
  %v1300 = vshrl.u32 %v1282, %v1298
  %v1301 = vor.u32 %v1299, %v1300
  %v1302 = vsub.s32 4294967266, %v1297
  %v1303 = vadd.s32 %v1302, 127
  %v1304 = vshll.u32 %v1303, 23
  %v1305 = vor.u32 4788187, %v1304
  %v1306 = vand.u32 2147483647, %v1305
  %v1308 = vcvt.s32.f32 %v1301
  %v1309 = vmul.f32 %v1308, %v1306
  %v1310 = vxor.u32 %v1309, 2147483648
  %v1311 = vsel %vm1228, %v1310, %v1309
  %v1312 = vsub.s32 4, %v1288
  %v1313 = vsel %vm1228, %v1312, %v1288
  %v1314 = vsel %vm1227, %v544, %v1311
  %v1315 = vsel %vm1227, 0, %v1313
  %v1316 = vcosq.f32.pop %v1314
  %v1317 = vsinq.f32.pop %v1314
  %vm1318 = vweird.f32 %v544
  %v1319 = vadd.s32 %v1315, 3
  %v1320 = vand.u32 %v1319, 3
  %vm1321 = vcmp.lt.s32.totalorder %v1320, 2
  %vm1322 = vcmp.eq.s32.totalorder %v1320, 0
  %v1323 = vxor.u32 %v1317, 2147483648
  %v1324 = vsel %vm1322, %v1316, %v1323
  %vm1325 = vcmp.eq.s32.totalorder %v1320, 2
  %v1326 = vxor.u32 %v1316, 2147483648
  %v1327 = vsel %vm1325, %v1326, %v1317
  %v1328 = vsel %vm1321, %v1324, %v1327
  %v1329 = vsel %vm1318, nan, %v1328
  %v1330 = vand.u32 2147483647, %v545
  %vm1331 = vcmp.le.f32.partialorder %v1330, 0.7853982
  %vm1332 = vcmp.lt.s32.totalorder %v545, 0
  %v1333 = vand.u32 %v545, 2139095040
  %v1334 = vshrl.u32 %v1333, 23
  %v1335 = vsub.s32 %v1334, 127
  %v1336 = vand.u32 2147483647, %v545
  %v1337 = vand.u32 %v1336, 8388607
  %v1338 = vor.u32 %v1337, 8388608
  %v1339 = vsub.s32 0, %v1338
  %v1340 = vadd.s32 %v1335, 1
  %vm1341 = vcmp.gt.s32.totalorder %v1340, 0
  %v1342 = vsel %vm1341, %v1340, 0
  %v1343 = vshrl.u32 %v1342, 5
  %v1344 = vand.u32 %v1342, 31
  %v1345 = vsub.s32 32, %v1344
  %v1346 = vshrl.u32 683565275, %v1345
  %v1347 = vshll.u32 683565275, %v1344
  %v1348 = vshrl.u32 2475754826, %v1345
  %v1349 = vor.u32 %v1347, %v1348
  %v1350 = vshll.u32 2475754826, %v1344
  %v1351 = vshrl.u32 2131351028, %v1345
  %v1352 = vor.u32 %v1350, %v1351
  %v1353 = vshll.u32 2131351028, %v1344
  %v1354 = vshrl.u32 2102212464, %v1345
  %v1355 = vor.u32 %v1353, %v1354
  %v1356 = vshll.u32 2102212464, %v1344
  %v1357 = vshrl.u32 920167782, %v1345
  %v1358 = vor.u32 %v1356, %v1357
  %v1359 = vshll.u32 920167782, %v1344
  %v1360 = vshrl.u32 1326507024, %v1345
  %v1361 = vor.u32 %v1359, %v1360
  %vm1362 = vcmp.lt.s32.totalorder %v1343, 1
  %vm1363 = vcmp.lt.s32.totalorder %v1343, 2
  %vm1364 = vcmp.lt.s32.totalorder %v1343, 3
  %vm1365 = vcmp.lt.s32.totalorder %v1343, 4
  %v1366 = vsel %vm1362, %v1346, %v1349
  %v1367 = vsel %vm1365, %v1355, 2102212464
  %v1368 = vsel %vm1364, %v1352, %v1367
  %v1369 = vsel %vm1363, %v1366, %v1368
  %v1370 = vsel %vm1362, %v1349, %v1352
  %v1371 = vsel %vm1365, %v1358, 920167782
  %v1372 = vsel %vm1364, %v1355, %v1371
  %v1373 = vsel %vm1363, %v1370, %v1372
  %v1374 = vsel %vm1362, %v1352, %v1355
  %v1375 = vsel %vm1365, %v1361, 1326507024
  %v1376 = vsel %vm1364, %v1358, %v1375
  %v1377 = vsel %vm1363, %v1374, %v1376
  %v1378 = vshll.u32 %v1338, 8
  %v1379 = vmul.u32.u64.compose %v1378, %v1377
  %v1380 = vextract.low.u32 %v1379
  %v1381 = vextract.high.u32 %v1379
  %v1382 = vmul.u32.u64.compose %v1378, %v1373
  %v1383 = vextract.low.u32 %v1382
  %v1384 = vextract.high.u32 %v1382
  %v1385 = vmul.u32 %v1378, %v1369
  %v1386 = vadd.s32 %v1381, %v1383
  %vm1387 = vc.u32 %v1381, %v1383
  %v1388 = vadd.s32 %v1384, 1
  %v1389 = vsel %vm1387, %v1388, %v1384
  %v1390 = vadd.s32 %v1385, %v1389
  %v1391 = vadd.s32 %v1390, 536870912
  %v1392 = vshrl.u32 %v1391, 30
  %v1393 = vshll.u32 %v1392, 30
  %v1394 = vsub.s32 %v1390, %v1393
  %vm1395 = vcmp.lt.s32.totalorder %v1394, 0
  %v1396 = vsub.s32 0, %v1394
  %v1397 = vsel %vm1395, %v1396, %v1394
  %v1398 = vclz %v1397
  %v1399 = vsub.s32 %v1398, 2
  %vm1400 = vcmp.gt.s32.totalorder 0, %v1399
  %v1401 = vsel %vm1400, 0, %v1399
  %v1402 = vsub.s32 32, %v1401
  %v1403 = vshll.u32 %v1394, %v1401
  %v1404 = vshrl.u32 %v1386, %v1402
  %v1405 = vor.u32 %v1403, %v1404
  %v1406 = vsub.s32 4294967266, %v1401
  %v1407 = vadd.s32 %v1406, 127
  %v1408 = vshll.u32 %v1407, 23
  %v1409 = vor.u32 4788187, %v1408
  %v1410 = vand.u32 2147483647, %v1409
  %v1412 = vcvt.s32.f32 %v1405
  %v1413 = vmul.f32 %v1412, %v1410
  %v1414 = vxor.u32 %v1413, 2147483648
  %v1415 = vsel %vm1332, %v1414, %v1413
  %v1416 = vsub.s32 4, %v1392
  %v1417 = vsel %vm1332, %v1416, %v1392
  %v1418 = vsel %vm1331, %v545, %v1415
  %v1419 = vsel %vm1331, 0, %v1417
  %v1420 = vcosq.f32.pop %v1418
  %v1421 = vsinq.f32.pop %v1418
  %vm1422 = vweird.f32 %v545
  %v1423 = vadd.s32 %v1419, 3
  %v1424 = vand.u32 %v1423, 3
  %vm1425 = vcmp.lt.s32.totalorder %v1424, 2
  %vm1426 = vcmp.eq.s32.totalorder %v1424, 0
  %v1427 = vxor.u32 %v1421, 2147483648
  %v1428 = vsel %vm1426, %v1420, %v1427
  %vm1429 = vcmp.eq.s32.totalorder %v1424, 2
  %v1430 = vxor.u32 %v1420, 2147483648
  %v1431 = vsel %vm1429, %v1430, %v1421
  %v1432 = vsel %vm1425, %v1428, %v1431
  %v1433 = vsel %vm1422, nan, %v1432
  %v1434 = vand.u32 2147483647, %v546
  %vm1435 = vcmp.le.f32.partialorder %v1434, 0.7853982
  %vm1436 = vcmp.lt.s32.totalorder %v546, 0
  %v1437 = vand.u32 %v546, 2139095040
  %v1438 = vshrl.u32 %v1437, 23
  %v1439 = vsub.s32 %v1438, 127
  %v1440 = vand.u32 2147483647, %v546
  %v1441 = vand.u32 %v1440, 8388607
  %v1442 = vor.u32 %v1441, 8388608
  %v1443 = vsub.s32 0, %v1442
  %v1444 = vadd.s32 %v1439, 1
  %vm1445 = vcmp.gt.s32.totalorder %v1444, 0
  %v1446 = vsel %vm1445, %v1444, 0
  %v1447 = vshrl.u32 %v1446, 5
  %v1448 = vand.u32 %v1446, 31
  %v1449 = vsub.s32 32, %v1448
  %v1450 = vshrl.u32 683565275, %v1449
  %v1451 = vshll.u32 683565275, %v1448
  %v1452 = vshrl.u32 2475754826, %v1449
  %v1453 = vor.u32 %v1451, %v1452
  %v1454 = vshll.u32 2475754826, %v1448
  %v1455 = vshrl.u32 2131351028, %v1449
  %v1456 = vor.u32 %v1454, %v1455
  %v1457 = vshll.u32 2131351028, %v1448
  %v1458 = vshrl.u32 2102212464, %v1449
  %v1459 = vor.u32 %v1457, %v1458
  %v1460 = vshll.u32 2102212464, %v1448
  %v1461 = vshrl.u32 920167782, %v1449
  %v1462 = vor.u32 %v1460, %v1461
  %v1463 = vshll.u32 920167782, %v1448
  %v1464 = vshrl.u32 1326507024, %v1449
  %v1465 = vor.u32 %v1463, %v1464
  %vm1466 = vcmp.lt.s32.totalorder %v1447, 1
  %vm1467 = vcmp.lt.s32.totalorder %v1447, 2
  %vm1468 = vcmp.lt.s32.totalorder %v1447, 3
  %vm1469 = vcmp.lt.s32.totalorder %v1447, 4
  %v1470 = vsel %vm1466, %v1450, %v1453
  %v1471 = vsel %vm1469, %v1459, 2102212464
  %v1472 = vsel %vm1468, %v1456, %v1471
  %v1473 = vsel %vm1467, %v1470, %v1472
  %v1474 = vsel %vm1466, %v1453, %v1456
  %v1475 = vsel %vm1469, %v1462, 920167782
  %v1476 = vsel %vm1468, %v1459, %v1475
  %v1477 = vsel %vm1467, %v1474, %v1476
  %v1478 = vsel %vm1466, %v1456, %v1459
  %v1479 = vsel %vm1469, %v1465, 1326507024
  %v1480 = vsel %vm1468, %v1462, %v1479
  %v1481 = vsel %vm1467, %v1478, %v1480
  %v1482 = vshll.u32 %v1442, 8
  %v1483 = vmul.u32.u64.compose %v1482, %v1481
  %v1484 = vextract.low.u32 %v1483
  %v1485 = vextract.high.u32 %v1483
  %v1486 = vmul.u32.u64.compose %v1482, %v1477
  %v1487 = vextract.low.u32 %v1486
  %v1488 = vextract.high.u32 %v1486
  %v1489 = vmul.u32 %v1482, %v1473
  %v1490 = vadd.s32 %v1485, %v1487
  %vm1491 = vc.u32 %v1485, %v1487
  %v1492 = vadd.s32 %v1488, 1
  %v1493 = vsel %vm1491, %v1492, %v1488
  %v1494 = vadd.s32 %v1489, %v1493
  %v1495 = vadd.s32 %v1494, 536870912
  %v1496 = vshrl.u32 %v1495, 30
  %v1497 = vshll.u32 %v1496, 30
  %v1498 = vsub.s32 %v1494, %v1497
  %vm1499 = vcmp.lt.s32.totalorder %v1498, 0
  %v1500 = vsub.s32 0, %v1498
  %v1501 = vsel %vm1499, %v1500, %v1498
  %v1502 = vclz %v1501
  %v1503 = vsub.s32 %v1502, 2
  %vm1504 = vcmp.gt.s32.totalorder 0, %v1503
  %v1505 = vsel %vm1504, 0, %v1503
  %v1506 = vsub.s32 32, %v1505
  %v1507 = vshll.u32 %v1498, %v1505
  %v1508 = vshrl.u32 %v1490, %v1506
  %v1509 = vor.u32 %v1507, %v1508
  %v1510 = vsub.s32 4294967266, %v1505
  %v1511 = vadd.s32 %v1510, 127
  %v1512 = vshll.u32 %v1511, 23
  %v1513 = vor.u32 4788187, %v1512
  %v1514 = vand.u32 2147483647, %v1513
  %v1516 = vcvt.s32.f32 %v1509
  %v1517 = vmul.f32 %v1516, %v1514
  %v1518 = vxor.u32 %v1517, 2147483648
  %v1519 = vsel %vm1436, %v1518, %v1517
  %v1520 = vsub.s32 4, %v1496
  %v1521 = vsel %vm1436, %v1520, %v1496
  %v1522 = vsel %vm1435, %v546, %v1519
  %v1523 = vsel %vm1435, 0, %v1521
  %v1524 = vcosq.f32.pop %v1522
  %v1525 = vsinq.f32.pop %v1522
  %vm1526 = vweird.f32 %v546
  %v1527 = vadd.s32 %v1523, 3
  %v1528 = vand.u32 %v1527, 3
  %vm1529 = vcmp.lt.s32.totalorder %v1528, 2
  %vm1530 = vcmp.eq.s32.totalorder %v1528, 0
  %v1531 = vxor.u32 %v1525, 2147483648
  %v1532 = vsel %vm1530, %v1524, %v1531
  %vm1533 = vcmp.eq.s32.totalorder %v1528, 2
  %v1534 = vxor.u32 %v1524, 2147483648
  %v1535 = vsel %vm1533, %v1534, %v1525
  %v1536 = vsel %vm1529, %v1532, %v1535
  %v1537 = vsel %vm1526, nan, %v1536
  %v1538 = vand.u32 2147483647, %v547
  %vm1539 = vcmp.le.f32.partialorder %v1538, 0.7853982
  %vm1540 = vcmp.lt.s32.totalorder %v547, 0
  %v1541 = vand.u32 %v547, 2139095040
  %v1542 = vshrl.u32 %v1541, 23
  %v1543 = vsub.s32 %v1542, 127
  %v1544 = vand.u32 2147483647, %v547
  %v1545 = vand.u32 %v1544, 8388607
  %v1546 = vor.u32 %v1545, 8388608
  %v1547 = vsub.s32 0, %v1546
  %v1548 = vadd.s32 %v1543, 1
  %vm1549 = vcmp.gt.s32.totalorder %v1548, 0
  %v1550 = vsel %vm1549, %v1548, 0
  %v1551 = vshrl.u32 %v1550, 5
  %v1552 = vand.u32 %v1550, 31
  %v1553 = vsub.s32 32, %v1552
  %v1554 = vshrl.u32 683565275, %v1553
  %v1555 = vshll.u32 683565275, %v1552
  %v1556 = vshrl.u32 2475754826, %v1553
  %v1557 = vor.u32 %v1555, %v1556
  %v1558 = vshll.u32 2475754826, %v1552
  %v1559 = vshrl.u32 2131351028, %v1553
  %v1560 = vor.u32 %v1558, %v1559
  %v1561 = vshll.u32 2131351028, %v1552
  %v1562 = vshrl.u32 2102212464, %v1553
  %v1563 = vor.u32 %v1561, %v1562
  %v1564 = vshll.u32 2102212464, %v1552
  %v1565 = vshrl.u32 920167782, %v1553
  %v1566 = vor.u32 %v1564, %v1565
  %v1567 = vshll.u32 920167782, %v1552
  %v1568 = vshrl.u32 1326507024, %v1553
  %v1569 = vor.u32 %v1567, %v1568
  %vm1570 = vcmp.lt.s32.totalorder %v1551, 1
  %vm1571 = vcmp.lt.s32.totalorder %v1551, 2
  %vm1572 = vcmp.lt.s32.totalorder %v1551, 3
  %vm1573 = vcmp.lt.s32.totalorder %v1551, 4
  %v1574 = vsel %vm1570, %v1554, %v1557
  %v1575 = vsel %vm1573, %v1563, 2102212464
  %v1576 = vsel %vm1572, %v1560, %v1575
  %v1577 = vsel %vm1571, %v1574, %v1576
  %v1578 = vsel %vm1570, %v1557, %v1560
  %v1579 = vsel %vm1573, %v1566, 920167782
  %v1580 = vsel %vm1572, %v1563, %v1579
  %v1581 = vsel %vm1571, %v1578, %v1580
  %v1582 = vsel %vm1570, %v1560, %v1563
  %v1583 = vsel %vm1573, %v1569, 1326507024
  %v1584 = vsel %vm1572, %v1566, %v1583
  %v1585 = vsel %vm1571, %v1582, %v1584
  %v1586 = vshll.u32 %v1546, 8
  %v1587 = vmul.u32.u64.compose %v1586, %v1585
  %v1588 = vextract.low.u32 %v1587
  %v1589 = vextract.high.u32 %v1587
  %v1590 = vmul.u32.u64.compose %v1586, %v1581
  %v1591 = vextract.low.u32 %v1590
  %v1592 = vextract.high.u32 %v1590
  %v1593 = vmul.u32 %v1586, %v1577
  %v1594 = vadd.s32 %v1589, %v1591
  %vm1595 = vc.u32 %v1589, %v1591
  %v1596 = vadd.s32 %v1592, 1
  %v1597 = vsel %vm1595, %v1596, %v1592
  %v1598 = vadd.s32 %v1593, %v1597
  %v1599 = vadd.s32 %v1598, 536870912
  %v1600 = vshrl.u32 %v1599, 30
  %v1601 = vshll.u32 %v1600, 30
  %v1602 = vsub.s32 %v1598, %v1601
  %vm1603 = vcmp.lt.s32.totalorder %v1602, 0
  %v1604 = vsub.s32 0, %v1602
  %v1605 = vsel %vm1603, %v1604, %v1602
  %v1606 = vclz %v1605
  %v1607 = vsub.s32 %v1606, 2
  %vm1608 = vcmp.gt.s32.totalorder 0, %v1607
  %v1609 = vsel %vm1608, 0, %v1607
  %v1610 = vsub.s32 32, %v1609
  %v1611 = vshll.u32 %v1602, %v1609
  %v1612 = vshrl.u32 %v1594, %v1610
  %v1613 = vor.u32 %v1611, %v1612
  %v1614 = vsub.s32 4294967266, %v1609
  %v1615 = vadd.s32 %v1614, 127
  %v1616 = vshll.u32 %v1615, 23
  %v1617 = vor.u32 4788187, %v1616
  %v1618 = vand.u32 2147483647, %v1617
  %v1620 = vcvt.s32.f32 %v1613
  %v1621 = vmul.f32 %v1620, %v1618
  %v1622 = vxor.u32 %v1621, 2147483648
  %v1623 = vsel %vm1540, %v1622, %v1621
  %v1624 = vsub.s32 4, %v1600
  %v1625 = vsel %vm1540, %v1624, %v1600
  %v1626 = vsel %vm1539, %v547, %v1623
  %v1627 = vsel %vm1539, 0, %v1625
  %v1628 = vcosq.f32.pop %v1626
  %v1629 = vsinq.f32.pop %v1626
  %vm1630 = vweird.f32 %v547
  %v1631 = vadd.s32 %v1627, 3
  %v1632 = vand.u32 %v1631, 3
  %vm1633 = vcmp.lt.s32.totalorder %v1632, 2
  %vm1634 = vcmp.eq.s32.totalorder %v1632, 0
  %v1635 = vxor.u32 %v1629, 2147483648
  %v1636 = vsel %vm1634, %v1628, %v1635
  %vm1637 = vcmp.eq.s32.totalorder %v1632, 2
  %v1638 = vxor.u32 %v1628, 2147483648
  %v1639 = vsel %vm1637, %v1638, %v1629
  %v1640 = vsel %vm1633, %v1636, %v1639
  %v1641 = vsel %vm1630, nan, %v1640
  %v1642 = vand.u32 2147483647, %v548
  %vm1643 = vcmp.le.f32.partialorder %v1642, 0.7853982
  %vm1644 = vcmp.lt.s32.totalorder %v548, 0
  %v1645 = vand.u32 %v548, 2139095040
  %v1646 = vshrl.u32 %v1645, 23
  %v1647 = vsub.s32 %v1646, 127
  %v1648 = vand.u32 2147483647, %v548
  %v1649 = vand.u32 %v1648, 8388607
  %v1650 = vor.u32 %v1649, 8388608
  %v1651 = vsub.s32 0, %v1650
  %v1652 = vadd.s32 %v1647, 1
  %vm1653 = vcmp.gt.s32.totalorder %v1652, 0
  %v1654 = vsel %vm1653, %v1652, 0
  %v1655 = vshrl.u32 %v1654, 5
  %v1656 = vand.u32 %v1654, 31
  %v1657 = vsub.s32 32, %v1656
  %v1658 = vshrl.u32 683565275, %v1657
  %v1659 = vshll.u32 683565275, %v1656
  %v1660 = vshrl.u32 2475754826, %v1657
  %v1661 = vor.u32 %v1659, %v1660
  %v1662 = vshll.u32 2475754826, %v1656
  %v1663 = vshrl.u32 2131351028, %v1657
  %v1664 = vor.u32 %v1662, %v1663
  %v1665 = vshll.u32 2131351028, %v1656
  %v1666 = vshrl.u32 2102212464, %v1657
  %v1667 = vor.u32 %v1665, %v1666
  %v1668 = vshll.u32 2102212464, %v1656
  %v1669 = vshrl.u32 920167782, %v1657
  %v1670 = vor.u32 %v1668, %v1669
  %v1671 = vshll.u32 920167782, %v1656
  %v1672 = vshrl.u32 1326507024, %v1657
  %v1673 = vor.u32 %v1671, %v1672
  %vm1674 = vcmp.lt.s32.totalorder %v1655, 1
  %vm1675 = vcmp.lt.s32.totalorder %v1655, 2
  %vm1676 = vcmp.lt.s32.totalorder %v1655, 3
  %vm1677 = vcmp.lt.s32.totalorder %v1655, 4
  %v1678 = vsel %vm1674, %v1658, %v1661
  %v1679 = vsel %vm1677, %v1667, 2102212464
  %v1680 = vsel %vm1676, %v1664, %v1679
  %v1681 = vsel %vm1675, %v1678, %v1680
  %v1682 = vsel %vm1674, %v1661, %v1664
  %v1683 = vsel %vm1677, %v1670, 920167782
  %v1684 = vsel %vm1676, %v1667, %v1683
  %v1685 = vsel %vm1675, %v1682, %v1684
  %v1686 = vsel %vm1674, %v1664, %v1667
  %v1687 = vsel %vm1677, %v1673, 1326507024
  %v1688 = vsel %vm1676, %v1670, %v1687
  %v1689 = vsel %vm1675, %v1686, %v1688
  %v1690 = vshll.u32 %v1650, 8
  %v1691 = vmul.u32.u64.compose %v1690, %v1689
  %v1692 = vextract.low.u32 %v1691
  %v1693 = vextract.high.u32 %v1691
  %v1694 = vmul.u32.u64.compose %v1690, %v1685
  %v1695 = vextract.low.u32 %v1694
  %v1696 = vextract.high.u32 %v1694
  %v1697 = vmul.u32 %v1690, %v1681
  %v1698 = vadd.s32 %v1693, %v1695
  %vm1699 = vc.u32 %v1693, %v1695
  %v1700 = vadd.s32 %v1696, 1
  %v1701 = vsel %vm1699, %v1700, %v1696
  %v1702 = vadd.s32 %v1697, %v1701
  %v1703 = vadd.s32 %v1702, 536870912
  %v1704 = vshrl.u32 %v1703, 30
  %v1705 = vshll.u32 %v1704, 30
  %v1706 = vsub.s32 %v1702, %v1705
  %vm1707 = vcmp.lt.s32.totalorder %v1706, 0
  %v1708 = vsub.s32 0, %v1706
  %v1709 = vsel %vm1707, %v1708, %v1706
  %v1710 = vclz %v1709
  %v1711 = vsub.s32 %v1710, 2
  %vm1712 = vcmp.gt.s32.totalorder 0, %v1711
  %v1713 = vsel %vm1712, 0, %v1711
  %v1714 = vsub.s32 32, %v1713
  %v1715 = vshll.u32 %v1706, %v1713
  %v1716 = vshrl.u32 %v1698, %v1714
  %v1717 = vor.u32 %v1715, %v1716
  %v1718 = vsub.s32 4294967266, %v1713
  %v1719 = vadd.s32 %v1718, 127
  %v1720 = vshll.u32 %v1719, 23
  %v1721 = vor.u32 4788187, %v1720
  %v1722 = vand.u32 2147483647, %v1721
  %v1724 = vcvt.s32.f32 %v1717
  %v1725 = vmul.f32 %v1724, %v1722
  %v1726 = vxor.u32 %v1725, 2147483648
  %v1727 = vsel %vm1644, %v1726, %v1725
  %v1728 = vsub.s32 4, %v1704
  %v1729 = vsel %vm1644, %v1728, %v1704
  %v1730 = vsel %vm1643, %v548, %v1727
  %v1731 = vsel %vm1643, 0, %v1729
  %v1732 = vcosq.f32.pop %v1730
  %v1733 = vsinq.f32.pop %v1730
  %vm1734 = vweird.f32 %v548
  %v1735 = vadd.s32 %v1731, 3
  %v1736 = vand.u32 %v1735, 3
  %vm1737 = vcmp.lt.s32.totalorder %v1736, 2
  %vm1738 = vcmp.eq.s32.totalorder %v1736, 0
  %v1739 = vxor.u32 %v1733, 2147483648
  %v1740 = vsel %vm1738, %v1732, %v1739
  %vm1741 = vcmp.eq.s32.totalorder %v1736, 2
  %v1742 = vxor.u32 %v1732, 2147483648
  %v1743 = vsel %vm1741, %v1742, %v1733
  %v1744 = vsel %vm1737, %v1740, %v1743
  %v1745 = vsel %vm1734, nan, %v1744
  %v1746 = vand.u32 2147483647, %v549
  %vm1747 = vcmp.le.f32.partialorder %v1746, 0.7853982
  %vm1748 = vcmp.lt.s32.totalorder %v549, 0
  %v1749 = vand.u32 %v549, 2139095040
  %v1750 = vshrl.u32 %v1749, 23
  %v1751 = vsub.s32 %v1750, 127
  %v1752 = vand.u32 2147483647, %v549
  %v1753 = vand.u32 %v1752, 8388607
  %v1754 = vor.u32 %v1753, 8388608
  %v1755 = vsub.s32 0, %v1754
  %v1756 = vadd.s32 %v1751, 1
  %vm1757 = vcmp.gt.s32.totalorder %v1756, 0
  %v1758 = vsel %vm1757, %v1756, 0
  %v1759 = vshrl.u32 %v1758, 5
  %v1760 = vand.u32 %v1758, 31
  %v1761 = vsub.s32 32, %v1760
  %v1762 = vshrl.u32 683565275, %v1761
  %v1763 = vshll.u32 683565275, %v1760
  %v1764 = vshrl.u32 2475754826, %v1761
  %v1765 = vor.u32 %v1763, %v1764
  %v1766 = vshll.u32 2475754826, %v1760
  %v1767 = vshrl.u32 2131351028, %v1761
  %v1768 = vor.u32 %v1766, %v1767
  %v1769 = vshll.u32 2131351028, %v1760
  %v1770 = vshrl.u32 2102212464, %v1761
  %v1771 = vor.u32 %v1769, %v1770
  %v1772 = vshll.u32 2102212464, %v1760
  %v1773 = vshrl.u32 920167782, %v1761
  %v1774 = vor.u32 %v1772, %v1773
  %v1775 = vshll.u32 920167782, %v1760
  %v1776 = vshrl.u32 1326507024, %v1761
  %v1777 = vor.u32 %v1775, %v1776
  %vm1778 = vcmp.lt.s32.totalorder %v1759, 1
  %vm1779 = vcmp.lt.s32.totalorder %v1759, 2
  %vm1780 = vcmp.lt.s32.totalorder %v1759, 3
  %vm1781 = vcmp.lt.s32.totalorder %v1759, 4
  %v1782 = vsel %vm1778, %v1762, %v1765
  %v1783 = vsel %vm1781, %v1771, 2102212464
  %v1784 = vsel %vm1780, %v1768, %v1783
  %v1785 = vsel %vm1779, %v1782, %v1784
  %v1786 = vsel %vm1778, %v1765, %v1768
  %v1787 = vsel %vm1781, %v1774, 920167782
  %v1788 = vsel %vm1780, %v1771, %v1787
  %v1789 = vsel %vm1779, %v1786, %v1788
  %v1790 = vsel %vm1778, %v1768, %v1771
  %v1791 = vsel %vm1781, %v1777, 1326507024
  %v1792 = vsel %vm1780, %v1774, %v1791
  %v1793 = vsel %vm1779, %v1790, %v1792
  %v1794 = vshll.u32 %v1754, 8
  %v1795 = vmul.u32.u64.compose %v1794, %v1793
  %v1796 = vextract.low.u32 %v1795
  %v1797 = vextract.high.u32 %v1795
  %v1798 = vmul.u32.u64.compose %v1794, %v1789
  %v1799 = vextract.low.u32 %v1798
  %v1800 = vextract.high.u32 %v1798
  %v1801 = vmul.u32 %v1794, %v1785
  %v1802 = vadd.s32 %v1797, %v1799
  %vm1803 = vc.u32 %v1797, %v1799
  %v1804 = vadd.s32 %v1800, 1
  %v1805 = vsel %vm1803, %v1804, %v1800
  %v1806 = vadd.s32 %v1801, %v1805
  %v1807 = vadd.s32 %v1806, 536870912
  %v1808 = vshrl.u32 %v1807, 30
  %v1809 = vshll.u32 %v1808, 30
  %v1810 = vsub.s32 %v1806, %v1809
  %vm1811 = vcmp.lt.s32.totalorder %v1810, 0
  %v1812 = vsub.s32 0, %v1810
  %v1813 = vsel %vm1811, %v1812, %v1810
  %v1814 = vclz %v1813
  %v1815 = vsub.s32 %v1814, 2
  %vm1816 = vcmp.gt.s32.totalorder 0, %v1815
  %v1817 = vsel %vm1816, 0, %v1815
  %v1818 = vsub.s32 32, %v1817
  %v1819 = vshll.u32 %v1810, %v1817
  %v1820 = vshrl.u32 %v1802, %v1818
  %v1821 = vor.u32 %v1819, %v1820
  %v1822 = vsub.s32 4294967266, %v1817
  %v1823 = vadd.s32 %v1822, 127
  %v1824 = vshll.u32 %v1823, 23
  %v1825 = vor.u32 4788187, %v1824
  %v1826 = vand.u32 2147483647, %v1825
  %v1828 = vcvt.s32.f32 %v1821
  %v1829 = vmul.f32 %v1828, %v1826
  %v1830 = vxor.u32 %v1829, 2147483648
  %v1831 = vsel %vm1748, %v1830, %v1829
  %v1832 = vsub.s32 4, %v1808
  %v1833 = vsel %vm1748, %v1832, %v1808
  %v1834 = vsel %vm1747, %v549, %v1831
  %v1835 = vsel %vm1747, 0, %v1833
  %v1836 = vcosq.f32.pop %v1834
  %v1837 = vsinq.f32.pop %v1834
  %vm1838 = vweird.f32 %v549
  %v1839 = vadd.s32 %v1835, 3
  %v1840 = vand.u32 %v1839, 3
  %vm1841 = vcmp.lt.s32.totalorder %v1840, 2
  %vm1842 = vcmp.eq.s32.totalorder %v1840, 0
  %v1843 = vxor.u32 %v1837, 2147483648
  %v1844 = vsel %vm1842, %v1836, %v1843
  %vm1845 = vcmp.eq.s32.totalorder %v1840, 2
  %v1846 = vxor.u32 %v1836, 2147483648
  %v1847 = vsel %vm1845, %v1846, %v1837
  %v1848 = vsel %vm1841, %v1844, %v1847
  %v1849 = vsel %vm1838, nan, %v1848
  %v1850 = vand.u32 2147483647, %v550
  %vm1851 = vcmp.le.f32.partialorder %v1850, 0.7853982
  %vm1852 = vcmp.lt.s32.totalorder %v550, 0
  %v1853 = vand.u32 %v550, 2139095040
  %v1854 = vshrl.u32 %v1853, 23
  %v1855 = vsub.s32 %v1854, 127
  %v1856 = vand.u32 2147483647, %v550
  %v1857 = vand.u32 %v1856, 8388607
  %v1858 = vor.u32 %v1857, 8388608
  %v1859 = vsub.s32 0, %v1858
  %v1860 = vadd.s32 %v1855, 1
  %vm1861 = vcmp.gt.s32.totalorder %v1860, 0
  %v1862 = vsel %vm1861, %v1860, 0
  %v1863 = vshrl.u32 %v1862, 5
  %v1864 = vand.u32 %v1862, 31
  %v1865 = vsub.s32 32, %v1864
  %v1866 = vshrl.u32 683565275, %v1865
  %v1867 = vshll.u32 683565275, %v1864
  %v1868 = vshrl.u32 2475754826, %v1865
  %v1869 = vor.u32 %v1867, %v1868
  %v1870 = vshll.u32 2475754826, %v1864
  %v1871 = vshrl.u32 2131351028, %v1865
  %v1872 = vor.u32 %v1870, %v1871
  %v1873 = vshll.u32 2131351028, %v1864
  %v1874 = vshrl.u32 2102212464, %v1865
  %v1875 = vor.u32 %v1873, %v1874
  %v1876 = vshll.u32 2102212464, %v1864
  %v1877 = vshrl.u32 920167782, %v1865
  %v1878 = vor.u32 %v1876, %v1877
  %v1879 = vshll.u32 920167782, %v1864
  %v1880 = vshrl.u32 1326507024, %v1865
  %v1881 = vor.u32 %v1879, %v1880
  %vm1882 = vcmp.lt.s32.totalorder %v1863, 1
  %vm1883 = vcmp.lt.s32.totalorder %v1863, 2
  %vm1884 = vcmp.lt.s32.totalorder %v1863, 3
  %vm1885 = vcmp.lt.s32.totalorder %v1863, 4
  %v1886 = vsel %vm1882, %v1866, %v1869
  %v1887 = vsel %vm1885, %v1875, 2102212464
  %v1888 = vsel %vm1884, %v1872, %v1887
  %v1889 = vsel %vm1883, %v1886, %v1888
  %v1890 = vsel %vm1882, %v1869, %v1872
  %v1891 = vsel %vm1885, %v1878, 920167782
  %v1892 = vsel %vm1884, %v1875, %v1891
  %v1893 = vsel %vm1883, %v1890, %v1892
  %v1894 = vsel %vm1882, %v1872, %v1875
  %v1895 = vsel %vm1885, %v1881, 1326507024
  %v1896 = vsel %vm1884, %v1878, %v1895
  %v1897 = vsel %vm1883, %v1894, %v1896
  %v1898 = vshll.u32 %v1858, 8
  %v1899 = vmul.u32.u64.compose %v1898, %v1897
  %v1900 = vextract.low.u32 %v1899
  %v1901 = vextract.high.u32 %v1899
  %v1902 = vmul.u32.u64.compose %v1898, %v1893
  %v1903 = vextract.low.u32 %v1902
  %v1904 = vextract.high.u32 %v1902
  %v1905 = vmul.u32 %v1898, %v1889
  %v1906 = vadd.s32 %v1901, %v1903
  %vm1907 = vc.u32 %v1901, %v1903
  %v1908 = vadd.s32 %v1904, 1
  %v1909 = vsel %vm1907, %v1908, %v1904
  %v1910 = vadd.s32 %v1905, %v1909
  %v1911 = vadd.s32 %v1910, 536870912
  %v1912 = vshrl.u32 %v1911, 30
  %v1913 = vshll.u32 %v1912, 30
  %v1914 = vsub.s32 %v1910, %v1913
  %vm1915 = vcmp.lt.s32.totalorder %v1914, 0
  %v1916 = vsub.s32 0, %v1914
  %v1917 = vsel %vm1915, %v1916, %v1914
  %v1918 = vclz %v1917
  %v1919 = vsub.s32 %v1918, 2
  %vm1920 = vcmp.gt.s32.totalorder 0, %v1919
  %v1921 = vsel %vm1920, 0, %v1919
  %v1922 = vsub.s32 32, %v1921
  %v1923 = vshll.u32 %v1914, %v1921
  %v1924 = vshrl.u32 %v1906, %v1922
  %v1925 = vor.u32 %v1923, %v1924
  %v1926 = vsub.s32 4294967266, %v1921
  %v1927 = vadd.s32 %v1926, 127
  %v1928 = vshll.u32 %v1927, 23
  %v1929 = vor.u32 4788187, %v1928
  %v1930 = vand.u32 2147483647, %v1929
  %v1932 = vcvt.s32.f32 %v1925
  %v1933 = vmul.f32 %v1932, %v1930
  %v1934 = vxor.u32 %v1933, 2147483648
  %v1935 = vsel %vm1852, %v1934, %v1933
  %v1936 = vsub.s32 4, %v1912
  %v1937 = vsel %vm1852, %v1936, %v1912
  %v1938 = vsel %vm1851, %v550, %v1935
  %v1939 = vsel %vm1851, 0, %v1937
  %v1940 = vcosq.f32.pop %v1938
  %v1941 = vsinq.f32.pop %v1938
  %vm1942 = vweird.f32 %v550
  %v1943 = vadd.s32 %v1939, 3
  %v1944 = vand.u32 %v1943, 3
  %vm1945 = vcmp.lt.s32.totalorder %v1944, 2
  %vm1946 = vcmp.eq.s32.totalorder %v1944, 0
  %v1947 = vxor.u32 %v1941, 2147483648
  %v1948 = vsel %vm1946, %v1940, %v1947
  %vm1949 = vcmp.eq.s32.totalorder %v1944, 2
  %v1950 = vxor.u32 %v1940, 2147483648
  %v1951 = vsel %vm1949, %v1950, %v1941
  %v1952 = vsel %vm1945, %v1948, %v1951
  %v1953 = vsel %vm1942, nan, %v1952
  %v1954 = vand.u32 2147483647, %v551
  %vm1955 = vcmp.le.f32.partialorder %v1954, 0.7853982
  %vm1956 = vcmp.lt.s32.totalorder %v551, 0
  %v1957 = vand.u32 %v551, 2139095040
  %v1958 = vshrl.u32 %v1957, 23
  %v1959 = vsub.s32 %v1958, 127
  %v1960 = vand.u32 2147483647, %v551
  %v1961 = vand.u32 %v1960, 8388607
  %v1962 = vor.u32 %v1961, 8388608
  %v1963 = vsub.s32 0, %v1962
  %v1964 = vadd.s32 %v1959, 1
  %vm1965 = vcmp.gt.s32.totalorder %v1964, 0
  %v1966 = vsel %vm1965, %v1964, 0
  %v1967 = vshrl.u32 %v1966, 5
  %v1968 = vand.u32 %v1966, 31
  %v1969 = vsub.s32 32, %v1968
  %v1970 = vshrl.u32 683565275, %v1969
  %v1971 = vshll.u32 683565275, %v1968
  %v1972 = vshrl.u32 2475754826, %v1969
  %v1973 = vor.u32 %v1971, %v1972
  %v1974 = vshll.u32 2475754826, %v1968
  %v1975 = vshrl.u32 2131351028, %v1969
  %v1976 = vor.u32 %v1974, %v1975
  %v1977 = vshll.u32 2131351028, %v1968
  %v1978 = vshrl.u32 2102212464, %v1969
  %v1979 = vor.u32 %v1977, %v1978
  %v1980 = vshll.u32 2102212464, %v1968
  %v1981 = vshrl.u32 920167782, %v1969
  %v1982 = vor.u32 %v1980, %v1981
  %v1983 = vshll.u32 920167782, %v1968
  %v1984 = vshrl.u32 1326507024, %v1969
  %v1985 = vor.u32 %v1983, %v1984
  %vm1986 = vcmp.lt.s32.totalorder %v1967, 1
  %vm1987 = vcmp.lt.s32.totalorder %v1967, 2
  %vm1988 = vcmp.lt.s32.totalorder %v1967, 3
  %vm1989 = vcmp.lt.s32.totalorder %v1967, 4
  %v1990 = vsel %vm1986, %v1970, %v1973
  %v1991 = vsel %vm1989, %v1979, 2102212464
  %v1992 = vsel %vm1988, %v1976, %v1991
  %v1993 = vsel %vm1987, %v1990, %v1992
  %v1994 = vsel %vm1986, %v1973, %v1976
  %v1995 = vsel %vm1989, %v1982, 920167782
  %v1996 = vsel %vm1988, %v1979, %v1995
  %v1997 = vsel %vm1987, %v1994, %v1996
  %v1998 = vsel %vm1986, %v1976, %v1979
  %v1999 = vsel %vm1989, %v1985, 1326507024
  %v2000 = vsel %vm1988, %v1982, %v1999
  %v2001 = vsel %vm1987, %v1998, %v2000
  %v2002 = vshll.u32 %v1962, 8
  %v2003 = vmul.u32.u64.compose %v2002, %v2001
  %v2004 = vextract.low.u32 %v2003
  %v2005 = vextract.high.u32 %v2003
  %v2006 = vmul.u32.u64.compose %v2002, %v1997
  %v2007 = vextract.low.u32 %v2006
  %v2008 = vextract.high.u32 %v2006
  %v2009 = vmul.u32 %v2002, %v1993
  %v2010 = vadd.s32 %v2005, %v2007
  %vm2011 = vc.u32 %v2005, %v2007
  %v2012 = vadd.s32 %v2008, 1
  %v2013 = vsel %vm2011, %v2012, %v2008
  %v2014 = vadd.s32 %v2009, %v2013
  %v2015 = vadd.s32 %v2014, 536870912
  %v2016 = vshrl.u32 %v2015, 30
  %v2017 = vshll.u32 %v2016, 30
  %v2018 = vsub.s32 %v2014, %v2017
  %vm2019 = vcmp.lt.s32.totalorder %v2018, 0
  %v2020 = vsub.s32 0, %v2018
  %v2021 = vsel %vm2019, %v2020, %v2018
  %v2022 = vclz %v2021
  %v2023 = vsub.s32 %v2022, 2
  %vm2024 = vcmp.gt.s32.totalorder 0, %v2023
  %v2025 = vsel %vm2024, 0, %v2023
  %v2026 = vsub.s32 32, %v2025
  %v2027 = vshll.u32 %v2018, %v2025
  %v2028 = vshrl.u32 %v2010, %v2026
  %v2029 = vor.u32 %v2027, %v2028
  %v2030 = vsub.s32 4294967266, %v2025
  %v2031 = vadd.s32 %v2030, 127
  %v2032 = vshll.u32 %v2031, 23
  %v2033 = vor.u32 4788187, %v2032
  %v2034 = vand.u32 2147483647, %v2033
  %v2036 = vcvt.s32.f32 %v2029
  %v2037 = vmul.f32 %v2036, %v2034
  %v2038 = vxor.u32 %v2037, 2147483648
  %v2039 = vsel %vm1956, %v2038, %v2037
  %v2040 = vsub.s32 4, %v2016
  %v2041 = vsel %vm1956, %v2040, %v2016
  %v2042 = vsel %vm1955, %v551, %v2039
  %v2043 = vsel %vm1955, 0, %v2041
  %v2044 = vcosq.f32.pop %v2042
  %v2045 = vsinq.f32.pop %v2042
  %vm2046 = vweird.f32 %v551
  %v2047 = vadd.s32 %v2043, 3
  %v2048 = vand.u32 %v2047, 3
  %vm2049 = vcmp.lt.s32.totalorder %v2048, 2
  %vm2050 = vcmp.eq.s32.totalorder %v2048, 0
  %v2051 = vxor.u32 %v2045, 2147483648
  %v2052 = vsel %vm2050, %v2044, %v2051
  %vm2053 = vcmp.eq.s32.totalorder %v2048, 2
  %v2054 = vxor.u32 %v2044, 2147483648
  %v2055 = vsel %vm2053, %v2054, %v2045
  %v2056 = vsel %vm2049, %v2052, %v2055
  %v2057 = vsel %vm2046, nan, %v2056
  %v2058 = vand.u32 2147483647, %v552
  %vm2059 = vcmp.le.f32.partialorder %v2058, 0.7853982
  %vm2060 = vcmp.lt.s32.totalorder %v552, 0
  %v2061 = vand.u32 %v552, 2139095040
  %v2062 = vshrl.u32 %v2061, 23
  %v2063 = vsub.s32 %v2062, 127
  %v2064 = vand.u32 2147483647, %v552
  %v2065 = vand.u32 %v2064, 8388607
  %v2066 = vor.u32 %v2065, 8388608
  %v2067 = vsub.s32 0, %v2066
  %v2068 = vadd.s32 %v2063, 1
  %vm2069 = vcmp.gt.s32.totalorder %v2068, 0
  %v2070 = vsel %vm2069, %v2068, 0
  %v2071 = vshrl.u32 %v2070, 5
  %v2072 = vand.u32 %v2070, 31
  %v2073 = vsub.s32 32, %v2072
  %v2074 = vshrl.u32 683565275, %v2073
  %v2075 = vshll.u32 683565275, %v2072
  %v2076 = vshrl.u32 2475754826, %v2073
  %v2077 = vor.u32 %v2075, %v2076
  %v2078 = vshll.u32 2475754826, %v2072
  %v2079 = vshrl.u32 2131351028, %v2073
  %v2080 = vor.u32 %v2078, %v2079
  %v2081 = vshll.u32 2131351028, %v2072
  %v2082 = vshrl.u32 2102212464, %v2073
  %v2083 = vor.u32 %v2081, %v2082
  %v2084 = vshll.u32 2102212464, %v2072
  %v2085 = vshrl.u32 920167782, %v2073
  %v2086 = vor.u32 %v2084, %v2085
  %v2087 = vshll.u32 920167782, %v2072
  %v2088 = vshrl.u32 1326507024, %v2073
  %v2089 = vor.u32 %v2087, %v2088
  %vm2090 = vcmp.lt.s32.totalorder %v2071, 1
  %vm2091 = vcmp.lt.s32.totalorder %v2071, 2
  %vm2092 = vcmp.lt.s32.totalorder %v2071, 3
  %vm2093 = vcmp.lt.s32.totalorder %v2071, 4
  %v2094 = vsel %vm2090, %v2074, %v2077
  %v2095 = vsel %vm2093, %v2083, 2102212464
  %v2096 = vsel %vm2092, %v2080, %v2095
  %v2097 = vsel %vm2091, %v2094, %v2096
  %v2098 = vsel %vm2090, %v2077, %v2080
  %v2099 = vsel %vm2093, %v2086, 920167782
  %v2100 = vsel %vm2092, %v2083, %v2099
  %v2101 = vsel %vm2091, %v2098, %v2100
  %v2102 = vsel %vm2090, %v2080, %v2083
  %v2103 = vsel %vm2093, %v2089, 1326507024
  %v2104 = vsel %vm2092, %v2086, %v2103
  %v2105 = vsel %vm2091, %v2102, %v2104
  %v2106 = vshll.u32 %v2066, 8
  %v2107 = vmul.u32.u64.compose %v2106, %v2105
  %v2108 = vextract.low.u32 %v2107
  %v2109 = vextract.high.u32 %v2107
  %v2110 = vmul.u32.u64.compose %v2106, %v2101
  %v2111 = vextract.low.u32 %v2110
  %v2112 = vextract.high.u32 %v2110
  %v2113 = vmul.u32 %v2106, %v2097
  %v2114 = vadd.s32 %v2109, %v2111
  %vm2115 = vc.u32 %v2109, %v2111
  %v2116 = vadd.s32 %v2112, 1
  %v2117 = vsel %vm2115, %v2116, %v2112
  %v2118 = vadd.s32 %v2113, %v2117
  %v2119 = vadd.s32 %v2118, 536870912
  %v2120 = vshrl.u32 %v2119, 30
  %v2121 = vshll.u32 %v2120, 30
  %v2122 = vsub.s32 %v2118, %v2121
  %vm2123 = vcmp.lt.s32.totalorder %v2122, 0
  %v2124 = vsub.s32 0, %v2122
  %v2125 = vsel %vm2123, %v2124, %v2122
  %v2126 = vclz %v2125
  %v2127 = vsub.s32 %v2126, 2
  %vm2128 = vcmp.gt.s32.totalorder 0, %v2127
  %v2129 = vsel %vm2128, 0, %v2127
  %v2130 = vsub.s32 32, %v2129
  %v2131 = vshll.u32 %v2122, %v2129
  %v2132 = vshrl.u32 %v2114, %v2130
  %v2133 = vor.u32 %v2131, %v2132
  %v2134 = vsub.s32 4294967266, %v2129
  %v2135 = vadd.s32 %v2134, 127
  %v2136 = vshll.u32 %v2135, 23
  %v2137 = vor.u32 4788187, %v2136
  %v2138 = vand.u32 2147483647, %v2137
  %v2140 = vcvt.s32.f32 %v2133
  %v2141 = vmul.f32 %v2140, %v2138
  %v2142 = vxor.u32 %v2141, 2147483648
  %v2143 = vsel %vm2060, %v2142, %v2141
  %v2144 = vsub.s32 4, %v2120
  %v2145 = vsel %vm2060, %v2144, %v2120
  %v2146 = vsel %vm2059, %v552, %v2143
  %v2147 = vsel %vm2059, 0, %v2145
  %v2148 = vcosq.f32.pop %v2146
  %v2149 = vsinq.f32.pop %v2146
  %vm2150 = vweird.f32 %v552
  %v2151 = vadd.s32 %v2147, 3
  %v2152 = vand.u32 %v2151, 3
  %vm2153 = vcmp.lt.s32.totalorder %v2152, 2
  %vm2154 = vcmp.eq.s32.totalorder %v2152, 0
  %v2155 = vxor.u32 %v2149, 2147483648
  %v2156 = vsel %vm2154, %v2148, %v2155
  %vm2157 = vcmp.eq.s32.totalorder %v2152, 2
  %v2158 = vxor.u32 %v2148, 2147483648
  %v2159 = vsel %vm2157, %v2158, %v2149
  %v2160 = vsel %vm2153, %v2156, %v2159
  %v2161 = vsel %vm2150, nan, %v2160
  %v2162 = vand.u32 2147483647, %v553
  %vm2163 = vcmp.le.f32.partialorder %v2162, 0.7853982
  %vm2164 = vcmp.lt.s32.totalorder %v553, 0
  %v2165 = vand.u32 %v553, 2139095040
  %v2166 = vshrl.u32 %v2165, 23
  %v2167 = vsub.s32 %v2166, 127
  %v2168 = vand.u32 2147483647, %v553
  %v2169 = vand.u32 %v2168, 8388607
  %v2170 = vor.u32 %v2169, 8388608
  %v2171 = vsub.s32 0, %v2170
  %v2172 = vadd.s32 %v2167, 1
  %vm2173 = vcmp.gt.s32.totalorder %v2172, 0
  %v2174 = vsel %vm2173, %v2172, 0
  %v2175 = vshrl.u32 %v2174, 5
  %v2176 = vand.u32 %v2174, 31
  %v2177 = vsub.s32 32, %v2176
  %v2178 = vshrl.u32 683565275, %v2177
  %v2179 = vshll.u32 683565275, %v2176
  %v2180 = vshrl.u32 2475754826, %v2177
  %v2181 = vor.u32 %v2179, %v2180
  %v2182 = vshll.u32 2475754826, %v2176
  %v2183 = vshrl.u32 2131351028, %v2177
  %v2184 = vor.u32 %v2182, %v2183
  %v2185 = vshll.u32 2131351028, %v2176
  %v2186 = vshrl.u32 2102212464, %v2177
  %v2187 = vor.u32 %v2185, %v2186
  %v2188 = vshll.u32 2102212464, %v2176
  %v2189 = vshrl.u32 920167782, %v2177
  %v2190 = vor.u32 %v2188, %v2189
  %v2191 = vshll.u32 920167782, %v2176
  %v2192 = vshrl.u32 1326507024, %v2177
  %v2193 = vor.u32 %v2191, %v2192
  %vm2194 = vcmp.lt.s32.totalorder %v2175, 1
  %vm2195 = vcmp.lt.s32.totalorder %v2175, 2
  %vm2196 = vcmp.lt.s32.totalorder %v2175, 3
  %vm2197 = vcmp.lt.s32.totalorder %v2175, 4
  %v2198 = vsel %vm2194, %v2178, %v2181
  %v2199 = vsel %vm2197, %v2187, 2102212464
  %v2200 = vsel %vm2196, %v2184, %v2199
  %v2201 = vsel %vm2195, %v2198, %v2200
  %v2202 = vsel %vm2194, %v2181, %v2184
  %v2203 = vsel %vm2197, %v2190, 920167782
  %v2204 = vsel %vm2196, %v2187, %v2203
  %v2205 = vsel %vm2195, %v2202, %v2204
  %v2206 = vsel %vm2194, %v2184, %v2187
  %v2207 = vsel %vm2197, %v2193, 1326507024
  %v2208 = vsel %vm2196, %v2190, %v2207
  %v2209 = vsel %vm2195, %v2206, %v2208
  %v2210 = vshll.u32 %v2170, 8
  %v2211 = vmul.u32.u64.compose %v2210, %v2209
  %v2212 = vextract.low.u32 %v2211
  %v2213 = vextract.high.u32 %v2211
  %v2214 = vmul.u32.u64.compose %v2210, %v2205
  %v2215 = vextract.low.u32 %v2214
  %v2216 = vextract.high.u32 %v2214
  %v2217 = vmul.u32 %v2210, %v2201
  %v2218 = vadd.s32 %v2213, %v2215
  %vm2219 = vc.u32 %v2213, %v2215
  %v2220 = vadd.s32 %v2216, 1
  %v2221 = vsel %vm2219, %v2220, %v2216
  %v2222 = vadd.s32 %v2217, %v2221
  %v2223 = vadd.s32 %v2222, 536870912
  %v2224 = vshrl.u32 %v2223, 30
  %v2225 = vshll.u32 %v2224, 30
  %v2226 = vsub.s32 %v2222, %v2225
  %vm2227 = vcmp.lt.s32.totalorder %v2226, 0
  %v2228 = vsub.s32 0, %v2226
  %v2229 = vsel %vm2227, %v2228, %v2226
  %v2230 = vclz %v2229
  %v2231 = vsub.s32 %v2230, 2
  %vm2232 = vcmp.gt.s32.totalorder 0, %v2231
  %v2233 = vsel %vm2232, 0, %v2231
  %v2234 = vsub.s32 32, %v2233
  %v2235 = vshll.u32 %v2226, %v2233
  %v2236 = vshrl.u32 %v2218, %v2234
  %v2237 = vor.u32 %v2235, %v2236
  %v2238 = vsub.s32 4294967266, %v2233
  %v2239 = vadd.s32 %v2238, 127
  %v2240 = vshll.u32 %v2239, 23
  %v2241 = vor.u32 4788187, %v2240
  %v2242 = vand.u32 2147483647, %v2241
  %v2244 = vcvt.s32.f32 %v2237
  %v2245 = vmul.f32 %v2244, %v2242
  %v2246 = vxor.u32 %v2245, 2147483648
  %v2247 = vsel %vm2164, %v2246, %v2245
  %v2248 = vsub.s32 4, %v2224
  %v2249 = vsel %vm2164, %v2248, %v2224
  %v2250 = vsel %vm2163, %v553, %v2247
  %v2251 = vsel %vm2163, 0, %v2249
  %v2252 = vcosq.f32.pop %v2250
  %v2253 = vsinq.f32.pop %v2250
  %vm2254 = vweird.f32 %v553
  %v2255 = vadd.s32 %v2251, 3
  %v2256 = vand.u32 %v2255, 3
  %vm2257 = vcmp.lt.s32.totalorder %v2256, 2
  %vm2258 = vcmp.eq.s32.totalorder %v2256, 0
  %v2259 = vxor.u32 %v2253, 2147483648
  %v2260 = vsel %vm2258, %v2252, %v2259
  %vm2261 = vcmp.eq.s32.totalorder %v2256, 2
  %v2262 = vxor.u32 %v2252, 2147483648
  %v2263 = vsel %vm2261, %v2262, %v2253
  %v2264 = vsel %vm2257, %v2260, %v2263
  %v2265 = vsel %vm2254, nan, %v2264
  %v2266 = vand.u32 2147483647, %v554
  %vm2267 = vcmp.le.f32.partialorder %v2266, 0.7853982
  %vm2268 = vcmp.lt.s32.totalorder %v554, 0
  %v2269 = vand.u32 %v554, 2139095040
  %v2270 = vshrl.u32 %v2269, 23
  %v2271 = vsub.s32 %v2270, 127
  %v2272 = vand.u32 2147483647, %v554
  %v2273 = vand.u32 %v2272, 8388607
  %v2274 = vor.u32 %v2273, 8388608
  %v2275 = vsub.s32 0, %v2274
  %v2276 = vadd.s32 %v2271, 1
  %vm2277 = vcmp.gt.s32.totalorder %v2276, 0
  %v2278 = vsel %vm2277, %v2276, 0
  %v2279 = vshrl.u32 %v2278, 5
  %v2280 = vand.u32 %v2278, 31
  %v2281 = vsub.s32 32, %v2280
  %v2282 = vshrl.u32 683565275, %v2281
  %v2283 = vshll.u32 683565275, %v2280
  %v2284 = vshrl.u32 2475754826, %v2281
  %v2285 = vor.u32 %v2283, %v2284
  %v2286 = vshll.u32 2475754826, %v2280
  %v2287 = vshrl.u32 2131351028, %v2281
  %v2288 = vor.u32 %v2286, %v2287
  %v2289 = vshll.u32 2131351028, %v2280
  %v2290 = vshrl.u32 2102212464, %v2281
  %v2291 = vor.u32 %v2289, %v2290
  %v2292 = vshll.u32 2102212464, %v2280
  %v2293 = vshrl.u32 920167782, %v2281
  %v2294 = vor.u32 %v2292, %v2293
  %v2295 = vshll.u32 920167782, %v2280
  %v2296 = vshrl.u32 1326507024, %v2281
  %v2297 = vor.u32 %v2295, %v2296
  %vm2298 = vcmp.lt.s32.totalorder %v2279, 1
  %vm2299 = vcmp.lt.s32.totalorder %v2279, 2
  %vm2300 = vcmp.lt.s32.totalorder %v2279, 3
  %vm2301 = vcmp.lt.s32.totalorder %v2279, 4
  %v2302 = vsel %vm2298, %v2282, %v2285
  %v2303 = vsel %vm2301, %v2291, 2102212464
  %v2304 = vsel %vm2300, %v2288, %v2303
  %v2305 = vsel %vm2299, %v2302, %v2304
  %v2306 = vsel %vm2298, %v2285, %v2288
  %v2307 = vsel %vm2301, %v2294, 920167782
  %v2308 = vsel %vm2300, %v2291, %v2307
  %v2309 = vsel %vm2299, %v2306, %v2308
  %v2310 = vsel %vm2298, %v2288, %v2291
  %v2311 = vsel %vm2301, %v2297, 1326507024
  %v2312 = vsel %vm2300, %v2294, %v2311
  %v2313 = vsel %vm2299, %v2310, %v2312
  %v2314 = vshll.u32 %v2274, 8
  %v2315 = vmul.u32.u64.compose %v2314, %v2313
  %v2316 = vextract.low.u32 %v2315
  %v2317 = vextract.high.u32 %v2315
  %v2318 = vmul.u32.u64.compose %v2314, %v2309
  %v2319 = vextract.low.u32 %v2318
  %v2320 = vextract.high.u32 %v2318
  %v2321 = vmul.u32 %v2314, %v2305
  %v2322 = vadd.s32 %v2317, %v2319
  %vm2323 = vc.u32 %v2317, %v2319
  %v2324 = vadd.s32 %v2320, 1
  %v2325 = vsel %vm2323, %v2324, %v2320
  %v2326 = vadd.s32 %v2321, %v2325
  %v2327 = vadd.s32 %v2326, 536870912
  %v2328 = vshrl.u32 %v2327, 30
  %v2329 = vshll.u32 %v2328, 30
  %v2330 = vsub.s32 %v2326, %v2329
  %vm2331 = vcmp.lt.s32.totalorder %v2330, 0
  %v2332 = vsub.s32 0, %v2330
  %v2333 = vsel %vm2331, %v2332, %v2330
  %v2334 = vclz %v2333
  %v2335 = vsub.s32 %v2334, 2
  %vm2336 = vcmp.gt.s32.totalorder 0, %v2335
  %v2337 = vsel %vm2336, 0, %v2335
  %v2338 = vsub.s32 32, %v2337
  %v2339 = vshll.u32 %v2330, %v2337
  %v2340 = vshrl.u32 %v2322, %v2338
  %v2341 = vor.u32 %v2339, %v2340
  %v2342 = vsub.s32 4294967266, %v2337
  %v2343 = vadd.s32 %v2342, 127
  %v2344 = vshll.u32 %v2343, 23
  %v2345 = vor.u32 4788187, %v2344
  %v2346 = vand.u32 2147483647, %v2345
  %v2348 = vcvt.s32.f32 %v2341
  %v2349 = vmul.f32 %v2348, %v2346
  %v2350 = vxor.u32 %v2349, 2147483648
  %v2351 = vsel %vm2268, %v2350, %v2349
  %v2352 = vsub.s32 4, %v2328
  %v2353 = vsel %vm2268, %v2352, %v2328
  %v2354 = vsel %vm2267, %v554, %v2351
  %v2355 = vsel %vm2267, 0, %v2353
  %v2356 = vcosq.f32.pop %v2354
  %v2357 = vsinq.f32.pop %v2354
  %vm2358 = vweird.f32 %v554
  %v2359 = vadd.s32 %v2355, 3
  %v2360 = vand.u32 %v2359, 3
  %vm2361 = vcmp.lt.s32.totalorder %v2360, 2
  %vm2362 = vcmp.eq.s32.totalorder %v2360, 0
  %v2363 = vxor.u32 %v2357, 2147483648
  %v2364 = vsel %vm2362, %v2356, %v2363
  %vm2365 = vcmp.eq.s32.totalorder %v2360, 2
  %v2366 = vxor.u32 %v2356, 2147483648
  %v2367 = vsel %vm2365, %v2366, %v2357
  %v2368 = vsel %vm2361, %v2364, %v2367
  %v2369 = vsel %vm2358, nan, %v2368
  %v2370 = vand.u32 2147483647, %v555
  %vm2371 = vcmp.le.f32.partialorder %v2370, 0.7853982
  %vm2372 = vcmp.lt.s32.totalorder %v555, 0
  %v2373 = vand.u32 %v555, 2139095040
  %v2374 = vshrl.u32 %v2373, 23
  %v2375 = vsub.s32 %v2374, 127
  %v2376 = vand.u32 2147483647, %v555
  %v2377 = vand.u32 %v2376, 8388607
  %v2378 = vor.u32 %v2377, 8388608
  %v2379 = vsub.s32 0, %v2378
  %v2380 = vadd.s32 %v2375, 1
  %vm2381 = vcmp.gt.s32.totalorder %v2380, 0
  %v2382 = vsel %vm2381, %v2380, 0
  %v2383 = vshrl.u32 %v2382, 5
  %v2384 = vand.u32 %v2382, 31
  %v2385 = vsub.s32 32, %v2384
  %v2386 = vshrl.u32 683565275, %v2385
  %v2387 = vshll.u32 683565275, %v2384
  %v2388 = vshrl.u32 2475754826, %v2385
  %v2389 = vor.u32 %v2387, %v2388
  %v2390 = vshll.u32 2475754826, %v2384
  %v2391 = vshrl.u32 2131351028, %v2385
  %v2392 = vor.u32 %v2390, %v2391
  %v2393 = vshll.u32 2131351028, %v2384
  %v2394 = vshrl.u32 2102212464, %v2385
  %v2395 = vor.u32 %v2393, %v2394
  %v2396 = vshll.u32 2102212464, %v2384
  %v2397 = vshrl.u32 920167782, %v2385
  %v2398 = vor.u32 %v2396, %v2397
  %v2399 = vshll.u32 920167782, %v2384
  %v2400 = vshrl.u32 1326507024, %v2385
  %v2401 = vor.u32 %v2399, %v2400
  %vm2402 = vcmp.lt.s32.totalorder %v2383, 1
  %vm2403 = vcmp.lt.s32.totalorder %v2383, 2
  %vm2404 = vcmp.lt.s32.totalorder %v2383, 3
  %vm2405 = vcmp.lt.s32.totalorder %v2383, 4
  %v2406 = vsel %vm2402, %v2386, %v2389
  %v2407 = vsel %vm2405, %v2395, 2102212464
  %v2408 = vsel %vm2404, %v2392, %v2407
  %v2409 = vsel %vm2403, %v2406, %v2408
  %v2410 = vsel %vm2402, %v2389, %v2392
  %v2411 = vsel %vm2405, %v2398, 920167782
  %v2412 = vsel %vm2404, %v2395, %v2411
  %v2413 = vsel %vm2403, %v2410, %v2412
  %v2414 = vsel %vm2402, %v2392, %v2395
  %v2415 = vsel %vm2405, %v2401, 1326507024
  %v2416 = vsel %vm2404, %v2398, %v2415
  %v2417 = vsel %vm2403, %v2414, %v2416
  %v2418 = vshll.u32 %v2378, 8
  %v2419 = vmul.u32.u64.compose %v2418, %v2417
  %v2420 = vextract.low.u32 %v2419
  %v2421 = vextract.high.u32 %v2419
  %v2422 = vmul.u32.u64.compose %v2418, %v2413
  %v2423 = vextract.low.u32 %v2422
  %v2424 = vextract.high.u32 %v2422
  %v2425 = vmul.u32 %v2418, %v2409
  %v2426 = vadd.s32 %v2421, %v2423
  %vm2427 = vc.u32 %v2421, %v2423
  %v2428 = vadd.s32 %v2424, 1
  %v2429 = vsel %vm2427, %v2428, %v2424
  %v2430 = vadd.s32 %v2425, %v2429
  %v2431 = vadd.s32 %v2430, 536870912
  %v2432 = vshrl.u32 %v2431, 30
  %v2433 = vshll.u32 %v2432, 30
  %v2434 = vsub.s32 %v2430, %v2433
  %vm2435 = vcmp.lt.s32.totalorder %v2434, 0
  %v2436 = vsub.s32 0, %v2434
  %v2437 = vsel %vm2435, %v2436, %v2434
  %v2438 = vclz %v2437
  %v2439 = vsub.s32 %v2438, 2
  %vm2440 = vcmp.gt.s32.totalorder 0, %v2439
  %v2441 = vsel %vm2440, 0, %v2439
  %v2442 = vsub.s32 32, %v2441
  %v2443 = vshll.u32 %v2434, %v2441
  %v2444 = vshrl.u32 %v2426, %v2442
  %v2445 = vor.u32 %v2443, %v2444
  %v2446 = vsub.s32 4294967266, %v2441
  %v2447 = vadd.s32 %v2446, 127
  %v2448 = vshll.u32 %v2447, 23
  %v2449 = vor.u32 4788187, %v2448
  %v2450 = vand.u32 2147483647, %v2449
  %v2452 = vcvt.s32.f32 %v2445
  %v2453 = vmul.f32 %v2452, %v2450
  %v2454 = vxor.u32 %v2453, 2147483648
  %v2455 = vsel %vm2372, %v2454, %v2453
  %v2456 = vsub.s32 4, %v2432
  %v2457 = vsel %vm2372, %v2456, %v2432
  %v2458 = vsel %vm2371, %v555, %v2455
  %v2459 = vsel %vm2371, 0, %v2457
  %v2460 = vcosq.f32.pop %v2458
  %v2461 = vsinq.f32.pop %v2458
  %vm2462 = vweird.f32 %v555
  %v2463 = vadd.s32 %v2459, 3
  %v2464 = vand.u32 %v2463, 3
  %vm2465 = vcmp.lt.s32.totalorder %v2464, 2
  %vm2466 = vcmp.eq.s32.totalorder %v2464, 0
  %v2467 = vxor.u32 %v2461, 2147483648
  %v2468 = vsel %vm2466, %v2460, %v2467
  %vm2469 = vcmp.eq.s32.totalorder %v2464, 2
  %v2470 = vxor.u32 %v2460, 2147483648
  %v2471 = vsel %vm2469, %v2470, %v2461
  %v2472 = vsel %vm2465, %v2468, %v2471
  %v2473 = vsel %vm2462, nan, %v2472
  %v2474 = vand.u32 2147483647, %v556
  %vm2475 = vcmp.le.f32.partialorder %v2474, 0.7853982
  %vm2476 = vcmp.lt.s32.totalorder %v556, 0
  %v2477 = vand.u32 %v556, 2139095040
  %v2478 = vshrl.u32 %v2477, 23
  %v2479 = vsub.s32 %v2478, 127
  %v2480 = vand.u32 2147483647, %v556
  %v2481 = vand.u32 %v2480, 8388607
  %v2482 = vor.u32 %v2481, 8388608
  %v2483 = vsub.s32 0, %v2482
  %v2484 = vadd.s32 %v2479, 1
  %vm2485 = vcmp.gt.s32.totalorder %v2484, 0
  %v2486 = vsel %vm2485, %v2484, 0
  %v2487 = vshrl.u32 %v2486, 5
  %v2488 = vand.u32 %v2486, 31
  %v2489 = vsub.s32 32, %v2488
  %v2490 = vshrl.u32 683565275, %v2489
  %v2491 = vshll.u32 683565275, %v2488
  %v2492 = vshrl.u32 2475754826, %v2489
  %v2493 = vor.u32 %v2491, %v2492
  %v2494 = vshll.u32 2475754826, %v2488
  %v2495 = vshrl.u32 2131351028, %v2489
  %v2496 = vor.u32 %v2494, %v2495
  %v2497 = vshll.u32 2131351028, %v2488
  %v2498 = vshrl.u32 2102212464, %v2489
  %v2499 = vor.u32 %v2497, %v2498
  %v2500 = vshll.u32 2102212464, %v2488
  %v2501 = vshrl.u32 920167782, %v2489
  %v2502 = vor.u32 %v2500, %v2501
  %v2503 = vshll.u32 920167782, %v2488
  %v2504 = vshrl.u32 1326507024, %v2489
  %v2505 = vor.u32 %v2503, %v2504
  %vm2506 = vcmp.lt.s32.totalorder %v2487, 1
  %vm2507 = vcmp.lt.s32.totalorder %v2487, 2
  %vm2508 = vcmp.lt.s32.totalorder %v2487, 3
  %vm2509 = vcmp.lt.s32.totalorder %v2487, 4
  %v2510 = vsel %vm2506, %v2490, %v2493
  %v2511 = vsel %vm2509, %v2499, 2102212464
  %v2512 = vsel %vm2508, %v2496, %v2511
  %v2513 = vsel %vm2507, %v2510, %v2512
  %v2514 = vsel %vm2506, %v2493, %v2496
  %v2515 = vsel %vm2509, %v2502, 920167782
  %v2516 = vsel %vm2508, %v2499, %v2515
  %v2517 = vsel %vm2507, %v2514, %v2516
  %v2518 = vsel %vm2506, %v2496, %v2499
  %v2519 = vsel %vm2509, %v2505, 1326507024
  %v2520 = vsel %vm2508, %v2502, %v2519
  %v2521 = vsel %vm2507, %v2518, %v2520
  %v2522 = vshll.u32 %v2482, 8
  %v2523 = vmul.u32.u64.compose %v2522, %v2521
  %v2524 = vextract.low.u32 %v2523
  %v2525 = vextract.high.u32 %v2523
  %v2526 = vmul.u32.u64.compose %v2522, %v2517
  %v2527 = vextract.low.u32 %v2526
  %v2528 = vextract.high.u32 %v2526
  %v2529 = vmul.u32 %v2522, %v2513
  %v2530 = vadd.s32 %v2525, %v2527
  %vm2531 = vc.u32 %v2525, %v2527
  %v2532 = vadd.s32 %v2528, 1
  %v2533 = vsel %vm2531, %v2532, %v2528
  %v2534 = vadd.s32 %v2529, %v2533
  %v2535 = vadd.s32 %v2534, 536870912
  %v2536 = vshrl.u32 %v2535, 30
  %v2537 = vshll.u32 %v2536, 30
  %v2538 = vsub.s32 %v2534, %v2537
  %vm2539 = vcmp.lt.s32.totalorder %v2538, 0
  %v2540 = vsub.s32 0, %v2538
  %v2541 = vsel %vm2539, %v2540, %v2538
  %v2542 = vclz %v2541
  %v2543 = vsub.s32 %v2542, 2
  %vm2544 = vcmp.gt.s32.totalorder 0, %v2543
  %v2545 = vsel %vm2544, 0, %v2543
  %v2546 = vsub.s32 32, %v2545
  %v2547 = vshll.u32 %v2538, %v2545
  %v2548 = vshrl.u32 %v2530, %v2546
  %v2549 = vor.u32 %v2547, %v2548
  %v2550 = vsub.s32 4294967266, %v2545
  %v2551 = vadd.s32 %v2550, 127
  %v2552 = vshll.u32 %v2551, 23
  %v2553 = vor.u32 4788187, %v2552
  %v2554 = vand.u32 2147483647, %v2553
  %v2556 = vcvt.s32.f32 %v2549
  %v2557 = vmul.f32 %v2556, %v2554
  %v2558 = vxor.u32 %v2557, 2147483648
  %v2559 = vsel %vm2476, %v2558, %v2557
  %v2560 = vsub.s32 4, %v2536
  %v2561 = vsel %vm2476, %v2560, %v2536
  %v2562 = vsel %vm2475, %v556, %v2559
  %v2563 = vsel %vm2475, 0, %v2561
  %v2564 = vcosq.f32.pop %v2562
  %v2565 = vsinq.f32.pop %v2562
  %vm2566 = vweird.f32 %v556
  %v2567 = vadd.s32 %v2563, 3
  %v2568 = vand.u32 %v2567, 3
  %vm2569 = vcmp.lt.s32.totalorder %v2568, 2
  %vm2570 = vcmp.eq.s32.totalorder %v2568, 0
  %v2571 = vxor.u32 %v2565, 2147483648
  %v2572 = vsel %vm2570, %v2564, %v2571
  %vm2573 = vcmp.eq.s32.totalorder %v2568, 2
  %v2574 = vxor.u32 %v2564, 2147483648
  %v2575 = vsel %vm2573, %v2574, %v2565
  %v2576 = vsel %vm2569, %v2572, %v2575
  %v2577 = vsel %vm2566, nan, %v2576
  %v2578 = vand.u32 2147483647, %v557
  %vm2579 = vcmp.le.f32.partialorder %v2578, 0.7853982
  %vm2580 = vcmp.lt.s32.totalorder %v557, 0
  %v2581 = vand.u32 %v557, 2139095040
  %v2582 = vshrl.u32 %v2581, 23
  %v2583 = vsub.s32 %v2582, 127
  %v2584 = vand.u32 2147483647, %v557
  %v2585 = vand.u32 %v2584, 8388607
  %v2586 = vor.u32 %v2585, 8388608
  %v2587 = vsub.s32 0, %v2586
  %v2588 = vadd.s32 %v2583, 1
  %vm2589 = vcmp.gt.s32.totalorder %v2588, 0
  %v2590 = vsel %vm2589, %v2588, 0
  %v2591 = vshrl.u32 %v2590, 5
  %v2592 = vand.u32 %v2590, 31
  %v2593 = vsub.s32 32, %v2592
  %v2594 = vshrl.u32 683565275, %v2593
  %v2595 = vshll.u32 683565275, %v2592
  %v2596 = vshrl.u32 2475754826, %v2593
  %v2597 = vor.u32 %v2595, %v2596
  %v2598 = vshll.u32 2475754826, %v2592
  %v2599 = vshrl.u32 2131351028, %v2593
  %v2600 = vor.u32 %v2598, %v2599
  %v2601 = vshll.u32 2131351028, %v2592
  %v2602 = vshrl.u32 2102212464, %v2593
  %v2603 = vor.u32 %v2601, %v2602
  %v2604 = vshll.u32 2102212464, %v2592
  %v2605 = vshrl.u32 920167782, %v2593
  %v2606 = vor.u32 %v2604, %v2605
  %v2607 = vshll.u32 920167782, %v2592
  %v2608 = vshrl.u32 1326507024, %v2593
  %v2609 = vor.u32 %v2607, %v2608
  %vm2610 = vcmp.lt.s32.totalorder %v2591, 1
  %vm2611 = vcmp.lt.s32.totalorder %v2591, 2
  %vm2612 = vcmp.lt.s32.totalorder %v2591, 3
  %vm2613 = vcmp.lt.s32.totalorder %v2591, 4
  %v2614 = vsel %vm2610, %v2594, %v2597
  %v2615 = vsel %vm2613, %v2603, 2102212464
  %v2616 = vsel %vm2612, %v2600, %v2615
  %v2617 = vsel %vm2611, %v2614, %v2616
  %v2618 = vsel %vm2610, %v2597, %v2600
  %v2619 = vsel %vm2613, %v2606, 920167782
  %v2620 = vsel %vm2612, %v2603, %v2619
  %v2621 = vsel %vm2611, %v2618, %v2620
  %v2622 = vsel %vm2610, %v2600, %v2603
  %v2623 = vsel %vm2613, %v2609, 1326507024
  %v2624 = vsel %vm2612, %v2606, %v2623
  %v2625 = vsel %vm2611, %v2622, %v2624
  %v2626 = vshll.u32 %v2586, 8
  %v2627 = vmul.u32.u64.compose %v2626, %v2625
  %v2628 = vextract.low.u32 %v2627
  %v2629 = vextract.high.u32 %v2627
  %v2630 = vmul.u32.u64.compose %v2626, %v2621
  %v2631 = vextract.low.u32 %v2630
  %v2632 = vextract.high.u32 %v2630
  %v2633 = vmul.u32 %v2626, %v2617
  %v2634 = vadd.s32 %v2629, %v2631
  %vm2635 = vc.u32 %v2629, %v2631
  %v2636 = vadd.s32 %v2632, 1
  %v2637 = vsel %vm2635, %v2636, %v2632
  %v2638 = vadd.s32 %v2633, %v2637
  %v2639 = vadd.s32 %v2638, 536870912
  %v2640 = vshrl.u32 %v2639, 30
  %v2641 = vshll.u32 %v2640, 30
  %v2642 = vsub.s32 %v2638, %v2641
  %vm2643 = vcmp.lt.s32.totalorder %v2642, 0
  %v2644 = vsub.s32 0, %v2642
  %v2645 = vsel %vm2643, %v2644, %v2642
  %v2646 = vclz %v2645
  %v2647 = vsub.s32 %v2646, 2
  %vm2648 = vcmp.gt.s32.totalorder 0, %v2647
  %v2649 = vsel %vm2648, 0, %v2647
  %v2650 = vsub.s32 32, %v2649
  %v2651 = vshll.u32 %v2642, %v2649
  %v2652 = vshrl.u32 %v2634, %v2650
  %v2653 = vor.u32 %v2651, %v2652
  %v2654 = vsub.s32 4294967266, %v2649
  %v2655 = vadd.s32 %v2654, 127
  %v2656 = vshll.u32 %v2655, 23
  %v2657 = vor.u32 4788187, %v2656
  %v2658 = vand.u32 2147483647, %v2657
  %v2660 = vcvt.s32.f32 %v2653
  %v2661 = vmul.f32 %v2660, %v2658
  %v2662 = vxor.u32 %v2661, 2147483648
  %v2663 = vsel %vm2580, %v2662, %v2661
  %v2664 = vsub.s32 4, %v2640
  %v2665 = vsel %vm2580, %v2664, %v2640
  %v2666 = vsel %vm2579, %v557, %v2663
  %v2667 = vsel %vm2579, 0, %v2665
  %v2668 = vcosq.f32.pop %v2666
  %v2669 = vsinq.f32.pop %v2666
  %vm2670 = vweird.f32 %v557
  %v2671 = vadd.s32 %v2667, 3
  %v2672 = vand.u32 %v2671, 3
  %vm2673 = vcmp.lt.s32.totalorder %v2672, 2
  %vm2674 = vcmp.eq.s32.totalorder %v2672, 0
  %v2675 = vxor.u32 %v2669, 2147483648
  %v2676 = vsel %vm2674, %v2668, %v2675
  %vm2677 = vcmp.eq.s32.totalorder %v2672, 2
  %v2678 = vxor.u32 %v2668, 2147483648
  %v2679 = vsel %vm2677, %v2678, %v2669
  %v2680 = vsel %vm2673, %v2676, %v2679
  %v2681 = vsel %vm2670, nan, %v2680
  %v2682 = vand.u32 2147483647, %v558
  %vm2683 = vcmp.le.f32.partialorder %v2682, 0.7853982
  %vm2684 = vcmp.lt.s32.totalorder %v558, 0
  %v2685 = vand.u32 %v558, 2139095040
  %v2686 = vshrl.u32 %v2685, 23
  %v2687 = vsub.s32 %v2686, 127
  %v2688 = vand.u32 2147483647, %v558
  %v2689 = vand.u32 %v2688, 8388607
  %v2690 = vor.u32 %v2689, 8388608
  %v2691 = vsub.s32 0, %v2690
  %v2692 = vadd.s32 %v2687, 1
  %vm2693 = vcmp.gt.s32.totalorder %v2692, 0
  %v2694 = vsel %vm2693, %v2692, 0
  %v2695 = vshrl.u32 %v2694, 5
  %v2696 = vand.u32 %v2694, 31
  %v2697 = vsub.s32 32, %v2696
  %v2698 = vshrl.u32 683565275, %v2697
  %v2699 = vshll.u32 683565275, %v2696
  %v2700 = vshrl.u32 2475754826, %v2697
  %v2701 = vor.u32 %v2699, %v2700
  %v2702 = vshll.u32 2475754826, %v2696
  %v2703 = vshrl.u32 2131351028, %v2697
  %v2704 = vor.u32 %v2702, %v2703
  %v2705 = vshll.u32 2131351028, %v2696
  %v2706 = vshrl.u32 2102212464, %v2697
  %v2707 = vor.u32 %v2705, %v2706
  %v2708 = vshll.u32 2102212464, %v2696
  %v2709 = vshrl.u32 920167782, %v2697
  %v2710 = vor.u32 %v2708, %v2709
  %v2711 = vshll.u32 920167782, %v2696
  %v2712 = vshrl.u32 1326507024, %v2697
  %v2713 = vor.u32 %v2711, %v2712
  %vm2714 = vcmp.lt.s32.totalorder %v2695, 1
  %vm2715 = vcmp.lt.s32.totalorder %v2695, 2
  %vm2716 = vcmp.lt.s32.totalorder %v2695, 3
  %vm2717 = vcmp.lt.s32.totalorder %v2695, 4
  %v2718 = vsel %vm2714, %v2698, %v2701
  %v2719 = vsel %vm2717, %v2707, 2102212464
  %v2720 = vsel %vm2716, %v2704, %v2719
  %v2721 = vsel %vm2715, %v2718, %v2720
  %v2722 = vsel %vm2714, %v2701, %v2704
  %v2723 = vsel %vm2717, %v2710, 920167782
  %v2724 = vsel %vm2716, %v2707, %v2723
  %v2725 = vsel %vm2715, %v2722, %v2724
  %v2726 = vsel %vm2714, %v2704, %v2707
  %v2727 = vsel %vm2717, %v2713, 1326507024
  %v2728 = vsel %vm2716, %v2710, %v2727
  %v2729 = vsel %vm2715, %v2726, %v2728
  %v2730 = vshll.u32 %v2690, 8
  %v2731 = vmul.u32.u64.compose %v2730, %v2729
  %v2732 = vextract.low.u32 %v2731
  %v2733 = vextract.high.u32 %v2731
  %v2734 = vmul.u32.u64.compose %v2730, %v2725
  %v2735 = vextract.low.u32 %v2734
  %v2736 = vextract.high.u32 %v2734
  %v2737 = vmul.u32 %v2730, %v2721
  %v2738 = vadd.s32 %v2733, %v2735
  %vm2739 = vc.u32 %v2733, %v2735
  %v2740 = vadd.s32 %v2736, 1
  %v2741 = vsel %vm2739, %v2740, %v2736
  %v2742 = vadd.s32 %v2737, %v2741
  %v2743 = vadd.s32 %v2742, 536870912
  %v2744 = vshrl.u32 %v2743, 30
  %v2745 = vshll.u32 %v2744, 30
  %v2746 = vsub.s32 %v2742, %v2745
  %vm2747 = vcmp.lt.s32.totalorder %v2746, 0
  %v2748 = vsub.s32 0, %v2746
  %v2749 = vsel %vm2747, %v2748, %v2746
  %v2750 = vclz %v2749
  %v2751 = vsub.s32 %v2750, 2
  %vm2752 = vcmp.gt.s32.totalorder 0, %v2751
  %v2753 = vsel %vm2752, 0, %v2751
  %v2754 = vsub.s32 32, %v2753
  %v2755 = vshll.u32 %v2746, %v2753
  %v2756 = vshrl.u32 %v2738, %v2754
  %v2757 = vor.u32 %v2755, %v2756
  %v2758 = vsub.s32 4294967266, %v2753
  %v2759 = vadd.s32 %v2758, 127
  %v2760 = vshll.u32 %v2759, 23
  %v2761 = vor.u32 4788187, %v2760
  %v2762 = vand.u32 2147483647, %v2761
  %v2764 = vcvt.s32.f32 %v2757
  %v2765 = vmul.f32 %v2764, %v2762
  %v2766 = vxor.u32 %v2765, 2147483648
  %v2767 = vsel %vm2684, %v2766, %v2765
  %v2768 = vsub.s32 4, %v2744
  %v2769 = vsel %vm2684, %v2768, %v2744
  %v2770 = vsel %vm2683, %v558, %v2767
  %v2771 = vsel %vm2683, 0, %v2769
  %v2772 = vcosq.f32.pop %v2770
  %v2773 = vsinq.f32.pop %v2770
  %vm2774 = vweird.f32 %v558
  %v2775 = vadd.s32 %v2771, 3
  %v2776 = vand.u32 %v2775, 3
  %vm2777 = vcmp.lt.s32.totalorder %v2776, 2
  %vm2778 = vcmp.eq.s32.totalorder %v2776, 0
  %v2779 = vxor.u32 %v2773, 2147483648
  %v2780 = vsel %vm2778, %v2772, %v2779
  %vm2781 = vcmp.eq.s32.totalorder %v2776, 2
  %v2782 = vxor.u32 %v2772, 2147483648
  %v2783 = vsel %vm2781, %v2782, %v2773
  %v2784 = vsel %vm2777, %v2780, %v2783
  %v2785 = vsel %vm2774, nan, %v2784
  %v2786 = vand.u32 2147483647, %v559
  %vm2787 = vcmp.le.f32.partialorder %v2786, 0.7853982
  %vm2788 = vcmp.lt.s32.totalorder %v559, 0
  %v2789 = vand.u32 %v559, 2139095040
  %v2790 = vshrl.u32 %v2789, 23
  %v2791 = vsub.s32 %v2790, 127
  %v2792 = vand.u32 2147483647, %v559
  %v2793 = vand.u32 %v2792, 8388607
  %v2794 = vor.u32 %v2793, 8388608
  %v2795 = vsub.s32 0, %v2794
  %v2796 = vadd.s32 %v2791, 1
  %vm2797 = vcmp.gt.s32.totalorder %v2796, 0
  %v2798 = vsel %vm2797, %v2796, 0
  %v2799 = vshrl.u32 %v2798, 5
  %v2800 = vand.u32 %v2798, 31
  %v2801 = vsub.s32 32, %v2800
  %v2802 = vshrl.u32 683565275, %v2801
  %v2803 = vshll.u32 683565275, %v2800
  %v2804 = vshrl.u32 2475754826, %v2801
  %v2805 = vor.u32 %v2803, %v2804
  %v2806 = vshll.u32 2475754826, %v2800
  %v2807 = vshrl.u32 2131351028, %v2801
  %v2808 = vor.u32 %v2806, %v2807
  %v2809 = vshll.u32 2131351028, %v2800
  %v2810 = vshrl.u32 2102212464, %v2801
  %v2811 = vor.u32 %v2809, %v2810
  %v2812 = vshll.u32 2102212464, %v2800
  %v2813 = vshrl.u32 920167782, %v2801
  %v2814 = vor.u32 %v2812, %v2813
  %v2815 = vshll.u32 920167782, %v2800
  %v2816 = vshrl.u32 1326507024, %v2801
  %v2817 = vor.u32 %v2815, %v2816
  %vm2818 = vcmp.lt.s32.totalorder %v2799, 1
  %vm2819 = vcmp.lt.s32.totalorder %v2799, 2
  %vm2820 = vcmp.lt.s32.totalorder %v2799, 3
  %vm2821 = vcmp.lt.s32.totalorder %v2799, 4
  %v2822 = vsel %vm2818, %v2802, %v2805
  %v2823 = vsel %vm2821, %v2811, 2102212464
  %v2824 = vsel %vm2820, %v2808, %v2823
  %v2825 = vsel %vm2819, %v2822, %v2824
  %v2826 = vsel %vm2818, %v2805, %v2808
  %v2827 = vsel %vm2821, %v2814, 920167782
  %v2828 = vsel %vm2820, %v2811, %v2827
  %v2829 = vsel %vm2819, %v2826, %v2828
  %v2830 = vsel %vm2818, %v2808, %v2811
  %v2831 = vsel %vm2821, %v2817, 1326507024
  %v2832 = vsel %vm2820, %v2814, %v2831
  %v2833 = vsel %vm2819, %v2830, %v2832
  %v2834 = vshll.u32 %v2794, 8
  %v2835 = vmul.u32.u64.compose %v2834, %v2833
  %v2836 = vextract.low.u32 %v2835
  %v2837 = vextract.high.u32 %v2835
  %v2838 = vmul.u32.u64.compose %v2834, %v2829
  %v2839 = vextract.low.u32 %v2838
  %v2840 = vextract.high.u32 %v2838
  %v2841 = vmul.u32 %v2834, %v2825
  %v2842 = vadd.s32 %v2837, %v2839
  %vm2843 = vc.u32 %v2837, %v2839
  %v2844 = vadd.s32 %v2840, 1
  %v2845 = vsel %vm2843, %v2844, %v2840
  %v2846 = vadd.s32 %v2841, %v2845
  %v2847 = vadd.s32 %v2846, 536870912
  %v2848 = vshrl.u32 %v2847, 30
  %v2849 = vshll.u32 %v2848, 30
  %v2850 = vsub.s32 %v2846, %v2849
  %vm2851 = vcmp.lt.s32.totalorder %v2850, 0
  %v2852 = vsub.s32 0, %v2850
  %v2853 = vsel %vm2851, %v2852, %v2850
  %v2854 = vclz %v2853
  %v2855 = vsub.s32 %v2854, 2
  %vm2856 = vcmp.gt.s32.totalorder 0, %v2855
  %v2857 = vsel %vm2856, 0, %v2855
  %v2858 = vsub.s32 32, %v2857
  %v2859 = vshll.u32 %v2850, %v2857
  %v2860 = vshrl.u32 %v2842, %v2858
  %v2861 = vor.u32 %v2859, %v2860
  %v2862 = vsub.s32 4294967266, %v2857
  %v2863 = vadd.s32 %v2862, 127
  %v2864 = vshll.u32 %v2863, 23
  %v2865 = vor.u32 4788187, %v2864
  %v2866 = vand.u32 2147483647, %v2865
  %v2868 = vcvt.s32.f32 %v2861
  %v2869 = vmul.f32 %v2868, %v2866
  %v2870 = vxor.u32 %v2869, 2147483648
  %v2871 = vsel %vm2788, %v2870, %v2869
  %v2872 = vsub.s32 4, %v2848
  %v2873 = vsel %vm2788, %v2872, %v2848
  %v2874 = vsel %vm2787, %v559, %v2871
  %v2875 = vsel %vm2787, 0, %v2873
  %v2876 = vcosq.f32.pop %v2874
  %v2877 = vsinq.f32.pop %v2874
  %vm2878 = vweird.f32 %v559
  %v2879 = vadd.s32 %v2875, 3
  %v2880 = vand.u32 %v2879, 3
  %vm2881 = vcmp.lt.s32.totalorder %v2880, 2
  %vm2882 = vcmp.eq.s32.totalorder %v2880, 0
  %v2883 = vxor.u32 %v2877, 2147483648
  %v2884 = vsel %vm2882, %v2876, %v2883
  %vm2885 = vcmp.eq.s32.totalorder %v2880, 2
  %v2886 = vxor.u32 %v2876, 2147483648
  %v2887 = vsel %vm2885, %v2886, %v2877
  %v2888 = vsel %vm2881, %v2884, %v2887
  %v2889 = vsel %vm2878, nan, %v2888
  %v2890 = vand.u32 2147483647, %v560
  %vm2891 = vcmp.le.f32.partialorder %v2890, 0.7853982
  %vm2892 = vcmp.lt.s32.totalorder %v560, 0
  %v2893 = vand.u32 %v560, 2139095040
  %v2894 = vshrl.u32 %v2893, 23
  %v2895 = vsub.s32 %v2894, 127
  %v2896 = vand.u32 2147483647, %v560
  %v2897 = vand.u32 %v2896, 8388607
  %v2898 = vor.u32 %v2897, 8388608
  %v2899 = vsub.s32 0, %v2898
  %v2900 = vadd.s32 %v2895, 1
  %vm2901 = vcmp.gt.s32.totalorder %v2900, 0
  %v2902 = vsel %vm2901, %v2900, 0
  %v2903 = vshrl.u32 %v2902, 5
  %v2904 = vand.u32 %v2902, 31
  %v2905 = vsub.s32 32, %v2904
  %v2906 = vshrl.u32 683565275, %v2905
  %v2907 = vshll.u32 683565275, %v2904
  %v2908 = vshrl.u32 2475754826, %v2905
  %v2909 = vor.u32 %v2907, %v2908
  %v2910 = vshll.u32 2475754826, %v2904
  %v2911 = vshrl.u32 2131351028, %v2905
  %v2912 = vor.u32 %v2910, %v2911
  %v2913 = vshll.u32 2131351028, %v2904
  %v2914 = vshrl.u32 2102212464, %v2905
  %v2915 = vor.u32 %v2913, %v2914
  %v2916 = vshll.u32 2102212464, %v2904
  %v2917 = vshrl.u32 920167782, %v2905
  %v2918 = vor.u32 %v2916, %v2917
  %v2919 = vshll.u32 920167782, %v2904
  %v2920 = vshrl.u32 1326507024, %v2905
  %v2921 = vor.u32 %v2919, %v2920
  %vm2922 = vcmp.lt.s32.totalorder %v2903, 1
  %vm2923 = vcmp.lt.s32.totalorder %v2903, 2
  %vm2924 = vcmp.lt.s32.totalorder %v2903, 3
  %vm2925 = vcmp.lt.s32.totalorder %v2903, 4
  %v2926 = vsel %vm2922, %v2906, %v2909
  %v2927 = vsel %vm2925, %v2915, 2102212464
  %v2928 = vsel %vm2924, %v2912, %v2927
  %v2929 = vsel %vm2923, %v2926, %v2928
  %v2930 = vsel %vm2922, %v2909, %v2912
  %v2931 = vsel %vm2925, %v2918, 920167782
  %v2932 = vsel %vm2924, %v2915, %v2931
  %v2933 = vsel %vm2923, %v2930, %v2932
  %v2934 = vsel %vm2922, %v2912, %v2915
  %v2935 = vsel %vm2925, %v2921, 1326507024
  %v2936 = vsel %vm2924, %v2918, %v2935
  %v2937 = vsel %vm2923, %v2934, %v2936
  %v2938 = vshll.u32 %v2898, 8
  %v2939 = vmul.u32.u64.compose %v2938, %v2937
  %v2940 = vextract.low.u32 %v2939
  %v2941 = vextract.high.u32 %v2939
  %v2942 = vmul.u32.u64.compose %v2938, %v2933
  %v2943 = vextract.low.u32 %v2942
  %v2944 = vextract.high.u32 %v2942
  %v2945 = vmul.u32 %v2938, %v2929
  %v2946 = vadd.s32 %v2941, %v2943
  %vm2947 = vc.u32 %v2941, %v2943
  %v2948 = vadd.s32 %v2944, 1
  %v2949 = vsel %vm2947, %v2948, %v2944
  %v2950 = vadd.s32 %v2945, %v2949
  %v2951 = vadd.s32 %v2950, 536870912
  %v2952 = vshrl.u32 %v2951, 30
  %v2953 = vshll.u32 %v2952, 30
  %v2954 = vsub.s32 %v2950, %v2953
  %vm2955 = vcmp.lt.s32.totalorder %v2954, 0
  %v2956 = vsub.s32 0, %v2954
  %v2957 = vsel %vm2955, %v2956, %v2954
  %v2958 = vclz %v2957
  %v2959 = vsub.s32 %v2958, 2
  %vm2960 = vcmp.gt.s32.totalorder 0, %v2959
  %v2961 = vsel %vm2960, 0, %v2959
  %v2962 = vsub.s32 32, %v2961
  %v2963 = vshll.u32 %v2954, %v2961
  %v2964 = vshrl.u32 %v2946, %v2962
  %v2965 = vor.u32 %v2963, %v2964
  %v2966 = vsub.s32 4294967266, %v2961
  %v2967 = vadd.s32 %v2966, 127
  %v2968 = vshll.u32 %v2967, 23
  %v2969 = vor.u32 4788187, %v2968
  %v2970 = vand.u32 2147483647, %v2969
  %v2972 = vcvt.s32.f32 %v2965
  %v2973 = vmul.f32 %v2972, %v2970
  %v2974 = vxor.u32 %v2973, 2147483648
  %v2975 = vsel %vm2892, %v2974, %v2973
  %v2976 = vsub.s32 4, %v2952
  %v2977 = vsel %vm2892, %v2976, %v2952
  %v2978 = vsel %vm2891, %v560, %v2975
  %v2979 = vsel %vm2891, 0, %v2977
  %v2980 = vcosq.f32.pop %v2978
  %v2981 = vsinq.f32.pop %v2978
  %vm2982 = vweird.f32 %v560
  %v2983 = vadd.s32 %v2979, 3
  %v2984 = vand.u32 %v2983, 3
  %vm2985 = vcmp.lt.s32.totalorder %v2984, 2
  %vm2986 = vcmp.eq.s32.totalorder %v2984, 0
  %v2987 = vxor.u32 %v2981, 2147483648
  %v2988 = vsel %vm2986, %v2980, %v2987
  %vm2989 = vcmp.eq.s32.totalorder %v2984, 2
  %v2990 = vxor.u32 %v2980, 2147483648
  %v2991 = vsel %vm2989, %v2990, %v2981
  %v2992 = vsel %vm2985, %v2988, %v2991
  %v2993 = vsel %vm2982, nan, %v2992
  %v2994 = vand.u32 2147483647, %v561
  %vm2995 = vcmp.le.f32.partialorder %v2994, 0.7853982
  %vm2996 = vcmp.lt.s32.totalorder %v561, 0
  %v2997 = vand.u32 %v561, 2139095040
  %v2998 = vshrl.u32 %v2997, 23
  %v2999 = vsub.s32 %v2998, 127
  %v3000 = vand.u32 2147483647, %v561
  %v3001 = vand.u32 %v3000, 8388607
  %v3002 = vor.u32 %v3001, 8388608
  %v3003 = vsub.s32 0, %v3002
  %v3004 = vadd.s32 %v2999, 1
  %vm3005 = vcmp.gt.s32.totalorder %v3004, 0
  %v3006 = vsel %vm3005, %v3004, 0
  %v3007 = vshrl.u32 %v3006, 5
  %v3008 = vand.u32 %v3006, 31
  %v3009 = vsub.s32 32, %v3008
  %v3010 = vshrl.u32 683565275, %v3009
  %v3011 = vshll.u32 683565275, %v3008
  %v3012 = vshrl.u32 2475754826, %v3009
  %v3013 = vor.u32 %v3011, %v3012
  %v3014 = vshll.u32 2475754826, %v3008
  %v3015 = vshrl.u32 2131351028, %v3009
  %v3016 = vor.u32 %v3014, %v3015
  %v3017 = vshll.u32 2131351028, %v3008
  %v3018 = vshrl.u32 2102212464, %v3009
  %v3019 = vor.u32 %v3017, %v3018
  %v3020 = vshll.u32 2102212464, %v3008
  %v3021 = vshrl.u32 920167782, %v3009
  %v3022 = vor.u32 %v3020, %v3021
  %v3023 = vshll.u32 920167782, %v3008
  %v3024 = vshrl.u32 1326507024, %v3009
  %v3025 = vor.u32 %v3023, %v3024
  %vm3026 = vcmp.lt.s32.totalorder %v3007, 1
  %vm3027 = vcmp.lt.s32.totalorder %v3007, 2
  %vm3028 = vcmp.lt.s32.totalorder %v3007, 3
  %vm3029 = vcmp.lt.s32.totalorder %v3007, 4
  %v3030 = vsel %vm3026, %v3010, %v3013
  %v3031 = vsel %vm3029, %v3019, 2102212464
  %v3032 = vsel %vm3028, %v3016, %v3031
  %v3033 = vsel %vm3027, %v3030, %v3032
  %v3034 = vsel %vm3026, %v3013, %v3016
  %v3035 = vsel %vm3029, %v3022, 920167782
  %v3036 = vsel %vm3028, %v3019, %v3035
  %v3037 = vsel %vm3027, %v3034, %v3036
  %v3038 = vsel %vm3026, %v3016, %v3019
  %v3039 = vsel %vm3029, %v3025, 1326507024
  %v3040 = vsel %vm3028, %v3022, %v3039
  %v3041 = vsel %vm3027, %v3038, %v3040
  %v3042 = vshll.u32 %v3002, 8
  %v3043 = vmul.u32.u64.compose %v3042, %v3041
  %v3044 = vextract.low.u32 %v3043
  %v3045 = vextract.high.u32 %v3043
  %v3046 = vmul.u32.u64.compose %v3042, %v3037
  %v3047 = vextract.low.u32 %v3046
  %v3048 = vextract.high.u32 %v3046
  %v3049 = vmul.u32 %v3042, %v3033
  %v3050 = vadd.s32 %v3045, %v3047
  %vm3051 = vc.u32 %v3045, %v3047
  %v3052 = vadd.s32 %v3048, 1
  %v3053 = vsel %vm3051, %v3052, %v3048
  %v3054 = vadd.s32 %v3049, %v3053
  %v3055 = vadd.s32 %v3054, 536870912
  %v3056 = vshrl.u32 %v3055, 30
  %v3057 = vshll.u32 %v3056, 30
  %v3058 = vsub.s32 %v3054, %v3057
  %vm3059 = vcmp.lt.s32.totalorder %v3058, 0
  %v3060 = vsub.s32 0, %v3058
  %v3061 = vsel %vm3059, %v3060, %v3058
  %v3062 = vclz %v3061
  %v3063 = vsub.s32 %v3062, 2
  %vm3064 = vcmp.gt.s32.totalorder 0, %v3063
  %v3065 = vsel %vm3064, 0, %v3063
  %v3066 = vsub.s32 32, %v3065
  %v3067 = vshll.u32 %v3058, %v3065
  %v3068 = vshrl.u32 %v3050, %v3066
  %v3069 = vor.u32 %v3067, %v3068
  %v3070 = vsub.s32 4294967266, %v3065
  %v3071 = vadd.s32 %v3070, 127
  %v3072 = vshll.u32 %v3071, 23
  %v3073 = vor.u32 4788187, %v3072
  %v3074 = vand.u32 2147483647, %v3073
  %v3076 = vcvt.s32.f32 %v3069
  %v3077 = vmul.f32 %v3076, %v3074
  %v3078 = vxor.u32 %v3077, 2147483648
  %v3079 = vsel %vm2996, %v3078, %v3077
  %v3080 = vsub.s32 4, %v3056
  %v3081 = vsel %vm2996, %v3080, %v3056
  %v3082 = vsel %vm2995, %v561, %v3079
  %v3083 = vsel %vm2995, 0, %v3081
  %v3084 = vcosq.f32.pop %v3082
  %v3085 = vsinq.f32.pop %v3082
  %vm3086 = vweird.f32 %v561
  %v3087 = vadd.s32 %v3083, 3
  %v3088 = vand.u32 %v3087, 3
  %vm3089 = vcmp.lt.s32.totalorder %v3088, 2
  %vm3090 = vcmp.eq.s32.totalorder %v3088, 0
  %v3091 = vxor.u32 %v3085, 2147483648
  %v3092 = vsel %vm3090, %v3084, %v3091
  %vm3093 = vcmp.eq.s32.totalorder %v3088, 2
  %v3094 = vxor.u32 %v3084, 2147483648
  %v3095 = vsel %vm3093, %v3094, %v3085
  %v3096 = vsel %vm3089, %v3092, %v3095
  %v3097 = vsel %vm3086, nan, %v3096
  %v3098 = vand.u32 2147483647, %v562
  %vm3099 = vcmp.le.f32.partialorder %v3098, 0.7853982
  %vm3100 = vcmp.lt.s32.totalorder %v562, 0
  %v3101 = vand.u32 %v562, 2139095040
  %v3102 = vshrl.u32 %v3101, 23
  %v3103 = vsub.s32 %v3102, 127
  %v3104 = vand.u32 2147483647, %v562
  %v3105 = vand.u32 %v3104, 8388607
  %v3106 = vor.u32 %v3105, 8388608
  %v3107 = vsub.s32 0, %v3106
  %v3108 = vadd.s32 %v3103, 1
  %vm3109 = vcmp.gt.s32.totalorder %v3108, 0
  %v3110 = vsel %vm3109, %v3108, 0
  %v3111 = vshrl.u32 %v3110, 5
  %v3112 = vand.u32 %v3110, 31
  %v3113 = vsub.s32 32, %v3112
  %v3114 = vshrl.u32 683565275, %v3113
  %v3115 = vshll.u32 683565275, %v3112
  %v3116 = vshrl.u32 2475754826, %v3113
  %v3117 = vor.u32 %v3115, %v3116
  %v3118 = vshll.u32 2475754826, %v3112
  %v3119 = vshrl.u32 2131351028, %v3113
  %v3120 = vor.u32 %v3118, %v3119
  %v3121 = vshll.u32 2131351028, %v3112
  %v3122 = vshrl.u32 2102212464, %v3113
  %v3123 = vor.u32 %v3121, %v3122
  %v3124 = vshll.u32 2102212464, %v3112
  %v3125 = vshrl.u32 920167782, %v3113
  %v3126 = vor.u32 %v3124, %v3125
  %v3127 = vshll.u32 920167782, %v3112
  %v3128 = vshrl.u32 1326507024, %v3113
  %v3129 = vor.u32 %v3127, %v3128
  %vm3130 = vcmp.lt.s32.totalorder %v3111, 1
  %vm3131 = vcmp.lt.s32.totalorder %v3111, 2
  %vm3132 = vcmp.lt.s32.totalorder %v3111, 3
  %vm3133 = vcmp.lt.s32.totalorder %v3111, 4
  %v3134 = vsel %vm3130, %v3114, %v3117
  %v3135 = vsel %vm3133, %v3123, 2102212464
  %v3136 = vsel %vm3132, %v3120, %v3135
  %v3137 = vsel %vm3131, %v3134, %v3136
  %v3138 = vsel %vm3130, %v3117, %v3120
  %v3139 = vsel %vm3133, %v3126, 920167782
  %v3140 = vsel %vm3132, %v3123, %v3139
  %v3141 = vsel %vm3131, %v3138, %v3140
  %v3142 = vsel %vm3130, %v3120, %v3123
  %v3143 = vsel %vm3133, %v3129, 1326507024
  %v3144 = vsel %vm3132, %v3126, %v3143
  %v3145 = vsel %vm3131, %v3142, %v3144
  %v3146 = vshll.u32 %v3106, 8
  %v3147 = vmul.u32.u64.compose %v3146, %v3145
  %v3148 = vextract.low.u32 %v3147
  %v3149 = vextract.high.u32 %v3147
  %v3150 = vmul.u32.u64.compose %v3146, %v3141
  %v3151 = vextract.low.u32 %v3150
  %v3152 = vextract.high.u32 %v3150
  %v3153 = vmul.u32 %v3146, %v3137
  %v3154 = vadd.s32 %v3149, %v3151
  %vm3155 = vc.u32 %v3149, %v3151
  %v3156 = vadd.s32 %v3152, 1
  %v3157 = vsel %vm3155, %v3156, %v3152
  %v3158 = vadd.s32 %v3153, %v3157
  %v3159 = vadd.s32 %v3158, 536870912
  %v3160 = vshrl.u32 %v3159, 30
  %v3161 = vshll.u32 %v3160, 30
  %v3162 = vsub.s32 %v3158, %v3161
  %vm3163 = vcmp.lt.s32.totalorder %v3162, 0
  %v3164 = vsub.s32 0, %v3162
  %v3165 = vsel %vm3163, %v3164, %v3162
  %v3166 = vclz %v3165
  %v3167 = vsub.s32 %v3166, 2
  %vm3168 = vcmp.gt.s32.totalorder 0, %v3167
  %v3169 = vsel %vm3168, 0, %v3167
  %v3170 = vsub.s32 32, %v3169
  %v3171 = vshll.u32 %v3162, %v3169
  %v3172 = vshrl.u32 %v3154, %v3170
  %v3173 = vor.u32 %v3171, %v3172
  %v3174 = vsub.s32 4294967266, %v3169
  %v3175 = vadd.s32 %v3174, 127
  %v3176 = vshll.u32 %v3175, 23
  %v3177 = vor.u32 4788187, %v3176
  %v3178 = vand.u32 2147483647, %v3177
  %v3180 = vcvt.s32.f32 %v3173
  %v3181 = vmul.f32 %v3180, %v3178
  %v3182 = vxor.u32 %v3181, 2147483648
  %v3183 = vsel %vm3100, %v3182, %v3181
  %v3184 = vsub.s32 4, %v3160
  %v3185 = vsel %vm3100, %v3184, %v3160
  %v3186 = vsel %vm3099, %v562, %v3183
  %v3187 = vsel %vm3099, 0, %v3185
  %v3188 = vcosq.f32.pop %v3186
  %v3189 = vsinq.f32.pop %v3186
  %vm3190 = vweird.f32 %v562
  %v3191 = vadd.s32 %v3187, 3
  %v3192 = vand.u32 %v3191, 3
  %vm3193 = vcmp.lt.s32.totalorder %v3192, 2
  %vm3194 = vcmp.eq.s32.totalorder %v3192, 0
  %v3195 = vxor.u32 %v3189, 2147483648
  %v3196 = vsel %vm3194, %v3188, %v3195
  %vm3197 = vcmp.eq.s32.totalorder %v3192, 2
  %v3198 = vxor.u32 %v3188, 2147483648
  %v3199 = vsel %vm3197, %v3198, %v3189
  %v3200 = vsel %vm3193, %v3196, %v3199
  %v3201 = vsel %vm3190, nan, %v3200
  %v3202 = vand.u32 2147483647, %v563
  %vm3203 = vcmp.le.f32.partialorder %v3202, 0.7853982
  %vm3204 = vcmp.lt.s32.totalorder %v563, 0
  %v3205 = vand.u32 %v563, 2139095040
  %v3206 = vshrl.u32 %v3205, 23
  %v3207 = vsub.s32 %v3206, 127
  %v3208 = vand.u32 2147483647, %v563
  %v3209 = vand.u32 %v3208, 8388607
  %v3210 = vor.u32 %v3209, 8388608
  %v3211 = vsub.s32 0, %v3210
  %v3212 = vadd.s32 %v3207, 1
  %vm3213 = vcmp.gt.s32.totalorder %v3212, 0
  %v3214 = vsel %vm3213, %v3212, 0
  %v3215 = vshrl.u32 %v3214, 5
  %v3216 = vand.u32 %v3214, 31
  %v3217 = vsub.s32 32, %v3216
  %v3218 = vshrl.u32 683565275, %v3217
  %v3219 = vshll.u32 683565275, %v3216
  %v3220 = vshrl.u32 2475754826, %v3217
  %v3221 = vor.u32 %v3219, %v3220
  %v3222 = vshll.u32 2475754826, %v3216
  %v3223 = vshrl.u32 2131351028, %v3217
  %v3224 = vor.u32 %v3222, %v3223
  %v3225 = vshll.u32 2131351028, %v3216
  %v3226 = vshrl.u32 2102212464, %v3217
  %v3227 = vor.u32 %v3225, %v3226
  %v3228 = vshll.u32 2102212464, %v3216
  %v3229 = vshrl.u32 920167782, %v3217
  %v3230 = vor.u32 %v3228, %v3229
  %v3231 = vshll.u32 920167782, %v3216
  %v3232 = vshrl.u32 1326507024, %v3217
  %v3233 = vor.u32 %v3231, %v3232
  %vm3234 = vcmp.lt.s32.totalorder %v3215, 1
  %vm3235 = vcmp.lt.s32.totalorder %v3215, 2
  %vm3236 = vcmp.lt.s32.totalorder %v3215, 3
  %vm3237 = vcmp.lt.s32.totalorder %v3215, 4
  %v3238 = vsel %vm3234, %v3218, %v3221
  %v3239 = vsel %vm3237, %v3227, 2102212464
  %v3240 = vsel %vm3236, %v3224, %v3239
  %v3241 = vsel %vm3235, %v3238, %v3240
  %v3242 = vsel %vm3234, %v3221, %v3224
  %v3243 = vsel %vm3237, %v3230, 920167782
  %v3244 = vsel %vm3236, %v3227, %v3243
  %v3245 = vsel %vm3235, %v3242, %v3244
  %v3246 = vsel %vm3234, %v3224, %v3227
  %v3247 = vsel %vm3237, %v3233, 1326507024
  %v3248 = vsel %vm3236, %v3230, %v3247
  %v3249 = vsel %vm3235, %v3246, %v3248
  %v3250 = vshll.u32 %v3210, 8
  %v3251 = vmul.u32.u64.compose %v3250, %v3249
  %v3252 = vextract.low.u32 %v3251
  %v3253 = vextract.high.u32 %v3251
  %v3254 = vmul.u32.u64.compose %v3250, %v3245
  %v3255 = vextract.low.u32 %v3254
  %v3256 = vextract.high.u32 %v3254
  %v3257 = vmul.u32 %v3250, %v3241
  %v3258 = vadd.s32 %v3253, %v3255
  %vm3259 = vc.u32 %v3253, %v3255
  %v3260 = vadd.s32 %v3256, 1
  %v3261 = vsel %vm3259, %v3260, %v3256
  %v3262 = vadd.s32 %v3257, %v3261
  %v3263 = vadd.s32 %v3262, 536870912
  %v3264 = vshrl.u32 %v3263, 30
  %v3265 = vshll.u32 %v3264, 30
  %v3266 = vsub.s32 %v3262, %v3265
  %vm3267 = vcmp.lt.s32.totalorder %v3266, 0
  %v3268 = vsub.s32 0, %v3266
  %v3269 = vsel %vm3267, %v3268, %v3266
  %v3270 = vclz %v3269
  %v3271 = vsub.s32 %v3270, 2
  %vm3272 = vcmp.gt.s32.totalorder 0, %v3271
  %v3273 = vsel %vm3272, 0, %v3271
  %v3274 = vsub.s32 32, %v3273
  %v3275 = vshll.u32 %v3266, %v3273
  %v3276 = vshrl.u32 %v3258, %v3274
  %v3277 = vor.u32 %v3275, %v3276
  %v3278 = vsub.s32 4294967266, %v3273
  %v3279 = vadd.s32 %v3278, 127
  %v3280 = vshll.u32 %v3279, 23
  %v3281 = vor.u32 4788187, %v3280
  %v3282 = vand.u32 2147483647, %v3281
  %v3284 = vcvt.s32.f32 %v3277
  %v3285 = vmul.f32 %v3284, %v3282
  %v3286 = vxor.u32 %v3285, 2147483648
  %v3287 = vsel %vm3204, %v3286, %v3285
  %v3288 = vsub.s32 4, %v3264
  %v3289 = vsel %vm3204, %v3288, %v3264
  %v3290 = vsel %vm3203, %v563, %v3287
  %v3291 = vsel %vm3203, 0, %v3289
  %v3292 = vcosq.f32.pop %v3290
  %v3293 = vsinq.f32.pop %v3290
  %vm3294 = vweird.f32 %v563
  %v3295 = vadd.s32 %v3291, 3
  %v3296 = vand.u32 %v3295, 3
  %vm3297 = vcmp.lt.s32.totalorder %v3296, 2
  %vm3298 = vcmp.eq.s32.totalorder %v3296, 0
  %v3299 = vxor.u32 %v3293, 2147483648
  %v3300 = vsel %vm3298, %v3292, %v3299
  %vm3301 = vcmp.eq.s32.totalorder %v3296, 2
  %v3302 = vxor.u32 %v3292, 2147483648
  %v3303 = vsel %vm3301, %v3302, %v3293
  %v3304 = vsel %vm3297, %v3300, %v3303
  %v3305 = vsel %vm3294, nan, %v3304
  %v3306 = vand.u32 2147483647, %v564
  %vm3307 = vcmp.le.f32.partialorder %v3306, 0.7853982
  %vm3308 = vcmp.lt.s32.totalorder %v564, 0
  %v3309 = vand.u32 %v564, 2139095040
  %v3310 = vshrl.u32 %v3309, 23
  %v3311 = vsub.s32 %v3310, 127
  %v3312 = vand.u32 2147483647, %v564
  %v3313 = vand.u32 %v3312, 8388607
  %v3314 = vor.u32 %v3313, 8388608
  %v3315 = vsub.s32 0, %v3314
  %v3316 = vadd.s32 %v3311, 1
  %vm3317 = vcmp.gt.s32.totalorder %v3316, 0
  %v3318 = vsel %vm3317, %v3316, 0
  %v3319 = vshrl.u32 %v3318, 5
  %v3320 = vand.u32 %v3318, 31
  %v3321 = vsub.s32 32, %v3320
  %v3322 = vshrl.u32 683565275, %v3321
  %v3323 = vshll.u32 683565275, %v3320
  %v3324 = vshrl.u32 2475754826, %v3321
  %v3325 = vor.u32 %v3323, %v3324
  %v3326 = vshll.u32 2475754826, %v3320
  %v3327 = vshrl.u32 2131351028, %v3321
  %v3328 = vor.u32 %v3326, %v3327
  %v3329 = vshll.u32 2131351028, %v3320
  %v3330 = vshrl.u32 2102212464, %v3321
  %v3331 = vor.u32 %v3329, %v3330
  %v3332 = vshll.u32 2102212464, %v3320
  %v3333 = vshrl.u32 920167782, %v3321
  %v3334 = vor.u32 %v3332, %v3333
  %v3335 = vshll.u32 920167782, %v3320
  %v3336 = vshrl.u32 1326507024, %v3321
  %v3337 = vor.u32 %v3335, %v3336
  %vm3338 = vcmp.lt.s32.totalorder %v3319, 1
  %vm3339 = vcmp.lt.s32.totalorder %v3319, 2
  %vm3340 = vcmp.lt.s32.totalorder %v3319, 3
  %vm3341 = vcmp.lt.s32.totalorder %v3319, 4
  %v3342 = vsel %vm3338, %v3322, %v3325
  %v3343 = vsel %vm3341, %v3331, 2102212464
  %v3344 = vsel %vm3340, %v3328, %v3343
  %v3345 = vsel %vm3339, %v3342, %v3344
  %v3346 = vsel %vm3338, %v3325, %v3328
  %v3347 = vsel %vm3341, %v3334, 920167782
  %v3348 = vsel %vm3340, %v3331, %v3347
  %v3349 = vsel %vm3339, %v3346, %v3348
  %v3350 = vsel %vm3338, %v3328, %v3331
  %v3351 = vsel %vm3341, %v3337, 1326507024
  %v3352 = vsel %vm3340, %v3334, %v3351
  %v3353 = vsel %vm3339, %v3350, %v3352
  %v3354 = vshll.u32 %v3314, 8
  %v3355 = vmul.u32.u64.compose %v3354, %v3353
  %v3356 = vextract.low.u32 %v3355
  %v3357 = vextract.high.u32 %v3355
  %v3358 = vmul.u32.u64.compose %v3354, %v3349
  %v3359 = vextract.low.u32 %v3358
  %v3360 = vextract.high.u32 %v3358
  %v3361 = vmul.u32 %v3354, %v3345
  %v3362 = vadd.s32 %v3357, %v3359
  %vm3363 = vc.u32 %v3357, %v3359
  %v3364 = vadd.s32 %v3360, 1
  %v3365 = vsel %vm3363, %v3364, %v3360
  %v3366 = vadd.s32 %v3361, %v3365
  %v3367 = vadd.s32 %v3366, 536870912
  %v3368 = vshrl.u32 %v3367, 30
  %v3369 = vshll.u32 %v3368, 30
  %v3370 = vsub.s32 %v3366, %v3369
  %vm3371 = vcmp.lt.s32.totalorder %v3370, 0
  %v3372 = vsub.s32 0, %v3370
  %v3373 = vsel %vm3371, %v3372, %v3370
  %v3374 = vclz %v3373
  %v3375 = vsub.s32 %v3374, 2
  %vm3376 = vcmp.gt.s32.totalorder 0, %v3375
  %v3377 = vsel %vm3376, 0, %v3375
  %v3378 = vsub.s32 32, %v3377
  %v3379 = vshll.u32 %v3370, %v3377
  %v3380 = vshrl.u32 %v3362, %v3378
  %v3381 = vor.u32 %v3379, %v3380
  %v3382 = vsub.s32 4294967266, %v3377
  %v3383 = vadd.s32 %v3382, 127
  %v3384 = vshll.u32 %v3383, 23
  %v3385 = vor.u32 4788187, %v3384
  %v3386 = vand.u32 2147483647, %v3385
  %v3388 = vcvt.s32.f32 %v3381
  %v3389 = vmul.f32 %v3388, %v3386
  %v3390 = vxor.u32 %v3389, 2147483648
  %v3391 = vsel %vm3308, %v3390, %v3389
  %v3392 = vsub.s32 4, %v3368
  %v3393 = vsel %vm3308, %v3392, %v3368
  %v3394 = vsel %vm3307, %v564, %v3391
  %v3395 = vsel %vm3307, 0, %v3393
  %v3396 = vcosq.f32.pop %v3394
  %v3397 = vsinq.f32.pop %v3394
  %vm3398 = vweird.f32 %v564
  %v3399 = vadd.s32 %v3395, 3
  %v3400 = vand.u32 %v3399, 3
  %vm3401 = vcmp.lt.s32.totalorder %v3400, 2
  %vm3402 = vcmp.eq.s32.totalorder %v3400, 0
  %v3403 = vxor.u32 %v3397, 2147483648
  %v3404 = vsel %vm3402, %v3396, %v3403
  %vm3405 = vcmp.eq.s32.totalorder %v3400, 2
  %v3406 = vxor.u32 %v3396, 2147483648
  %v3407 = vsel %vm3405, %v3406, %v3397
  %v3408 = vsel %vm3401, %v3404, %v3407
  %v3409 = vsel %vm3398, nan, %v3408
  %v3410 = vand.u32 2147483647, %v565
  %vm3411 = vcmp.le.f32.partialorder %v3410, 0.7853982
  %vm3412 = vcmp.lt.s32.totalorder %v565, 0
  %v3413 = vand.u32 %v565, 2139095040
  %v3414 = vshrl.u32 %v3413, 23
  %v3415 = vsub.s32 %v3414, 127
  %v3416 = vand.u32 2147483647, %v565
  %v3417 = vand.u32 %v3416, 8388607
  %v3418 = vor.u32 %v3417, 8388608
  %v3419 = vsub.s32 0, %v3418
  %v3420 = vadd.s32 %v3415, 1
  %vm3421 = vcmp.gt.s32.totalorder %v3420, 0
  %v3422 = vsel %vm3421, %v3420, 0
  %v3423 = vshrl.u32 %v3422, 5
  %v3424 = vand.u32 %v3422, 31
  %v3425 = vsub.s32 32, %v3424
  %v3426 = vshrl.u32 683565275, %v3425
  %v3427 = vshll.u32 683565275, %v3424
  %v3428 = vshrl.u32 2475754826, %v3425
  %v3429 = vor.u32 %v3427, %v3428
  %v3430 = vshll.u32 2475754826, %v3424
  %v3431 = vshrl.u32 2131351028, %v3425
  %v3432 = vor.u32 %v3430, %v3431
  %v3433 = vshll.u32 2131351028, %v3424
  %v3434 = vshrl.u32 2102212464, %v3425
  %v3435 = vor.u32 %v3433, %v3434
  %v3436 = vshll.u32 2102212464, %v3424
  %v3437 = vshrl.u32 920167782, %v3425
  %v3438 = vor.u32 %v3436, %v3437
  %v3439 = vshll.u32 920167782, %v3424
  %v3440 = vshrl.u32 1326507024, %v3425
  %v3441 = vor.u32 %v3439, %v3440
  %vm3442 = vcmp.lt.s32.totalorder %v3423, 1
  %vm3443 = vcmp.lt.s32.totalorder %v3423, 2
  %vm3444 = vcmp.lt.s32.totalorder %v3423, 3
  %vm3445 = vcmp.lt.s32.totalorder %v3423, 4
  %v3446 = vsel %vm3442, %v3426, %v3429
  %v3447 = vsel %vm3445, %v3435, 2102212464
  %v3448 = vsel %vm3444, %v3432, %v3447
  %v3449 = vsel %vm3443, %v3446, %v3448
  %v3450 = vsel %vm3442, %v3429, %v3432
  %v3451 = vsel %vm3445, %v3438, 920167782
  %v3452 = vsel %vm3444, %v3435, %v3451
  %v3453 = vsel %vm3443, %v3450, %v3452
  %v3454 = vsel %vm3442, %v3432, %v3435
  %v3455 = vsel %vm3445, %v3441, 1326507024
  %v3456 = vsel %vm3444, %v3438, %v3455
  %v3457 = vsel %vm3443, %v3454, %v3456
  %v3458 = vshll.u32 %v3418, 8
  %v3459 = vmul.u32.u64.compose %v3458, %v3457
  %v3460 = vextract.low.u32 %v3459
  %v3461 = vextract.high.u32 %v3459
  %v3462 = vmul.u32.u64.compose %v3458, %v3453
  %v3463 = vextract.low.u32 %v3462
  %v3464 = vextract.high.u32 %v3462
  %v3465 = vmul.u32 %v3458, %v3449
  %v3466 = vadd.s32 %v3461, %v3463
  %vm3467 = vc.u32 %v3461, %v3463
  %v3468 = vadd.s32 %v3464, 1
  %v3469 = vsel %vm3467, %v3468, %v3464
  %v3470 = vadd.s32 %v3465, %v3469
  %v3471 = vadd.s32 %v3470, 536870912
  %v3472 = vshrl.u32 %v3471, 30
  %v3473 = vshll.u32 %v3472, 30
  %v3474 = vsub.s32 %v3470, %v3473
  %vm3475 = vcmp.lt.s32.totalorder %v3474, 0
  %v3476 = vsub.s32 0, %v3474
  %v3477 = vsel %vm3475, %v3476, %v3474
  %v3478 = vclz %v3477
  %v3479 = vsub.s32 %v3478, 2
  %vm3480 = vcmp.gt.s32.totalorder 0, %v3479
  %v3481 = vsel %vm3480, 0, %v3479
  %v3482 = vsub.s32 32, %v3481
  %v3483 = vshll.u32 %v3474, %v3481
  %v3484 = vshrl.u32 %v3466, %v3482
  %v3485 = vor.u32 %v3483, %v3484
  %v3486 = vsub.s32 4294967266, %v3481
  %v3487 = vadd.s32 %v3486, 127
  %v3488 = vshll.u32 %v3487, 23
  %v3489 = vor.u32 4788187, %v3488
  %v3490 = vand.u32 2147483647, %v3489
  %v3492 = vcvt.s32.f32 %v3485
  %v3493 = vmul.f32 %v3492, %v3490
  %v3494 = vxor.u32 %v3493, 2147483648
  %v3495 = vsel %vm3412, %v3494, %v3493
  %v3496 = vsub.s32 4, %v3472
  %v3497 = vsel %vm3412, %v3496, %v3472
  %v3498 = vsel %vm3411, %v565, %v3495
  %v3499 = vsel %vm3411, 0, %v3497
  %v3500 = vcosq.f32.pop %v3498
  %v3501 = vsinq.f32.pop %v3498
  %vm3502 = vweird.f32 %v565
  %v3503 = vadd.s32 %v3499, 3
  %v3504 = vand.u32 %v3503, 3
  %vm3505 = vcmp.lt.s32.totalorder %v3504, 2
  %vm3506 = vcmp.eq.s32.totalorder %v3504, 0
  %v3507 = vxor.u32 %v3501, 2147483648
  %v3508 = vsel %vm3506, %v3500, %v3507
  %vm3509 = vcmp.eq.s32.totalorder %v3504, 2
  %v3510 = vxor.u32 %v3500, 2147483648
  %v3511 = vsel %vm3509, %v3510, %v3501
  %v3512 = vsel %vm3505, %v3508, %v3511
  %v3513 = vsel %vm3502, nan, %v3512
  %v3514 = vand.u32 2147483647, %v566
  %vm3515 = vcmp.le.f32.partialorder %v3514, 0.7853982
  %vm3516 = vcmp.lt.s32.totalorder %v566, 0
  %v3517 = vand.u32 %v566, 2139095040
  %v3518 = vshrl.u32 %v3517, 23
  %v3519 = vsub.s32 %v3518, 127
  %v3520 = vand.u32 2147483647, %v566
  %v3521 = vand.u32 %v3520, 8388607
  %v3522 = vor.u32 %v3521, 8388608
  %v3523 = vsub.s32 0, %v3522
  %v3524 = vadd.s32 %v3519, 1
  %vm3525 = vcmp.gt.s32.totalorder %v3524, 0
  %v3526 = vsel %vm3525, %v3524, 0
  %v3527 = vshrl.u32 %v3526, 5
  %v3528 = vand.u32 %v3526, 31
  %v3529 = vsub.s32 32, %v3528
  %v3530 = vshrl.u32 683565275, %v3529
  %v3531 = vshll.u32 683565275, %v3528
  %v3532 = vshrl.u32 2475754826, %v3529
  %v3533 = vor.u32 %v3531, %v3532
  %v3534 = vshll.u32 2475754826, %v3528
  %v3535 = vshrl.u32 2131351028, %v3529
  %v3536 = vor.u32 %v3534, %v3535
  %v3537 = vshll.u32 2131351028, %v3528
  %v3538 = vshrl.u32 2102212464, %v3529
  %v3539 = vor.u32 %v3537, %v3538
  %v3540 = vshll.u32 2102212464, %v3528
  %v3541 = vshrl.u32 920167782, %v3529
  %v3542 = vor.u32 %v3540, %v3541
  %v3543 = vshll.u32 920167782, %v3528
  %v3544 = vshrl.u32 1326507024, %v3529
  %v3545 = vor.u32 %v3543, %v3544
  %vm3546 = vcmp.lt.s32.totalorder %v3527, 1
  %vm3547 = vcmp.lt.s32.totalorder %v3527, 2
  %vm3548 = vcmp.lt.s32.totalorder %v3527, 3
  %vm3549 = vcmp.lt.s32.totalorder %v3527, 4
  %v3550 = vsel %vm3546, %v3530, %v3533
  %v3551 = vsel %vm3549, %v3539, 2102212464
  %v3552 = vsel %vm3548, %v3536, %v3551
  %v3553 = vsel %vm3547, %v3550, %v3552
  %v3554 = vsel %vm3546, %v3533, %v3536
  %v3555 = vsel %vm3549, %v3542, 920167782
  %v3556 = vsel %vm3548, %v3539, %v3555
  %v3557 = vsel %vm3547, %v3554, %v3556
  %v3558 = vsel %vm3546, %v3536, %v3539
  %v3559 = vsel %vm3549, %v3545, 1326507024
  %v3560 = vsel %vm3548, %v3542, %v3559
  %v3561 = vsel %vm3547, %v3558, %v3560
  %v3562 = vshll.u32 %v3522, 8
  %v3563 = vmul.u32.u64.compose %v3562, %v3561
  %v3564 = vextract.low.u32 %v3563
  %v3565 = vextract.high.u32 %v3563
  %v3566 = vmul.u32.u64.compose %v3562, %v3557
  %v3567 = vextract.low.u32 %v3566
  %v3568 = vextract.high.u32 %v3566
  %v3569 = vmul.u32 %v3562, %v3553
  %v3570 = vadd.s32 %v3565, %v3567
  %vm3571 = vc.u32 %v3565, %v3567
  %v3572 = vadd.s32 %v3568, 1
  %v3573 = vsel %vm3571, %v3572, %v3568
  %v3574 = vadd.s32 %v3569, %v3573
  %v3575 = vadd.s32 %v3574, 536870912
  %v3576 = vshrl.u32 %v3575, 30
  %v3577 = vshll.u32 %v3576, 30
  %v3578 = vsub.s32 %v3574, %v3577
  %vm3579 = vcmp.lt.s32.totalorder %v3578, 0
  %v3580 = vsub.s32 0, %v3578
  %v3581 = vsel %vm3579, %v3580, %v3578
  %v3582 = vclz %v3581
  %v3583 = vsub.s32 %v3582, 2
  %vm3584 = vcmp.gt.s32.totalorder 0, %v3583
  %v3585 = vsel %vm3584, 0, %v3583
  %v3586 = vsub.s32 32, %v3585
  %v3587 = vshll.u32 %v3578, %v3585
  %v3588 = vshrl.u32 %v3570, %v3586
  %v3589 = vor.u32 %v3587, %v3588
  %v3590 = vsub.s32 4294967266, %v3585
  %v3591 = vadd.s32 %v3590, 127
  %v3592 = vshll.u32 %v3591, 23
  %v3593 = vor.u32 4788187, %v3592
  %v3594 = vand.u32 2147483647, %v3593
  %v3596 = vcvt.s32.f32 %v3589
  %v3597 = vmul.f32 %v3596, %v3594
  %v3598 = vxor.u32 %v3597, 2147483648
  %v3599 = vsel %vm3516, %v3598, %v3597
  %v3600 = vsub.s32 4, %v3576
  %v3601 = vsel %vm3516, %v3600, %v3576
  %v3602 = vsel %vm3515, %v566, %v3599
  %v3603 = vsel %vm3515, 0, %v3601
  %v3604 = vcosq.f32.pop %v3602
  %v3605 = vsinq.f32.pop %v3602
  %vm3606 = vweird.f32 %v566
  %v3607 = vadd.s32 %v3603, 3
  %v3608 = vand.u32 %v3607, 3
  %vm3609 = vcmp.lt.s32.totalorder %v3608, 2
  %vm3610 = vcmp.eq.s32.totalorder %v3608, 0
  %v3611 = vxor.u32 %v3605, 2147483648
  %v3612 = vsel %vm3610, %v3604, %v3611
  %vm3613 = vcmp.eq.s32.totalorder %v3608, 2
  %v3614 = vxor.u32 %v3604, 2147483648
  %v3615 = vsel %vm3613, %v3614, %v3605
  %v3616 = vsel %vm3609, %v3612, %v3615
  %v3617 = vsel %vm3606, nan, %v3616
  %v3618 = vand.u32 2147483647, %v567
  %vm3619 = vcmp.le.f32.partialorder %v3618, 0.7853982
  %vm3620 = vcmp.lt.s32.totalorder %v567, 0
  %v3621 = vand.u32 %v567, 2139095040
  %v3622 = vshrl.u32 %v3621, 23
  %v3623 = vsub.s32 %v3622, 127
  %v3624 = vand.u32 2147483647, %v567
  %v3625 = vand.u32 %v3624, 8388607
  %v3626 = vor.u32 %v3625, 8388608
  %v3627 = vsub.s32 0, %v3626
  %v3628 = vadd.s32 %v3623, 1
  %vm3629 = vcmp.gt.s32.totalorder %v3628, 0
  %v3630 = vsel %vm3629, %v3628, 0
  %v3631 = vshrl.u32 %v3630, 5
  %v3632 = vand.u32 %v3630, 31
  %v3633 = vsub.s32 32, %v3632
  %v3634 = vshrl.u32 683565275, %v3633
  %v3635 = vshll.u32 683565275, %v3632
  %v3636 = vshrl.u32 2475754826, %v3633
  %v3637 = vor.u32 %v3635, %v3636
  %v3638 = vshll.u32 2475754826, %v3632
  %v3639 = vshrl.u32 2131351028, %v3633
  %v3640 = vor.u32 %v3638, %v3639
  %v3641 = vshll.u32 2131351028, %v3632
  %v3642 = vshrl.u32 2102212464, %v3633
  %v3643 = vor.u32 %v3641, %v3642
  %v3644 = vshll.u32 2102212464, %v3632
  %v3645 = vshrl.u32 920167782, %v3633
  %v3646 = vor.u32 %v3644, %v3645
  %v3647 = vshll.u32 920167782, %v3632
  %v3648 = vshrl.u32 1326507024, %v3633
  %v3649 = vor.u32 %v3647, %v3648
  %vm3650 = vcmp.lt.s32.totalorder %v3631, 1
  %vm3651 = vcmp.lt.s32.totalorder %v3631, 2
  %vm3652 = vcmp.lt.s32.totalorder %v3631, 3
  %vm3653 = vcmp.lt.s32.totalorder %v3631, 4
  %v3654 = vsel %vm3650, %v3634, %v3637
  %v3655 = vsel %vm3653, %v3643, 2102212464
  %v3656 = vsel %vm3652, %v3640, %v3655
  %v3657 = vsel %vm3651, %v3654, %v3656
  %v3658 = vsel %vm3650, %v3637, %v3640
  %v3659 = vsel %vm3653, %v3646, 920167782
  %v3660 = vsel %vm3652, %v3643, %v3659
  %v3661 = vsel %vm3651, %v3658, %v3660
  %v3662 = vsel %vm3650, %v3640, %v3643
  %v3663 = vsel %vm3653, %v3649, 1326507024
  %v3664 = vsel %vm3652, %v3646, %v3663
  %v3665 = vsel %vm3651, %v3662, %v3664
  %v3666 = vshll.u32 %v3626, 8
  %v3667 = vmul.u32.u64.compose %v3666, %v3665
  %v3668 = vextract.low.u32 %v3667
  %v3669 = vextract.high.u32 %v3667
  %v3670 = vmul.u32.u64.compose %v3666, %v3661
  %v3671 = vextract.low.u32 %v3670
  %v3672 = vextract.high.u32 %v3670
  %v3673 = vmul.u32 %v3666, %v3657
  %v3674 = vadd.s32 %v3669, %v3671
  %vm3675 = vc.u32 %v3669, %v3671
  %v3676 = vadd.s32 %v3672, 1
  %v3677 = vsel %vm3675, %v3676, %v3672
  %v3678 = vadd.s32 %v3673, %v3677
  %v3679 = vadd.s32 %v3678, 536870912
  %v3680 = vshrl.u32 %v3679, 30
  %v3681 = vshll.u32 %v3680, 30
  %v3682 = vsub.s32 %v3678, %v3681
  %vm3683 = vcmp.lt.s32.totalorder %v3682, 0
  %v3684 = vsub.s32 0, %v3682
  %v3685 = vsel %vm3683, %v3684, %v3682
  %v3686 = vclz %v3685
  %v3687 = vsub.s32 %v3686, 2
  %vm3688 = vcmp.gt.s32.totalorder 0, %v3687
  %v3689 = vsel %vm3688, 0, %v3687
  %v3690 = vsub.s32 32, %v3689
  %v3691 = vshll.u32 %v3682, %v3689
  %v3692 = vshrl.u32 %v3674, %v3690
  %v3693 = vor.u32 %v3691, %v3692
  %v3694 = vsub.s32 4294967266, %v3689
  %v3695 = vadd.s32 %v3694, 127
  %v3696 = vshll.u32 %v3695, 23
  %v3697 = vor.u32 4788187, %v3696
  %v3698 = vand.u32 2147483647, %v3697
  %v3700 = vcvt.s32.f32 %v3693
  %v3701 = vmul.f32 %v3700, %v3698
  %v3702 = vxor.u32 %v3701, 2147483648
  %v3703 = vsel %vm3620, %v3702, %v3701
  %v3704 = vsub.s32 4, %v3680
  %v3705 = vsel %vm3620, %v3704, %v3680
  %v3706 = vsel %vm3619, %v567, %v3703
  %v3707 = vsel %vm3619, 0, %v3705
  %v3708 = vcosq.f32.pop %v3706
  %v3709 = vsinq.f32.pop %v3706
  %vm3710 = vweird.f32 %v567
  %v3711 = vadd.s32 %v3707, 3
  %v3712 = vand.u32 %v3711, 3
  %vm3713 = vcmp.lt.s32.totalorder %v3712, 2
  %vm3714 = vcmp.eq.s32.totalorder %v3712, 0
  %v3715 = vxor.u32 %v3709, 2147483648
  %v3716 = vsel %vm3714, %v3708, %v3715
  %vm3717 = vcmp.eq.s32.totalorder %v3712, 2
  %v3718 = vxor.u32 %v3708, 2147483648
  %v3719 = vsel %vm3717, %v3718, %v3709
  %v3720 = vsel %vm3713, %v3716, %v3719
  %v3721 = vsel %vm3710, nan, %v3720
  %v3722 = vand.u32 2147483647, %v568
  %vm3723 = vcmp.le.f32.partialorder %v3722, 0.7853982
  %vm3724 = vcmp.lt.s32.totalorder %v568, 0
  %v3725 = vand.u32 %v568, 2139095040
  %v3726 = vshrl.u32 %v3725, 23
  %v3727 = vsub.s32 %v3726, 127
  %v3728 = vand.u32 2147483647, %v568
  %v3729 = vand.u32 %v3728, 8388607
  %v3730 = vor.u32 %v3729, 8388608
  %v3731 = vsub.s32 0, %v3730
  %v3732 = vadd.s32 %v3727, 1
  %vm3733 = vcmp.gt.s32.totalorder %v3732, 0
  %v3734 = vsel %vm3733, %v3732, 0
  %v3735 = vshrl.u32 %v3734, 5
  %v3736 = vand.u32 %v3734, 31
  %v3737 = vsub.s32 32, %v3736
  %v3738 = vshrl.u32 683565275, %v3737
  %v3739 = vshll.u32 683565275, %v3736
  %v3740 = vshrl.u32 2475754826, %v3737
  %v3741 = vor.u32 %v3739, %v3740
  %v3742 = vshll.u32 2475754826, %v3736
  %v3743 = vshrl.u32 2131351028, %v3737
  %v3744 = vor.u32 %v3742, %v3743
  %v3745 = vshll.u32 2131351028, %v3736
  %v3746 = vshrl.u32 2102212464, %v3737
  %v3747 = vor.u32 %v3745, %v3746
  %v3748 = vshll.u32 2102212464, %v3736
  %v3749 = vshrl.u32 920167782, %v3737
  %v3750 = vor.u32 %v3748, %v3749
  %v3751 = vshll.u32 920167782, %v3736
  %v3752 = vshrl.u32 1326507024, %v3737
  %v3753 = vor.u32 %v3751, %v3752
  %vm3754 = vcmp.lt.s32.totalorder %v3735, 1
  %vm3755 = vcmp.lt.s32.totalorder %v3735, 2
  %vm3756 = vcmp.lt.s32.totalorder %v3735, 3
  %vm3757 = vcmp.lt.s32.totalorder %v3735, 4
  %v3758 = vsel %vm3754, %v3738, %v3741
  %v3759 = vsel %vm3757, %v3747, 2102212464
  %v3760 = vsel %vm3756, %v3744, %v3759
  %v3761 = vsel %vm3755, %v3758, %v3760
  %v3762 = vsel %vm3754, %v3741, %v3744
  %v3763 = vsel %vm3757, %v3750, 920167782
  %v3764 = vsel %vm3756, %v3747, %v3763
  %v3765 = vsel %vm3755, %v3762, %v3764
  %v3766 = vsel %vm3754, %v3744, %v3747
  %v3767 = vsel %vm3757, %v3753, 1326507024
  %v3768 = vsel %vm3756, %v3750, %v3767
  %v3769 = vsel %vm3755, %v3766, %v3768
  %v3770 = vshll.u32 %v3730, 8
  %v3771 = vmul.u32.u64.compose %v3770, %v3769
  %v3772 = vextract.low.u32 %v3771
  %v3773 = vextract.high.u32 %v3771
  %v3774 = vmul.u32.u64.compose %v3770, %v3765
  %v3775 = vextract.low.u32 %v3774
  %v3776 = vextract.high.u32 %v3774
  %v3777 = vmul.u32 %v3770, %v3761
  %v3778 = vadd.s32 %v3773, %v3775
  %vm3779 = vc.u32 %v3773, %v3775
  %v3780 = vadd.s32 %v3776, 1
  %v3781 = vsel %vm3779, %v3780, %v3776
  %v3782 = vadd.s32 %v3777, %v3781
  %v3783 = vadd.s32 %v3782, 536870912
  %v3784 = vshrl.u32 %v3783, 30
  %v3785 = vshll.u32 %v3784, 30
  %v3786 = vsub.s32 %v3782, %v3785
  %vm3787 = vcmp.lt.s32.totalorder %v3786, 0
  %v3788 = vsub.s32 0, %v3786
  %v3789 = vsel %vm3787, %v3788, %v3786
  %v3790 = vclz %v3789
  %v3791 = vsub.s32 %v3790, 2
  %vm3792 = vcmp.gt.s32.totalorder 0, %v3791
  %v3793 = vsel %vm3792, 0, %v3791
  %v3794 = vsub.s32 32, %v3793
  %v3795 = vshll.u32 %v3786, %v3793
  %v3796 = vshrl.u32 %v3778, %v3794
  %v3797 = vor.u32 %v3795, %v3796
  %v3798 = vsub.s32 4294967266, %v3793
  %v3799 = vadd.s32 %v3798, 127
  %v3800 = vshll.u32 %v3799, 23
  %v3801 = vor.u32 4788187, %v3800
  %v3802 = vand.u32 2147483647, %v3801
  %v3804 = vcvt.s32.f32 %v3797
  %v3805 = vmul.f32 %v3804, %v3802
  %v3806 = vxor.u32 %v3805, 2147483648
  %v3807 = vsel %vm3724, %v3806, %v3805
  %v3808 = vsub.s32 4, %v3784
  %v3809 = vsel %vm3724, %v3808, %v3784
  %v3810 = vsel %vm3723, %v568, %v3807
  %v3811 = vsel %vm3723, 0, %v3809
  %v3812 = vcosq.f32.pop %v3810
  %v3813 = vsinq.f32.pop %v3810
  %vm3814 = vweird.f32 %v568
  %v3815 = vadd.s32 %v3811, 3
  %v3816 = vand.u32 %v3815, 3
  %vm3817 = vcmp.lt.s32.totalorder %v3816, 2
  %vm3818 = vcmp.eq.s32.totalorder %v3816, 0
  %v3819 = vxor.u32 %v3813, 2147483648
  %v3820 = vsel %vm3818, %v3812, %v3819
  %vm3821 = vcmp.eq.s32.totalorder %v3816, 2
  %v3822 = vxor.u32 %v3812, 2147483648
  %v3823 = vsel %vm3821, %v3822, %v3813
  %v3824 = vsel %vm3817, %v3820, %v3823
  %v3825 = vsel %vm3814, nan, %v3824
  %v3826 = vand.u32 2147483647, %v569
  %vm3827 = vcmp.le.f32.partialorder %v3826, 0.7853982
  %vm3828 = vcmp.lt.s32.totalorder %v569, 0
  %v3829 = vand.u32 %v569, 2139095040
  %v3830 = vshrl.u32 %v3829, 23
  %v3831 = vsub.s32 %v3830, 127
  %v3832 = vand.u32 2147483647, %v569
  %v3833 = vand.u32 %v3832, 8388607
  %v3834 = vor.u32 %v3833, 8388608
  %v3835 = vsub.s32 0, %v3834
  %v3836 = vadd.s32 %v3831, 1
  %vm3837 = vcmp.gt.s32.totalorder %v3836, 0
  %v3838 = vsel %vm3837, %v3836, 0
  %v3839 = vshrl.u32 %v3838, 5
  %v3840 = vand.u32 %v3838, 31
  %v3841 = vsub.s32 32, %v3840
  %v3842 = vshrl.u32 683565275, %v3841
  %v3843 = vshll.u32 683565275, %v3840
  %v3844 = vshrl.u32 2475754826, %v3841
  %v3845 = vor.u32 %v3843, %v3844
  %v3846 = vshll.u32 2475754826, %v3840
  %v3847 = vshrl.u32 2131351028, %v3841
  %v3848 = vor.u32 %v3846, %v3847
  %v3849 = vshll.u32 2131351028, %v3840
  %v3850 = vshrl.u32 2102212464, %v3841
  %v3851 = vor.u32 %v3849, %v3850
  %v3852 = vshll.u32 2102212464, %v3840
  %v3853 = vshrl.u32 920167782, %v3841
  %v3854 = vor.u32 %v3852, %v3853
  %v3855 = vshll.u32 920167782, %v3840
  %v3856 = vshrl.u32 1326507024, %v3841
  %v3857 = vor.u32 %v3855, %v3856
  %vm3858 = vcmp.lt.s32.totalorder %v3839, 1
  %vm3859 = vcmp.lt.s32.totalorder %v3839, 2
  %vm3860 = vcmp.lt.s32.totalorder %v3839, 3
  %vm3861 = vcmp.lt.s32.totalorder %v3839, 4
  %v3862 = vsel %vm3858, %v3842, %v3845
  %v3863 = vsel %vm3861, %v3851, 2102212464
  %v3864 = vsel %vm3860, %v3848, %v3863
  %v3865 = vsel %vm3859, %v3862, %v3864
  %v3866 = vsel %vm3858, %v3845, %v3848
  %v3867 = vsel %vm3861, %v3854, 920167782
  %v3868 = vsel %vm3860, %v3851, %v3867
  %v3869 = vsel %vm3859, %v3866, %v3868
  %v3870 = vsel %vm3858, %v3848, %v3851
  %v3871 = vsel %vm3861, %v3857, 1326507024
  %v3872 = vsel %vm3860, %v3854, %v3871
  %v3873 = vsel %vm3859, %v3870, %v3872
  %v3874 = vshll.u32 %v3834, 8
  %v3875 = vmul.u32.u64.compose %v3874, %v3873
  %v3876 = vextract.low.u32 %v3875
  %v3877 = vextract.high.u32 %v3875
  %v3878 = vmul.u32.u64.compose %v3874, %v3869
  %v3879 = vextract.low.u32 %v3878
  %v3880 = vextract.high.u32 %v3878
  %v3881 = vmul.u32 %v3874, %v3865
  %v3882 = vadd.s32 %v3877, %v3879
  %vm3883 = vc.u32 %v3877, %v3879
  %v3884 = vadd.s32 %v3880, 1
  %v3885 = vsel %vm3883, %v3884, %v3880
  %v3886 = vadd.s32 %v3881, %v3885
  %v3887 = vadd.s32 %v3886, 536870912
  %v3888 = vshrl.u32 %v3887, 30
  %v3889 = vshll.u32 %v3888, 30
  %v3890 = vsub.s32 %v3886, %v3889
  %vm3891 = vcmp.lt.s32.totalorder %v3890, 0
  %v3892 = vsub.s32 0, %v3890
  %v3893 = vsel %vm3891, %v3892, %v3890
  %v3894 = vclz %v3893
  %v3895 = vsub.s32 %v3894, 2
  %vm3896 = vcmp.gt.s32.totalorder 0, %v3895
  %v3897 = vsel %vm3896, 0, %v3895
  %v3898 = vsub.s32 32, %v3897
  %v3899 = vshll.u32 %v3890, %v3897
  %v3900 = vshrl.u32 %v3882, %v3898
  %v3901 = vor.u32 %v3899, %v3900
  %v3902 = vsub.s32 4294967266, %v3897
  %v3903 = vadd.s32 %v3902, 127
  %v3904 = vshll.u32 %v3903, 23
  %v3905 = vor.u32 4788187, %v3904
  %v3906 = vand.u32 2147483647, %v3905
  %v3908 = vcvt.s32.f32 %v3901
  %v3909 = vmul.f32 %v3908, %v3906
  %v3910 = vxor.u32 %v3909, 2147483648
  %v3911 = vsel %vm3828, %v3910, %v3909
  %v3912 = vsub.s32 4, %v3888
  %v3913 = vsel %vm3828, %v3912, %v3888
  %v3914 = vsel %vm3827, %v569, %v3911
  %v3915 = vsel %vm3827, 0, %v3913
  %v3916 = vcosq.f32.pop %v3914
  %v3917 = vsinq.f32.pop %v3914
  %vm3918 = vweird.f32 %v569
  %v3919 = vadd.s32 %v3915, 3
  %v3920 = vand.u32 %v3919, 3
  %vm3921 = vcmp.lt.s32.totalorder %v3920, 2
  %vm3922 = vcmp.eq.s32.totalorder %v3920, 0
  %v3923 = vxor.u32 %v3917, 2147483648
  %v3924 = vsel %vm3922, %v3916, %v3923
  %vm3925 = vcmp.eq.s32.totalorder %v3920, 2
  %v3926 = vxor.u32 %v3916, 2147483648
  %v3927 = vsel %vm3925, %v3926, %v3917
  %v3928 = vsel %vm3921, %v3924, %v3927
  %v3929 = vsel %vm3918, nan, %v3928
  %v3930 = vand.u32 2147483647, %v570
  %vm3931 = vcmp.le.f32.partialorder %v3930, 0.7853982
  %vm3932 = vcmp.lt.s32.totalorder %v570, 0
  %v3933 = vand.u32 %v570, 2139095040
  %v3934 = vshrl.u32 %v3933, 23
  %v3935 = vsub.s32 %v3934, 127
  %v3936 = vand.u32 2147483647, %v570
  %v3937 = vand.u32 %v3936, 8388607
  %v3938 = vor.u32 %v3937, 8388608
  %v3939 = vsub.s32 0, %v3938
  %v3940 = vadd.s32 %v3935, 1
  %vm3941 = vcmp.gt.s32.totalorder %v3940, 0
  %v3942 = vsel %vm3941, %v3940, 0
  %v3943 = vshrl.u32 %v3942, 5
  %v3944 = vand.u32 %v3942, 31
  %v3945 = vsub.s32 32, %v3944
  %v3946 = vshrl.u32 683565275, %v3945
  %v3947 = vshll.u32 683565275, %v3944
  %v3948 = vshrl.u32 2475754826, %v3945
  %v3949 = vor.u32 %v3947, %v3948
  %v3950 = vshll.u32 2475754826, %v3944
  %v3951 = vshrl.u32 2131351028, %v3945
  %v3952 = vor.u32 %v3950, %v3951
  %v3953 = vshll.u32 2131351028, %v3944
  %v3954 = vshrl.u32 2102212464, %v3945
  %v3955 = vor.u32 %v3953, %v3954
  %v3956 = vshll.u32 2102212464, %v3944
  %v3957 = vshrl.u32 920167782, %v3945
  %v3958 = vor.u32 %v3956, %v3957
  %v3959 = vshll.u32 920167782, %v3944
  %v3960 = vshrl.u32 1326507024, %v3945
  %v3961 = vor.u32 %v3959, %v3960
  %vm3962 = vcmp.lt.s32.totalorder %v3943, 1
  %vm3963 = vcmp.lt.s32.totalorder %v3943, 2
  %vm3964 = vcmp.lt.s32.totalorder %v3943, 3
  %vm3965 = vcmp.lt.s32.totalorder %v3943, 4
  %v3966 = vsel %vm3962, %v3946, %v3949
  %v3967 = vsel %vm3965, %v3955, 2102212464
  %v3968 = vsel %vm3964, %v3952, %v3967
  %v3969 = vsel %vm3963, %v3966, %v3968
  %v3970 = vsel %vm3962, %v3949, %v3952
  %v3971 = vsel %vm3965, %v3958, 920167782
  %v3972 = vsel %vm3964, %v3955, %v3971
  %v3973 = vsel %vm3963, %v3970, %v3972
  %v3974 = vsel %vm3962, %v3952, %v3955
  %v3975 = vsel %vm3965, %v3961, 1326507024
  %v3976 = vsel %vm3964, %v3958, %v3975
  %v3977 = vsel %vm3963, %v3974, %v3976
  %v3978 = vshll.u32 %v3938, 8
  %v3979 = vmul.u32.u64.compose %v3978, %v3977
  %v3980 = vextract.low.u32 %v3979
  %v3981 = vextract.high.u32 %v3979
  %v3982 = vmul.u32.u64.compose %v3978, %v3973
  %v3983 = vextract.low.u32 %v3982
  %v3984 = vextract.high.u32 %v3982
  %v3985 = vmul.u32 %v3978, %v3969
  %v3986 = vadd.s32 %v3981, %v3983
  %vm3987 = vc.u32 %v3981, %v3983
  %v3988 = vadd.s32 %v3984, 1
  %v3989 = vsel %vm3987, %v3988, %v3984
  %v3990 = vadd.s32 %v3985, %v3989
  %v3991 = vadd.s32 %v3990, 536870912
  %v3992 = vshrl.u32 %v3991, 30
  %v3993 = vshll.u32 %v3992, 30
  %v3994 = vsub.s32 %v3990, %v3993
  %vm3995 = vcmp.lt.s32.totalorder %v3994, 0
  %v3996 = vsub.s32 0, %v3994
  %v3997 = vsel %vm3995, %v3996, %v3994
  %v3998 = vclz %v3997
  %v3999 = vsub.s32 %v3998, 2
  %vm4000 = vcmp.gt.s32.totalorder 0, %v3999
  %v4001 = vsel %vm4000, 0, %v3999
  %v4002 = vsub.s32 32, %v4001
  %v4003 = vshll.u32 %v3994, %v4001
  %v4004 = vshrl.u32 %v3986, %v4002
  %v4005 = vor.u32 %v4003, %v4004
  %v4006 = vsub.s32 4294967266, %v4001
  %v4007 = vadd.s32 %v4006, 127
  %v4008 = vshll.u32 %v4007, 23
  %v4009 = vor.u32 4788187, %v4008
  %v4010 = vand.u32 2147483647, %v4009
  %v4012 = vcvt.s32.f32 %v4005
  %v4013 = vmul.f32 %v4012, %v4010
  %v4014 = vxor.u32 %v4013, 2147483648
  %v4015 = vsel %vm3932, %v4014, %v4013
  %v4016 = vsub.s32 4, %v3992
  %v4017 = vsel %vm3932, %v4016, %v3992
  %v4018 = vsel %vm3931, %v570, %v4015
  %v4019 = vsel %vm3931, 0, %v4017
  %v4020 = vcosq.f32.pop %v4018
  %v4021 = vsinq.f32.pop %v4018
  %vm4022 = vweird.f32 %v570
  %v4023 = vadd.s32 %v4019, 3
  %v4024 = vand.u32 %v4023, 3
  %vm4025 = vcmp.lt.s32.totalorder %v4024, 2
  %vm4026 = vcmp.eq.s32.totalorder %v4024, 0
  %v4027 = vxor.u32 %v4021, 2147483648
  %v4028 = vsel %vm4026, %v4020, %v4027
  %vm4029 = vcmp.eq.s32.totalorder %v4024, 2
  %v4030 = vxor.u32 %v4020, 2147483648
  %v4031 = vsel %vm4029, %v4030, %v4021
  %v4032 = vsel %vm4025, %v4028, %v4031
  %v4033 = vsel %vm4022, nan, %v4032
  %v4034 = vand.u32 2147483647, %v571
  %vm4035 = vcmp.le.f32.partialorder %v4034, 0.7853982
  %vm4036 = vcmp.lt.s32.totalorder %v571, 0
  %v4037 = vand.u32 %v571, 2139095040
  %v4038 = vshrl.u32 %v4037, 23
  %v4039 = vsub.s32 %v4038, 127
  %v4040 = vand.u32 2147483647, %v571
  %v4041 = vand.u32 %v4040, 8388607
  %v4042 = vor.u32 %v4041, 8388608
  %v4043 = vsub.s32 0, %v4042
  %v4044 = vadd.s32 %v4039, 1
  %vm4045 = vcmp.gt.s32.totalorder %v4044, 0
  %v4046 = vsel %vm4045, %v4044, 0
  %v4047 = vshrl.u32 %v4046, 5
  %v4048 = vand.u32 %v4046, 31
  %v4049 = vsub.s32 32, %v4048
  %v4050 = vshrl.u32 683565275, %v4049
  %v4051 = vshll.u32 683565275, %v4048
  %v4052 = vshrl.u32 2475754826, %v4049
  %v4053 = vor.u32 %v4051, %v4052
  %v4054 = vshll.u32 2475754826, %v4048
  %v4055 = vshrl.u32 2131351028, %v4049
  %v4056 = vor.u32 %v4054, %v4055
  %v4057 = vshll.u32 2131351028, %v4048
  %v4058 = vshrl.u32 2102212464, %v4049
  %v4059 = vor.u32 %v4057, %v4058
  %v4060 = vshll.u32 2102212464, %v4048
  %v4061 = vshrl.u32 920167782, %v4049
  %v4062 = vor.u32 %v4060, %v4061
  %v4063 = vshll.u32 920167782, %v4048
  %v4064 = vshrl.u32 1326507024, %v4049
  %v4065 = vor.u32 %v4063, %v4064
  %vm4066 = vcmp.lt.s32.totalorder %v4047, 1
  %vm4067 = vcmp.lt.s32.totalorder %v4047, 2
  %vm4068 = vcmp.lt.s32.totalorder %v4047, 3
  %vm4069 = vcmp.lt.s32.totalorder %v4047, 4
  %v4070 = vsel %vm4066, %v4050, %v4053
  %v4071 = vsel %vm4069, %v4059, 2102212464
  %v4072 = vsel %vm4068, %v4056, %v4071
  %v4073 = vsel %vm4067, %v4070, %v4072
  %v4074 = vsel %vm4066, %v4053, %v4056
  %v4075 = vsel %vm4069, %v4062, 920167782
  %v4076 = vsel %vm4068, %v4059, %v4075
  %v4077 = vsel %vm4067, %v4074, %v4076
  %v4078 = vsel %vm4066, %v4056, %v4059
  %v4079 = vsel %vm4069, %v4065, 1326507024
  %v4080 = vsel %vm4068, %v4062, %v4079
  %v4081 = vsel %vm4067, %v4078, %v4080
  %v4082 = vshll.u32 %v4042, 8
  %v4083 = vmul.u32.u64.compose %v4082, %v4081
  %v4084 = vextract.low.u32 %v4083
  %v4085 = vextract.high.u32 %v4083
  %v4086 = vmul.u32.u64.compose %v4082, %v4077
  %v4087 = vextract.low.u32 %v4086
  %v4088 = vextract.high.u32 %v4086
  %v4089 = vmul.u32 %v4082, %v4073
  %v4090 = vadd.s32 %v4085, %v4087
  %vm4091 = vc.u32 %v4085, %v4087
  %v4092 = vadd.s32 %v4088, 1
  %v4093 = vsel %vm4091, %v4092, %v4088
  %v4094 = vadd.s32 %v4089, %v4093
  %v4095 = vadd.s32 %v4094, 536870912
  %v4096 = vshrl.u32 %v4095, 30
  %v4097 = vshll.u32 %v4096, 30
  %v4098 = vsub.s32 %v4094, %v4097
  %vm4099 = vcmp.lt.s32.totalorder %v4098, 0
  %v4100 = vsub.s32 0, %v4098
  %v4101 = vsel %vm4099, %v4100, %v4098
  %v4102 = vclz %v4101
  %v4103 = vsub.s32 %v4102, 2
  %vm4104 = vcmp.gt.s32.totalorder 0, %v4103
  %v4105 = vsel %vm4104, 0, %v4103
  %v4106 = vsub.s32 32, %v4105
  %v4107 = vshll.u32 %v4098, %v4105
  %v4108 = vshrl.u32 %v4090, %v4106
  %v4109 = vor.u32 %v4107, %v4108
  %v4110 = vsub.s32 4294967266, %v4105
  %v4111 = vadd.s32 %v4110, 127
  %v4112 = vshll.u32 %v4111, 23
  %v4113 = vor.u32 4788187, %v4112
  %v4114 = vand.u32 2147483647, %v4113
  %v4116 = vcvt.s32.f32 %v4109
  %v4117 = vmul.f32 %v4116, %v4114
  %v4118 = vxor.u32 %v4117, 2147483648
  %v4119 = vsel %vm4036, %v4118, %v4117
  %v4120 = vsub.s32 4, %v4096
  %v4121 = vsel %vm4036, %v4120, %v4096
  %v4122 = vsel %vm4035, %v571, %v4119
  %v4123 = vsel %vm4035, 0, %v4121
  %v4124 = vcosq.f32.pop %v4122
  %v4125 = vsinq.f32.pop %v4122
  %vm4126 = vweird.f32 %v571
  %v4127 = vadd.s32 %v4123, 3
  %v4128 = vand.u32 %v4127, 3
  %vm4129 = vcmp.lt.s32.totalorder %v4128, 2
  %vm4130 = vcmp.eq.s32.totalorder %v4128, 0
  %v4131 = vxor.u32 %v4125, 2147483648
  %v4132 = vsel %vm4130, %v4124, %v4131
  %vm4133 = vcmp.eq.s32.totalorder %v4128, 2
  %v4134 = vxor.u32 %v4124, 2147483648
  %v4135 = vsel %vm4133, %v4134, %v4125
  %v4136 = vsel %vm4129, %v4132, %v4135
  %v4137 = vsel %vm4126, nan, %v4136
  %v4138 = vand.u32 2147483647, %v572
  %vm4139 = vcmp.le.f32.partialorder %v4138, 0.7853982
  %vm4140 = vcmp.lt.s32.totalorder %v572, 0
  %v4141 = vand.u32 %v572, 2139095040
  %v4142 = vshrl.u32 %v4141, 23
  %v4143 = vsub.s32 %v4142, 127
  %v4144 = vand.u32 2147483647, %v572
  %v4145 = vand.u32 %v4144, 8388607
  %v4146 = vor.u32 %v4145, 8388608
  %v4147 = vsub.s32 0, %v4146
  %v4148 = vadd.s32 %v4143, 1
  %vm4149 = vcmp.gt.s32.totalorder %v4148, 0
  %v4150 = vsel %vm4149, %v4148, 0
  %v4151 = vshrl.u32 %v4150, 5
  %v4152 = vand.u32 %v4150, 31
  %v4153 = vsub.s32 32, %v4152
  %v4154 = vshrl.u32 683565275, %v4153
  %v4155 = vshll.u32 683565275, %v4152
  %v4156 = vshrl.u32 2475754826, %v4153
  %v4157 = vor.u32 %v4155, %v4156
  %v4158 = vshll.u32 2475754826, %v4152
  %v4159 = vshrl.u32 2131351028, %v4153
  %v4160 = vor.u32 %v4158, %v4159
  %v4161 = vshll.u32 2131351028, %v4152
  %v4162 = vshrl.u32 2102212464, %v4153
  %v4163 = vor.u32 %v4161, %v4162
  %v4164 = vshll.u32 2102212464, %v4152
  %v4165 = vshrl.u32 920167782, %v4153
  %v4166 = vor.u32 %v4164, %v4165
  %v4167 = vshll.u32 920167782, %v4152
  %v4168 = vshrl.u32 1326507024, %v4153
  %v4169 = vor.u32 %v4167, %v4168
  %vm4170 = vcmp.lt.s32.totalorder %v4151, 1
  %vm4171 = vcmp.lt.s32.totalorder %v4151, 2
  %vm4172 = vcmp.lt.s32.totalorder %v4151, 3
  %vm4173 = vcmp.lt.s32.totalorder %v4151, 4
  %v4174 = vsel %vm4170, %v4154, %v4157
  %v4175 = vsel %vm4173, %v4163, 2102212464
  %v4176 = vsel %vm4172, %v4160, %v4175
  %v4177 = vsel %vm4171, %v4174, %v4176
  %v4178 = vsel %vm4170, %v4157, %v4160
  %v4179 = vsel %vm4173, %v4166, 920167782
  %v4180 = vsel %vm4172, %v4163, %v4179
  %v4181 = vsel %vm4171, %v4178, %v4180
  %v4182 = vsel %vm4170, %v4160, %v4163
  %v4183 = vsel %vm4173, %v4169, 1326507024
  %v4184 = vsel %vm4172, %v4166, %v4183
  %v4185 = vsel %vm4171, %v4182, %v4184
  %v4186 = vshll.u32 %v4146, 8
  %v4187 = vmul.u32.u64.compose %v4186, %v4185
  %v4188 = vextract.low.u32 %v4187
  %v4189 = vextract.high.u32 %v4187
  %v4190 = vmul.u32.u64.compose %v4186, %v4181
  %v4191 = vextract.low.u32 %v4190
  %v4192 = vextract.high.u32 %v4190
  %v4193 = vmul.u32 %v4186, %v4177
  %v4194 = vadd.s32 %v4189, %v4191
  %vm4195 = vc.u32 %v4189, %v4191
  %v4196 = vadd.s32 %v4192, 1
  %v4197 = vsel %vm4195, %v4196, %v4192
  %v4198 = vadd.s32 %v4193, %v4197
  %v4199 = vadd.s32 %v4198, 536870912
  %v4200 = vshrl.u32 %v4199, 30
  %v4201 = vshll.u32 %v4200, 30
  %v4202 = vsub.s32 %v4198, %v4201
  %vm4203 = vcmp.lt.s32.totalorder %v4202, 0
  %v4204 = vsub.s32 0, %v4202
  %v4205 = vsel %vm4203, %v4204, %v4202
  %v4206 = vclz %v4205
  %v4207 = vsub.s32 %v4206, 2
  %vm4208 = vcmp.gt.s32.totalorder 0, %v4207
  %v4209 = vsel %vm4208, 0, %v4207
  %v4210 = vsub.s32 32, %v4209
  %v4211 = vshll.u32 %v4202, %v4209
  %v4212 = vshrl.u32 %v4194, %v4210
  %v4213 = vor.u32 %v4211, %v4212
  %v4214 = vsub.s32 4294967266, %v4209
  %v4215 = vadd.s32 %v4214, 127
  %v4216 = vshll.u32 %v4215, 23
  %v4217 = vor.u32 4788187, %v4216
  %v4218 = vand.u32 2147483647, %v4217
  %v4220 = vcvt.s32.f32 %v4213
  %v4221 = vmul.f32 %v4220, %v4218
  %v4222 = vxor.u32 %v4221, 2147483648
  %v4223 = vsel %vm4140, %v4222, %v4221
  %v4224 = vsub.s32 4, %v4200
  %v4225 = vsel %vm4140, %v4224, %v4200
  %v4226 = vsel %vm4139, %v572, %v4223
  %v4227 = vsel %vm4139, 0, %v4225
  %v4228 = vcosq.f32.pop %v4226
  %v4229 = vsinq.f32.pop %v4226
  %vm4230 = vweird.f32 %v572
  %v4231 = vadd.s32 %v4227, 3
  %v4232 = vand.u32 %v4231, 3
  %vm4233 = vcmp.lt.s32.totalorder %v4232, 2
  %vm4234 = vcmp.eq.s32.totalorder %v4232, 0
  %v4235 = vxor.u32 %v4229, 2147483648
  %v4236 = vsel %vm4234, %v4228, %v4235
  %vm4237 = vcmp.eq.s32.totalorder %v4232, 2
  %v4238 = vxor.u32 %v4228, 2147483648
  %v4239 = vsel %vm4237, %v4238, %v4229
  %v4240 = vsel %vm4233, %v4236, %v4239
  %v4241 = vsel %vm4230, nan, %v4240
  %v4242 = vand.u32 2147483647, %v573
  %vm4243 = vcmp.le.f32.partialorder %v4242, 0.7853982
  %vm4244 = vcmp.lt.s32.totalorder %v573, 0
  %v4245 = vand.u32 %v573, 2139095040
  %v4246 = vshrl.u32 %v4245, 23
  %v4247 = vsub.s32 %v4246, 127
  %v4248 = vand.u32 2147483647, %v573
  %v4249 = vand.u32 %v4248, 8388607
  %v4250 = vor.u32 %v4249, 8388608
  %v4251 = vsub.s32 0, %v4250
  %v4252 = vadd.s32 %v4247, 1
  %vm4253 = vcmp.gt.s32.totalorder %v4252, 0
  %v4254 = vsel %vm4253, %v4252, 0
  %v4255 = vshrl.u32 %v4254, 5
  %v4256 = vand.u32 %v4254, 31
  %v4257 = vsub.s32 32, %v4256
  %v4258 = vshrl.u32 683565275, %v4257
  %v4259 = vshll.u32 683565275, %v4256
  %v4260 = vshrl.u32 2475754826, %v4257
  %v4261 = vor.u32 %v4259, %v4260
  %v4262 = vshll.u32 2475754826, %v4256
  %v4263 = vshrl.u32 2131351028, %v4257
  %v4264 = vor.u32 %v4262, %v4263
  %v4265 = vshll.u32 2131351028, %v4256
  %v4266 = vshrl.u32 2102212464, %v4257
  %v4267 = vor.u32 %v4265, %v4266
  %v4268 = vshll.u32 2102212464, %v4256
  %v4269 = vshrl.u32 920167782, %v4257
  %v4270 = vor.u32 %v4268, %v4269
  %v4271 = vshll.u32 920167782, %v4256
  %v4272 = vshrl.u32 1326507024, %v4257
  %v4273 = vor.u32 %v4271, %v4272
  %vm4274 = vcmp.lt.s32.totalorder %v4255, 1
  %vm4275 = vcmp.lt.s32.totalorder %v4255, 2
  %vm4276 = vcmp.lt.s32.totalorder %v4255, 3
  %vm4277 = vcmp.lt.s32.totalorder %v4255, 4
  %v4278 = vsel %vm4274, %v4258, %v4261
  %v4279 = vsel %vm4277, %v4267, 2102212464
  %v4280 = vsel %vm4276, %v4264, %v4279
  %v4281 = vsel %vm4275, %v4278, %v4280
  %v4282 = vsel %vm4274, %v4261, %v4264
  %v4283 = vsel %vm4277, %v4270, 920167782
  %v4284 = vsel %vm4276, %v4267, %v4283
  %v4285 = vsel %vm4275, %v4282, %v4284
  %v4286 = vsel %vm4274, %v4264, %v4267
  %v4287 = vsel %vm4277, %v4273, 1326507024
  %v4288 = vsel %vm4276, %v4270, %v4287
  %v4289 = vsel %vm4275, %v4286, %v4288
  %v4290 = vshll.u32 %v4250, 8
  %v4291 = vmul.u32.u64.compose %v4290, %v4289
  %v4292 = vextract.low.u32 %v4291
  %v4293 = vextract.high.u32 %v4291
  %v4294 = vmul.u32.u64.compose %v4290, %v4285
  %v4295 = vextract.low.u32 %v4294
  %v4296 = vextract.high.u32 %v4294
  %v4297 = vmul.u32 %v4290, %v4281
  %v4298 = vadd.s32 %v4293, %v4295
  %vm4299 = vc.u32 %v4293, %v4295
  %v4300 = vadd.s32 %v4296, 1
  %v4301 = vsel %vm4299, %v4300, %v4296
  %v4302 = vadd.s32 %v4297, %v4301
  %v4303 = vadd.s32 %v4302, 536870912
  %v4304 = vshrl.u32 %v4303, 30
  %v4305 = vshll.u32 %v4304, 30
  %v4306 = vsub.s32 %v4302, %v4305
  %vm4307 = vcmp.lt.s32.totalorder %v4306, 0
  %v4308 = vsub.s32 0, %v4306
  %v4309 = vsel %vm4307, %v4308, %v4306
  %v4310 = vclz %v4309
  %v4311 = vsub.s32 %v4310, 2
  %vm4312 = vcmp.gt.s32.totalorder 0, %v4311
  %v4313 = vsel %vm4312, 0, %v4311
  %v4314 = vsub.s32 32, %v4313
  %v4315 = vshll.u32 %v4306, %v4313
  %v4316 = vshrl.u32 %v4298, %v4314
  %v4317 = vor.u32 %v4315, %v4316
  %v4318 = vsub.s32 4294967266, %v4313
  %v4319 = vadd.s32 %v4318, 127
  %v4320 = vshll.u32 %v4319, 23
  %v4321 = vor.u32 4788187, %v4320
  %v4322 = vand.u32 2147483647, %v4321
  %v4324 = vcvt.s32.f32 %v4317
  %v4325 = vmul.f32 %v4324, %v4322
  %v4326 = vxor.u32 %v4325, 2147483648
  %v4327 = vsel %vm4244, %v4326, %v4325
  %v4328 = vsub.s32 4, %v4304
  %v4329 = vsel %vm4244, %v4328, %v4304
  %v4330 = vsel %vm4243, %v573, %v4327
  %v4331 = vsel %vm4243, 0, %v4329
  %v4332 = vcosq.f32.pop %v4330
  %v4333 = vsinq.f32.pop %v4330
  %vm4334 = vweird.f32 %v573
  %v4335 = vadd.s32 %v4331, 3
  %v4336 = vand.u32 %v4335, 3
  %vm4337 = vcmp.lt.s32.totalorder %v4336, 2
  %vm4338 = vcmp.eq.s32.totalorder %v4336, 0
  %v4339 = vxor.u32 %v4333, 2147483648
  %v4340 = vsel %vm4338, %v4332, %v4339
  %vm4341 = vcmp.eq.s32.totalorder %v4336, 2
  %v4342 = vxor.u32 %v4332, 2147483648
  %v4343 = vsel %vm4341, %v4342, %v4333
  %v4344 = vsel %vm4337, %v4340, %v4343
  %v4345 = vsel %vm4334, nan, %v4344
  %v4346 = vand.u32 2147483647, %v574
  %vm4347 = vcmp.le.f32.partialorder %v4346, 0.7853982
  %vm4348 = vcmp.lt.s32.totalorder %v574, 0
  %v4349 = vand.u32 %v574, 2139095040
  %v4350 = vshrl.u32 %v4349, 23
  %v4351 = vsub.s32 %v4350, 127
  %v4352 = vand.u32 2147483647, %v574
  %v4353 = vand.u32 %v4352, 8388607
  %v4354 = vor.u32 %v4353, 8388608
  %v4355 = vsub.s32 0, %v4354
  %v4356 = vadd.s32 %v4351, 1
  %vm4357 = vcmp.gt.s32.totalorder %v4356, 0
  %v4358 = vsel %vm4357, %v4356, 0
  %v4359 = vshrl.u32 %v4358, 5
  %v4360 = vand.u32 %v4358, 31
  %v4361 = vsub.s32 32, %v4360
  %v4362 = vshrl.u32 683565275, %v4361
  %v4363 = vshll.u32 683565275, %v4360
  %v4364 = vshrl.u32 2475754826, %v4361
  %v4365 = vor.u32 %v4363, %v4364
  %v4366 = vshll.u32 2475754826, %v4360
  %v4367 = vshrl.u32 2131351028, %v4361
  %v4368 = vor.u32 %v4366, %v4367
  %v4369 = vshll.u32 2131351028, %v4360
  %v4370 = vshrl.u32 2102212464, %v4361
  %v4371 = vor.u32 %v4369, %v4370
  %v4372 = vshll.u32 2102212464, %v4360
  %v4373 = vshrl.u32 920167782, %v4361
  %v4374 = vor.u32 %v4372, %v4373
  %v4375 = vshll.u32 920167782, %v4360
  %v4376 = vshrl.u32 1326507024, %v4361
  %v4377 = vor.u32 %v4375, %v4376
  %vm4378 = vcmp.lt.s32.totalorder %v4359, 1
  %vm4379 = vcmp.lt.s32.totalorder %v4359, 2
  %vm4380 = vcmp.lt.s32.totalorder %v4359, 3
  %vm4381 = vcmp.lt.s32.totalorder %v4359, 4
  %v4382 = vsel %vm4378, %v4362, %v4365
  %v4383 = vsel %vm4381, %v4371, 2102212464
  %v4384 = vsel %vm4380, %v4368, %v4383
  %v4385 = vsel %vm4379, %v4382, %v4384
  %v4386 = vsel %vm4378, %v4365, %v4368
  %v4387 = vsel %vm4381, %v4374, 920167782
  %v4388 = vsel %vm4380, %v4371, %v4387
  %v4389 = vsel %vm4379, %v4386, %v4388
  %v4390 = vsel %vm4378, %v4368, %v4371
  %v4391 = vsel %vm4381, %v4377, 1326507024
  %v4392 = vsel %vm4380, %v4374, %v4391
  %v4393 = vsel %vm4379, %v4390, %v4392
  %v4394 = vshll.u32 %v4354, 8
  %v4395 = vmul.u32.u64.compose %v4394, %v4393
  %v4396 = vextract.low.u32 %v4395
  %v4397 = vextract.high.u32 %v4395
  %v4398 = vmul.u32.u64.compose %v4394, %v4389
  %v4399 = vextract.low.u32 %v4398
  %v4400 = vextract.high.u32 %v4398
  %v4401 = vmul.u32 %v4394, %v4385
  %v4402 = vadd.s32 %v4397, %v4399
  %vm4403 = vc.u32 %v4397, %v4399
  %v4404 = vadd.s32 %v4400, 1
  %v4405 = vsel %vm4403, %v4404, %v4400
  %v4406 = vadd.s32 %v4401, %v4405
  %v4407 = vadd.s32 %v4406, 536870912
  %v4408 = vshrl.u32 %v4407, 30
  %v4409 = vshll.u32 %v4408, 30
  %v4410 = vsub.s32 %v4406, %v4409
  %vm4411 = vcmp.lt.s32.totalorder %v4410, 0
  %v4412 = vsub.s32 0, %v4410
  %v4413 = vsel %vm4411, %v4412, %v4410
  %v4414 = vclz %v4413
  %v4415 = vsub.s32 %v4414, 2
  %vm4416 = vcmp.gt.s32.totalorder 0, %v4415
  %v4417 = vsel %vm4416, 0, %v4415
  %v4418 = vsub.s32 32, %v4417
  %v4419 = vshll.u32 %v4410, %v4417
  %v4420 = vshrl.u32 %v4402, %v4418
  %v4421 = vor.u32 %v4419, %v4420
  %v4422 = vsub.s32 4294967266, %v4417
  %v4423 = vadd.s32 %v4422, 127
  %v4424 = vshll.u32 %v4423, 23
  %v4425 = vor.u32 4788187, %v4424
  %v4426 = vand.u32 2147483647, %v4425
  %v4428 = vcvt.s32.f32 %v4421
  %v4429 = vmul.f32 %v4428, %v4426
  %v4430 = vxor.u32 %v4429, 2147483648
  %v4431 = vsel %vm4348, %v4430, %v4429
  %v4432 = vsub.s32 4, %v4408
  %v4433 = vsel %vm4348, %v4432, %v4408
  %v4434 = vsel %vm4347, %v574, %v4431
  %v4435 = vsel %vm4347, 0, %v4433
  %v4436 = vcosq.f32.pop %v4434
  %v4437 = vsinq.f32.pop %v4434
  %vm4438 = vweird.f32 %v574
  %v4439 = vadd.s32 %v4435, 3
  %v4440 = vand.u32 %v4439, 3
  %vm4441 = vcmp.lt.s32.totalorder %v4440, 2
  %vm4442 = vcmp.eq.s32.totalorder %v4440, 0
  %v4443 = vxor.u32 %v4437, 2147483648
  %v4444 = vsel %vm4442, %v4436, %v4443
  %vm4445 = vcmp.eq.s32.totalorder %v4440, 2
  %v4446 = vxor.u32 %v4436, 2147483648
  %v4447 = vsel %vm4445, %v4446, %v4437
  %v4448 = vsel %vm4441, %v4444, %v4447
  %v4449 = vsel %vm4438, nan, %v4448
  %v4450 = vand.u32 2147483647, %v575
  %vm4451 = vcmp.le.f32.partialorder %v4450, 0.7853982
  %vm4452 = vcmp.lt.s32.totalorder %v575, 0
  %v4453 = vand.u32 %v575, 2139095040
  %v4454 = vshrl.u32 %v4453, 23
  %v4455 = vsub.s32 %v4454, 127
  %v4456 = vand.u32 2147483647, %v575
  %v4457 = vand.u32 %v4456, 8388607
  %v4458 = vor.u32 %v4457, 8388608
  %v4459 = vsub.s32 0, %v4458
  %v4460 = vadd.s32 %v4455, 1
  %vm4461 = vcmp.gt.s32.totalorder %v4460, 0
  %v4462 = vsel %vm4461, %v4460, 0
  %v4463 = vshrl.u32 %v4462, 5
  %v4464 = vand.u32 %v4462, 31
  %v4465 = vsub.s32 32, %v4464
  %v4466 = vshrl.u32 683565275, %v4465
  %v4467 = vshll.u32 683565275, %v4464
  %v4468 = vshrl.u32 2475754826, %v4465
  %v4469 = vor.u32 %v4467, %v4468
  %v4470 = vshll.u32 2475754826, %v4464
  %v4471 = vshrl.u32 2131351028, %v4465
  %v4472 = vor.u32 %v4470, %v4471
  %v4473 = vshll.u32 2131351028, %v4464
  %v4474 = vshrl.u32 2102212464, %v4465
  %v4475 = vor.u32 %v4473, %v4474
  %v4476 = vshll.u32 2102212464, %v4464
  %v4477 = vshrl.u32 920167782, %v4465
  %v4478 = vor.u32 %v4476, %v4477
  %v4479 = vshll.u32 920167782, %v4464
  %v4480 = vshrl.u32 1326507024, %v4465
  %v4481 = vor.u32 %v4479, %v4480
  %vm4482 = vcmp.lt.s32.totalorder %v4463, 1
  %vm4483 = vcmp.lt.s32.totalorder %v4463, 2
  %vm4484 = vcmp.lt.s32.totalorder %v4463, 3
  %vm4485 = vcmp.lt.s32.totalorder %v4463, 4
  %v4486 = vsel %vm4482, %v4466, %v4469
  %v4487 = vsel %vm4485, %v4475, 2102212464
  %v4488 = vsel %vm4484, %v4472, %v4487
  %v4489 = vsel %vm4483, %v4486, %v4488
  %v4490 = vsel %vm4482, %v4469, %v4472
  %v4491 = vsel %vm4485, %v4478, 920167782
  %v4492 = vsel %vm4484, %v4475, %v4491
  %v4493 = vsel %vm4483, %v4490, %v4492
  %v4494 = vsel %vm4482, %v4472, %v4475
  %v4495 = vsel %vm4485, %v4481, 1326507024
  %v4496 = vsel %vm4484, %v4478, %v4495
  %v4497 = vsel %vm4483, %v4494, %v4496
  %v4498 = vshll.u32 %v4458, 8
  %v4499 = vmul.u32.u64.compose %v4498, %v4497
  %v4500 = vextract.low.u32 %v4499
  %v4501 = vextract.high.u32 %v4499
  %v4502 = vmul.u32.u64.compose %v4498, %v4493
  %v4503 = vextract.low.u32 %v4502
  %v4504 = vextract.high.u32 %v4502
  %v4505 = vmul.u32 %v4498, %v4489
  %v4506 = vadd.s32 %v4501, %v4503
  %vm4507 = vc.u32 %v4501, %v4503
  %v4508 = vadd.s32 %v4504, 1
  %v4509 = vsel %vm4507, %v4508, %v4504
  %v4510 = vadd.s32 %v4505, %v4509
  %v4511 = vadd.s32 %v4510, 536870912
  %v4512 = vshrl.u32 %v4511, 30
  %v4513 = vshll.u32 %v4512, 30
  %v4514 = vsub.s32 %v4510, %v4513
  %vm4515 = vcmp.lt.s32.totalorder %v4514, 0
  %v4516 = vsub.s32 0, %v4514
  %v4517 = vsel %vm4515, %v4516, %v4514
  %v4518 = vclz %v4517
  %v4519 = vsub.s32 %v4518, 2
  %vm4520 = vcmp.gt.s32.totalorder 0, %v4519
  %v4521 = vsel %vm4520, 0, %v4519
  %v4522 = vsub.s32 32, %v4521
  %v4523 = vshll.u32 %v4514, %v4521
  %v4524 = vshrl.u32 %v4506, %v4522
  %v4525 = vor.u32 %v4523, %v4524
  %v4526 = vsub.s32 4294967266, %v4521
  %v4527 = vadd.s32 %v4526, 127
  %v4528 = vshll.u32 %v4527, 23
  %v4529 = vor.u32 4788187, %v4528
  %v4530 = vand.u32 2147483647, %v4529
  %v4532 = vcvt.s32.f32 %v4525
  %v4533 = vmul.f32 %v4532, %v4530
  %v4534 = vxor.u32 %v4533, 2147483648
  %v4535 = vsel %vm4452, %v4534, %v4533
  %v4536 = vsub.s32 4, %v4512
  %v4537 = vsel %vm4452, %v4536, %v4512
  %v4538 = vsel %vm4451, %v575, %v4535
  %v4539 = vsel %vm4451, 0, %v4537
  %v4540 = vcosq.f32.pop %v4538
  %v4541 = vsinq.f32.pop %v4538
  %vm4542 = vweird.f32 %v575
  %v4543 = vadd.s32 %v4539, 3
  %v4544 = vand.u32 %v4543, 3
  %vm4545 = vcmp.lt.s32.totalorder %v4544, 2
  %vm4546 = vcmp.eq.s32.totalorder %v4544, 0
  %v4547 = vxor.u32 %v4541, 2147483648
  %v4548 = vsel %vm4546, %v4540, %v4547
  %vm4549 = vcmp.eq.s32.totalorder %v4544, 2
  %v4550 = vxor.u32 %v4540, 2147483648
  %v4551 = vsel %vm4549, %v4550, %v4541
  %v4552 = vsel %vm4545, %v4548, %v4551
  %v4553 = vsel %vm4542, nan, %v4552
  %v4554 = vand.u32 2147483647, %v576
  %vm4555 = vcmp.le.f32.partialorder %v4554, 0.7853982
  %vm4556 = vcmp.lt.s32.totalorder %v576, 0
  %v4557 = vand.u32 %v576, 2139095040
  %v4558 = vshrl.u32 %v4557, 23
  %v4559 = vsub.s32 %v4558, 127
  %v4560 = vand.u32 2147483647, %v576
  %v4561 = vand.u32 %v4560, 8388607
  %v4562 = vor.u32 %v4561, 8388608
  %v4563 = vsub.s32 0, %v4562
  %v4564 = vadd.s32 %v4559, 1
  %vm4565 = vcmp.gt.s32.totalorder %v4564, 0
  %v4566 = vsel %vm4565, %v4564, 0
  %v4567 = vshrl.u32 %v4566, 5
  %v4568 = vand.u32 %v4566, 31
  %v4569 = vsub.s32 32, %v4568
  %v4570 = vshrl.u32 683565275, %v4569
  %v4571 = vshll.u32 683565275, %v4568
  %v4572 = vshrl.u32 2475754826, %v4569
  %v4573 = vor.u32 %v4571, %v4572
  %v4574 = vshll.u32 2475754826, %v4568
  %v4575 = vshrl.u32 2131351028, %v4569
  %v4576 = vor.u32 %v4574, %v4575
  %v4577 = vshll.u32 2131351028, %v4568
  %v4578 = vshrl.u32 2102212464, %v4569
  %v4579 = vor.u32 %v4577, %v4578
  %v4580 = vshll.u32 2102212464, %v4568
  %v4581 = vshrl.u32 920167782, %v4569
  %v4582 = vor.u32 %v4580, %v4581
  %v4583 = vshll.u32 920167782, %v4568
  %v4584 = vshrl.u32 1326507024, %v4569
  %v4585 = vor.u32 %v4583, %v4584
  %vm4586 = vcmp.lt.s32.totalorder %v4567, 1
  %vm4587 = vcmp.lt.s32.totalorder %v4567, 2
  %vm4588 = vcmp.lt.s32.totalorder %v4567, 3
  %vm4589 = vcmp.lt.s32.totalorder %v4567, 4
  %v4590 = vsel %vm4586, %v4570, %v4573
  %v4591 = vsel %vm4589, %v4579, 2102212464
  %v4592 = vsel %vm4588, %v4576, %v4591
  %v4593 = vsel %vm4587, %v4590, %v4592
  %v4594 = vsel %vm4586, %v4573, %v4576
  %v4595 = vsel %vm4589, %v4582, 920167782
  %v4596 = vsel %vm4588, %v4579, %v4595
  %v4597 = vsel %vm4587, %v4594, %v4596
  %v4598 = vsel %vm4586, %v4576, %v4579
  %v4599 = vsel %vm4589, %v4585, 1326507024
  %v4600 = vsel %vm4588, %v4582, %v4599
  %v4601 = vsel %vm4587, %v4598, %v4600
  %v4602 = vshll.u32 %v4562, 8
  %v4603 = vmul.u32.u64.compose %v4602, %v4601
  %v4604 = vextract.low.u32 %v4603
  %v4605 = vextract.high.u32 %v4603
  %v4606 = vmul.u32.u64.compose %v4602, %v4597
  %v4607 = vextract.low.u32 %v4606
  %v4608 = vextract.high.u32 %v4606
  %v4609 = vmul.u32 %v4602, %v4593
  %v4610 = vadd.s32 %v4605, %v4607
  %vm4611 = vc.u32 %v4605, %v4607
  %v4612 = vadd.s32 %v4608, 1
  %v4613 = vsel %vm4611, %v4612, %v4608
  %v4614 = vadd.s32 %v4609, %v4613
  %v4615 = vadd.s32 %v4614, 536870912
  %v4616 = vshrl.u32 %v4615, 30
  %v4617 = vshll.u32 %v4616, 30
  %v4618 = vsub.s32 %v4614, %v4617
  %vm4619 = vcmp.lt.s32.totalorder %v4618, 0
  %v4620 = vsub.s32 0, %v4618
  %v4621 = vsel %vm4619, %v4620, %v4618
  %v4622 = vclz %v4621
  %v4623 = vsub.s32 %v4622, 2
  %vm4624 = vcmp.gt.s32.totalorder 0, %v4623
  %v4625 = vsel %vm4624, 0, %v4623
  %v4626 = vsub.s32 32, %v4625
  %v4627 = vshll.u32 %v4618, %v4625
  %v4628 = vshrl.u32 %v4610, %v4626
  %v4629 = vor.u32 %v4627, %v4628
  %v4630 = vsub.s32 4294967266, %v4625
  %v4631 = vadd.s32 %v4630, 127
  %v4632 = vshll.u32 %v4631, 23
  %v4633 = vor.u32 4788187, %v4632
  %v4634 = vand.u32 2147483647, %v4633
  %v4636 = vcvt.s32.f32 %v4629
  %v4637 = vmul.f32 %v4636, %v4634
  %v4638 = vxor.u32 %v4637, 2147483648
  %v4639 = vsel %vm4556, %v4638, %v4637
  %v4640 = vsub.s32 4, %v4616
  %v4641 = vsel %vm4556, %v4640, %v4616
  %v4642 = vsel %vm4555, %v576, %v4639
  %v4643 = vsel %vm4555, 0, %v4641
  %v4644 = vcosq.f32.pop %v4642
  %v4645 = vsinq.f32.pop %v4642
  %vm4646 = vweird.f32 %v576
  %v4647 = vadd.s32 %v4643, 3
  %v4648 = vand.u32 %v4647, 3
  %vm4649 = vcmp.lt.s32.totalorder %v4648, 2
  %vm4650 = vcmp.eq.s32.totalorder %v4648, 0
  %v4651 = vxor.u32 %v4645, 2147483648
  %v4652 = vsel %vm4650, %v4644, %v4651
  %vm4653 = vcmp.eq.s32.totalorder %v4648, 2
  %v4654 = vxor.u32 %v4644, 2147483648
  %v4655 = vsel %vm4653, %v4654, %v4645
  %v4656 = vsel %vm4649, %v4652, %v4655
  %v4657 = vsel %vm4646, nan, %v4656
  %v4658 = vand.u32 2147483647, %v577
  %vm4659 = vcmp.le.f32.partialorder %v4658, 0.7853982
  %vm4660 = vcmp.lt.s32.totalorder %v577, 0
  %v4661 = vand.u32 %v577, 2139095040
  %v4662 = vshrl.u32 %v4661, 23
  %v4663 = vsub.s32 %v4662, 127
  %v4664 = vand.u32 2147483647, %v577
  %v4665 = vand.u32 %v4664, 8388607
  %v4666 = vor.u32 %v4665, 8388608
  %v4667 = vsub.s32 0, %v4666
  %v4668 = vadd.s32 %v4663, 1
  %vm4669 = vcmp.gt.s32.totalorder %v4668, 0
  %v4670 = vsel %vm4669, %v4668, 0
  %v4671 = vshrl.u32 %v4670, 5
  %v4672 = vand.u32 %v4670, 31
  %v4673 = vsub.s32 32, %v4672
  %v4674 = vshrl.u32 683565275, %v4673
  %v4675 = vshll.u32 683565275, %v4672
  %v4676 = vshrl.u32 2475754826, %v4673
  %v4677 = vor.u32 %v4675, %v4676
  %v4678 = vshll.u32 2475754826, %v4672
  %v4679 = vshrl.u32 2131351028, %v4673
  %v4680 = vor.u32 %v4678, %v4679
  %v4681 = vshll.u32 2131351028, %v4672
  %v4682 = vshrl.u32 2102212464, %v4673
  %v4683 = vor.u32 %v4681, %v4682
  %v4684 = vshll.u32 2102212464, %v4672
  %v4685 = vshrl.u32 920167782, %v4673
  %v4686 = vor.u32 %v4684, %v4685
  %v4687 = vshll.u32 920167782, %v4672
  %v4688 = vshrl.u32 1326507024, %v4673
  %v4689 = vor.u32 %v4687, %v4688
  %vm4690 = vcmp.lt.s32.totalorder %v4671, 1
  %vm4691 = vcmp.lt.s32.totalorder %v4671, 2
  %vm4692 = vcmp.lt.s32.totalorder %v4671, 3
  %vm4693 = vcmp.lt.s32.totalorder %v4671, 4
  %v4694 = vsel %vm4690, %v4674, %v4677
  %v4695 = vsel %vm4693, %v4683, 2102212464
  %v4696 = vsel %vm4692, %v4680, %v4695
  %v4697 = vsel %vm4691, %v4694, %v4696
  %v4698 = vsel %vm4690, %v4677, %v4680
  %v4699 = vsel %vm4693, %v4686, 920167782
  %v4700 = vsel %vm4692, %v4683, %v4699
  %v4701 = vsel %vm4691, %v4698, %v4700
  %v4702 = vsel %vm4690, %v4680, %v4683
  %v4703 = vsel %vm4693, %v4689, 1326507024
  %v4704 = vsel %vm4692, %v4686, %v4703
  %v4705 = vsel %vm4691, %v4702, %v4704
  %v4706 = vshll.u32 %v4666, 8
  %v4707 = vmul.u32.u64.compose %v4706, %v4705
  %v4708 = vextract.low.u32 %v4707
  %v4709 = vextract.high.u32 %v4707
  %v4710 = vmul.u32.u64.compose %v4706, %v4701
  %v4711 = vextract.low.u32 %v4710
  %v4712 = vextract.high.u32 %v4710
  %v4713 = vmul.u32 %v4706, %v4697
  %v4714 = vadd.s32 %v4709, %v4711
  %vm4715 = vc.u32 %v4709, %v4711
  %v4716 = vadd.s32 %v4712, 1
  %v4717 = vsel %vm4715, %v4716, %v4712
  %v4718 = vadd.s32 %v4713, %v4717
  %v4719 = vadd.s32 %v4718, 536870912
  %v4720 = vshrl.u32 %v4719, 30
  %v4721 = vshll.u32 %v4720, 30
  %v4722 = vsub.s32 %v4718, %v4721
  %vm4723 = vcmp.lt.s32.totalorder %v4722, 0
  %v4724 = vsub.s32 0, %v4722
  %v4725 = vsel %vm4723, %v4724, %v4722
  %v4726 = vclz %v4725
  %v4727 = vsub.s32 %v4726, 2
  %vm4728 = vcmp.gt.s32.totalorder 0, %v4727
  %v4729 = vsel %vm4728, 0, %v4727
  %v4730 = vsub.s32 32, %v4729
  %v4731 = vshll.u32 %v4722, %v4729
  %v4732 = vshrl.u32 %v4714, %v4730
  %v4733 = vor.u32 %v4731, %v4732
  %v4734 = vsub.s32 4294967266, %v4729
  %v4735 = vadd.s32 %v4734, 127
  %v4736 = vshll.u32 %v4735, 23
  %v4737 = vor.u32 4788187, %v4736
  %v4738 = vand.u32 2147483647, %v4737
  %v4740 = vcvt.s32.f32 %v4733
  %v4741 = vmul.f32 %v4740, %v4738
  %v4742 = vxor.u32 %v4741, 2147483648
  %v4743 = vsel %vm4660, %v4742, %v4741
  %v4744 = vsub.s32 4, %v4720
  %v4745 = vsel %vm4660, %v4744, %v4720
  %v4746 = vsel %vm4659, %v577, %v4743
  %v4747 = vsel %vm4659, 0, %v4745
  %v4748 = vcosq.f32.pop %v4746
  %v4749 = vsinq.f32.pop %v4746
  %vm4750 = vweird.f32 %v577
  %v4751 = vadd.s32 %v4747, 3
  %v4752 = vand.u32 %v4751, 3
  %vm4753 = vcmp.lt.s32.totalorder %v4752, 2
  %vm4754 = vcmp.eq.s32.totalorder %v4752, 0
  %v4755 = vxor.u32 %v4749, 2147483648
  %v4756 = vsel %vm4754, %v4748, %v4755
  %vm4757 = vcmp.eq.s32.totalorder %v4752, 2
  %v4758 = vxor.u32 %v4748, 2147483648
  %v4759 = vsel %vm4757, %v4758, %v4749
  %v4760 = vsel %vm4753, %v4756, %v4759
  %v4761 = vsel %vm4750, nan, %v4760
  %v4762 = vand.u32 2147483647, %v578
  %vm4763 = vcmp.le.f32.partialorder %v4762, 0.7853982
  %vm4764 = vcmp.lt.s32.totalorder %v578, 0
  %v4765 = vand.u32 %v578, 2139095040
  %v4766 = vshrl.u32 %v4765, 23
  %v4767 = vsub.s32 %v4766, 127
  %v4768 = vand.u32 2147483647, %v578
  %v4769 = vand.u32 %v4768, 8388607
  %v4770 = vor.u32 %v4769, 8388608
  %v4771 = vsub.s32 0, %v4770
  %v4772 = vadd.s32 %v4767, 1
  %vm4773 = vcmp.gt.s32.totalorder %v4772, 0
  %v4774 = vsel %vm4773, %v4772, 0
  %v4775 = vshrl.u32 %v4774, 5
  %v4776 = vand.u32 %v4774, 31
  %v4777 = vsub.s32 32, %v4776
  %v4778 = vshrl.u32 683565275, %v4777
  %v4779 = vshll.u32 683565275, %v4776
  %v4780 = vshrl.u32 2475754826, %v4777
  %v4781 = vor.u32 %v4779, %v4780
  %v4782 = vshll.u32 2475754826, %v4776
  %v4783 = vshrl.u32 2131351028, %v4777
  %v4784 = vor.u32 %v4782, %v4783
  %v4785 = vshll.u32 2131351028, %v4776
  %v4786 = vshrl.u32 2102212464, %v4777
  %v4787 = vor.u32 %v4785, %v4786
  %v4788 = vshll.u32 2102212464, %v4776
  %v4789 = vshrl.u32 920167782, %v4777
  %v4790 = vor.u32 %v4788, %v4789
  %v4791 = vshll.u32 920167782, %v4776
  %v4792 = vshrl.u32 1326507024, %v4777
  %v4793 = vor.u32 %v4791, %v4792
  %vm4794 = vcmp.lt.s32.totalorder %v4775, 1
  %vm4795 = vcmp.lt.s32.totalorder %v4775, 2
  %vm4796 = vcmp.lt.s32.totalorder %v4775, 3
  %vm4797 = vcmp.lt.s32.totalorder %v4775, 4
  %v4798 = vsel %vm4794, %v4778, %v4781
  %v4799 = vsel %vm4797, %v4787, 2102212464
  %v4800 = vsel %vm4796, %v4784, %v4799
  %v4801 = vsel %vm4795, %v4798, %v4800
  %v4802 = vsel %vm4794, %v4781, %v4784
  %v4803 = vsel %vm4797, %v4790, 920167782
  %v4804 = vsel %vm4796, %v4787, %v4803
  %v4805 = vsel %vm4795, %v4802, %v4804
  %v4806 = vsel %vm4794, %v4784, %v4787
  %v4807 = vsel %vm4797, %v4793, 1326507024
  %v4808 = vsel %vm4796, %v4790, %v4807
  %v4809 = vsel %vm4795, %v4806, %v4808
  %v4810 = vshll.u32 %v4770, 8
  %v4811 = vmul.u32.u64.compose %v4810, %v4809
  %v4812 = vextract.low.u32 %v4811
  %v4813 = vextract.high.u32 %v4811
  %v4814 = vmul.u32.u64.compose %v4810, %v4805
  %v4815 = vextract.low.u32 %v4814
  %v4816 = vextract.high.u32 %v4814
  %v4817 = vmul.u32 %v4810, %v4801
  %v4818 = vadd.s32 %v4813, %v4815
  %vm4819 = vc.u32 %v4813, %v4815
  %v4820 = vadd.s32 %v4816, 1
  %v4821 = vsel %vm4819, %v4820, %v4816
  %v4822 = vadd.s32 %v4817, %v4821
  %v4823 = vadd.s32 %v4822, 536870912
  %v4824 = vshrl.u32 %v4823, 30
  %v4825 = vshll.u32 %v4824, 30
  %v4826 = vsub.s32 %v4822, %v4825
  %vm4827 = vcmp.lt.s32.totalorder %v4826, 0
  %v4828 = vsub.s32 0, %v4826
  %v4829 = vsel %vm4827, %v4828, %v4826
  %v4830 = vclz %v4829
  %v4831 = vsub.s32 %v4830, 2
  %vm4832 = vcmp.gt.s32.totalorder 0, %v4831
  %v4833 = vsel %vm4832, 0, %v4831
  %v4834 = vsub.s32 32, %v4833
  %v4835 = vshll.u32 %v4826, %v4833
  %v4836 = vshrl.u32 %v4818, %v4834
  %v4837 = vor.u32 %v4835, %v4836
  %v4838 = vsub.s32 4294967266, %v4833
  %v4839 = vadd.s32 %v4838, 127
  %v4840 = vshll.u32 %v4839, 23
  %v4841 = vor.u32 4788187, %v4840
  %v4842 = vand.u32 2147483647, %v4841
  %v4844 = vcvt.s32.f32 %v4837
  %v4845 = vmul.f32 %v4844, %v4842
  %v4846 = vxor.u32 %v4845, 2147483648
  %v4847 = vsel %vm4764, %v4846, %v4845
  %v4848 = vsub.s32 4, %v4824
  %v4849 = vsel %vm4764, %v4848, %v4824
  %v4850 = vsel %vm4763, %v578, %v4847
  %v4851 = vsel %vm4763, 0, %v4849
  %v4852 = vcosq.f32.pop %v4850
  %v4853 = vsinq.f32.pop %v4850
  %vm4854 = vweird.f32 %v578
  %v4855 = vadd.s32 %v4851, 3
  %v4856 = vand.u32 %v4855, 3
  %vm4857 = vcmp.lt.s32.totalorder %v4856, 2
  %vm4858 = vcmp.eq.s32.totalorder %v4856, 0
  %v4859 = vxor.u32 %v4853, 2147483648
  %v4860 = vsel %vm4858, %v4852, %v4859
  %vm4861 = vcmp.eq.s32.totalorder %v4856, 2
  %v4862 = vxor.u32 %v4852, 2147483648
  %v4863 = vsel %vm4861, %v4862, %v4853
  %v4864 = vsel %vm4857, %v4860, %v4863
  %v4865 = vsel %vm4854, nan, %v4864
  %v4866 = vand.u32 2147483647, %v579
  %vm4867 = vcmp.le.f32.partialorder %v4866, 0.7853982
  %vm4868 = vcmp.lt.s32.totalorder %v579, 0
  %v4869 = vand.u32 %v579, 2139095040
  %v4870 = vshrl.u32 %v4869, 23
  %v4871 = vsub.s32 %v4870, 127
  %v4872 = vand.u32 2147483647, %v579
  %v4873 = vand.u32 %v4872, 8388607
  %v4874 = vor.u32 %v4873, 8388608
  %v4875 = vsub.s32 0, %v4874
  %v4876 = vadd.s32 %v4871, 1
  %vm4877 = vcmp.gt.s32.totalorder %v4876, 0
  %v4878 = vsel %vm4877, %v4876, 0
  %v4879 = vshrl.u32 %v4878, 5
  %v4880 = vand.u32 %v4878, 31
  %v4881 = vsub.s32 32, %v4880
  %v4882 = vshrl.u32 683565275, %v4881
  %v4883 = vshll.u32 683565275, %v4880
  %v4884 = vshrl.u32 2475754826, %v4881
  %v4885 = vor.u32 %v4883, %v4884
  %v4886 = vshll.u32 2475754826, %v4880
  %v4887 = vshrl.u32 2131351028, %v4881
  %v4888 = vor.u32 %v4886, %v4887
  %v4889 = vshll.u32 2131351028, %v4880
  %v4890 = vshrl.u32 2102212464, %v4881
  %v4891 = vor.u32 %v4889, %v4890
  %v4892 = vshll.u32 2102212464, %v4880
  %v4893 = vshrl.u32 920167782, %v4881
  %v4894 = vor.u32 %v4892, %v4893
  %v4895 = vshll.u32 920167782, %v4880
  %v4896 = vshrl.u32 1326507024, %v4881
  %v4897 = vor.u32 %v4895, %v4896
  %vm4898 = vcmp.lt.s32.totalorder %v4879, 1
  %vm4899 = vcmp.lt.s32.totalorder %v4879, 2
  %vm4900 = vcmp.lt.s32.totalorder %v4879, 3
  %vm4901 = vcmp.lt.s32.totalorder %v4879, 4
  %v4902 = vsel %vm4898, %v4882, %v4885
  %v4903 = vsel %vm4901, %v4891, 2102212464
  %v4904 = vsel %vm4900, %v4888, %v4903
  %v4905 = vsel %vm4899, %v4902, %v4904
  %v4906 = vsel %vm4898, %v4885, %v4888
  %v4907 = vsel %vm4901, %v4894, 920167782
  %v4908 = vsel %vm4900, %v4891, %v4907
  %v4909 = vsel %vm4899, %v4906, %v4908
  %v4910 = vsel %vm4898, %v4888, %v4891
  %v4911 = vsel %vm4901, %v4897, 1326507024
  %v4912 = vsel %vm4900, %v4894, %v4911
  %v4913 = vsel %vm4899, %v4910, %v4912
  %v4914 = vshll.u32 %v4874, 8
  %v4915 = vmul.u32.u64.compose %v4914, %v4913
  %v4916 = vextract.low.u32 %v4915
  %v4917 = vextract.high.u32 %v4915
  %v4918 = vmul.u32.u64.compose %v4914, %v4909
  %v4919 = vextract.low.u32 %v4918
  %v4920 = vextract.high.u32 %v4918
  %v4921 = vmul.u32 %v4914, %v4905
  %v4922 = vadd.s32 %v4917, %v4919
  %vm4923 = vc.u32 %v4917, %v4919
  %v4924 = vadd.s32 %v4920, 1
  %v4925 = vsel %vm4923, %v4924, %v4920
  %v4926 = vadd.s32 %v4921, %v4925
  %v4927 = vadd.s32 %v4926, 536870912
  %v4928 = vshrl.u32 %v4927, 30
  %v4929 = vshll.u32 %v4928, 30
  %v4930 = vsub.s32 %v4926, %v4929
  %vm4931 = vcmp.lt.s32.totalorder %v4930, 0
  %v4932 = vsub.s32 0, %v4930
  %v4933 = vsel %vm4931, %v4932, %v4930
  %v4934 = vclz %v4933
  %v4935 = vsub.s32 %v4934, 2
  %vm4936 = vcmp.gt.s32.totalorder 0, %v4935
  %v4937 = vsel %vm4936, 0, %v4935
  %v4938 = vsub.s32 32, %v4937
  %v4939 = vshll.u32 %v4930, %v4937
  %v4940 = vshrl.u32 %v4922, %v4938
  %v4941 = vor.u32 %v4939, %v4940
  %v4942 = vsub.s32 4294967266, %v4937
  %v4943 = vadd.s32 %v4942, 127
  %v4944 = vshll.u32 %v4943, 23
  %v4945 = vor.u32 4788187, %v4944
  %v4946 = vand.u32 2147483647, %v4945
  %v4948 = vcvt.s32.f32 %v4941
  %v4949 = vmul.f32 %v4948, %v4946
  %v4950 = vxor.u32 %v4949, 2147483648
  %v4951 = vsel %vm4868, %v4950, %v4949
  %v4952 = vsub.s32 4, %v4928
  %v4953 = vsel %vm4868, %v4952, %v4928
  %v4954 = vsel %vm4867, %v579, %v4951
  %v4955 = vsel %vm4867, 0, %v4953
  %v4956 = vcosq.f32.pop %v4954
  %v4957 = vsinq.f32.pop %v4954
  %vm4958 = vweird.f32 %v579
  %v4959 = vadd.s32 %v4955, 3
  %v4960 = vand.u32 %v4959, 3
  %vm4961 = vcmp.lt.s32.totalorder %v4960, 2
  %vm4962 = vcmp.eq.s32.totalorder %v4960, 0
  %v4963 = vxor.u32 %v4957, 2147483648
  %v4964 = vsel %vm4962, %v4956, %v4963
  %vm4965 = vcmp.eq.s32.totalorder %v4960, 2
  %v4966 = vxor.u32 %v4956, 2147483648
  %v4967 = vsel %vm4965, %v4966, %v4957
  %v4968 = vsel %vm4961, %v4964, %v4967
  %v4969 = vsel %vm4958, nan, %v4968
  %v4970 = vand.u32 2147483647, %v580
  %vm4971 = vcmp.le.f32.partialorder %v4970, 0.7853982
  %vm4972 = vcmp.lt.s32.totalorder %v580, 0
  %v4973 = vand.u32 %v580, 2139095040
  %v4974 = vshrl.u32 %v4973, 23
  %v4975 = vsub.s32 %v4974, 127
  %v4976 = vand.u32 2147483647, %v580
  %v4977 = vand.u32 %v4976, 8388607
  %v4978 = vor.u32 %v4977, 8388608
  %v4979 = vsub.s32 0, %v4978
  %v4980 = vadd.s32 %v4975, 1
  %vm4981 = vcmp.gt.s32.totalorder %v4980, 0
  %v4982 = vsel %vm4981, %v4980, 0
  %v4983 = vshrl.u32 %v4982, 5
  %v4984 = vand.u32 %v4982, 31
  %v4985 = vsub.s32 32, %v4984
  %v4986 = vshrl.u32 683565275, %v4985
  %v4987 = vshll.u32 683565275, %v4984
  %v4988 = vshrl.u32 2475754826, %v4985
  %v4989 = vor.u32 %v4987, %v4988
  %v4990 = vshll.u32 2475754826, %v4984
  %v4991 = vshrl.u32 2131351028, %v4985
  %v4992 = vor.u32 %v4990, %v4991
  %v4993 = vshll.u32 2131351028, %v4984
  %v4994 = vshrl.u32 2102212464, %v4985
  %v4995 = vor.u32 %v4993, %v4994
  %v4996 = vshll.u32 2102212464, %v4984
  %v4997 = vshrl.u32 920167782, %v4985
  %v4998 = vor.u32 %v4996, %v4997
  %v4999 = vshll.u32 920167782, %v4984
  %v5000 = vshrl.u32 1326507024, %v4985
  %v5001 = vor.u32 %v4999, %v5000
  %vm5002 = vcmp.lt.s32.totalorder %v4983, 1
  %vm5003 = vcmp.lt.s32.totalorder %v4983, 2
  %vm5004 = vcmp.lt.s32.totalorder %v4983, 3
  %vm5005 = vcmp.lt.s32.totalorder %v4983, 4
  %v5006 = vsel %vm5002, %v4986, %v4989
  %v5007 = vsel %vm5005, %v4995, 2102212464
  %v5008 = vsel %vm5004, %v4992, %v5007
  %v5009 = vsel %vm5003, %v5006, %v5008
  %v5010 = vsel %vm5002, %v4989, %v4992
  %v5011 = vsel %vm5005, %v4998, 920167782
  %v5012 = vsel %vm5004, %v4995, %v5011
  %v5013 = vsel %vm5003, %v5010, %v5012
  %v5014 = vsel %vm5002, %v4992, %v4995
  %v5015 = vsel %vm5005, %v5001, 1326507024
  %v5016 = vsel %vm5004, %v4998, %v5015
  %v5017 = vsel %vm5003, %v5014, %v5016
  %v5018 = vshll.u32 %v4978, 8
  %v5019 = vmul.u32.u64.compose %v5018, %v5017
  %v5020 = vextract.low.u32 %v5019
  %v5021 = vextract.high.u32 %v5019
  %v5022 = vmul.u32.u64.compose %v5018, %v5013
  %v5023 = vextract.low.u32 %v5022
  %v5024 = vextract.high.u32 %v5022
  %v5025 = vmul.u32 %v5018, %v5009
  %v5026 = vadd.s32 %v5021, %v5023
  %vm5027 = vc.u32 %v5021, %v5023
  %v5028 = vadd.s32 %v5024, 1
  %v5029 = vsel %vm5027, %v5028, %v5024
  %v5030 = vadd.s32 %v5025, %v5029
  %v5031 = vadd.s32 %v5030, 536870912
  %v5032 = vshrl.u32 %v5031, 30
  %v5033 = vshll.u32 %v5032, 30
  %v5034 = vsub.s32 %v5030, %v5033
  %vm5035 = vcmp.lt.s32.totalorder %v5034, 0
  %v5036 = vsub.s32 0, %v5034
  %v5037 = vsel %vm5035, %v5036, %v5034
  %v5038 = vclz %v5037
  %v5039 = vsub.s32 %v5038, 2
  %vm5040 = vcmp.gt.s32.totalorder 0, %v5039
  %v5041 = vsel %vm5040, 0, %v5039
  %v5042 = vsub.s32 32, %v5041
  %v5043 = vshll.u32 %v5034, %v5041
  %v5044 = vshrl.u32 %v5026, %v5042
  %v5045 = vor.u32 %v5043, %v5044
  %v5046 = vsub.s32 4294967266, %v5041
  %v5047 = vadd.s32 %v5046, 127
  %v5048 = vshll.u32 %v5047, 23
  %v5049 = vor.u32 4788187, %v5048
  %v5050 = vand.u32 2147483647, %v5049
  %v5052 = vcvt.s32.f32 %v5045
  %v5053 = vmul.f32 %v5052, %v5050
  %v5054 = vxor.u32 %v5053, 2147483648
  %v5055 = vsel %vm4972, %v5054, %v5053
  %v5056 = vsub.s32 4, %v5032
  %v5057 = vsel %vm4972, %v5056, %v5032
  %v5058 = vsel %vm4971, %v580, %v5055
  %v5059 = vsel %vm4971, 0, %v5057
  %v5060 = vcosq.f32.pop %v5058
  %v5061 = vsinq.f32.pop %v5058
  %vm5062 = vweird.f32 %v580
  %v5063 = vadd.s32 %v5059, 3
  %v5064 = vand.u32 %v5063, 3
  %vm5065 = vcmp.lt.s32.totalorder %v5064, 2
  %vm5066 = vcmp.eq.s32.totalorder %v5064, 0
  %v5067 = vxor.u32 %v5061, 2147483648
  %v5068 = vsel %vm5066, %v5060, %v5067
  %vm5069 = vcmp.eq.s32.totalorder %v5064, 2
  %v5070 = vxor.u32 %v5060, 2147483648
  %v5071 = vsel %vm5069, %v5070, %v5061
  %v5072 = vsel %vm5065, %v5068, %v5071
  %v5073 = vsel %vm5062, nan, %v5072
  %v5074 = vand.u32 2147483647, %v581
  %vm5075 = vcmp.le.f32.partialorder %v5074, 0.7853982
  %vm5076 = vcmp.lt.s32.totalorder %v581, 0
  %v5077 = vand.u32 %v581, 2139095040
  %v5078 = vshrl.u32 %v5077, 23
  %v5079 = vsub.s32 %v5078, 127
  %v5080 = vand.u32 2147483647, %v581
  %v5081 = vand.u32 %v5080, 8388607
  %v5082 = vor.u32 %v5081, 8388608
  %v5083 = vsub.s32 0, %v5082
  %v5084 = vadd.s32 %v5079, 1
  %vm5085 = vcmp.gt.s32.totalorder %v5084, 0
  %v5086 = vsel %vm5085, %v5084, 0
  %v5087 = vshrl.u32 %v5086, 5
  %v5088 = vand.u32 %v5086, 31
  %v5089 = vsub.s32 32, %v5088
  %v5090 = vshrl.u32 683565275, %v5089
  %v5091 = vshll.u32 683565275, %v5088
  %v5092 = vshrl.u32 2475754826, %v5089
  %v5093 = vor.u32 %v5091, %v5092
  %v5094 = vshll.u32 2475754826, %v5088
  %v5095 = vshrl.u32 2131351028, %v5089
  %v5096 = vor.u32 %v5094, %v5095
  %v5097 = vshll.u32 2131351028, %v5088
  %v5098 = vshrl.u32 2102212464, %v5089
  %v5099 = vor.u32 %v5097, %v5098
  %v5100 = vshll.u32 2102212464, %v5088
  %v5101 = vshrl.u32 920167782, %v5089
  %v5102 = vor.u32 %v5100, %v5101
  %v5103 = vshll.u32 920167782, %v5088
  %v5104 = vshrl.u32 1326507024, %v5089
  %v5105 = vor.u32 %v5103, %v5104
  %vm5106 = vcmp.lt.s32.totalorder %v5087, 1
  %vm5107 = vcmp.lt.s32.totalorder %v5087, 2
  %vm5108 = vcmp.lt.s32.totalorder %v5087, 3
  %vm5109 = vcmp.lt.s32.totalorder %v5087, 4
  %v5110 = vsel %vm5106, %v5090, %v5093
  %v5111 = vsel %vm5109, %v5099, 2102212464
  %v5112 = vsel %vm5108, %v5096, %v5111
  %v5113 = vsel %vm5107, %v5110, %v5112
  %v5114 = vsel %vm5106, %v5093, %v5096
  %v5115 = vsel %vm5109, %v5102, 920167782
  %v5116 = vsel %vm5108, %v5099, %v5115
  %v5117 = vsel %vm5107, %v5114, %v5116
  %v5118 = vsel %vm5106, %v5096, %v5099
  %v5119 = vsel %vm5109, %v5105, 1326507024
  %v5120 = vsel %vm5108, %v5102, %v5119
  %v5121 = vsel %vm5107, %v5118, %v5120
  %v5122 = vshll.u32 %v5082, 8
  %v5123 = vmul.u32.u64.compose %v5122, %v5121
  %v5124 = vextract.low.u32 %v5123
  %v5125 = vextract.high.u32 %v5123
  %v5126 = vmul.u32.u64.compose %v5122, %v5117
  %v5127 = vextract.low.u32 %v5126
  %v5128 = vextract.high.u32 %v5126
  %v5129 = vmul.u32 %v5122, %v5113
  %v5130 = vadd.s32 %v5125, %v5127
  %vm5131 = vc.u32 %v5125, %v5127
  %v5132 = vadd.s32 %v5128, 1
  %v5133 = vsel %vm5131, %v5132, %v5128
  %v5134 = vadd.s32 %v5129, %v5133
  %v5135 = vadd.s32 %v5134, 536870912
  %v5136 = vshrl.u32 %v5135, 30
  %v5137 = vshll.u32 %v5136, 30
  %v5138 = vsub.s32 %v5134, %v5137
  %vm5139 = vcmp.lt.s32.totalorder %v5138, 0
  %v5140 = vsub.s32 0, %v5138
  %v5141 = vsel %vm5139, %v5140, %v5138
  %v5142 = vclz %v5141
  %v5143 = vsub.s32 %v5142, 2
  %vm5144 = vcmp.gt.s32.totalorder 0, %v5143
  %v5145 = vsel %vm5144, 0, %v5143
  %v5146 = vsub.s32 32, %v5145
  %v5147 = vshll.u32 %v5138, %v5145
  %v5148 = vshrl.u32 %v5130, %v5146
  %v5149 = vor.u32 %v5147, %v5148
  %v5150 = vsub.s32 4294967266, %v5145
  %v5151 = vadd.s32 %v5150, 127
  %v5152 = vshll.u32 %v5151, 23
  %v5153 = vor.u32 4788187, %v5152
  %v5154 = vand.u32 2147483647, %v5153
  %v5156 = vcvt.s32.f32 %v5149
  %v5157 = vmul.f32 %v5156, %v5154
  %v5158 = vxor.u32 %v5157, 2147483648
  %v5159 = vsel %vm5076, %v5158, %v5157
  %v5160 = vsub.s32 4, %v5136
  %v5161 = vsel %vm5076, %v5160, %v5136
  %v5162 = vsel %vm5075, %v581, %v5159
  %v5163 = vsel %vm5075, 0, %v5161
  %v5164 = vcosq.f32.pop %v5162
  %v5165 = vsinq.f32.pop %v5162
  %vm5166 = vweird.f32 %v581
  %v5167 = vadd.s32 %v5163, 3
  %v5168 = vand.u32 %v5167, 3
  %vm5169 = vcmp.lt.s32.totalorder %v5168, 2
  %vm5170 = vcmp.eq.s32.totalorder %v5168, 0
  %v5171 = vxor.u32 %v5165, 2147483648
  %v5172 = vsel %vm5170, %v5164, %v5171
  %vm5173 = vcmp.eq.s32.totalorder %v5168, 2
  %v5174 = vxor.u32 %v5164, 2147483648
  %v5175 = vsel %vm5173, %v5174, %v5165
  %v5176 = vsel %vm5169, %v5172, %v5175
  %v5177 = vsel %vm5166, nan, %v5176
  %v5178 = vand.u32 2147483647, %v582
  %vm5179 = vcmp.le.f32.partialorder %v5178, 0.7853982
  %vm5180 = vcmp.lt.s32.totalorder %v582, 0
  %v5181 = vand.u32 %v582, 2139095040
  %v5182 = vshrl.u32 %v5181, 23
  %v5183 = vsub.s32 %v5182, 127
  %v5184 = vand.u32 2147483647, %v582
  %v5185 = vand.u32 %v5184, 8388607
  %v5186 = vor.u32 %v5185, 8388608
  %v5187 = vsub.s32 0, %v5186
  %v5188 = vadd.s32 %v5183, 1
  %vm5189 = vcmp.gt.s32.totalorder %v5188, 0
  %v5190 = vsel %vm5189, %v5188, 0
  %v5191 = vshrl.u32 %v5190, 5
  %v5192 = vand.u32 %v5190, 31
  %v5193 = vsub.s32 32, %v5192
  %v5194 = vshrl.u32 683565275, %v5193
  %v5195 = vshll.u32 683565275, %v5192
  %v5196 = vshrl.u32 2475754826, %v5193
  %v5197 = vor.u32 %v5195, %v5196
  %v5198 = vshll.u32 2475754826, %v5192
  %v5199 = vshrl.u32 2131351028, %v5193
  %v5200 = vor.u32 %v5198, %v5199
  %v5201 = vshll.u32 2131351028, %v5192
  %v5202 = vshrl.u32 2102212464, %v5193
  %v5203 = vor.u32 %v5201, %v5202
  %v5204 = vshll.u32 2102212464, %v5192
  %v5205 = vshrl.u32 920167782, %v5193
  %v5206 = vor.u32 %v5204, %v5205
  %v5207 = vshll.u32 920167782, %v5192
  %v5208 = vshrl.u32 1326507024, %v5193
  %v5209 = vor.u32 %v5207, %v5208
  %vm5210 = vcmp.lt.s32.totalorder %v5191, 1
  %vm5211 = vcmp.lt.s32.totalorder %v5191, 2
  %vm5212 = vcmp.lt.s32.totalorder %v5191, 3
  %vm5213 = vcmp.lt.s32.totalorder %v5191, 4
  %v5214 = vsel %vm5210, %v5194, %v5197
  %v5215 = vsel %vm5213, %v5203, 2102212464
  %v5216 = vsel %vm5212, %v5200, %v5215
  %v5217 = vsel %vm5211, %v5214, %v5216
  %v5218 = vsel %vm5210, %v5197, %v5200
  %v5219 = vsel %vm5213, %v5206, 920167782
  %v5220 = vsel %vm5212, %v5203, %v5219
  %v5221 = vsel %vm5211, %v5218, %v5220
  %v5222 = vsel %vm5210, %v5200, %v5203
  %v5223 = vsel %vm5213, %v5209, 1326507024
  %v5224 = vsel %vm5212, %v5206, %v5223
  %v5225 = vsel %vm5211, %v5222, %v5224
  %v5226 = vshll.u32 %v5186, 8
  %v5227 = vmul.u32.u64.compose %v5226, %v5225
  %v5228 = vextract.low.u32 %v5227
  %v5229 = vextract.high.u32 %v5227
  %v5230 = vmul.u32.u64.compose %v5226, %v5221
  %v5231 = vextract.low.u32 %v5230
  %v5232 = vextract.high.u32 %v5230
  %v5233 = vmul.u32 %v5226, %v5217
  %v5234 = vadd.s32 %v5229, %v5231
  %vm5235 = vc.u32 %v5229, %v5231
  %v5236 = vadd.s32 %v5232, 1
  %v5237 = vsel %vm5235, %v5236, %v5232
  %v5238 = vadd.s32 %v5233, %v5237
  %v5239 = vadd.s32 %v5238, 536870912
  %v5240 = vshrl.u32 %v5239, 30
  %v5241 = vshll.u32 %v5240, 30
  %v5242 = vsub.s32 %v5238, %v5241
  %vm5243 = vcmp.lt.s32.totalorder %v5242, 0
  %v5244 = vsub.s32 0, %v5242
  %v5245 = vsel %vm5243, %v5244, %v5242
  %v5246 = vclz %v5245
  %v5247 = vsub.s32 %v5246, 2
  %vm5248 = vcmp.gt.s32.totalorder 0, %v5247
  %v5249 = vsel %vm5248, 0, %v5247
  %v5250 = vsub.s32 32, %v5249
  %v5251 = vshll.u32 %v5242, %v5249
  %v5252 = vshrl.u32 %v5234, %v5250
  %v5253 = vor.u32 %v5251, %v5252
  %v5254 = vsub.s32 4294967266, %v5249
  %v5255 = vadd.s32 %v5254, 127
  %v5256 = vshll.u32 %v5255, 23
  %v5257 = vor.u32 4788187, %v5256
  %v5258 = vand.u32 2147483647, %v5257
  %v5260 = vcvt.s32.f32 %v5253
  %v5261 = vmul.f32 %v5260, %v5258
  %v5262 = vxor.u32 %v5261, 2147483648
  %v5263 = vsel %vm5180, %v5262, %v5261
  %v5264 = vsub.s32 4, %v5240
  %v5265 = vsel %vm5180, %v5264, %v5240
  %v5266 = vsel %vm5179, %v582, %v5263
  %v5267 = vsel %vm5179, 0, %v5265
  %v5268 = vcosq.f32.pop %v5266
  %v5269 = vsinq.f32.pop %v5266
  %vm5270 = vweird.f32 %v582
  %v5271 = vadd.s32 %v5267, 3
  %v5272 = vand.u32 %v5271, 3
  %vm5273 = vcmp.lt.s32.totalorder %v5272, 2
  %vm5274 = vcmp.eq.s32.totalorder %v5272, 0
  %v5275 = vxor.u32 %v5269, 2147483648
  %v5276 = vsel %vm5274, %v5268, %v5275
  %vm5277 = vcmp.eq.s32.totalorder %v5272, 2
  %v5278 = vxor.u32 %v5268, 2147483648
  %v5279 = vsel %vm5277, %v5278, %v5269
  %v5280 = vsel %vm5273, %v5276, %v5279
  %v5281 = vsel %vm5270, nan, %v5280
  %v5282 = vand.u32 2147483647, %v583
  %vm5283 = vcmp.le.f32.partialorder %v5282, 0.7853982
  %vm5284 = vcmp.lt.s32.totalorder %v583, 0
  %v5285 = vand.u32 %v583, 2139095040
  %v5286 = vshrl.u32 %v5285, 23
  %v5287 = vsub.s32 %v5286, 127
  %v5288 = vand.u32 2147483647, %v583
  %v5289 = vand.u32 %v5288, 8388607
  %v5290 = vor.u32 %v5289, 8388608
  %v5291 = vsub.s32 0, %v5290
  %v5292 = vadd.s32 %v5287, 1
  %vm5293 = vcmp.gt.s32.totalorder %v5292, 0
  %v5294 = vsel %vm5293, %v5292, 0
  %v5295 = vshrl.u32 %v5294, 5
  %v5296 = vand.u32 %v5294, 31
  %v5297 = vsub.s32 32, %v5296
  %v5298 = vshrl.u32 683565275, %v5297
  %v5299 = vshll.u32 683565275, %v5296
  %v5300 = vshrl.u32 2475754826, %v5297
  %v5301 = vor.u32 %v5299, %v5300
  %v5302 = vshll.u32 2475754826, %v5296
  %v5303 = vshrl.u32 2131351028, %v5297
  %v5304 = vor.u32 %v5302, %v5303
  %v5305 = vshll.u32 2131351028, %v5296
  %v5306 = vshrl.u32 2102212464, %v5297
  %v5307 = vor.u32 %v5305, %v5306
  %v5308 = vshll.u32 2102212464, %v5296
  %v5309 = vshrl.u32 920167782, %v5297
  %v5310 = vor.u32 %v5308, %v5309
  %v5311 = vshll.u32 920167782, %v5296
  %v5312 = vshrl.u32 1326507024, %v5297
  %v5313 = vor.u32 %v5311, %v5312
  %vm5314 = vcmp.lt.s32.totalorder %v5295, 1
  %vm5315 = vcmp.lt.s32.totalorder %v5295, 2
  %vm5316 = vcmp.lt.s32.totalorder %v5295, 3
  %vm5317 = vcmp.lt.s32.totalorder %v5295, 4
  %v5318 = vsel %vm5314, %v5298, %v5301
  %v5319 = vsel %vm5317, %v5307, 2102212464
  %v5320 = vsel %vm5316, %v5304, %v5319
  %v5321 = vsel %vm5315, %v5318, %v5320
  %v5322 = vsel %vm5314, %v5301, %v5304
  %v5323 = vsel %vm5317, %v5310, 920167782
  %v5324 = vsel %vm5316, %v5307, %v5323
  %v5325 = vsel %vm5315, %v5322, %v5324
  %v5326 = vsel %vm5314, %v5304, %v5307
  %v5327 = vsel %vm5317, %v5313, 1326507024
  %v5328 = vsel %vm5316, %v5310, %v5327
  %v5329 = vsel %vm5315, %v5326, %v5328
  %v5330 = vshll.u32 %v5290, 8
  %v5331 = vmul.u32.u64.compose %v5330, %v5329
  %v5332 = vextract.low.u32 %v5331
  %v5333 = vextract.high.u32 %v5331
  %v5334 = vmul.u32.u64.compose %v5330, %v5325
  %v5335 = vextract.low.u32 %v5334
  %v5336 = vextract.high.u32 %v5334
  %v5337 = vmul.u32 %v5330, %v5321
  %v5338 = vadd.s32 %v5333, %v5335
  %vm5339 = vc.u32 %v5333, %v5335
  %v5340 = vadd.s32 %v5336, 1
  %v5341 = vsel %vm5339, %v5340, %v5336
  %v5342 = vadd.s32 %v5337, %v5341
  %v5343 = vadd.s32 %v5342, 536870912
  %v5344 = vshrl.u32 %v5343, 30
  %v5345 = vshll.u32 %v5344, 30
  %v5346 = vsub.s32 %v5342, %v5345
  %vm5347 = vcmp.lt.s32.totalorder %v5346, 0
  %v5348 = vsub.s32 0, %v5346
  %v5349 = vsel %vm5347, %v5348, %v5346
  %v5350 = vclz %v5349
  %v5351 = vsub.s32 %v5350, 2
  %vm5352 = vcmp.gt.s32.totalorder 0, %v5351
  %v5353 = vsel %vm5352, 0, %v5351
  %v5354 = vsub.s32 32, %v5353
  %v5355 = vshll.u32 %v5346, %v5353
  %v5356 = vshrl.u32 %v5338, %v5354
  %v5357 = vor.u32 %v5355, %v5356
  %v5358 = vsub.s32 4294967266, %v5353
  %v5359 = vadd.s32 %v5358, 127
  %v5360 = vshll.u32 %v5359, 23
  %v5361 = vor.u32 4788187, %v5360
  %v5362 = vand.u32 2147483647, %v5361
  %v5364 = vcvt.s32.f32 %v5357
  %v5365 = vmul.f32 %v5364, %v5362
  %v5366 = vxor.u32 %v5365, 2147483648
  %v5367 = vsel %vm5284, %v5366, %v5365
  %v5368 = vsub.s32 4, %v5344
  %v5369 = vsel %vm5284, %v5368, %v5344
  %v5370 = vsel %vm5283, %v583, %v5367
  %v5371 = vsel %vm5283, 0, %v5369
  %v5372 = vcosq.f32.pop %v5370
  %v5373 = vsinq.f32.pop %v5370
  %vm5374 = vweird.f32 %v583
  %v5375 = vadd.s32 %v5371, 3
  %v5376 = vand.u32 %v5375, 3
  %vm5377 = vcmp.lt.s32.totalorder %v5376, 2
  %vm5378 = vcmp.eq.s32.totalorder %v5376, 0
  %v5379 = vxor.u32 %v5373, 2147483648
  %v5380 = vsel %vm5378, %v5372, %v5379
  %vm5381 = vcmp.eq.s32.totalorder %v5376, 2
  %v5382 = vxor.u32 %v5372, 2147483648
  %v5383 = vsel %vm5381, %v5382, %v5373
  %v5384 = vsel %vm5377, %v5380, %v5383
  %v5385 = vsel %vm5374, nan, %v5384
  %v5386 = vand.u32 2147483647, %v584
  %vm5387 = vcmp.le.f32.partialorder %v5386, 0.7853982
  %vm5388 = vcmp.lt.s32.totalorder %v584, 0
  %v5389 = vand.u32 %v584, 2139095040
  %v5390 = vshrl.u32 %v5389, 23
  %v5391 = vsub.s32 %v5390, 127
  %v5392 = vand.u32 2147483647, %v584
  %v5393 = vand.u32 %v5392, 8388607
  %v5394 = vor.u32 %v5393, 8388608
  %v5395 = vsub.s32 0, %v5394
  %v5396 = vadd.s32 %v5391, 1
  %vm5397 = vcmp.gt.s32.totalorder %v5396, 0
  %v5398 = vsel %vm5397, %v5396, 0
  %v5399 = vshrl.u32 %v5398, 5
  %v5400 = vand.u32 %v5398, 31
  %v5401 = vsub.s32 32, %v5400
  %v5402 = vshrl.u32 683565275, %v5401
  %v5403 = vshll.u32 683565275, %v5400
  %v5404 = vshrl.u32 2475754826, %v5401
  %v5405 = vor.u32 %v5403, %v5404
  %v5406 = vshll.u32 2475754826, %v5400
  %v5407 = vshrl.u32 2131351028, %v5401
  %v5408 = vor.u32 %v5406, %v5407
  %v5409 = vshll.u32 2131351028, %v5400
  %v5410 = vshrl.u32 2102212464, %v5401
  %v5411 = vor.u32 %v5409, %v5410
  %v5412 = vshll.u32 2102212464, %v5400
  %v5413 = vshrl.u32 920167782, %v5401
  %v5414 = vor.u32 %v5412, %v5413
  %v5415 = vshll.u32 920167782, %v5400
  %v5416 = vshrl.u32 1326507024, %v5401
  %v5417 = vor.u32 %v5415, %v5416
  %vm5418 = vcmp.lt.s32.totalorder %v5399, 1
  %vm5419 = vcmp.lt.s32.totalorder %v5399, 2
  %vm5420 = vcmp.lt.s32.totalorder %v5399, 3
  %vm5421 = vcmp.lt.s32.totalorder %v5399, 4
  %v5422 = vsel %vm5418, %v5402, %v5405
  %v5423 = vsel %vm5421, %v5411, 2102212464
  %v5424 = vsel %vm5420, %v5408, %v5423
  %v5425 = vsel %vm5419, %v5422, %v5424
  %v5426 = vsel %vm5418, %v5405, %v5408
  %v5427 = vsel %vm5421, %v5414, 920167782
  %v5428 = vsel %vm5420, %v5411, %v5427
  %v5429 = vsel %vm5419, %v5426, %v5428
  %v5430 = vsel %vm5418, %v5408, %v5411
  %v5431 = vsel %vm5421, %v5417, 1326507024
  %v5432 = vsel %vm5420, %v5414, %v5431
  %v5433 = vsel %vm5419, %v5430, %v5432
  %v5434 = vshll.u32 %v5394, 8
  %v5435 = vmul.u32.u64.compose %v5434, %v5433
  %v5436 = vextract.low.u32 %v5435
  %v5437 = vextract.high.u32 %v5435
  %v5438 = vmul.u32.u64.compose %v5434, %v5429
  %v5439 = vextract.low.u32 %v5438
  %v5440 = vextract.high.u32 %v5438
  %v5441 = vmul.u32 %v5434, %v5425
  %v5442 = vadd.s32 %v5437, %v5439
  %vm5443 = vc.u32 %v5437, %v5439
  %v5444 = vadd.s32 %v5440, 1
  %v5445 = vsel %vm5443, %v5444, %v5440
  %v5446 = vadd.s32 %v5441, %v5445
  %v5447 = vadd.s32 %v5446, 536870912
  %v5448 = vshrl.u32 %v5447, 30
  %v5449 = vshll.u32 %v5448, 30
  %v5450 = vsub.s32 %v5446, %v5449
  %vm5451 = vcmp.lt.s32.totalorder %v5450, 0
  %v5452 = vsub.s32 0, %v5450
  %v5453 = vsel %vm5451, %v5452, %v5450
  %v5454 = vclz %v5453
  %v5455 = vsub.s32 %v5454, 2
  %vm5456 = vcmp.gt.s32.totalorder 0, %v5455
  %v5457 = vsel %vm5456, 0, %v5455
  %v5458 = vsub.s32 32, %v5457
  %v5459 = vshll.u32 %v5450, %v5457
  %v5460 = vshrl.u32 %v5442, %v5458
  %v5461 = vor.u32 %v5459, %v5460
  %v5462 = vsub.s32 4294967266, %v5457
  %v5463 = vadd.s32 %v5462, 127
  %v5464 = vshll.u32 %v5463, 23
  %v5465 = vor.u32 4788187, %v5464
  %v5466 = vand.u32 2147483647, %v5465
  %v5468 = vcvt.s32.f32 %v5461
  %v5469 = vmul.f32 %v5468, %v5466
  %v5470 = vxor.u32 %v5469, 2147483648
  %v5471 = vsel %vm5388, %v5470, %v5469
  %v5472 = vsub.s32 4, %v5448
  %v5473 = vsel %vm5388, %v5472, %v5448
  %v5474 = vsel %vm5387, %v584, %v5471
  %v5475 = vsel %vm5387, 0, %v5473
  %v5476 = vcosq.f32.pop %v5474
  %v5477 = vsinq.f32.pop %v5474
  %vm5478 = vweird.f32 %v584
  %v5479 = vadd.s32 %v5475, 3
  %v5480 = vand.u32 %v5479, 3
  %vm5481 = vcmp.lt.s32.totalorder %v5480, 2
  %vm5482 = vcmp.eq.s32.totalorder %v5480, 0
  %v5483 = vxor.u32 %v5477, 2147483648
  %v5484 = vsel %vm5482, %v5476, %v5483
  %vm5485 = vcmp.eq.s32.totalorder %v5480, 2
  %v5486 = vxor.u32 %v5476, 2147483648
  %v5487 = vsel %vm5485, %v5486, %v5477
  %v5488 = vsel %vm5481, %v5484, %v5487
  %v5489 = vsel %vm5478, nan, %v5488
  %v5490 = vand.u32 2147483647, %v585
  %vm5491 = vcmp.le.f32.partialorder %v5490, 0.7853982
  %vm5492 = vcmp.lt.s32.totalorder %v585, 0
  %v5493 = vand.u32 %v585, 2139095040
  %v5494 = vshrl.u32 %v5493, 23
  %v5495 = vsub.s32 %v5494, 127
  %v5496 = vand.u32 2147483647, %v585
  %v5497 = vand.u32 %v5496, 8388607
  %v5498 = vor.u32 %v5497, 8388608
  %v5499 = vsub.s32 0, %v5498
  %v5500 = vadd.s32 %v5495, 1
  %vm5501 = vcmp.gt.s32.totalorder %v5500, 0
  %v5502 = vsel %vm5501, %v5500, 0
  %v5503 = vshrl.u32 %v5502, 5
  %v5504 = vand.u32 %v5502, 31
  %v5505 = vsub.s32 32, %v5504
  %v5506 = vshrl.u32 683565275, %v5505
  %v5507 = vshll.u32 683565275, %v5504
  %v5508 = vshrl.u32 2475754826, %v5505
  %v5509 = vor.u32 %v5507, %v5508
  %v5510 = vshll.u32 2475754826, %v5504
  %v5511 = vshrl.u32 2131351028, %v5505
  %v5512 = vor.u32 %v5510, %v5511
  %v5513 = vshll.u32 2131351028, %v5504
  %v5514 = vshrl.u32 2102212464, %v5505
  %v5515 = vor.u32 %v5513, %v5514
  %v5516 = vshll.u32 2102212464, %v5504
  %v5517 = vshrl.u32 920167782, %v5505
  %v5518 = vor.u32 %v5516, %v5517
  %v5519 = vshll.u32 920167782, %v5504
  %v5520 = vshrl.u32 1326507024, %v5505
  %v5521 = vor.u32 %v5519, %v5520
  %vm5522 = vcmp.lt.s32.totalorder %v5503, 1
  %vm5523 = vcmp.lt.s32.totalorder %v5503, 2
  %vm5524 = vcmp.lt.s32.totalorder %v5503, 3
  %vm5525 = vcmp.lt.s32.totalorder %v5503, 4
  %v5526 = vsel %vm5522, %v5506, %v5509
  %v5527 = vsel %vm5525, %v5515, 2102212464
  %v5528 = vsel %vm5524, %v5512, %v5527
  %v5529 = vsel %vm5523, %v5526, %v5528
  %v5530 = vsel %vm5522, %v5509, %v5512
  %v5531 = vsel %vm5525, %v5518, 920167782
  %v5532 = vsel %vm5524, %v5515, %v5531
  %v5533 = vsel %vm5523, %v5530, %v5532
  %v5534 = vsel %vm5522, %v5512, %v5515
  %v5535 = vsel %vm5525, %v5521, 1326507024
  %v5536 = vsel %vm5524, %v5518, %v5535
  %v5537 = vsel %vm5523, %v5534, %v5536
  %v5538 = vshll.u32 %v5498, 8
  %v5539 = vmul.u32.u64.compose %v5538, %v5537
  %v5540 = vextract.low.u32 %v5539
  %v5541 = vextract.high.u32 %v5539
  %v5542 = vmul.u32.u64.compose %v5538, %v5533
  %v5543 = vextract.low.u32 %v5542
  %v5544 = vextract.high.u32 %v5542
  %v5545 = vmul.u32 %v5538, %v5529
  %v5546 = vadd.s32 %v5541, %v5543
  %vm5547 = vc.u32 %v5541, %v5543
  %v5548 = vadd.s32 %v5544, 1
  %v5549 = vsel %vm5547, %v5548, %v5544
  %v5550 = vadd.s32 %v5545, %v5549
  %v5551 = vadd.s32 %v5550, 536870912
  %v5552 = vshrl.u32 %v5551, 30
  %v5553 = vshll.u32 %v5552, 30
  %v5554 = vsub.s32 %v5550, %v5553
  %vm5555 = vcmp.lt.s32.totalorder %v5554, 0
  %v5556 = vsub.s32 0, %v5554
  %v5557 = vsel %vm5555, %v5556, %v5554
  %v5558 = vclz %v5557
  %v5559 = vsub.s32 %v5558, 2
  %vm5560 = vcmp.gt.s32.totalorder 0, %v5559
  %v5561 = vsel %vm5560, 0, %v5559
  %v5562 = vsub.s32 32, %v5561
  %v5563 = vshll.u32 %v5554, %v5561
  %v5564 = vshrl.u32 %v5546, %v5562
  %v5565 = vor.u32 %v5563, %v5564
  %v5566 = vsub.s32 4294967266, %v5561
  %v5567 = vadd.s32 %v5566, 127
  %v5568 = vshll.u32 %v5567, 23
  %v5569 = vor.u32 4788187, %v5568
  %v5570 = vand.u32 2147483647, %v5569
  %v5572 = vcvt.s32.f32 %v5565
  %v5573 = vmul.f32 %v5572, %v5570
  %v5574 = vxor.u32 %v5573, 2147483648
  %v5575 = vsel %vm5492, %v5574, %v5573
  %v5576 = vsub.s32 4, %v5552
  %v5577 = vsel %vm5492, %v5576, %v5552
  %v5578 = vsel %vm5491, %v585, %v5575
  %v5579 = vsel %vm5491, 0, %v5577
  %v5580 = vcosq.f32.pop %v5578
  %v5581 = vsinq.f32.pop %v5578
  %vm5582 = vweird.f32 %v585
  %v5583 = vadd.s32 %v5579, 3
  %v5584 = vand.u32 %v5583, 3
  %vm5585 = vcmp.lt.s32.totalorder %v5584, 2
  %vm5586 = vcmp.eq.s32.totalorder %v5584, 0
  %v5587 = vxor.u32 %v5581, 2147483648
  %v5588 = vsel %vm5586, %v5580, %v5587
  %vm5589 = vcmp.eq.s32.totalorder %v5584, 2
  %v5590 = vxor.u32 %v5580, 2147483648
  %v5591 = vsel %vm5589, %v5590, %v5581
  %v5592 = vsel %vm5585, %v5588, %v5591
  %v5593 = vsel %vm5582, nan, %v5592
  %v5594 = vand.u32 2147483647, %v586
  %vm5595 = vcmp.le.f32.partialorder %v5594, 0.7853982
  %vm5596 = vcmp.lt.s32.totalorder %v586, 0
  %v5597 = vand.u32 %v586, 2139095040
  %v5598 = vshrl.u32 %v5597, 23
  %v5599 = vsub.s32 %v5598, 127
  %v5600 = vand.u32 2147483647, %v586
  %v5601 = vand.u32 %v5600, 8388607
  %v5602 = vor.u32 %v5601, 8388608
  %v5603 = vsub.s32 0, %v5602
  %v5604 = vadd.s32 %v5599, 1
  %vm5605 = vcmp.gt.s32.totalorder %v5604, 0
  %v5606 = vsel %vm5605, %v5604, 0
  %v5607 = vshrl.u32 %v5606, 5
  %v5608 = vand.u32 %v5606, 31
  %v5609 = vsub.s32 32, %v5608
  %v5610 = vshrl.u32 683565275, %v5609
  %v5611 = vshll.u32 683565275, %v5608
  %v5612 = vshrl.u32 2475754826, %v5609
  %v5613 = vor.u32 %v5611, %v5612
  %v5614 = vshll.u32 2475754826, %v5608
  %v5615 = vshrl.u32 2131351028, %v5609
  %v5616 = vor.u32 %v5614, %v5615
  %v5617 = vshll.u32 2131351028, %v5608
  %v5618 = vshrl.u32 2102212464, %v5609
  %v5619 = vor.u32 %v5617, %v5618
  %v5620 = vshll.u32 2102212464, %v5608
  %v5621 = vshrl.u32 920167782, %v5609
  %v5622 = vor.u32 %v5620, %v5621
  %v5623 = vshll.u32 920167782, %v5608
  %v5624 = vshrl.u32 1326507024, %v5609
  %v5625 = vor.u32 %v5623, %v5624
  %vm5626 = vcmp.lt.s32.totalorder %v5607, 1
  %vm5627 = vcmp.lt.s32.totalorder %v5607, 2
  %vm5628 = vcmp.lt.s32.totalorder %v5607, 3
  %vm5629 = vcmp.lt.s32.totalorder %v5607, 4
  %v5630 = vsel %vm5626, %v5610, %v5613
  %v5631 = vsel %vm5629, %v5619, 2102212464
  %v5632 = vsel %vm5628, %v5616, %v5631
  %v5633 = vsel %vm5627, %v5630, %v5632
  %v5634 = vsel %vm5626, %v5613, %v5616
  %v5635 = vsel %vm5629, %v5622, 920167782
  %v5636 = vsel %vm5628, %v5619, %v5635
  %v5637 = vsel %vm5627, %v5634, %v5636
  %v5638 = vsel %vm5626, %v5616, %v5619
  %v5639 = vsel %vm5629, %v5625, 1326507024
  %v5640 = vsel %vm5628, %v5622, %v5639
  %v5641 = vsel %vm5627, %v5638, %v5640
  %v5642 = vshll.u32 %v5602, 8
  %v5643 = vmul.u32.u64.compose %v5642, %v5641
  %v5644 = vextract.low.u32 %v5643
  %v5645 = vextract.high.u32 %v5643
  %v5646 = vmul.u32.u64.compose %v5642, %v5637
  %v5647 = vextract.low.u32 %v5646
  %v5648 = vextract.high.u32 %v5646
  %v5649 = vmul.u32 %v5642, %v5633
  %v5650 = vadd.s32 %v5645, %v5647
  %vm5651 = vc.u32 %v5645, %v5647
  %v5652 = vadd.s32 %v5648, 1
  %v5653 = vsel %vm5651, %v5652, %v5648
  %v5654 = vadd.s32 %v5649, %v5653
  %v5655 = vadd.s32 %v5654, 536870912
  %v5656 = vshrl.u32 %v5655, 30
  %v5657 = vshll.u32 %v5656, 30
  %v5658 = vsub.s32 %v5654, %v5657
  %vm5659 = vcmp.lt.s32.totalorder %v5658, 0
  %v5660 = vsub.s32 0, %v5658
  %v5661 = vsel %vm5659, %v5660, %v5658
  %v5662 = vclz %v5661
  %v5663 = vsub.s32 %v5662, 2
  %vm5664 = vcmp.gt.s32.totalorder 0, %v5663
  %v5665 = vsel %vm5664, 0, %v5663
  %v5666 = vsub.s32 32, %v5665
  %v5667 = vshll.u32 %v5658, %v5665
  %v5668 = vshrl.u32 %v5650, %v5666
  %v5669 = vor.u32 %v5667, %v5668
  %v5670 = vsub.s32 4294967266, %v5665
  %v5671 = vadd.s32 %v5670, 127
  %v5672 = vshll.u32 %v5671, 23
  %v5673 = vor.u32 4788187, %v5672
  %v5674 = vand.u32 2147483647, %v5673
  %v5676 = vcvt.s32.f32 %v5669
  %v5677 = vmul.f32 %v5676, %v5674
  %v5678 = vxor.u32 %v5677, 2147483648
  %v5679 = vsel %vm5596, %v5678, %v5677
  %v5680 = vsub.s32 4, %v5656
  %v5681 = vsel %vm5596, %v5680, %v5656
  %v5682 = vsel %vm5595, %v586, %v5679
  %v5683 = vsel %vm5595, 0, %v5681
  %v5684 = vcosq.f32.pop %v5682
  %v5685 = vsinq.f32.pop %v5682
  %vm5686 = vweird.f32 %v586
  %v5687 = vadd.s32 %v5683, 3
  %v5688 = vand.u32 %v5687, 3
  %vm5689 = vcmp.lt.s32.totalorder %v5688, 2
  %vm5690 = vcmp.eq.s32.totalorder %v5688, 0
  %v5691 = vxor.u32 %v5685, 2147483648
  %v5692 = vsel %vm5690, %v5684, %v5691
  %vm5693 = vcmp.eq.s32.totalorder %v5688, 2
  %v5694 = vxor.u32 %v5684, 2147483648
  %v5695 = vsel %vm5693, %v5694, %v5685
  %v5696 = vsel %vm5689, %v5692, %v5695
  %v5697 = vsel %vm5686, nan, %v5696
  %v5698 = vand.u32 2147483647, %v587
  %vm5699 = vcmp.le.f32.partialorder %v5698, 0.7853982
  %vm5700 = vcmp.lt.s32.totalorder %v587, 0
  %v5701 = vand.u32 %v587, 2139095040
  %v5702 = vshrl.u32 %v5701, 23
  %v5703 = vsub.s32 %v5702, 127
  %v5704 = vand.u32 2147483647, %v587
  %v5705 = vand.u32 %v5704, 8388607
  %v5706 = vor.u32 %v5705, 8388608
  %v5707 = vsub.s32 0, %v5706
  %v5708 = vadd.s32 %v5703, 1
  %vm5709 = vcmp.gt.s32.totalorder %v5708, 0
  %v5710 = vsel %vm5709, %v5708, 0
  %v5711 = vshrl.u32 %v5710, 5
  %v5712 = vand.u32 %v5710, 31
  %v5713 = vsub.s32 32, %v5712
  %v5714 = vshrl.u32 683565275, %v5713
  %v5715 = vshll.u32 683565275, %v5712
  %v5716 = vshrl.u32 2475754826, %v5713
  %v5717 = vor.u32 %v5715, %v5716
  %v5718 = vshll.u32 2475754826, %v5712
  %v5719 = vshrl.u32 2131351028, %v5713
  %v5720 = vor.u32 %v5718, %v5719
  %v5721 = vshll.u32 2131351028, %v5712
  %v5722 = vshrl.u32 2102212464, %v5713
  %v5723 = vor.u32 %v5721, %v5722
  %v5724 = vshll.u32 2102212464, %v5712
  %v5725 = vshrl.u32 920167782, %v5713
  %v5726 = vor.u32 %v5724, %v5725
  %v5727 = vshll.u32 920167782, %v5712
  %v5728 = vshrl.u32 1326507024, %v5713
  %v5729 = vor.u32 %v5727, %v5728
  %vm5730 = vcmp.lt.s32.totalorder %v5711, 1
  %vm5731 = vcmp.lt.s32.totalorder %v5711, 2
  %vm5732 = vcmp.lt.s32.totalorder %v5711, 3
  %vm5733 = vcmp.lt.s32.totalorder %v5711, 4
  %v5734 = vsel %vm5730, %v5714, %v5717
  %v5735 = vsel %vm5733, %v5723, 2102212464
  %v5736 = vsel %vm5732, %v5720, %v5735
  %v5737 = vsel %vm5731, %v5734, %v5736
  %v5738 = vsel %vm5730, %v5717, %v5720
  %v5739 = vsel %vm5733, %v5726, 920167782
  %v5740 = vsel %vm5732, %v5723, %v5739
  %v5741 = vsel %vm5731, %v5738, %v5740
  %v5742 = vsel %vm5730, %v5720, %v5723
  %v5743 = vsel %vm5733, %v5729, 1326507024
  %v5744 = vsel %vm5732, %v5726, %v5743
  %v5745 = vsel %vm5731, %v5742, %v5744
  %v5746 = vshll.u32 %v5706, 8
  %v5747 = vmul.u32.u64.compose %v5746, %v5745
  %v5748 = vextract.low.u32 %v5747
  %v5749 = vextract.high.u32 %v5747
  %v5750 = vmul.u32.u64.compose %v5746, %v5741
  %v5751 = vextract.low.u32 %v5750
  %v5752 = vextract.high.u32 %v5750
  %v5753 = vmul.u32 %v5746, %v5737
  %v5754 = vadd.s32 %v5749, %v5751
  %vm5755 = vc.u32 %v5749, %v5751
  %v5756 = vadd.s32 %v5752, 1
  %v5757 = vsel %vm5755, %v5756, %v5752
  %v5758 = vadd.s32 %v5753, %v5757
  %v5759 = vadd.s32 %v5758, 536870912
  %v5760 = vshrl.u32 %v5759, 30
  %v5761 = vshll.u32 %v5760, 30
  %v5762 = vsub.s32 %v5758, %v5761
  %vm5763 = vcmp.lt.s32.totalorder %v5762, 0
  %v5764 = vsub.s32 0, %v5762
  %v5765 = vsel %vm5763, %v5764, %v5762
  %v5766 = vclz %v5765
  %v5767 = vsub.s32 %v5766, 2
  %vm5768 = vcmp.gt.s32.totalorder 0, %v5767
  %v5769 = vsel %vm5768, 0, %v5767
  %v5770 = vsub.s32 32, %v5769
  %v5771 = vshll.u32 %v5762, %v5769
  %v5772 = vshrl.u32 %v5754, %v5770
  %v5773 = vor.u32 %v5771, %v5772
  %v5774 = vsub.s32 4294967266, %v5769
  %v5775 = vadd.s32 %v5774, 127
  %v5776 = vshll.u32 %v5775, 23
  %v5777 = vor.u32 4788187, %v5776
  %v5778 = vand.u32 2147483647, %v5777
  %v5780 = vcvt.s32.f32 %v5773
  %v5781 = vmul.f32 %v5780, %v5778
  %v5782 = vxor.u32 %v5781, 2147483648
  %v5783 = vsel %vm5700, %v5782, %v5781
  %v5784 = vsub.s32 4, %v5760
  %v5785 = vsel %vm5700, %v5784, %v5760
  %v5786 = vsel %vm5699, %v587, %v5783
  %v5787 = vsel %vm5699, 0, %v5785
  %v5788 = vcosq.f32.pop %v5786
  %v5789 = vsinq.f32.pop %v5786
  %vm5790 = vweird.f32 %v587
  %v5791 = vadd.s32 %v5787, 3
  %v5792 = vand.u32 %v5791, 3
  %vm5793 = vcmp.lt.s32.totalorder %v5792, 2
  %vm5794 = vcmp.eq.s32.totalorder %v5792, 0
  %v5795 = vxor.u32 %v5789, 2147483648
  %v5796 = vsel %vm5794, %v5788, %v5795
  %vm5797 = vcmp.eq.s32.totalorder %v5792, 2
  %v5798 = vxor.u32 %v5788, 2147483648
  %v5799 = vsel %vm5797, %v5798, %v5789
  %v5800 = vsel %vm5793, %v5796, %v5799
  %v5801 = vsel %vm5790, nan, %v5800
  %v5802 = vand.u32 2147483647, %v588
  %vm5803 = vcmp.le.f32.partialorder %v5802, 0.7853982
  %vm5804 = vcmp.lt.s32.totalorder %v588, 0
  %v5805 = vand.u32 %v588, 2139095040
  %v5806 = vshrl.u32 %v5805, 23
  %v5807 = vsub.s32 %v5806, 127
  %v5808 = vand.u32 2147483647, %v588
  %v5809 = vand.u32 %v5808, 8388607
  %v5810 = vor.u32 %v5809, 8388608
  %v5811 = vsub.s32 0, %v5810
  %v5812 = vadd.s32 %v5807, 1
  %vm5813 = vcmp.gt.s32.totalorder %v5812, 0
  %v5814 = vsel %vm5813, %v5812, 0
  %v5815 = vshrl.u32 %v5814, 5
  %v5816 = vand.u32 %v5814, 31
  %v5817 = vsub.s32 32, %v5816
  %v5818 = vshrl.u32 683565275, %v5817
  %v5819 = vshll.u32 683565275, %v5816
  %v5820 = vshrl.u32 2475754826, %v5817
  %v5821 = vor.u32 %v5819, %v5820
  %v5822 = vshll.u32 2475754826, %v5816
  %v5823 = vshrl.u32 2131351028, %v5817
  %v5824 = vor.u32 %v5822, %v5823
  %v5825 = vshll.u32 2131351028, %v5816
  %v5826 = vshrl.u32 2102212464, %v5817
  %v5827 = vor.u32 %v5825, %v5826
  %v5828 = vshll.u32 2102212464, %v5816
  %v5829 = vshrl.u32 920167782, %v5817
  %v5830 = vor.u32 %v5828, %v5829
  %v5831 = vshll.u32 920167782, %v5816
  %v5832 = vshrl.u32 1326507024, %v5817
  %v5833 = vor.u32 %v5831, %v5832
  %vm5834 = vcmp.lt.s32.totalorder %v5815, 1
  %vm5835 = vcmp.lt.s32.totalorder %v5815, 2
  %vm5836 = vcmp.lt.s32.totalorder %v5815, 3
  %vm5837 = vcmp.lt.s32.totalorder %v5815, 4
  %v5838 = vsel %vm5834, %v5818, %v5821
  %v5839 = vsel %vm5837, %v5827, 2102212464
  %v5840 = vsel %vm5836, %v5824, %v5839
  %v5841 = vsel %vm5835, %v5838, %v5840
  %v5842 = vsel %vm5834, %v5821, %v5824
  %v5843 = vsel %vm5837, %v5830, 920167782
  %v5844 = vsel %vm5836, %v5827, %v5843
  %v5845 = vsel %vm5835, %v5842, %v5844
  %v5846 = vsel %vm5834, %v5824, %v5827
  %v5847 = vsel %vm5837, %v5833, 1326507024
  %v5848 = vsel %vm5836, %v5830, %v5847
  %v5849 = vsel %vm5835, %v5846, %v5848
  %v5850 = vshll.u32 %v5810, 8
  %v5851 = vmul.u32.u64.compose %v5850, %v5849
  %v5852 = vextract.low.u32 %v5851
  %v5853 = vextract.high.u32 %v5851
  %v5854 = vmul.u32.u64.compose %v5850, %v5845
  %v5855 = vextract.low.u32 %v5854
  %v5856 = vextract.high.u32 %v5854
  %v5857 = vmul.u32 %v5850, %v5841
  %v5858 = vadd.s32 %v5853, %v5855
  %vm5859 = vc.u32 %v5853, %v5855
  %v5860 = vadd.s32 %v5856, 1
  %v5861 = vsel %vm5859, %v5860, %v5856
  %v5862 = vadd.s32 %v5857, %v5861
  %v5863 = vadd.s32 %v5862, 536870912
  %v5864 = vshrl.u32 %v5863, 30
  %v5865 = vshll.u32 %v5864, 30
  %v5866 = vsub.s32 %v5862, %v5865
  %vm5867 = vcmp.lt.s32.totalorder %v5866, 0
  %v5868 = vsub.s32 0, %v5866
  %v5869 = vsel %vm5867, %v5868, %v5866
  %v5870 = vclz %v5869
  %v5871 = vsub.s32 %v5870, 2
  %vm5872 = vcmp.gt.s32.totalorder 0, %v5871
  %v5873 = vsel %vm5872, 0, %v5871
  %v5874 = vsub.s32 32, %v5873
  %v5875 = vshll.u32 %v5866, %v5873
  %v5876 = vshrl.u32 %v5858, %v5874
  %v5877 = vor.u32 %v5875, %v5876
  %v5878 = vsub.s32 4294967266, %v5873
  %v5879 = vadd.s32 %v5878, 127
  %v5880 = vshll.u32 %v5879, 23
  %v5881 = vor.u32 4788187, %v5880
  %v5882 = vand.u32 2147483647, %v5881
  %v5884 = vcvt.s32.f32 %v5877
  %v5885 = vmul.f32 %v5884, %v5882
  %v5886 = vxor.u32 %v5885, 2147483648
  %v5887 = vsel %vm5804, %v5886, %v5885
  %v5888 = vsub.s32 4, %v5864
  %v5889 = vsel %vm5804, %v5888, %v5864
  %v5890 = vsel %vm5803, %v588, %v5887
  %v5891 = vsel %vm5803, 0, %v5889
  %v5892 = vcosq.f32.pop %v5890
  %v5893 = vsinq.f32.pop %v5890
  %vm5894 = vweird.f32 %v588
  %v5895 = vadd.s32 %v5891, 3
  %v5896 = vand.u32 %v5895, 3
  %vm5897 = vcmp.lt.s32.totalorder %v5896, 2
  %vm5898 = vcmp.eq.s32.totalorder %v5896, 0
  %v5899 = vxor.u32 %v5893, 2147483648
  %v5900 = vsel %vm5898, %v5892, %v5899
  %vm5901 = vcmp.eq.s32.totalorder %v5896, 2
  %v5902 = vxor.u32 %v5892, 2147483648
  %v5903 = vsel %vm5901, %v5902, %v5893
  %v5904 = vsel %vm5897, %v5900, %v5903
  %v5905 = vsel %vm5894, nan, %v5904
  %v5906 = vand.u32 2147483647, %v589
  %vm5907 = vcmp.le.f32.partialorder %v5906, 0.7853982
  %vm5908 = vcmp.lt.s32.totalorder %v589, 0
  %v5909 = vand.u32 %v589, 2139095040
  %v5910 = vshrl.u32 %v5909, 23
  %v5911 = vsub.s32 %v5910, 127
  %v5912 = vand.u32 2147483647, %v589
  %v5913 = vand.u32 %v5912, 8388607
  %v5914 = vor.u32 %v5913, 8388608
  %v5915 = vsub.s32 0, %v5914
  %v5916 = vadd.s32 %v5911, 1
  %vm5917 = vcmp.gt.s32.totalorder %v5916, 0
  %v5918 = vsel %vm5917, %v5916, 0
  %v5919 = vshrl.u32 %v5918, 5
  %v5920 = vand.u32 %v5918, 31
  %v5921 = vsub.s32 32, %v5920
  %v5922 = vshrl.u32 683565275, %v5921
  %v5923 = vshll.u32 683565275, %v5920
  %v5924 = vshrl.u32 2475754826, %v5921
  %v5925 = vor.u32 %v5923, %v5924
  %v5926 = vshll.u32 2475754826, %v5920
  %v5927 = vshrl.u32 2131351028, %v5921
  %v5928 = vor.u32 %v5926, %v5927
  %v5929 = vshll.u32 2131351028, %v5920
  %v5930 = vshrl.u32 2102212464, %v5921
  %v5931 = vor.u32 %v5929, %v5930
  %v5932 = vshll.u32 2102212464, %v5920
  %v5933 = vshrl.u32 920167782, %v5921
  %v5934 = vor.u32 %v5932, %v5933
  %v5935 = vshll.u32 920167782, %v5920
  %v5936 = vshrl.u32 1326507024, %v5921
  %v5937 = vor.u32 %v5935, %v5936
  %vm5938 = vcmp.lt.s32.totalorder %v5919, 1
  %vm5939 = vcmp.lt.s32.totalorder %v5919, 2
  %vm5940 = vcmp.lt.s32.totalorder %v5919, 3
  %vm5941 = vcmp.lt.s32.totalorder %v5919, 4
  %v5942 = vsel %vm5938, %v5922, %v5925
  %v5943 = vsel %vm5941, %v5931, 2102212464
  %v5944 = vsel %vm5940, %v5928, %v5943
  %v5945 = vsel %vm5939, %v5942, %v5944
  %v5946 = vsel %vm5938, %v5925, %v5928
  %v5947 = vsel %vm5941, %v5934, 920167782
  %v5948 = vsel %vm5940, %v5931, %v5947
  %v5949 = vsel %vm5939, %v5946, %v5948
  %v5950 = vsel %vm5938, %v5928, %v5931
  %v5951 = vsel %vm5941, %v5937, 1326507024
  %v5952 = vsel %vm5940, %v5934, %v5951
  %v5953 = vsel %vm5939, %v5950, %v5952
  %v5954 = vshll.u32 %v5914, 8
  %v5955 = vmul.u32.u64.compose %v5954, %v5953
  %v5956 = vextract.low.u32 %v5955
  %v5957 = vextract.high.u32 %v5955
  %v5958 = vmul.u32.u64.compose %v5954, %v5949
  %v5959 = vextract.low.u32 %v5958
  %v5960 = vextract.high.u32 %v5958
  %v5961 = vmul.u32 %v5954, %v5945
  %v5962 = vadd.s32 %v5957, %v5959
  %vm5963 = vc.u32 %v5957, %v5959
  %v5964 = vadd.s32 %v5960, 1
  %v5965 = vsel %vm5963, %v5964, %v5960
  %v5966 = vadd.s32 %v5961, %v5965
  %v5967 = vadd.s32 %v5966, 536870912
  %v5968 = vshrl.u32 %v5967, 30
  %v5969 = vshll.u32 %v5968, 30
  %v5970 = vsub.s32 %v5966, %v5969
  %vm5971 = vcmp.lt.s32.totalorder %v5970, 0
  %v5972 = vsub.s32 0, %v5970
  %v5973 = vsel %vm5971, %v5972, %v5970
  %v5974 = vclz %v5973
  %v5975 = vsub.s32 %v5974, 2
  %vm5976 = vcmp.gt.s32.totalorder 0, %v5975
  %v5977 = vsel %vm5976, 0, %v5975
  %v5978 = vsub.s32 32, %v5977
  %v5979 = vshll.u32 %v5970, %v5977
  %v5980 = vshrl.u32 %v5962, %v5978
  %v5981 = vor.u32 %v5979, %v5980
  %v5982 = vsub.s32 4294967266, %v5977
  %v5983 = vadd.s32 %v5982, 127
  %v5984 = vshll.u32 %v5983, 23
  %v5985 = vor.u32 4788187, %v5984
  %v5986 = vand.u32 2147483647, %v5985
  %v5988 = vcvt.s32.f32 %v5981
  %v5989 = vmul.f32 %v5988, %v5986
  %v5990 = vxor.u32 %v5989, 2147483648
  %v5991 = vsel %vm5908, %v5990, %v5989
  %v5992 = vsub.s32 4, %v5968
  %v5993 = vsel %vm5908, %v5992, %v5968
  %v5994 = vsel %vm5907, %v589, %v5991
  %v5995 = vsel %vm5907, 0, %v5993
  %v5996 = vcosq.f32.pop %v5994
  %v5997 = vsinq.f32.pop %v5994
  %vm5998 = vweird.f32 %v589
  %v5999 = vadd.s32 %v5995, 3
  %v6000 = vand.u32 %v5999, 3
  %vm6001 = vcmp.lt.s32.totalorder %v6000, 2
  %vm6002 = vcmp.eq.s32.totalorder %v6000, 0
  %v6003 = vxor.u32 %v5997, 2147483648
  %v6004 = vsel %vm6002, %v5996, %v6003
  %vm6005 = vcmp.eq.s32.totalorder %v6000, 2
  %v6006 = vxor.u32 %v5996, 2147483648
  %v6007 = vsel %vm6005, %v6006, %v5997
  %v6008 = vsel %vm6001, %v6004, %v6007
  %v6009 = vsel %vm5998, nan, %v6008
  %v6010 = vand.u32 2147483647, %v590
  %vm6011 = vcmp.le.f32.partialorder %v6010, 0.7853982
  %vm6012 = vcmp.lt.s32.totalorder %v590, 0
  %v6013 = vand.u32 %v590, 2139095040
  %v6014 = vshrl.u32 %v6013, 23
  %v6015 = vsub.s32 %v6014, 127
  %v6016 = vand.u32 2147483647, %v590
  %v6017 = vand.u32 %v6016, 8388607
  %v6018 = vor.u32 %v6017, 8388608
  %v6019 = vsub.s32 0, %v6018
  %v6020 = vadd.s32 %v6015, 1
  %vm6021 = vcmp.gt.s32.totalorder %v6020, 0
  %v6022 = vsel %vm6021, %v6020, 0
  %v6023 = vshrl.u32 %v6022, 5
  %v6024 = vand.u32 %v6022, 31
  %v6025 = vsub.s32 32, %v6024
  %v6026 = vshrl.u32 683565275, %v6025
  %v6027 = vshll.u32 683565275, %v6024
  %v6028 = vshrl.u32 2475754826, %v6025
  %v6029 = vor.u32 %v6027, %v6028
  %v6030 = vshll.u32 2475754826, %v6024
  %v6031 = vshrl.u32 2131351028, %v6025
  %v6032 = vor.u32 %v6030, %v6031
  %v6033 = vshll.u32 2131351028, %v6024
  %v6034 = vshrl.u32 2102212464, %v6025
  %v6035 = vor.u32 %v6033, %v6034
  %v6036 = vshll.u32 2102212464, %v6024
  %v6037 = vshrl.u32 920167782, %v6025
  %v6038 = vor.u32 %v6036, %v6037
  %v6039 = vshll.u32 920167782, %v6024
  %v6040 = vshrl.u32 1326507024, %v6025
  %v6041 = vor.u32 %v6039, %v6040
  %vm6042 = vcmp.lt.s32.totalorder %v6023, 1
  %vm6043 = vcmp.lt.s32.totalorder %v6023, 2
  %vm6044 = vcmp.lt.s32.totalorder %v6023, 3
  %vm6045 = vcmp.lt.s32.totalorder %v6023, 4
  %v6046 = vsel %vm6042, %v6026, %v6029
  %v6047 = vsel %vm6045, %v6035, 2102212464
  %v6048 = vsel %vm6044, %v6032, %v6047
  %v6049 = vsel %vm6043, %v6046, %v6048
  %v6050 = vsel %vm6042, %v6029, %v6032
  %v6051 = vsel %vm6045, %v6038, 920167782
  %v6052 = vsel %vm6044, %v6035, %v6051
  %v6053 = vsel %vm6043, %v6050, %v6052
  %v6054 = vsel %vm6042, %v6032, %v6035
  %v6055 = vsel %vm6045, %v6041, 1326507024
  %v6056 = vsel %vm6044, %v6038, %v6055
  %v6057 = vsel %vm6043, %v6054, %v6056
  %v6058 = vshll.u32 %v6018, 8
  %v6059 = vmul.u32.u64.compose %v6058, %v6057
  %v6060 = vextract.low.u32 %v6059
  %v6061 = vextract.high.u32 %v6059
  %v6062 = vmul.u32.u64.compose %v6058, %v6053
  %v6063 = vextract.low.u32 %v6062
  %v6064 = vextract.high.u32 %v6062
  %v6065 = vmul.u32 %v6058, %v6049
  %v6066 = vadd.s32 %v6061, %v6063
  %vm6067 = vc.u32 %v6061, %v6063
  %v6068 = vadd.s32 %v6064, 1
  %v6069 = vsel %vm6067, %v6068, %v6064
  %v6070 = vadd.s32 %v6065, %v6069
  %v6071 = vadd.s32 %v6070, 536870912
  %v6072 = vshrl.u32 %v6071, 30
  %v6073 = vshll.u32 %v6072, 30
  %v6074 = vsub.s32 %v6070, %v6073
  %vm6075 = vcmp.lt.s32.totalorder %v6074, 0
  %v6076 = vsub.s32 0, %v6074
  %v6077 = vsel %vm6075, %v6076, %v6074
  %v6078 = vclz %v6077
  %v6079 = vsub.s32 %v6078, 2
  %vm6080 = vcmp.gt.s32.totalorder 0, %v6079
  %v6081 = vsel %vm6080, 0, %v6079
  %v6082 = vsub.s32 32, %v6081
  %v6083 = vshll.u32 %v6074, %v6081
  %v6084 = vshrl.u32 %v6066, %v6082
  %v6085 = vor.u32 %v6083, %v6084
  %v6086 = vsub.s32 4294967266, %v6081
  %v6087 = vadd.s32 %v6086, 127
  %v6088 = vshll.u32 %v6087, 23
  %v6089 = vor.u32 4788187, %v6088
  %v6090 = vand.u32 2147483647, %v6089
  %v6092 = vcvt.s32.f32 %v6085
  %v6093 = vmul.f32 %v6092, %v6090
  %v6094 = vxor.u32 %v6093, 2147483648
  %v6095 = vsel %vm6012, %v6094, %v6093
  %v6096 = vsub.s32 4, %v6072
  %v6097 = vsel %vm6012, %v6096, %v6072
  %v6098 = vsel %vm6011, %v590, %v6095
  %v6099 = vsel %vm6011, 0, %v6097
  %v6100 = vcosq.f32.pop %v6098
  %v6101 = vsinq.f32.pop %v6098
  %vm6102 = vweird.f32 %v590
  %v6103 = vadd.s32 %v6099, 3
  %v6104 = vand.u32 %v6103, 3
  %vm6105 = vcmp.lt.s32.totalorder %v6104, 2
  %vm6106 = vcmp.eq.s32.totalorder %v6104, 0
  %v6107 = vxor.u32 %v6101, 2147483648
  %v6108 = vsel %vm6106, %v6100, %v6107
  %vm6109 = vcmp.eq.s32.totalorder %v6104, 2
  %v6110 = vxor.u32 %v6100, 2147483648
  %v6111 = vsel %vm6109, %v6110, %v6101
  %v6112 = vsel %vm6105, %v6108, %v6111
  %v6113 = vsel %vm6102, nan, %v6112
  %v6114 = vand.u32 2147483647, %v591
  %vm6115 = vcmp.le.f32.partialorder %v6114, 0.7853982
  %vm6116 = vcmp.lt.s32.totalorder %v591, 0
  %v6117 = vand.u32 %v591, 2139095040
  %v6118 = vshrl.u32 %v6117, 23
  %v6119 = vsub.s32 %v6118, 127
  %v6120 = vand.u32 2147483647, %v591
  %v6121 = vand.u32 %v6120, 8388607
  %v6122 = vor.u32 %v6121, 8388608
  %v6123 = vsub.s32 0, %v6122
  %v6124 = vadd.s32 %v6119, 1
  %vm6125 = vcmp.gt.s32.totalorder %v6124, 0
  %v6126 = vsel %vm6125, %v6124, 0
  %v6127 = vshrl.u32 %v6126, 5
  %v6128 = vand.u32 %v6126, 31
  %v6129 = vsub.s32 32, %v6128
  %v6130 = vshrl.u32 683565275, %v6129
  %v6131 = vshll.u32 683565275, %v6128
  %v6132 = vshrl.u32 2475754826, %v6129
  %v6133 = vor.u32 %v6131, %v6132
  %v6134 = vshll.u32 2475754826, %v6128
  %v6135 = vshrl.u32 2131351028, %v6129
  %v6136 = vor.u32 %v6134, %v6135
  %v6137 = vshll.u32 2131351028, %v6128
  %v6138 = vshrl.u32 2102212464, %v6129
  %v6139 = vor.u32 %v6137, %v6138
  %v6140 = vshll.u32 2102212464, %v6128
  %v6141 = vshrl.u32 920167782, %v6129
  %v6142 = vor.u32 %v6140, %v6141
  %v6143 = vshll.u32 920167782, %v6128
  %v6144 = vshrl.u32 1326507024, %v6129
  %v6145 = vor.u32 %v6143, %v6144
  %vm6146 = vcmp.lt.s32.totalorder %v6127, 1
  %vm6147 = vcmp.lt.s32.totalorder %v6127, 2
  %vm6148 = vcmp.lt.s32.totalorder %v6127, 3
  %vm6149 = vcmp.lt.s32.totalorder %v6127, 4
  %v6150 = vsel %vm6146, %v6130, %v6133
  %v6151 = vsel %vm6149, %v6139, 2102212464
  %v6152 = vsel %vm6148, %v6136, %v6151
  %v6153 = vsel %vm6147, %v6150, %v6152
  %v6154 = vsel %vm6146, %v6133, %v6136
  %v6155 = vsel %vm6149, %v6142, 920167782
  %v6156 = vsel %vm6148, %v6139, %v6155
  %v6157 = vsel %vm6147, %v6154, %v6156
  %v6158 = vsel %vm6146, %v6136, %v6139
  %v6159 = vsel %vm6149, %v6145, 1326507024
  %v6160 = vsel %vm6148, %v6142, %v6159
  %v6161 = vsel %vm6147, %v6158, %v6160
  %v6162 = vshll.u32 %v6122, 8
  %v6163 = vmul.u32.u64.compose %v6162, %v6161
  %v6164 = vextract.low.u32 %v6163
  %v6165 = vextract.high.u32 %v6163
  %v6166 = vmul.u32.u64.compose %v6162, %v6157
  %v6167 = vextract.low.u32 %v6166
  %v6168 = vextract.high.u32 %v6166
  %v6169 = vmul.u32 %v6162, %v6153
  %v6170 = vadd.s32 %v6165, %v6167
  %vm6171 = vc.u32 %v6165, %v6167
  %v6172 = vadd.s32 %v6168, 1
  %v6173 = vsel %vm6171, %v6172, %v6168
  %v6174 = vadd.s32 %v6169, %v6173
  %v6175 = vadd.s32 %v6174, 536870912
  %v6176 = vshrl.u32 %v6175, 30
  %v6177 = vshll.u32 %v6176, 30
  %v6178 = vsub.s32 %v6174, %v6177
  %vm6179 = vcmp.lt.s32.totalorder %v6178, 0
  %v6180 = vsub.s32 0, %v6178
  %v6181 = vsel %vm6179, %v6180, %v6178
  %v6182 = vclz %v6181
  %v6183 = vsub.s32 %v6182, 2
  %vm6184 = vcmp.gt.s32.totalorder 0, %v6183
  %v6185 = vsel %vm6184, 0, %v6183
  %v6186 = vsub.s32 32, %v6185
  %v6187 = vshll.u32 %v6178, %v6185
  %v6188 = vshrl.u32 %v6170, %v6186
  %v6189 = vor.u32 %v6187, %v6188
  %v6190 = vsub.s32 4294967266, %v6185
  %v6191 = vadd.s32 %v6190, 127
  %v6192 = vshll.u32 %v6191, 23
  %v6193 = vor.u32 4788187, %v6192
  %v6194 = vand.u32 2147483647, %v6193
  %v6196 = vcvt.s32.f32 %v6189
  %v6197 = vmul.f32 %v6196, %v6194
  %v6198 = vxor.u32 %v6197, 2147483648
  %v6199 = vsel %vm6116, %v6198, %v6197
  %v6200 = vsub.s32 4, %v6176
  %v6201 = vsel %vm6116, %v6200, %v6176
  %v6202 = vsel %vm6115, %v591, %v6199
  %v6203 = vsel %vm6115, 0, %v6201
  %v6204 = vcosq.f32.pop %v6202
  %v6205 = vsinq.f32.pop %v6202
  %vm6206 = vweird.f32 %v591
  %v6207 = vadd.s32 %v6203, 3
  %v6208 = vand.u32 %v6207, 3
  %vm6209 = vcmp.lt.s32.totalorder %v6208, 2
  %vm6210 = vcmp.eq.s32.totalorder %v6208, 0
  %v6211 = vxor.u32 %v6205, 2147483648
  %v6212 = vsel %vm6210, %v6204, %v6211
  %vm6213 = vcmp.eq.s32.totalorder %v6208, 2
  %v6214 = vxor.u32 %v6204, 2147483648
  %v6215 = vsel %vm6213, %v6214, %v6205
  %v6216 = vsel %vm6209, %v6212, %v6215
  %v6217 = vsel %vm6206, nan, %v6216
  %v6218 = vand.u32 2147483647, %v592
  %vm6219 = vcmp.le.f32.partialorder %v6218, 0.7853982
  %vm6220 = vcmp.lt.s32.totalorder %v592, 0
  %v6221 = vand.u32 %v592, 2139095040
  %v6222 = vshrl.u32 %v6221, 23
  %v6223 = vsub.s32 %v6222, 127
  %v6224 = vand.u32 2147483647, %v592
  %v6225 = vand.u32 %v6224, 8388607
  %v6226 = vor.u32 %v6225, 8388608
  %v6227 = vsub.s32 0, %v6226
  %v6228 = vadd.s32 %v6223, 1
  %vm6229 = vcmp.gt.s32.totalorder %v6228, 0
  %v6230 = vsel %vm6229, %v6228, 0
  %v6231 = vshrl.u32 %v6230, 5
  %v6232 = vand.u32 %v6230, 31
  %v6233 = vsub.s32 32, %v6232
  %v6234 = vshrl.u32 683565275, %v6233
  %v6235 = vshll.u32 683565275, %v6232
  %v6236 = vshrl.u32 2475754826, %v6233
  %v6237 = vor.u32 %v6235, %v6236
  %v6238 = vshll.u32 2475754826, %v6232
  %v6239 = vshrl.u32 2131351028, %v6233
  %v6240 = vor.u32 %v6238, %v6239
  %v6241 = vshll.u32 2131351028, %v6232
  %v6242 = vshrl.u32 2102212464, %v6233
  %v6243 = vor.u32 %v6241, %v6242
  %v6244 = vshll.u32 2102212464, %v6232
  %v6245 = vshrl.u32 920167782, %v6233
  %v6246 = vor.u32 %v6244, %v6245
  %v6247 = vshll.u32 920167782, %v6232
  %v6248 = vshrl.u32 1326507024, %v6233
  %v6249 = vor.u32 %v6247, %v6248
  %vm6250 = vcmp.lt.s32.totalorder %v6231, 1
  %vm6251 = vcmp.lt.s32.totalorder %v6231, 2
  %vm6252 = vcmp.lt.s32.totalorder %v6231, 3
  %vm6253 = vcmp.lt.s32.totalorder %v6231, 4
  %v6254 = vsel %vm6250, %v6234, %v6237
  %v6255 = vsel %vm6253, %v6243, 2102212464
  %v6256 = vsel %vm6252, %v6240, %v6255
  %v6257 = vsel %vm6251, %v6254, %v6256
  %v6258 = vsel %vm6250, %v6237, %v6240
  %v6259 = vsel %vm6253, %v6246, 920167782
  %v6260 = vsel %vm6252, %v6243, %v6259
  %v6261 = vsel %vm6251, %v6258, %v6260
  %v6262 = vsel %vm6250, %v6240, %v6243
  %v6263 = vsel %vm6253, %v6249, 1326507024
  %v6264 = vsel %vm6252, %v6246, %v6263
  %v6265 = vsel %vm6251, %v6262, %v6264
  %v6266 = vshll.u32 %v6226, 8
  %v6267 = vmul.u32.u64.compose %v6266, %v6265
  %v6268 = vextract.low.u32 %v6267
  %v6269 = vextract.high.u32 %v6267
  %v6270 = vmul.u32.u64.compose %v6266, %v6261
  %v6271 = vextract.low.u32 %v6270
  %v6272 = vextract.high.u32 %v6270
  %v6273 = vmul.u32 %v6266, %v6257
  %v6274 = vadd.s32 %v6269, %v6271
  %vm6275 = vc.u32 %v6269, %v6271
  %v6276 = vadd.s32 %v6272, 1
  %v6277 = vsel %vm6275, %v6276, %v6272
  %v6278 = vadd.s32 %v6273, %v6277
  %v6279 = vadd.s32 %v6278, 536870912
  %v6280 = vshrl.u32 %v6279, 30
  %v6281 = vshll.u32 %v6280, 30
  %v6282 = vsub.s32 %v6278, %v6281
  %vm6283 = vcmp.lt.s32.totalorder %v6282, 0
  %v6284 = vsub.s32 0, %v6282
  %v6285 = vsel %vm6283, %v6284, %v6282
  %v6286 = vclz %v6285
  %v6287 = vsub.s32 %v6286, 2
  %vm6288 = vcmp.gt.s32.totalorder 0, %v6287
  %v6289 = vsel %vm6288, 0, %v6287
  %v6290 = vsub.s32 32, %v6289
  %v6291 = vshll.u32 %v6282, %v6289
  %v6292 = vshrl.u32 %v6274, %v6290
  %v6293 = vor.u32 %v6291, %v6292
  %v6294 = vsub.s32 4294967266, %v6289
  %v6295 = vadd.s32 %v6294, 127
  %v6296 = vshll.u32 %v6295, 23
  %v6297 = vor.u32 4788187, %v6296
  %v6298 = vand.u32 2147483647, %v6297
  %v6300 = vcvt.s32.f32 %v6293
  %v6301 = vmul.f32 %v6300, %v6298
  %v6302 = vxor.u32 %v6301, 2147483648
  %v6303 = vsel %vm6220, %v6302, %v6301
  %v6304 = vsub.s32 4, %v6280
  %v6305 = vsel %vm6220, %v6304, %v6280
  %v6306 = vsel %vm6219, %v592, %v6303
  %v6307 = vsel %vm6219, 0, %v6305
  %v6308 = vcosq.f32.pop %v6306
  %v6309 = vsinq.f32.pop %v6306
  %vm6310 = vweird.f32 %v592
  %v6311 = vadd.s32 %v6307, 3
  %v6312 = vand.u32 %v6311, 3
  %vm6313 = vcmp.lt.s32.totalorder %v6312, 2
  %vm6314 = vcmp.eq.s32.totalorder %v6312, 0
  %v6315 = vxor.u32 %v6309, 2147483648
  %v6316 = vsel %vm6314, %v6308, %v6315
  %vm6317 = vcmp.eq.s32.totalorder %v6312, 2
  %v6318 = vxor.u32 %v6308, 2147483648
  %v6319 = vsel %vm6317, %v6318, %v6309
  %v6320 = vsel %vm6313, %v6316, %v6319
  %v6321 = vsel %vm6310, nan, %v6320
  %v6322 = vand.u32 2147483647, %v593
  %vm6323 = vcmp.le.f32.partialorder %v6322, 0.7853982
  %vm6324 = vcmp.lt.s32.totalorder %v593, 0
  %v6325 = vand.u32 %v593, 2139095040
  %v6326 = vshrl.u32 %v6325, 23
  %v6327 = vsub.s32 %v6326, 127
  %v6328 = vand.u32 2147483647, %v593
  %v6329 = vand.u32 %v6328, 8388607
  %v6330 = vor.u32 %v6329, 8388608
  %v6331 = vsub.s32 0, %v6330
  %v6332 = vadd.s32 %v6327, 1
  %vm6333 = vcmp.gt.s32.totalorder %v6332, 0
  %v6334 = vsel %vm6333, %v6332, 0
  %v6335 = vshrl.u32 %v6334, 5
  %v6336 = vand.u32 %v6334, 31
  %v6337 = vsub.s32 32, %v6336
  %v6338 = vshrl.u32 683565275, %v6337
  %v6339 = vshll.u32 683565275, %v6336
  %v6340 = vshrl.u32 2475754826, %v6337
  %v6341 = vor.u32 %v6339, %v6340
  %v6342 = vshll.u32 2475754826, %v6336
  %v6343 = vshrl.u32 2131351028, %v6337
  %v6344 = vor.u32 %v6342, %v6343
  %v6345 = vshll.u32 2131351028, %v6336
  %v6346 = vshrl.u32 2102212464, %v6337
  %v6347 = vor.u32 %v6345, %v6346
  %v6348 = vshll.u32 2102212464, %v6336
  %v6349 = vshrl.u32 920167782, %v6337
  %v6350 = vor.u32 %v6348, %v6349
  %v6351 = vshll.u32 920167782, %v6336
  %v6352 = vshrl.u32 1326507024, %v6337
  %v6353 = vor.u32 %v6351, %v6352
  %vm6354 = vcmp.lt.s32.totalorder %v6335, 1
  %vm6355 = vcmp.lt.s32.totalorder %v6335, 2
  %vm6356 = vcmp.lt.s32.totalorder %v6335, 3
  %vm6357 = vcmp.lt.s32.totalorder %v6335, 4
  %v6358 = vsel %vm6354, %v6338, %v6341
  %v6359 = vsel %vm6357, %v6347, 2102212464
  %v6360 = vsel %vm6356, %v6344, %v6359
  %v6361 = vsel %vm6355, %v6358, %v6360
  %v6362 = vsel %vm6354, %v6341, %v6344
  %v6363 = vsel %vm6357, %v6350, 920167782
  %v6364 = vsel %vm6356, %v6347, %v6363
  %v6365 = vsel %vm6355, %v6362, %v6364
  %v6366 = vsel %vm6354, %v6344, %v6347
  %v6367 = vsel %vm6357, %v6353, 1326507024
  %v6368 = vsel %vm6356, %v6350, %v6367
  %v6369 = vsel %vm6355, %v6366, %v6368
  %v6370 = vshll.u32 %v6330, 8
  %v6371 = vmul.u32.u64.compose %v6370, %v6369
  %v6372 = vextract.low.u32 %v6371
  %v6373 = vextract.high.u32 %v6371
  %v6374 = vmul.u32.u64.compose %v6370, %v6365
  %v6375 = vextract.low.u32 %v6374
  %v6376 = vextract.high.u32 %v6374
  %v6377 = vmul.u32 %v6370, %v6361
  %v6378 = vadd.s32 %v6373, %v6375
  %vm6379 = vc.u32 %v6373, %v6375
  %v6380 = vadd.s32 %v6376, 1
  %v6381 = vsel %vm6379, %v6380, %v6376
  %v6382 = vadd.s32 %v6377, %v6381
  %v6383 = vadd.s32 %v6382, 536870912
  %v6384 = vshrl.u32 %v6383, 30
  %v6385 = vshll.u32 %v6384, 30
  %v6386 = vsub.s32 %v6382, %v6385
  %vm6387 = vcmp.lt.s32.totalorder %v6386, 0
  %v6388 = vsub.s32 0, %v6386
  %v6389 = vsel %vm6387, %v6388, %v6386
  %v6390 = vclz %v6389
  %v6391 = vsub.s32 %v6390, 2
  %vm6392 = vcmp.gt.s32.totalorder 0, %v6391
  %v6393 = vsel %vm6392, 0, %v6391
  %v6394 = vsub.s32 32, %v6393
  %v6395 = vshll.u32 %v6386, %v6393
  %v6396 = vshrl.u32 %v6378, %v6394
  %v6397 = vor.u32 %v6395, %v6396
  %v6398 = vsub.s32 4294967266, %v6393
  %v6399 = vadd.s32 %v6398, 127
  %v6400 = vshll.u32 %v6399, 23
  %v6401 = vor.u32 4788187, %v6400
  %v6402 = vand.u32 2147483647, %v6401
  %v6404 = vcvt.s32.f32 %v6397
  %v6405 = vmul.f32 %v6404, %v6402
  %v6406 = vxor.u32 %v6405, 2147483648
  %v6407 = vsel %vm6324, %v6406, %v6405
  %v6408 = vsub.s32 4, %v6384
  %v6409 = vsel %vm6324, %v6408, %v6384
  %v6410 = vsel %vm6323, %v593, %v6407
  %v6411 = vsel %vm6323, 0, %v6409
  %v6412 = vcosq.f32.pop %v6410
  %v6413 = vsinq.f32.pop %v6410
  %vm6414 = vweird.f32 %v593
  %v6415 = vadd.s32 %v6411, 3
  %v6416 = vand.u32 %v6415, 3
  %vm6417 = vcmp.lt.s32.totalorder %v6416, 2
  %vm6418 = vcmp.eq.s32.totalorder %v6416, 0
  %v6419 = vxor.u32 %v6413, 2147483648
  %v6420 = vsel %vm6418, %v6412, %v6419
  %vm6421 = vcmp.eq.s32.totalorder %v6416, 2
  %v6422 = vxor.u32 %v6412, 2147483648
  %v6423 = vsel %vm6421, %v6422, %v6413
  %v6424 = vsel %vm6417, %v6420, %v6423
  %v6425 = vsel %vm6414, nan, %v6424
  %v6426 = vand.u32 2147483647, %v594
  %vm6427 = vcmp.le.f32.partialorder %v6426, 0.7853982
  %vm6428 = vcmp.lt.s32.totalorder %v594, 0
  %v6429 = vand.u32 %v594, 2139095040
  %v6430 = vshrl.u32 %v6429, 23
  %v6431 = vsub.s32 %v6430, 127
  %v6432 = vand.u32 2147483647, %v594
  %v6433 = vand.u32 %v6432, 8388607
  %v6434 = vor.u32 %v6433, 8388608
  %v6435 = vsub.s32 0, %v6434
  %v6436 = vadd.s32 %v6431, 1
  %vm6437 = vcmp.gt.s32.totalorder %v6436, 0
  %v6438 = vsel %vm6437, %v6436, 0
  %v6439 = vshrl.u32 %v6438, 5
  %v6440 = vand.u32 %v6438, 31
  %v6441 = vsub.s32 32, %v6440
  %v6442 = vshrl.u32 683565275, %v6441
  %v6443 = vshll.u32 683565275, %v6440
  %v6444 = vshrl.u32 2475754826, %v6441
  %v6445 = vor.u32 %v6443, %v6444
  %v6446 = vshll.u32 2475754826, %v6440
  %v6447 = vshrl.u32 2131351028, %v6441
  %v6448 = vor.u32 %v6446, %v6447
  %v6449 = vshll.u32 2131351028, %v6440
  %v6450 = vshrl.u32 2102212464, %v6441
  %v6451 = vor.u32 %v6449, %v6450
  %v6452 = vshll.u32 2102212464, %v6440
  %v6453 = vshrl.u32 920167782, %v6441
  %v6454 = vor.u32 %v6452, %v6453
  %v6455 = vshll.u32 920167782, %v6440
  %v6456 = vshrl.u32 1326507024, %v6441
  %v6457 = vor.u32 %v6455, %v6456
  %vm6458 = vcmp.lt.s32.totalorder %v6439, 1
  %vm6459 = vcmp.lt.s32.totalorder %v6439, 2
  %vm6460 = vcmp.lt.s32.totalorder %v6439, 3
  %vm6461 = vcmp.lt.s32.totalorder %v6439, 4
  %v6462 = vsel %vm6458, %v6442, %v6445
  %v6463 = vsel %vm6461, %v6451, 2102212464
  %v6464 = vsel %vm6460, %v6448, %v6463
  %v6465 = vsel %vm6459, %v6462, %v6464
  %v6466 = vsel %vm6458, %v6445, %v6448
  %v6467 = vsel %vm6461, %v6454, 920167782
  %v6468 = vsel %vm6460, %v6451, %v6467
  %v6469 = vsel %vm6459, %v6466, %v6468
  %v6470 = vsel %vm6458, %v6448, %v6451
  %v6471 = vsel %vm6461, %v6457, 1326507024
  %v6472 = vsel %vm6460, %v6454, %v6471
  %v6473 = vsel %vm6459, %v6470, %v6472
  %v6474 = vshll.u32 %v6434, 8
  %v6475 = vmul.u32.u64.compose %v6474, %v6473
  %v6476 = vextract.low.u32 %v6475
  %v6477 = vextract.high.u32 %v6475
  %v6478 = vmul.u32.u64.compose %v6474, %v6469
  %v6479 = vextract.low.u32 %v6478
  %v6480 = vextract.high.u32 %v6478
  %v6481 = vmul.u32 %v6474, %v6465
  %v6482 = vadd.s32 %v6477, %v6479
  %vm6483 = vc.u32 %v6477, %v6479
  %v6484 = vadd.s32 %v6480, 1
  %v6485 = vsel %vm6483, %v6484, %v6480
  %v6486 = vadd.s32 %v6481, %v6485
  %v6487 = vadd.s32 %v6486, 536870912
  %v6488 = vshrl.u32 %v6487, 30
  %v6489 = vshll.u32 %v6488, 30
  %v6490 = vsub.s32 %v6486, %v6489
  %vm6491 = vcmp.lt.s32.totalorder %v6490, 0
  %v6492 = vsub.s32 0, %v6490
  %v6493 = vsel %vm6491, %v6492, %v6490
  %v6494 = vclz %v6493
  %v6495 = vsub.s32 %v6494, 2
  %vm6496 = vcmp.gt.s32.totalorder 0, %v6495
  %v6497 = vsel %vm6496, 0, %v6495
  %v6498 = vsub.s32 32, %v6497
  %v6499 = vshll.u32 %v6490, %v6497
  %v6500 = vshrl.u32 %v6482, %v6498
  %v6501 = vor.u32 %v6499, %v6500
  %v6502 = vsub.s32 4294967266, %v6497
  %v6503 = vadd.s32 %v6502, 127
  %v6504 = vshll.u32 %v6503, 23
  %v6505 = vor.u32 4788187, %v6504
  %v6506 = vand.u32 2147483647, %v6505
  %v6508 = vcvt.s32.f32 %v6501
  %v6509 = vmul.f32 %v6508, %v6506
  %v6510 = vxor.u32 %v6509, 2147483648
  %v6511 = vsel %vm6428, %v6510, %v6509
  %v6512 = vsub.s32 4, %v6488
  %v6513 = vsel %vm6428, %v6512, %v6488
  %v6514 = vsel %vm6427, %v594, %v6511
  %v6515 = vsel %vm6427, 0, %v6513
  %v6516 = vcosq.f32.pop %v6514
  %v6517 = vsinq.f32.pop %v6514
  %vm6518 = vweird.f32 %v594
  %v6519 = vadd.s32 %v6515, 3
  %v6520 = vand.u32 %v6519, 3
  %vm6521 = vcmp.lt.s32.totalorder %v6520, 2
  %vm6522 = vcmp.eq.s32.totalorder %v6520, 0
  %v6523 = vxor.u32 %v6517, 2147483648
  %v6524 = vsel %vm6522, %v6516, %v6523
  %vm6525 = vcmp.eq.s32.totalorder %v6520, 2
  %v6526 = vxor.u32 %v6516, 2147483648
  %v6527 = vsel %vm6525, %v6526, %v6517
  %v6528 = vsel %vm6521, %v6524, %v6527
  %v6529 = vsel %vm6518, nan, %v6528
  %v6530 = vand.u32 2147483647, %v595
  %vm6531 = vcmp.le.f32.partialorder %v6530, 0.7853982
  %vm6532 = vcmp.lt.s32.totalorder %v595, 0
  %v6533 = vand.u32 %v595, 2139095040
  %v6534 = vshrl.u32 %v6533, 23
  %v6535 = vsub.s32 %v6534, 127
  %v6536 = vand.u32 2147483647, %v595
  %v6537 = vand.u32 %v6536, 8388607
  %v6538 = vor.u32 %v6537, 8388608
  %v6539 = vsub.s32 0, %v6538
  %v6540 = vadd.s32 %v6535, 1
  %vm6541 = vcmp.gt.s32.totalorder %v6540, 0
  %v6542 = vsel %vm6541, %v6540, 0
  %v6543 = vshrl.u32 %v6542, 5
  %v6544 = vand.u32 %v6542, 31
  %v6545 = vsub.s32 32, %v6544
  %v6546 = vshrl.u32 683565275, %v6545
  %v6547 = vshll.u32 683565275, %v6544
  %v6548 = vshrl.u32 2475754826, %v6545
  %v6549 = vor.u32 %v6547, %v6548
  %v6550 = vshll.u32 2475754826, %v6544
  %v6551 = vshrl.u32 2131351028, %v6545
  %v6552 = vor.u32 %v6550, %v6551
  %v6553 = vshll.u32 2131351028, %v6544
  %v6554 = vshrl.u32 2102212464, %v6545
  %v6555 = vor.u32 %v6553, %v6554
  %v6556 = vshll.u32 2102212464, %v6544
  %v6557 = vshrl.u32 920167782, %v6545
  %v6558 = vor.u32 %v6556, %v6557
  %v6559 = vshll.u32 920167782, %v6544
  %v6560 = vshrl.u32 1326507024, %v6545
  %v6561 = vor.u32 %v6559, %v6560
  %vm6562 = vcmp.lt.s32.totalorder %v6543, 1
  %vm6563 = vcmp.lt.s32.totalorder %v6543, 2
  %vm6564 = vcmp.lt.s32.totalorder %v6543, 3
  %vm6565 = vcmp.lt.s32.totalorder %v6543, 4
  %v6566 = vsel %vm6562, %v6546, %v6549
  %v6567 = vsel %vm6565, %v6555, 2102212464
  %v6568 = vsel %vm6564, %v6552, %v6567
  %v6569 = vsel %vm6563, %v6566, %v6568
  %v6570 = vsel %vm6562, %v6549, %v6552
  %v6571 = vsel %vm6565, %v6558, 920167782
  %v6572 = vsel %vm6564, %v6555, %v6571
  %v6573 = vsel %vm6563, %v6570, %v6572
  %v6574 = vsel %vm6562, %v6552, %v6555
  %v6575 = vsel %vm6565, %v6561, 1326507024
  %v6576 = vsel %vm6564, %v6558, %v6575
  %v6577 = vsel %vm6563, %v6574, %v6576
  %v6578 = vshll.u32 %v6538, 8
  %v6579 = vmul.u32.u64.compose %v6578, %v6577
  %v6580 = vextract.low.u32 %v6579
  %v6581 = vextract.high.u32 %v6579
  %v6582 = vmul.u32.u64.compose %v6578, %v6573
  %v6583 = vextract.low.u32 %v6582
  %v6584 = vextract.high.u32 %v6582
  %v6585 = vmul.u32 %v6578, %v6569
  %v6586 = vadd.s32 %v6581, %v6583
  %vm6587 = vc.u32 %v6581, %v6583
  %v6588 = vadd.s32 %v6584, 1
  %v6589 = vsel %vm6587, %v6588, %v6584
  %v6590 = vadd.s32 %v6585, %v6589
  %v6591 = vadd.s32 %v6590, 536870912
  %v6592 = vshrl.u32 %v6591, 30
  %v6593 = vshll.u32 %v6592, 30
  %v6594 = vsub.s32 %v6590, %v6593
  %vm6595 = vcmp.lt.s32.totalorder %v6594, 0
  %v6596 = vsub.s32 0, %v6594
  %v6597 = vsel %vm6595, %v6596, %v6594
  %v6598 = vclz %v6597
  %v6599 = vsub.s32 %v6598, 2
  %vm6600 = vcmp.gt.s32.totalorder 0, %v6599
  %v6601 = vsel %vm6600, 0, %v6599
  %v6602 = vsub.s32 32, %v6601
  %v6603 = vshll.u32 %v6594, %v6601
  %v6604 = vshrl.u32 %v6586, %v6602
  %v6605 = vor.u32 %v6603, %v6604
  %v6606 = vsub.s32 4294967266, %v6601
  %v6607 = vadd.s32 %v6606, 127
  %v6608 = vshll.u32 %v6607, 23
  %v6609 = vor.u32 4788187, %v6608
  %v6610 = vand.u32 2147483647, %v6609
  %v6612 = vcvt.s32.f32 %v6605
  %v6613 = vmul.f32 %v6612, %v6610
  %v6614 = vxor.u32 %v6613, 2147483648
  %v6615 = vsel %vm6532, %v6614, %v6613
  %v6616 = vsub.s32 4, %v6592
  %v6617 = vsel %vm6532, %v6616, %v6592
  %v6618 = vsel %vm6531, %v595, %v6615
  %v6619 = vsel %vm6531, 0, %v6617
  %v6620 = vcosq.f32.pop %v6618
  %v6621 = vsinq.f32.pop %v6618
  %vm6622 = vweird.f32 %v595
  %v6623 = vadd.s32 %v6619, 3
  %v6624 = vand.u32 %v6623, 3
  %vm6625 = vcmp.lt.s32.totalorder %v6624, 2
  %vm6626 = vcmp.eq.s32.totalorder %v6624, 0
  %v6627 = vxor.u32 %v6621, 2147483648
  %v6628 = vsel %vm6626, %v6620, %v6627
  %vm6629 = vcmp.eq.s32.totalorder %v6624, 2
  %v6630 = vxor.u32 %v6620, 2147483648
  %v6631 = vsel %vm6629, %v6630, %v6621
  %v6632 = vsel %vm6625, %v6628, %v6631
  %v6633 = vsel %vm6622, nan, %v6632
  %v6634 = vand.u32 2147483647, %v596
  %vm6635 = vcmp.le.f32.partialorder %v6634, 0.7853982
  %vm6636 = vcmp.lt.s32.totalorder %v596, 0
  %v6637 = vand.u32 %v596, 2139095040
  %v6638 = vshrl.u32 %v6637, 23
  %v6639 = vsub.s32 %v6638, 127
  %v6640 = vand.u32 2147483647, %v596
  %v6641 = vand.u32 %v6640, 8388607
  %v6642 = vor.u32 %v6641, 8388608
  %v6643 = vsub.s32 0, %v6642
  %v6644 = vadd.s32 %v6639, 1
  %vm6645 = vcmp.gt.s32.totalorder %v6644, 0
  %v6646 = vsel %vm6645, %v6644, 0
  %v6647 = vshrl.u32 %v6646, 5
  %v6648 = vand.u32 %v6646, 31
  %v6649 = vsub.s32 32, %v6648
  %v6650 = vshrl.u32 683565275, %v6649
  %v6651 = vshll.u32 683565275, %v6648
  %v6652 = vshrl.u32 2475754826, %v6649
  %v6653 = vor.u32 %v6651, %v6652
  %v6654 = vshll.u32 2475754826, %v6648
  %v6655 = vshrl.u32 2131351028, %v6649
  %v6656 = vor.u32 %v6654, %v6655
  %v6657 = vshll.u32 2131351028, %v6648
  %v6658 = vshrl.u32 2102212464, %v6649
  %v6659 = vor.u32 %v6657, %v6658
  %v6660 = vshll.u32 2102212464, %v6648
  %v6661 = vshrl.u32 920167782, %v6649
  %v6662 = vor.u32 %v6660, %v6661
  %v6663 = vshll.u32 920167782, %v6648
  %v6664 = vshrl.u32 1326507024, %v6649
  %v6665 = vor.u32 %v6663, %v6664
  %vm6666 = vcmp.lt.s32.totalorder %v6647, 1
  %vm6667 = vcmp.lt.s32.totalorder %v6647, 2
  %vm6668 = vcmp.lt.s32.totalorder %v6647, 3
  %vm6669 = vcmp.lt.s32.totalorder %v6647, 4
  %v6670 = vsel %vm6666, %v6650, %v6653
  %v6671 = vsel %vm6669, %v6659, 2102212464
  %v6672 = vsel %vm6668, %v6656, %v6671
  %v6673 = vsel %vm6667, %v6670, %v6672
  %v6674 = vsel %vm6666, %v6653, %v6656
  %v6675 = vsel %vm6669, %v6662, 920167782
  %v6676 = vsel %vm6668, %v6659, %v6675
  %v6677 = vsel %vm6667, %v6674, %v6676
  %v6678 = vsel %vm6666, %v6656, %v6659
  %v6679 = vsel %vm6669, %v6665, 1326507024
  %v6680 = vsel %vm6668, %v6662, %v6679
  %v6681 = vsel %vm6667, %v6678, %v6680
  %v6682 = vshll.u32 %v6642, 8
  %v6683 = vmul.u32.u64.compose %v6682, %v6681
  %v6684 = vextract.low.u32 %v6683
  %v6685 = vextract.high.u32 %v6683
  %v6686 = vmul.u32.u64.compose %v6682, %v6677
  %v6687 = vextract.low.u32 %v6686
  %v6688 = vextract.high.u32 %v6686
  %v6689 = vmul.u32 %v6682, %v6673
  %v6690 = vadd.s32 %v6685, %v6687
  %vm6691 = vc.u32 %v6685, %v6687
  %v6692 = vadd.s32 %v6688, 1
  %v6693 = vsel %vm6691, %v6692, %v6688
  %v6694 = vadd.s32 %v6689, %v6693
  %v6695 = vadd.s32 %v6694, 536870912
  %v6696 = vshrl.u32 %v6695, 30
  %v6697 = vshll.u32 %v6696, 30
  %v6698 = vsub.s32 %v6694, %v6697
  %vm6699 = vcmp.lt.s32.totalorder %v6698, 0
  %v6700 = vsub.s32 0, %v6698
  %v6701 = vsel %vm6699, %v6700, %v6698
  %v6702 = vclz %v6701
  %v6703 = vsub.s32 %v6702, 2
  %vm6704 = vcmp.gt.s32.totalorder 0, %v6703
  %v6705 = vsel %vm6704, 0, %v6703
  %v6706 = vsub.s32 32, %v6705
  %v6707 = vshll.u32 %v6698, %v6705
  %v6708 = vshrl.u32 %v6690, %v6706
  %v6709 = vor.u32 %v6707, %v6708
  %v6710 = vsub.s32 4294967266, %v6705
  %v6711 = vadd.s32 %v6710, 127
  %v6712 = vshll.u32 %v6711, 23
  %v6713 = vor.u32 4788187, %v6712
  %v6714 = vand.u32 2147483647, %v6713
  %v6716 = vcvt.s32.f32 %v6709
  %v6717 = vmul.f32 %v6716, %v6714
  %v6718 = vxor.u32 %v6717, 2147483648
  %v6719 = vsel %vm6636, %v6718, %v6717
  %v6720 = vsub.s32 4, %v6696
  %v6721 = vsel %vm6636, %v6720, %v6696
  %v6722 = vsel %vm6635, %v596, %v6719
  %v6723 = vsel %vm6635, 0, %v6721
  %v6724 = vcosq.f32.pop %v6722
  %v6725 = vsinq.f32.pop %v6722
  %vm6726 = vweird.f32 %v596
  %v6727 = vadd.s32 %v6723, 3
  %v6728 = vand.u32 %v6727, 3
  %vm6729 = vcmp.lt.s32.totalorder %v6728, 2
  %vm6730 = vcmp.eq.s32.totalorder %v6728, 0
  %v6731 = vxor.u32 %v6725, 2147483648
  %v6732 = vsel %vm6730, %v6724, %v6731
  %vm6733 = vcmp.eq.s32.totalorder %v6728, 2
  %v6734 = vxor.u32 %v6724, 2147483648
  %v6735 = vsel %vm6733, %v6734, %v6725
  %v6736 = vsel %vm6729, %v6732, %v6735
  %v6737 = vsel %vm6726, nan, %v6736
  %v6738 = vand.u32 2147483647, %v597
  %vm6739 = vcmp.le.f32.partialorder %v6738, 0.7853982
  %vm6740 = vcmp.lt.s32.totalorder %v597, 0
  %v6741 = vand.u32 %v597, 2139095040
  %v6742 = vshrl.u32 %v6741, 23
  %v6743 = vsub.s32 %v6742, 127
  %v6744 = vand.u32 2147483647, %v597
  %v6745 = vand.u32 %v6744, 8388607
  %v6746 = vor.u32 %v6745, 8388608
  %v6747 = vsub.s32 0, %v6746
  %v6748 = vadd.s32 %v6743, 1
  %vm6749 = vcmp.gt.s32.totalorder %v6748, 0
  %v6750 = vsel %vm6749, %v6748, 0
  %v6751 = vshrl.u32 %v6750, 5
  %v6752 = vand.u32 %v6750, 31
  %v6753 = vsub.s32 32, %v6752
  %v6754 = vshrl.u32 683565275, %v6753
  %v6755 = vshll.u32 683565275, %v6752
  %v6756 = vshrl.u32 2475754826, %v6753
  %v6757 = vor.u32 %v6755, %v6756
  %v6758 = vshll.u32 2475754826, %v6752
  %v6759 = vshrl.u32 2131351028, %v6753
  %v6760 = vor.u32 %v6758, %v6759
  %v6761 = vshll.u32 2131351028, %v6752
  %v6762 = vshrl.u32 2102212464, %v6753
  %v6763 = vor.u32 %v6761, %v6762
  %v6764 = vshll.u32 2102212464, %v6752
  %v6765 = vshrl.u32 920167782, %v6753
  %v6766 = vor.u32 %v6764, %v6765
  %v6767 = vshll.u32 920167782, %v6752
  %v6768 = vshrl.u32 1326507024, %v6753
  %v6769 = vor.u32 %v6767, %v6768
  %vm6770 = vcmp.lt.s32.totalorder %v6751, 1
  %vm6771 = vcmp.lt.s32.totalorder %v6751, 2
  %vm6772 = vcmp.lt.s32.totalorder %v6751, 3
  %vm6773 = vcmp.lt.s32.totalorder %v6751, 4
  %v6774 = vsel %vm6770, %v6754, %v6757
  %v6775 = vsel %vm6773, %v6763, 2102212464
  %v6776 = vsel %vm6772, %v6760, %v6775
  %v6777 = vsel %vm6771, %v6774, %v6776
  %v6778 = vsel %vm6770, %v6757, %v6760
  %v6779 = vsel %vm6773, %v6766, 920167782
  %v6780 = vsel %vm6772, %v6763, %v6779
  %v6781 = vsel %vm6771, %v6778, %v6780
  %v6782 = vsel %vm6770, %v6760, %v6763
  %v6783 = vsel %vm6773, %v6769, 1326507024
  %v6784 = vsel %vm6772, %v6766, %v6783
  %v6785 = vsel %vm6771, %v6782, %v6784
  %v6786 = vshll.u32 %v6746, 8
  %v6787 = vmul.u32.u64.compose %v6786, %v6785
  %v6788 = vextract.low.u32 %v6787
  %v6789 = vextract.high.u32 %v6787
  %v6790 = vmul.u32.u64.compose %v6786, %v6781
  %v6791 = vextract.low.u32 %v6790
  %v6792 = vextract.high.u32 %v6790
  %v6793 = vmul.u32 %v6786, %v6777
  %v6794 = vadd.s32 %v6789, %v6791
  %vm6795 = vc.u32 %v6789, %v6791
  %v6796 = vadd.s32 %v6792, 1
  %v6797 = vsel %vm6795, %v6796, %v6792
  %v6798 = vadd.s32 %v6793, %v6797
  %v6799 = vadd.s32 %v6798, 536870912
  %v6800 = vshrl.u32 %v6799, 30
  %v6801 = vshll.u32 %v6800, 30
  %v6802 = vsub.s32 %v6798, %v6801
  %vm6803 = vcmp.lt.s32.totalorder %v6802, 0
  %v6804 = vsub.s32 0, %v6802
  %v6805 = vsel %vm6803, %v6804, %v6802
  %v6806 = vclz %v6805
  %v6807 = vsub.s32 %v6806, 2
  %vm6808 = vcmp.gt.s32.totalorder 0, %v6807
  %v6809 = vsel %vm6808, 0, %v6807
  %v6810 = vsub.s32 32, %v6809
  %v6811 = vshll.u32 %v6802, %v6809
  %v6812 = vshrl.u32 %v6794, %v6810
  %v6813 = vor.u32 %v6811, %v6812
  %v6814 = vsub.s32 4294967266, %v6809
  %v6815 = vadd.s32 %v6814, 127
  %v6816 = vshll.u32 %v6815, 23
  %v6817 = vor.u32 4788187, %v6816
  %v6818 = vand.u32 2147483647, %v6817
  %v6820 = vcvt.s32.f32 %v6813
  %v6821 = vmul.f32 %v6820, %v6818
  %v6822 = vxor.u32 %v6821, 2147483648
  %v6823 = vsel %vm6740, %v6822, %v6821
  %v6824 = vsub.s32 4, %v6800
  %v6825 = vsel %vm6740, %v6824, %v6800
  %v6826 = vsel %vm6739, %v597, %v6823
  %v6827 = vsel %vm6739, 0, %v6825
  %v6828 = vcosq.f32.pop %v6826
  %v6829 = vsinq.f32.pop %v6826
  %vm6830 = vweird.f32 %v597
  %v6831 = vadd.s32 %v6827, 3
  %v6832 = vand.u32 %v6831, 3
  %vm6833 = vcmp.lt.s32.totalorder %v6832, 2
  %vm6834 = vcmp.eq.s32.totalorder %v6832, 0
  %v6835 = vxor.u32 %v6829, 2147483648
  %v6836 = vsel %vm6834, %v6828, %v6835
  %vm6837 = vcmp.eq.s32.totalorder %v6832, 2
  %v6838 = vxor.u32 %v6828, 2147483648
  %v6839 = vsel %vm6837, %v6838, %v6829
  %v6840 = vsel %vm6833, %v6836, %v6839
  %v6841 = vsel %vm6830, nan, %v6840
  %v6842 = vand.u32 2147483647, %v598
  %vm6843 = vcmp.le.f32.partialorder %v6842, 0.7853982
  %vm6844 = vcmp.lt.s32.totalorder %v598, 0
  %v6845 = vand.u32 %v598, 2139095040
  %v6846 = vshrl.u32 %v6845, 23
  %v6847 = vsub.s32 %v6846, 127
  %v6848 = vand.u32 2147483647, %v598
  %v6849 = vand.u32 %v6848, 8388607
  %v6850 = vor.u32 %v6849, 8388608
  %v6851 = vsub.s32 0, %v6850
  %v6852 = vadd.s32 %v6847, 1
  %vm6853 = vcmp.gt.s32.totalorder %v6852, 0
  %v6854 = vsel %vm6853, %v6852, 0
  %v6855 = vshrl.u32 %v6854, 5
  %v6856 = vand.u32 %v6854, 31
  %v6857 = vsub.s32 32, %v6856
  %v6858 = vshrl.u32 683565275, %v6857
  %v6859 = vshll.u32 683565275, %v6856
  %v6860 = vshrl.u32 2475754826, %v6857
  %v6861 = vor.u32 %v6859, %v6860
  %v6862 = vshll.u32 2475754826, %v6856
  %v6863 = vshrl.u32 2131351028, %v6857
  %v6864 = vor.u32 %v6862, %v6863
  %v6865 = vshll.u32 2131351028, %v6856
  %v6866 = vshrl.u32 2102212464, %v6857
  %v6867 = vor.u32 %v6865, %v6866
  %v6868 = vshll.u32 2102212464, %v6856
  %v6869 = vshrl.u32 920167782, %v6857
  %v6870 = vor.u32 %v6868, %v6869
  %v6871 = vshll.u32 920167782, %v6856
  %v6872 = vshrl.u32 1326507024, %v6857
  %v6873 = vor.u32 %v6871, %v6872
  %vm6874 = vcmp.lt.s32.totalorder %v6855, 1
  %vm6875 = vcmp.lt.s32.totalorder %v6855, 2
  %vm6876 = vcmp.lt.s32.totalorder %v6855, 3
  %vm6877 = vcmp.lt.s32.totalorder %v6855, 4
  %v6878 = vsel %vm6874, %v6858, %v6861
  %v6879 = vsel %vm6877, %v6867, 2102212464
  %v6880 = vsel %vm6876, %v6864, %v6879
  %v6881 = vsel %vm6875, %v6878, %v6880
  %v6882 = vsel %vm6874, %v6861, %v6864
  %v6883 = vsel %vm6877, %v6870, 920167782
  %v6884 = vsel %vm6876, %v6867, %v6883
  %v6885 = vsel %vm6875, %v6882, %v6884
  %v6886 = vsel %vm6874, %v6864, %v6867
  %v6887 = vsel %vm6877, %v6873, 1326507024
  %v6888 = vsel %vm6876, %v6870, %v6887
  %v6889 = vsel %vm6875, %v6886, %v6888
  %v6890 = vshll.u32 %v6850, 8
  %v6891 = vmul.u32.u64.compose %v6890, %v6889
  %v6892 = vextract.low.u32 %v6891
  %v6893 = vextract.high.u32 %v6891
  %v6894 = vmul.u32.u64.compose %v6890, %v6885
  %v6895 = vextract.low.u32 %v6894
  %v6896 = vextract.high.u32 %v6894
  %v6897 = vmul.u32 %v6890, %v6881
  %v6898 = vadd.s32 %v6893, %v6895
  %vm6899 = vc.u32 %v6893, %v6895
  %v6900 = vadd.s32 %v6896, 1
  %v6901 = vsel %vm6899, %v6900, %v6896
  %v6902 = vadd.s32 %v6897, %v6901
  %v6903 = vadd.s32 %v6902, 536870912
  %v6904 = vshrl.u32 %v6903, 30
  %v6905 = vshll.u32 %v6904, 30
  %v6906 = vsub.s32 %v6902, %v6905
  %vm6907 = vcmp.lt.s32.totalorder %v6906, 0
  %v6908 = vsub.s32 0, %v6906
  %v6909 = vsel %vm6907, %v6908, %v6906
  %v6910 = vclz %v6909
  %v6911 = vsub.s32 %v6910, 2
  %vm6912 = vcmp.gt.s32.totalorder 0, %v6911
  %v6913 = vsel %vm6912, 0, %v6911
  %v6914 = vsub.s32 32, %v6913
  %v6915 = vshll.u32 %v6906, %v6913
  %v6916 = vshrl.u32 %v6898, %v6914
  %v6917 = vor.u32 %v6915, %v6916
  %v6918 = vsub.s32 4294967266, %v6913
  %v6919 = vadd.s32 %v6918, 127
  %v6920 = vshll.u32 %v6919, 23
  %v6921 = vor.u32 4788187, %v6920
  %v6922 = vand.u32 2147483647, %v6921
  %v6924 = vcvt.s32.f32 %v6917
  %v6925 = vmul.f32 %v6924, %v6922
  %v6926 = vxor.u32 %v6925, 2147483648
  %v6927 = vsel %vm6844, %v6926, %v6925
  %v6928 = vsub.s32 4, %v6904
  %v6929 = vsel %vm6844, %v6928, %v6904
  %v6930 = vsel %vm6843, %v598, %v6927
  %v6931 = vsel %vm6843, 0, %v6929
  %v6932 = vcosq.f32.pop %v6930
  %v6933 = vsinq.f32.pop %v6930
  %vm6934 = vweird.f32 %v598
  %v6935 = vadd.s32 %v6931, 3
  %v6936 = vand.u32 %v6935, 3
  %vm6937 = vcmp.lt.s32.totalorder %v6936, 2
  %vm6938 = vcmp.eq.s32.totalorder %v6936, 0
  %v6939 = vxor.u32 %v6933, 2147483648
  %v6940 = vsel %vm6938, %v6932, %v6939
  %vm6941 = vcmp.eq.s32.totalorder %v6936, 2
  %v6942 = vxor.u32 %v6932, 2147483648
  %v6943 = vsel %vm6941, %v6942, %v6933
  %v6944 = vsel %vm6937, %v6940, %v6943
  %v6945 = vsel %vm6934, nan, %v6944
  %v6946 = vand.u32 2147483647, %v599
  %vm6947 = vcmp.le.f32.partialorder %v6946, 0.7853982
  %vm6948 = vcmp.lt.s32.totalorder %v599, 0
  %v6949 = vand.u32 %v599, 2139095040
  %v6950 = vshrl.u32 %v6949, 23
  %v6951 = vsub.s32 %v6950, 127
  %v6952 = vand.u32 2147483647, %v599
  %v6953 = vand.u32 %v6952, 8388607
  %v6954 = vor.u32 %v6953, 8388608
  %v6955 = vsub.s32 0, %v6954
  %v6956 = vadd.s32 %v6951, 1
  %vm6957 = vcmp.gt.s32.totalorder %v6956, 0
  %v6958 = vsel %vm6957, %v6956, 0
  %v6959 = vshrl.u32 %v6958, 5
  %v6960 = vand.u32 %v6958, 31
  %v6961 = vsub.s32 32, %v6960
  %v6962 = vshrl.u32 683565275, %v6961
  %v6963 = vshll.u32 683565275, %v6960
  %v6964 = vshrl.u32 2475754826, %v6961
  %v6965 = vor.u32 %v6963, %v6964
  %v6966 = vshll.u32 2475754826, %v6960
  %v6967 = vshrl.u32 2131351028, %v6961
  %v6968 = vor.u32 %v6966, %v6967
  %v6969 = vshll.u32 2131351028, %v6960
  %v6970 = vshrl.u32 2102212464, %v6961
  %v6971 = vor.u32 %v6969, %v6970
  %v6972 = vshll.u32 2102212464, %v6960
  %v6973 = vshrl.u32 920167782, %v6961
  %v6974 = vor.u32 %v6972, %v6973
  %v6975 = vshll.u32 920167782, %v6960
  %v6976 = vshrl.u32 1326507024, %v6961
  %v6977 = vor.u32 %v6975, %v6976
  %vm6978 = vcmp.lt.s32.totalorder %v6959, 1
  %vm6979 = vcmp.lt.s32.totalorder %v6959, 2
  %vm6980 = vcmp.lt.s32.totalorder %v6959, 3
  %vm6981 = vcmp.lt.s32.totalorder %v6959, 4
  %v6982 = vsel %vm6978, %v6962, %v6965
  %v6983 = vsel %vm6981, %v6971, 2102212464
  %v6984 = vsel %vm6980, %v6968, %v6983
  %v6985 = vsel %vm6979, %v6982, %v6984
  %v6986 = vsel %vm6978, %v6965, %v6968
  %v6987 = vsel %vm6981, %v6974, 920167782
  %v6988 = vsel %vm6980, %v6971, %v6987
  %v6989 = vsel %vm6979, %v6986, %v6988
  %v6990 = vsel %vm6978, %v6968, %v6971
  %v6991 = vsel %vm6981, %v6977, 1326507024
  %v6992 = vsel %vm6980, %v6974, %v6991
  %v6993 = vsel %vm6979, %v6990, %v6992
  %v6994 = vshll.u32 %v6954, 8
  %v6995 = vmul.u32.u64.compose %v6994, %v6993
  %v6996 = vextract.low.u32 %v6995
  %v6997 = vextract.high.u32 %v6995
  %v6998 = vmul.u32.u64.compose %v6994, %v6989
  %v6999 = vextract.low.u32 %v6998
  %v7000 = vextract.high.u32 %v6998
  %v7001 = vmul.u32 %v6994, %v6985
  %v7002 = vadd.s32 %v6997, %v6999
  %vm7003 = vc.u32 %v6997, %v6999
  %v7004 = vadd.s32 %v7000, 1
  %v7005 = vsel %vm7003, %v7004, %v7000
  %v7006 = vadd.s32 %v7001, %v7005
  %v7007 = vadd.s32 %v7006, 536870912
  %v7008 = vshrl.u32 %v7007, 30
  %v7009 = vshll.u32 %v7008, 30
  %v7010 = vsub.s32 %v7006, %v7009
  %vm7011 = vcmp.lt.s32.totalorder %v7010, 0
  %v7012 = vsub.s32 0, %v7010
  %v7013 = vsel %vm7011, %v7012, %v7010
  %v7014 = vclz %v7013
  %v7015 = vsub.s32 %v7014, 2
  %vm7016 = vcmp.gt.s32.totalorder 0, %v7015
  %v7017 = vsel %vm7016, 0, %v7015
  %v7018 = vsub.s32 32, %v7017
  %v7019 = vshll.u32 %v7010, %v7017
  %v7020 = vshrl.u32 %v7002, %v7018
  %v7021 = vor.u32 %v7019, %v7020
  %v7022 = vsub.s32 4294967266, %v7017
  %v7023 = vadd.s32 %v7022, 127
  %v7024 = vshll.u32 %v7023, 23
  %v7025 = vor.u32 4788187, %v7024
  %v7026 = vand.u32 2147483647, %v7025
  %v7028 = vcvt.s32.f32 %v7021
  %v7029 = vmul.f32 %v7028, %v7026
  %v7030 = vxor.u32 %v7029, 2147483648
  %v7031 = vsel %vm6948, %v7030, %v7029
  %v7032 = vsub.s32 4, %v7008
  %v7033 = vsel %vm6948, %v7032, %v7008
  %v7034 = vsel %vm6947, %v599, %v7031
  %v7035 = vsel %vm6947, 0, %v7033
  %v7036 = vcosq.f32.pop %v7034
  %v7037 = vsinq.f32.pop %v7034
  %vm7038 = vweird.f32 %v599
  %v7039 = vadd.s32 %v7035, 3
  %v7040 = vand.u32 %v7039, 3
  %vm7041 = vcmp.lt.s32.totalorder %v7040, 2
  %vm7042 = vcmp.eq.s32.totalorder %v7040, 0
  %v7043 = vxor.u32 %v7037, 2147483648
  %v7044 = vsel %vm7042, %v7036, %v7043
  %vm7045 = vcmp.eq.s32.totalorder %v7040, 2
  %v7046 = vxor.u32 %v7036, 2147483648
  %v7047 = vsel %vm7045, %v7046, %v7037
  %v7048 = vsel %vm7041, %v7044, %v7047
  %v7049 = vsel %vm7038, nan, %v7048
  %v7050 = vand.u32 2147483647, %v600
  %vm7051 = vcmp.le.f32.partialorder %v7050, 0.7853982
  %vm7052 = vcmp.lt.s32.totalorder %v600, 0
  %v7053 = vand.u32 %v600, 2139095040
  %v7054 = vshrl.u32 %v7053, 23
  %v7055 = vsub.s32 %v7054, 127
  %v7056 = vand.u32 2147483647, %v600
  %v7057 = vand.u32 %v7056, 8388607
  %v7058 = vor.u32 %v7057, 8388608
  %v7059 = vsub.s32 0, %v7058
  %v7060 = vadd.s32 %v7055, 1
  %vm7061 = vcmp.gt.s32.totalorder %v7060, 0
  %v7062 = vsel %vm7061, %v7060, 0
  %v7063 = vshrl.u32 %v7062, 5
  %v7064 = vand.u32 %v7062, 31
  %v7065 = vsub.s32 32, %v7064
  %v7066 = vshrl.u32 683565275, %v7065
  %v7067 = vshll.u32 683565275, %v7064
  %v7068 = vshrl.u32 2475754826, %v7065
  %v7069 = vor.u32 %v7067, %v7068
  %v7070 = vshll.u32 2475754826, %v7064
  %v7071 = vshrl.u32 2131351028, %v7065
  %v7072 = vor.u32 %v7070, %v7071
  %v7073 = vshll.u32 2131351028, %v7064
  %v7074 = vshrl.u32 2102212464, %v7065
  %v7075 = vor.u32 %v7073, %v7074
  %v7076 = vshll.u32 2102212464, %v7064
  %v7077 = vshrl.u32 920167782, %v7065
  %v7078 = vor.u32 %v7076, %v7077
  %v7079 = vshll.u32 920167782, %v7064
  %v7080 = vshrl.u32 1326507024, %v7065
  %v7081 = vor.u32 %v7079, %v7080
  %vm7082 = vcmp.lt.s32.totalorder %v7063, 1
  %vm7083 = vcmp.lt.s32.totalorder %v7063, 2
  %vm7084 = vcmp.lt.s32.totalorder %v7063, 3
  %vm7085 = vcmp.lt.s32.totalorder %v7063, 4
  %v7086 = vsel %vm7082, %v7066, %v7069
  %v7087 = vsel %vm7085, %v7075, 2102212464
  %v7088 = vsel %vm7084, %v7072, %v7087
  %v7089 = vsel %vm7083, %v7086, %v7088
  %v7090 = vsel %vm7082, %v7069, %v7072
  %v7091 = vsel %vm7085, %v7078, 920167782
  %v7092 = vsel %vm7084, %v7075, %v7091
  %v7093 = vsel %vm7083, %v7090, %v7092
  %v7094 = vsel %vm7082, %v7072, %v7075
  %v7095 = vsel %vm7085, %v7081, 1326507024
  %v7096 = vsel %vm7084, %v7078, %v7095
  %v7097 = vsel %vm7083, %v7094, %v7096
  %v7098 = vshll.u32 %v7058, 8
  %v7099 = vmul.u32.u64.compose %v7098, %v7097
  %v7100 = vextract.low.u32 %v7099
  %v7101 = vextract.high.u32 %v7099
  %v7102 = vmul.u32.u64.compose %v7098, %v7093
  %v7103 = vextract.low.u32 %v7102
  %v7104 = vextract.high.u32 %v7102
  %v7105 = vmul.u32 %v7098, %v7089
  %v7106 = vadd.s32 %v7101, %v7103
  %vm7107 = vc.u32 %v7101, %v7103
  %v7108 = vadd.s32 %v7104, 1
  %v7109 = vsel %vm7107, %v7108, %v7104
  %v7110 = vadd.s32 %v7105, %v7109
  %v7111 = vadd.s32 %v7110, 536870912
  %v7112 = vshrl.u32 %v7111, 30
  %v7113 = vshll.u32 %v7112, 30
  %v7114 = vsub.s32 %v7110, %v7113
  %vm7115 = vcmp.lt.s32.totalorder %v7114, 0
  %v7116 = vsub.s32 0, %v7114
  %v7117 = vsel %vm7115, %v7116, %v7114
  %v7118 = vclz %v7117
  %v7119 = vsub.s32 %v7118, 2
  %vm7120 = vcmp.gt.s32.totalorder 0, %v7119
  %v7121 = vsel %vm7120, 0, %v7119
  %v7122 = vsub.s32 32, %v7121
  %v7123 = vshll.u32 %v7114, %v7121
  %v7124 = vshrl.u32 %v7106, %v7122
  %v7125 = vor.u32 %v7123, %v7124
  %v7126 = vsub.s32 4294967266, %v7121
  %v7127 = vadd.s32 %v7126, 127
  %v7128 = vshll.u32 %v7127, 23
  %v7129 = vor.u32 4788187, %v7128
  %v7130 = vand.u32 2147483647, %v7129
  %v7132 = vcvt.s32.f32 %v7125
  %v7133 = vmul.f32 %v7132, %v7130
  %v7134 = vxor.u32 %v7133, 2147483648
  %v7135 = vsel %vm7052, %v7134, %v7133
  %v7136 = vsub.s32 4, %v7112
  %v7137 = vsel %vm7052, %v7136, %v7112
  %v7138 = vsel %vm7051, %v600, %v7135
  %v7139 = vsel %vm7051, 0, %v7137
  %v7140 = vcosq.f32.pop %v7138
  %v7141 = vsinq.f32.pop %v7138
  %vm7142 = vweird.f32 %v600
  %v7143 = vadd.s32 %v7139, 3
  %v7144 = vand.u32 %v7143, 3
  %vm7145 = vcmp.lt.s32.totalorder %v7144, 2
  %vm7146 = vcmp.eq.s32.totalorder %v7144, 0
  %v7147 = vxor.u32 %v7141, 2147483648
  %v7148 = vsel %vm7146, %v7140, %v7147
  %vm7149 = vcmp.eq.s32.totalorder %v7144, 2
  %v7150 = vxor.u32 %v7140, 2147483648
  %v7151 = vsel %vm7149, %v7150, %v7141
  %v7152 = vsel %vm7145, %v7148, %v7151
  %v7153 = vsel %vm7142, nan, %v7152
  %v7154 = vand.u32 2147483647, %v601
  %vm7155 = vcmp.le.f32.partialorder %v7154, 0.7853982
  %vm7156 = vcmp.lt.s32.totalorder %v601, 0
  %v7157 = vand.u32 %v601, 2139095040
  %v7158 = vshrl.u32 %v7157, 23
  %v7159 = vsub.s32 %v7158, 127
  %v7160 = vand.u32 2147483647, %v601
  %v7161 = vand.u32 %v7160, 8388607
  %v7162 = vor.u32 %v7161, 8388608
  %v7163 = vsub.s32 0, %v7162
  %v7164 = vadd.s32 %v7159, 1
  %vm7165 = vcmp.gt.s32.totalorder %v7164, 0
  %v7166 = vsel %vm7165, %v7164, 0
  %v7167 = vshrl.u32 %v7166, 5
  %v7168 = vand.u32 %v7166, 31
  %v7169 = vsub.s32 32, %v7168
  %v7170 = vshrl.u32 683565275, %v7169
  %v7171 = vshll.u32 683565275, %v7168
  %v7172 = vshrl.u32 2475754826, %v7169
  %v7173 = vor.u32 %v7171, %v7172
  %v7174 = vshll.u32 2475754826, %v7168
  %v7175 = vshrl.u32 2131351028, %v7169
  %v7176 = vor.u32 %v7174, %v7175
  %v7177 = vshll.u32 2131351028, %v7168
  %v7178 = vshrl.u32 2102212464, %v7169
  %v7179 = vor.u32 %v7177, %v7178
  %v7180 = vshll.u32 2102212464, %v7168
  %v7181 = vshrl.u32 920167782, %v7169
  %v7182 = vor.u32 %v7180, %v7181
  %v7183 = vshll.u32 920167782, %v7168
  %v7184 = vshrl.u32 1326507024, %v7169
  %v7185 = vor.u32 %v7183, %v7184
  %vm7186 = vcmp.lt.s32.totalorder %v7167, 1
  %vm7187 = vcmp.lt.s32.totalorder %v7167, 2
  %vm7188 = vcmp.lt.s32.totalorder %v7167, 3
  %vm7189 = vcmp.lt.s32.totalorder %v7167, 4
  %v7190 = vsel %vm7186, %v7170, %v7173
  %v7191 = vsel %vm7189, %v7179, 2102212464
  %v7192 = vsel %vm7188, %v7176, %v7191
  %v7193 = vsel %vm7187, %v7190, %v7192
  %v7194 = vsel %vm7186, %v7173, %v7176
  %v7195 = vsel %vm7189, %v7182, 920167782
  %v7196 = vsel %vm7188, %v7179, %v7195
  %v7197 = vsel %vm7187, %v7194, %v7196
  %v7198 = vsel %vm7186, %v7176, %v7179
  %v7199 = vsel %vm7189, %v7185, 1326507024
  %v7200 = vsel %vm7188, %v7182, %v7199
  %v7201 = vsel %vm7187, %v7198, %v7200
  %v7202 = vshll.u32 %v7162, 8
  %v7203 = vmul.u32.u64.compose %v7202, %v7201
  %v7204 = vextract.low.u32 %v7203
  %v7205 = vextract.high.u32 %v7203
  %v7206 = vmul.u32.u64.compose %v7202, %v7197
  %v7207 = vextract.low.u32 %v7206
  %v7208 = vextract.high.u32 %v7206
  %v7209 = vmul.u32 %v7202, %v7193
  %v7210 = vadd.s32 %v7205, %v7207
  %vm7211 = vc.u32 %v7205, %v7207
  %v7212 = vadd.s32 %v7208, 1
  %v7213 = vsel %vm7211, %v7212, %v7208
  %v7214 = vadd.s32 %v7209, %v7213
  %v7215 = vadd.s32 %v7214, 536870912
  %v7216 = vshrl.u32 %v7215, 30
  %v7217 = vshll.u32 %v7216, 30
  %v7218 = vsub.s32 %v7214, %v7217
  %vm7219 = vcmp.lt.s32.totalorder %v7218, 0
  %v7220 = vsub.s32 0, %v7218
  %v7221 = vsel %vm7219, %v7220, %v7218
  %v7222 = vclz %v7221
  %v7223 = vsub.s32 %v7222, 2
  %vm7224 = vcmp.gt.s32.totalorder 0, %v7223
  %v7225 = vsel %vm7224, 0, %v7223
  %v7226 = vsub.s32 32, %v7225
  %v7227 = vshll.u32 %v7218, %v7225
  %v7228 = vshrl.u32 %v7210, %v7226
  %v7229 = vor.u32 %v7227, %v7228
  %v7230 = vsub.s32 4294967266, %v7225
  %v7231 = vadd.s32 %v7230, 127
  %v7232 = vshll.u32 %v7231, 23
  %v7233 = vor.u32 4788187, %v7232
  %v7234 = vand.u32 2147483647, %v7233
  %v7236 = vcvt.s32.f32 %v7229
  %v7237 = vmul.f32 %v7236, %v7234
  %v7238 = vxor.u32 %v7237, 2147483648
  %v7239 = vsel %vm7156, %v7238, %v7237
  %v7240 = vsub.s32 4, %v7216
  %v7241 = vsel %vm7156, %v7240, %v7216
  %v7242 = vsel %vm7155, %v601, %v7239
  %v7243 = vsel %vm7155, 0, %v7241
  %v7244 = vcosq.f32.pop %v7242
  %v7245 = vsinq.f32.pop %v7242
  %vm7246 = vweird.f32 %v601
  %v7247 = vadd.s32 %v7243, 3
  %v7248 = vand.u32 %v7247, 3
  %vm7249 = vcmp.lt.s32.totalorder %v7248, 2
  %vm7250 = vcmp.eq.s32.totalorder %v7248, 0
  %v7251 = vxor.u32 %v7245, 2147483648
  %v7252 = vsel %vm7250, %v7244, %v7251
  %vm7253 = vcmp.eq.s32.totalorder %v7248, 2
  %v7254 = vxor.u32 %v7244, 2147483648
  %v7255 = vsel %vm7253, %v7254, %v7245
  %v7256 = vsel %vm7249, %v7252, %v7255
  %v7257 = vsel %vm7246, nan, %v7256
  %7258 = vset.pattern.permute.xlu0 0
  %7259 = vperm.xlu0 %7258, %v11
  %v7260 = vpop.permute.xlu0 %7259
  %v7262 = vlaneseq
  %v7263 = vshrl.u32 %v7262, 7
  %v7264 = vsub.s32 0, %v7263
  %v7265 = vrot.slane %v7260, %v7264
  %7266 = vset.pattern.permute.xlu0 0
  %7267 = vperm.xlu0 %7266, %v12
  %v7268 = vpop.permute.xlu0 %7267
  %v7270 = vlaneseq
  %v7271 = vshrl.u32 %v7270, 7
  %v7272 = vsub.s32 0, %v7271
  %v7273 = vrot.slane %v7268, %v7272
  %7274 = vset.pattern.permute.xlu0 0
  %7275 = vperm.xlu0 %7274, %v13
  %v7276 = vpop.permute.xlu0 %7275
  %v7278 = vlaneseq
  %v7279 = vshrl.u32 %v7278, 7
  %v7280 = vsub.s32 0, %v7279
  %v7281 = vrot.slane %v7276, %v7280
  %7282 = vset.pattern.permute.xlu0 0
  %7283 = vperm.xlu0 %7282, %v14
  %v7284 = vpop.permute.xlu0 %7283
  %v7286 = vlaneseq
  %v7287 = vshrl.u32 %v7286, 7
  %v7288 = vsub.s32 0, %v7287
  %v7289 = vrot.slane %v7284, %v7288
  %7290 = vset.pattern.permute.xlu0 0
  %7291 = vperm.xlu0 %7290, %v15
  %v7292 = vpop.permute.xlu0 %7291
  %v7294 = vlaneseq
  %v7295 = vshrl.u32 %v7294, 7
  %v7296 = vsub.s32 0, %v7295
  %v7297 = vrot.slane %v7292, %v7296
  %7298 = vset.pattern.permute.xlu0 0
  %7299 = vperm.xlu0 %7298, %v16
  %v7300 = vpop.permute.xlu0 %7299
  %v7302 = vlaneseq
  %v7303 = vshrl.u32 %v7302, 7
  %v7304 = vsub.s32 0, %v7303
  %v7305 = vrot.slane %v7300, %v7304
  %7306 = vset.pattern.permute.xlu0 0
  %7307 = vperm.xlu0 %7306, %v17
  %v7308 = vpop.permute.xlu0 %7307
  %v7310 = vlaneseq
  %v7311 = vshrl.u32 %v7310, 7
  %v7312 = vsub.s32 0, %v7311
  %v7313 = vrot.slane %v7308, %v7312
  %7314 = vset.pattern.permute.xlu0 0
  %7315 = vperm.xlu0 %7314, %v18
  %v7316 = vpop.permute.xlu0 %7315
  %v7318 = vlaneseq
  %v7319 = vshrl.u32 %v7318, 7
  %v7320 = vsub.s32 0, %v7319
  %v7321 = vrot.slane %v7316, %v7320
  %7322 = vset.pattern.permute.xlu0 0
  %7323 = vperm.xlu0 %7322, %v19
  %v7324 = vpop.permute.xlu0 %7323
  %v7326 = vlaneseq
  %v7327 = vshrl.u32 %v7326, 7
  %v7328 = vsub.s32 0, %v7327
  %v7329 = vrot.slane %v7324, %v7328
  %7330 = vset.pattern.permute.xlu0 0
  %7331 = vperm.xlu0 %7330, %v20
  %v7332 = vpop.permute.xlu0 %7331
  %v7334 = vlaneseq
  %v7335 = vshrl.u32 %v7334, 7
  %v7336 = vsub.s32 0, %v7335
  %v7337 = vrot.slane %v7332, %v7336
  %7338 = vset.pattern.permute.xlu0 0
  %7339 = vperm.xlu0 %7338, %v21
  %v7340 = vpop.permute.xlu0 %7339
  %v7342 = vlaneseq
  %v7343 = vshrl.u32 %v7342, 7
  %v7344 = vsub.s32 0, %v7343
  %v7345 = vrot.slane %v7340, %v7344
  %7346 = vset.pattern.permute.xlu0 0
  %7347 = vperm.xlu0 %7346, %v22
  %v7348 = vpop.permute.xlu0 %7347
  %v7350 = vlaneseq
  %v7351 = vshrl.u32 %v7350, 7
  %v7352 = vsub.s32 0, %v7351
  %v7353 = vrot.slane %v7348, %v7352
  %7354 = vset.pattern.permute.xlu0 0
  %7355 = vperm.xlu0 %7354, %v23
  %v7356 = vpop.permute.xlu0 %7355
  %v7358 = vlaneseq
  %v7359 = vshrl.u32 %v7358, 7
  %v7360 = vsub.s32 0, %v7359
  %v7361 = vrot.slane %v7356, %v7360
  %7362 = vset.pattern.permute.xlu0 0
  %7363 = vperm.xlu0 %7362, %v24
  %v7364 = vpop.permute.xlu0 %7363
  %v7366 = vlaneseq
  %v7367 = vshrl.u32 %v7366, 7
  %v7368 = vsub.s32 0, %v7367
  %v7369 = vrot.slane %v7364, %v7368
  %7370 = vset.pattern.permute.xlu0 0
  %7371 = vperm.xlu0 %7370, %v25
  %v7372 = vpop.permute.xlu0 %7371
  %v7374 = vlaneseq
  %v7375 = vshrl.u32 %v7374, 7
  %v7376 = vsub.s32 0, %v7375
  %v7377 = vrot.slane %v7372, %v7376
  %7378 = vset.pattern.permute.xlu0 0
  %7379 = vperm.xlu0 %7378, %v26
  %v7380 = vpop.permute.xlu0 %7379
  %v7382 = vlaneseq
  %v7383 = vshrl.u32 %v7382, 7
  %v7384 = vsub.s32 0, %v7383
  %v7385 = vrot.slane %v7380, %v7384
  %7386 = vset.pattern.permute.xlu0 0
  %7387 = vperm.xlu0 %7386, %v27
  %v7388 = vpop.permute.xlu0 %7387
  %v7390 = vlaneseq
  %v7391 = vshrl.u32 %v7390, 7
  %v7392 = vsub.s32 0, %v7391
  %v7393 = vrot.slane %v7388, %v7392
  %7394 = vset.pattern.permute.xlu0 0
  %7395 = vperm.xlu0 %7394, %v28
  %v7396 = vpop.permute.xlu0 %7395
  %v7398 = vlaneseq
  %v7399 = vshrl.u32 %v7398, 7
  %v7400 = vsub.s32 0, %v7399
  %v7401 = vrot.slane %v7396, %v7400
  %7402 = vset.pattern.permute.xlu0 0
  %7403 = vperm.xlu0 %7402, %v29
  %v7404 = vpop.permute.xlu0 %7403
  %v7406 = vlaneseq
  %v7407 = vshrl.u32 %v7406, 7
  %v7408 = vsub.s32 0, %v7407
  %v7409 = vrot.slane %v7404, %v7408
  %7410 = vset.pattern.permute.xlu0 0
  %7411 = vperm.xlu0 %7410, %v30
  %v7412 = vpop.permute.xlu0 %7411
  %v7414 = vlaneseq
  %v7415 = vshrl.u32 %v7414, 7
  %v7416 = vsub.s32 0, %v7415
  %v7417 = vrot.slane %v7412, %v7416
  %7418 = vset.pattern.permute.xlu0 0
  %7419 = vperm.xlu0 %7418, %v31
  %v7420 = vpop.permute.xlu0 %7419
  %v7422 = vlaneseq
  %v7423 = vshrl.u32 %v7422, 7
  %v7424 = vsub.s32 0, %v7423
  %v7425 = vrot.slane %v7420, %v7424
  %7426 = vset.pattern.permute.xlu0 0
  %7427 = vperm.xlu0 %7426, %v32
  %v7428 = vpop.permute.xlu0 %7427
  %v7430 = vlaneseq
  %v7431 = vshrl.u32 %v7430, 7
  %v7432 = vsub.s32 0, %v7431
  %v7433 = vrot.slane %v7428, %v7432
  %7434 = vset.pattern.permute.xlu0 0
  %7435 = vperm.xlu0 %7434, %v33
  %v7436 = vpop.permute.xlu0 %7435
  %v7438 = vlaneseq
  %v7439 = vshrl.u32 %v7438, 7
  %v7440 = vsub.s32 0, %v7439
  %v7441 = vrot.slane %v7436, %v7440
  %7442 = vset.pattern.permute.xlu0 0
  %7443 = vperm.xlu0 %7442, %v34
  %v7444 = vpop.permute.xlu0 %7443
  %v7446 = vlaneseq
  %v7447 = vshrl.u32 %v7446, 7
  %v7448 = vsub.s32 0, %v7447
  %v7449 = vrot.slane %v7444, %v7448
  %7450 = vset.pattern.permute.xlu0 0
  %7451 = vperm.xlu0 %7450, %v35
  %v7452 = vpop.permute.xlu0 %7451
  %v7454 = vlaneseq
  %v7455 = vshrl.u32 %v7454, 7
  %v7456 = vsub.s32 0, %v7455
  %v7457 = vrot.slane %v7452, %v7456
  %7458 = vset.pattern.permute.xlu0 0
  %7459 = vperm.xlu0 %7458, %v36
  %v7460 = vpop.permute.xlu0 %7459
  %v7462 = vlaneseq
  %v7463 = vshrl.u32 %v7462, 7
  %v7464 = vsub.s32 0, %v7463
  %v7465 = vrot.slane %v7460, %v7464
  %7466 = vset.pattern.permute.xlu0 0
  %7467 = vperm.xlu0 %7466, %v37
  %v7468 = vpop.permute.xlu0 %7467
  %v7470 = vlaneseq
  %v7471 = vshrl.u32 %v7470, 7
  %v7472 = vsub.s32 0, %v7471
  %v7473 = vrot.slane %v7468, %v7472
  %7474 = vset.pattern.permute.xlu0 0
  %7475 = vperm.xlu0 %7474, %v38
  %v7476 = vpop.permute.xlu0 %7475
  %v7478 = vlaneseq
  %v7479 = vshrl.u32 %v7478, 7
  %v7480 = vsub.s32 0, %v7479
  %v7481 = vrot.slane %v7476, %v7480
  %7482 = vset.pattern.permute.xlu0 0
  %7483 = vperm.xlu0 %7482, %v39
  %v7484 = vpop.permute.xlu0 %7483
  %v7486 = vlaneseq
  %v7487 = vshrl.u32 %v7486, 7
  %v7488 = vsub.s32 0, %v7487
  %v7489 = vrot.slane %v7484, %v7488
  %7490 = vset.pattern.permute.xlu0 0
  %7491 = vperm.xlu0 %7490, %v40
  %v7492 = vpop.permute.xlu0 %7491
  %v7494 = vlaneseq
  %v7495 = vshrl.u32 %v7494, 7
  %v7496 = vsub.s32 0, %v7495
  %v7497 = vrot.slane %v7492, %v7496
  %7498 = vset.pattern.permute.xlu0 0
  %7499 = vperm.xlu0 %7498, %v41
  %v7500 = vpop.permute.xlu0 %7499
  %v7502 = vlaneseq
  %v7503 = vshrl.u32 %v7502, 7
  %v7504 = vsub.s32 0, %v7503
  %v7505 = vrot.slane %v7500, %v7504
  %7506 = vset.pattern.permute.xlu0 0
  %7507 = vperm.xlu0 %7506, %v42
  %v7508 = vpop.permute.xlu0 %7507
  %v7510 = vlaneseq
  %v7511 = vshrl.u32 %v7510, 7
  %v7512 = vsub.s32 0, %v7511
  %v7513 = vrot.slane %v7508, %v7512
  %v7514 = vmul.f32 %v89, %v7265
  %v7515 = vmul.f32 %v89, %v7273
  %v7516 = vmul.f32 %v89, %v7281
  %v7517 = vmul.f32 %v89, %v7289
  %v7518 = vmul.f32 %v89, %v7297
  %v7519 = vmul.f32 %v89, %v7305
  %v7520 = vmul.f32 %v89, %v7313
  %v7521 = vmul.f32 %v89, %v7321
  %v7522 = vmul.f32 %v89, %v7329
  %v7523 = vmul.f32 %v89, %v7337
  %v7524 = vmul.f32 %v89, %v7345
  %v7525 = vmul.f32 %v89, %v7353
  %v7526 = vmul.f32 %v89, %v7361
  %v7527 = vmul.f32 %v89, %v7369
  %v7528 = vmul.f32 %v89, %v7377
  %v7529 = vmul.f32 %v89, %v7385
  %v7530 = vmul.f32 %v89, %v7393
  %v7531 = vmul.f32 %v89, %v7401
  %v7532 = vmul.f32 %v89, %v7409
  %v7533 = vmul.f32 %v89, %v7417
  %v7534 = vmul.f32 %v89, %v7425
  %v7535 = vmul.f32 %v89, %v7433
  %v7536 = vmul.f32 %v89, %v7441
  %v7537 = vmul.f32 %v89, %v7449
  %v7538 = vmul.f32 %v89, %v7457
  %v7539 = vmul.f32 %v89, %v7465
  %v7540 = vmul.f32 %v89, %v7473
  %v7541 = vmul.f32 %v89, %v7481
  %v7542 = vmul.f32 %v89, %v7489
  %v7543 = vmul.f32 %v89, %v7497
  %v7544 = vmul.f32 %v89, %v7505
  %v7545 = vmul.f32 %v89, %v7513
  %7546 = vset.pattern.permute.xlu0 0
  %7547 = vperm.xlu0 %7546, %v43
  %v7548 = vpop.permute.xlu0 %7547
  %v7550 = vlaneseq
  %v7551 = vshrl.u32 %v7550, 7
  %v7552 = vsub.s32 0, %v7551
  %v7553 = vrot.slane %v7548, %v7552
  %7554 = vset.pattern.permute.xlu0 0
  %7555 = vperm.xlu0 %7554, %v44
  %v7556 = vpop.permute.xlu0 %7555
  %v7558 = vlaneseq
  %v7559 = vshrl.u32 %v7558, 7
  %v7560 = vsub.s32 0, %v7559
  %v7561 = vrot.slane %v7556, %v7560
  %7562 = vset.pattern.permute.xlu0 0
  %7563 = vperm.xlu0 %7562, %v45
  %v7564 = vpop.permute.xlu0 %7563
  %v7566 = vlaneseq
  %v7567 = vshrl.u32 %v7566, 7
  %v7568 = vsub.s32 0, %v7567
  %v7569 = vrot.slane %v7564, %v7568
  %7570 = vset.pattern.permute.xlu0 0
  %7571 = vperm.xlu0 %7570, %v46
  %v7572 = vpop.permute.xlu0 %7571
  %v7574 = vlaneseq
  %v7575 = vshrl.u32 %v7574, 7
  %v7576 = vsub.s32 0, %v7575
  %v7577 = vrot.slane %v7572, %v7576
  %7578 = vset.pattern.permute.xlu0 0
  %7579 = vperm.xlu0 %7578, %v47
  %v7580 = vpop.permute.xlu0 %7579
  %v7582 = vlaneseq
  %v7583 = vshrl.u32 %v7582, 7
  %v7584 = vsub.s32 0, %v7583
  %v7585 = vrot.slane %v7580, %v7584
  %7586 = vset.pattern.permute.xlu0 0
  %7587 = vperm.xlu0 %7586, %v48
  %v7588 = vpop.permute.xlu0 %7587
  %v7590 = vlaneseq
  %v7591 = vshrl.u32 %v7590, 7
  %v7592 = vsub.s32 0, %v7591
  %v7593 = vrot.slane %v7588, %v7592
  %7594 = vset.pattern.permute.xlu0 0
  %7595 = vperm.xlu0 %7594, %v49
  %v7596 = vpop.permute.xlu0 %7595
  %v7598 = vlaneseq
  %v7599 = vshrl.u32 %v7598, 7
  %v7600 = vsub.s32 0, %v7599
  %v7601 = vrot.slane %v7596, %v7600
  %7602 = vset.pattern.permute.xlu0 0
  %7603 = vperm.xlu0 %7602, %v50
  %v7604 = vpop.permute.xlu0 %7603
  %v7606 = vlaneseq
  %v7607 = vshrl.u32 %v7606, 7
  %v7608 = vsub.s32 0, %v7607
  %v7609 = vrot.slane %v7604, %v7608
  %7610 = vset.pattern.permute.xlu0 0
  %7611 = vperm.xlu0 %7610, %v51
  %v7612 = vpop.permute.xlu0 %7611
  %v7614 = vlaneseq
  %v7615 = vshrl.u32 %v7614, 7
  %v7616 = vsub.s32 0, %v7615
  %v7617 = vrot.slane %v7612, %v7616
  %7618 = vset.pattern.permute.xlu0 0
  %7619 = vperm.xlu0 %7618, %v52
  %v7620 = vpop.permute.xlu0 %7619
  %v7622 = vlaneseq
  %v7623 = vshrl.u32 %v7622, 7
  %v7624 = vsub.s32 0, %v7623
  %v7625 = vrot.slane %v7620, %v7624
  %7626 = vset.pattern.permute.xlu0 0
  %7627 = vperm.xlu0 %7626, %v53
  %v7628 = vpop.permute.xlu0 %7627
  %v7630 = vlaneseq
  %v7631 = vshrl.u32 %v7630, 7
  %v7632 = vsub.s32 0, %v7631
  %v7633 = vrot.slane %v7628, %v7632
  %7634 = vset.pattern.permute.xlu0 0
  %7635 = vperm.xlu0 %7634, %v54
  %v7636 = vpop.permute.xlu0 %7635
  %v7638 = vlaneseq
  %v7639 = vshrl.u32 %v7638, 7
  %v7640 = vsub.s32 0, %v7639
  %v7641 = vrot.slane %v7636, %v7640
  %7642 = vset.pattern.permute.xlu0 0
  %7643 = vperm.xlu0 %7642, %v55
  %v7644 = vpop.permute.xlu0 %7643
  %v7646 = vlaneseq
  %v7647 = vshrl.u32 %v7646, 7
  %v7648 = vsub.s32 0, %v7647
  %v7649 = vrot.slane %v7644, %v7648
  %7650 = vset.pattern.permute.xlu0 0
  %7651 = vperm.xlu0 %7650, %v56
  %v7652 = vpop.permute.xlu0 %7651
  %v7654 = vlaneseq
  %v7655 = vshrl.u32 %v7654, 7
  %v7656 = vsub.s32 0, %v7655
  %v7657 = vrot.slane %v7652, %v7656
  %7658 = vset.pattern.permute.xlu0 0
  %7659 = vperm.xlu0 %7658, %v57
  %v7660 = vpop.permute.xlu0 %7659
  %v7662 = vlaneseq
  %v7663 = vshrl.u32 %v7662, 7
  %v7664 = vsub.s32 0, %v7663
  %v7665 = vrot.slane %v7660, %v7664
  %7666 = vset.pattern.permute.xlu0 0
  %7667 = vperm.xlu0 %7666, %v58
  %v7668 = vpop.permute.xlu0 %7667
  %v7670 = vlaneseq
  %v7671 = vshrl.u32 %v7670, 7
  %v7672 = vsub.s32 0, %v7671
  %v7673 = vrot.slane %v7668, %v7672
  %7674 = vset.pattern.permute.xlu0 0
  %7675 = vperm.xlu0 %7674, %v59
  %v7676 = vpop.permute.xlu0 %7675
  %v7678 = vlaneseq
  %v7679 = vshrl.u32 %v7678, 7
  %v7680 = vsub.s32 0, %v7679
  %v7681 = vrot.slane %v7676, %v7680
  %7682 = vset.pattern.permute.xlu0 0
  %7683 = vperm.xlu0 %7682, %v60
  %v7684 = vpop.permute.xlu0 %7683
  %v7686 = vlaneseq
  %v7687 = vshrl.u32 %v7686, 7
  %v7688 = vsub.s32 0, %v7687
  %v7689 = vrot.slane %v7684, %v7688
  %7690 = vset.pattern.permute.xlu0 0
  %7691 = vperm.xlu0 %7690, %v61
  %v7692 = vpop.permute.xlu0 %7691
  %v7694 = vlaneseq
  %v7695 = vshrl.u32 %v7694, 7
  %v7696 = vsub.s32 0, %v7695
  %v7697 = vrot.slane %v7692, %v7696
  %7698 = vset.pattern.permute.xlu0 0
  %7699 = vperm.xlu0 %7698, %v62
  %v7700 = vpop.permute.xlu0 %7699
  %v7702 = vlaneseq
  %v7703 = vshrl.u32 %v7702, 7
  %v7704 = vsub.s32 0, %v7703
  %v7705 = vrot.slane %v7700, %v7704
  %7706 = vset.pattern.permute.xlu0 0
  %7707 = vperm.xlu0 %7706, %v63
  %v7708 = vpop.permute.xlu0 %7707
  %v7710 = vlaneseq
  %v7711 = vshrl.u32 %v7710, 7
  %v7712 = vsub.s32 0, %v7711
  %v7713 = vrot.slane %v7708, %v7712
  %7714 = vset.pattern.permute.xlu0 0
  %7715 = vperm.xlu0 %7714, %v64
  %v7716 = vpop.permute.xlu0 %7715
  %v7718 = vlaneseq
  %v7719 = vshrl.u32 %v7718, 7
  %v7720 = vsub.s32 0, %v7719
  %v7721 = vrot.slane %v7716, %v7720
  %7722 = vset.pattern.permute.xlu0 0
  %7723 = vperm.xlu0 %7722, %v65
  %v7724 = vpop.permute.xlu0 %7723
  %v7726 = vlaneseq
  %v7727 = vshrl.u32 %v7726, 7
  %v7728 = vsub.s32 0, %v7727
  %v7729 = vrot.slane %v7724, %v7728
  %7730 = vset.pattern.permute.xlu0 0
  %7731 = vperm.xlu0 %7730, %v66
  %v7732 = vpop.permute.xlu0 %7731
  %v7734 = vlaneseq
  %v7735 = vshrl.u32 %v7734, 7
  %v7736 = vsub.s32 0, %v7735
  %v7737 = vrot.slane %v7732, %v7736
  %7738 = vset.pattern.permute.xlu0 0
  %7739 = vperm.xlu0 %7738, %v67
  %v7740 = vpop.permute.xlu0 %7739
  %v7742 = vlaneseq
  %v7743 = vshrl.u32 %v7742, 7
  %v7744 = vsub.s32 0, %v7743
  %v7745 = vrot.slane %v7740, %v7744
  %7746 = vset.pattern.permute.xlu0 0
  %7747 = vperm.xlu0 %7746, %v68
  %v7748 = vpop.permute.xlu0 %7747
  %v7750 = vlaneseq
  %v7751 = vshrl.u32 %v7750, 7
  %v7752 = vsub.s32 0, %v7751
  %v7753 = vrot.slane %v7748, %v7752
  %7754 = vset.pattern.permute.xlu0 0
  %7755 = vperm.xlu0 %7754, %v69
  %v7756 = vpop.permute.xlu0 %7755
  %v7758 = vlaneseq
  %v7759 = vshrl.u32 %v7758, 7
  %v7760 = vsub.s32 0, %v7759
  %v7761 = vrot.slane %v7756, %v7760
  %7762 = vset.pattern.permute.xlu0 0
  %7763 = vperm.xlu0 %7762, %v70
  %v7764 = vpop.permute.xlu0 %7763
  %v7766 = vlaneseq
  %v7767 = vshrl.u32 %v7766, 7
  %v7768 = vsub.s32 0, %v7767
  %v7769 = vrot.slane %v7764, %v7768
  %7770 = vset.pattern.permute.xlu0 0
  %7771 = vperm.xlu0 %7770, %v71
  %v7772 = vpop.permute.xlu0 %7771
  %v7774 = vlaneseq
  %v7775 = vshrl.u32 %v7774, 7
  %v7776 = vsub.s32 0, %v7775
  %v7777 = vrot.slane %v7772, %v7776
  %7778 = vset.pattern.permute.xlu0 0
  %7779 = vperm.xlu0 %7778, %v72
  %v7780 = vpop.permute.xlu0 %7779
  %v7782 = vlaneseq
  %v7783 = vshrl.u32 %v7782, 7
  %v7784 = vsub.s32 0, %v7783
  %v7785 = vrot.slane %v7780, %v7784
  %7786 = vset.pattern.permute.xlu0 0
  %7787 = vperm.xlu0 %7786, %v73
  %v7788 = vpop.permute.xlu0 %7787
  %v7790 = vlaneseq
  %v7791 = vshrl.u32 %v7790, 7
  %v7792 = vsub.s32 0, %v7791
  %v7793 = vrot.slane %v7788, %v7792
  %7794 = vset.pattern.permute.xlu0 0
  %7795 = vperm.xlu0 %7794, %v74
  %v7796 = vpop.permute.xlu0 %7795
  %v7798 = vlaneseq
  %v7799 = vshrl.u32 %v7798, 7
  %v7800 = vsub.s32 0, %v7799
  %v7801 = vrot.slane %v7796, %v7800
  %v7802 = vadd.f32 %v7514, %v7553
  %v7803 = vadd.f32 %v7515, %v7561
  %v7804 = vadd.f32 %v7516, %v7569
  %v7805 = vadd.f32 %v7517, %v7577
  %v7806 = vadd.f32 %v7518, %v7585
  %v7807 = vadd.f32 %v7519, %v7593
  %v7808 = vadd.f32 %v7520, %v7601
  %v7809 = vadd.f32 %v7521, %v7609
  %v7810 = vadd.f32 %v7522, %v7617
  %v7811 = vadd.f32 %v7523, %v7625
  %v7812 = vadd.f32 %v7524, %v7633
  %v7813 = vadd.f32 %v7525, %v7641
  %v7814 = vadd.f32 %v7526, %v7649
  %v7815 = vadd.f32 %v7527, %v7657
  %v7816 = vadd.f32 %v7528, %v7665
  %v7817 = vadd.f32 %v7529, %v7673
  %v7818 = vadd.f32 %v7530, %v7681
  %v7819 = vadd.f32 %v7531, %v7689
  %v7820 = vadd.f32 %v7532, %v7697
  %v7821 = vadd.f32 %v7533, %v7705
  %v7822 = vadd.f32 %v7534, %v7713
  %v7823 = vadd.f32 %v7535, %v7721
  %v7824 = vadd.f32 %v7536, %v7729
  %v7825 = vadd.f32 %v7537, %v7737
  %v7826 = vadd.f32 %v7538, %v7745
  %v7827 = vadd.f32 %v7539, %v7753
  %v7828 = vadd.f32 %v7540, %v7761
  %v7829 = vadd.f32 %v7541, %v7769
  %v7830 = vadd.f32 %v7542, %v7777
  %v7831 = vadd.f32 %v7543, %v7785
  %v7832 = vadd.f32 %v7544, %v7793
  %v7833 = vadd.f32 %v7545, %v7801
  %v7834 = vand.u32 2147483647, %v7802
  %vm7835 = vcmp.le.f32.partialorder %v7834, 0.7853982
  %vm7836 = vcmp.lt.s32.totalorder %v7802, 0
  %v7837 = vand.u32 %v7802, 2139095040
  %v7838 = vshrl.u32 %v7837, 23
  %v7839 = vsub.s32 %v7838, 127
  %v7840 = vand.u32 2147483647, %v7802
  %v7841 = vand.u32 %v7840, 8388607
  %v7842 = vor.u32 %v7841, 8388608
  %v7843 = vsub.s32 0, %v7842
  %v7844 = vadd.s32 %v7839, 1
  %vm7845 = vcmp.gt.s32.totalorder %v7844, 0
  %v7846 = vsel %vm7845, %v7844, 0
  %v7847 = vshrl.u32 %v7846, 5
  %v7848 = vand.u32 %v7846, 31
  %v7849 = vsub.s32 32, %v7848
  %v7850 = vshrl.u32 683565275, %v7849
  %v7851 = vshll.u32 683565275, %v7848
  %v7852 = vshrl.u32 2475754826, %v7849
  %v7853 = vor.u32 %v7851, %v7852
  %v7854 = vshll.u32 2475754826, %v7848
  %v7855 = vshrl.u32 2131351028, %v7849
  %v7856 = vor.u32 %v7854, %v7855
  %v7857 = vshll.u32 2131351028, %v7848
  %v7858 = vshrl.u32 2102212464, %v7849
  %v7859 = vor.u32 %v7857, %v7858
  %v7860 = vshll.u32 2102212464, %v7848
  %v7861 = vshrl.u32 920167782, %v7849
  %v7862 = vor.u32 %v7860, %v7861
  %v7863 = vshll.u32 920167782, %v7848
  %v7864 = vshrl.u32 1326507024, %v7849
  %v7865 = vor.u32 %v7863, %v7864
  %vm7866 = vcmp.lt.s32.totalorder %v7847, 1
  %vm7867 = vcmp.lt.s32.totalorder %v7847, 2
  %vm7868 = vcmp.lt.s32.totalorder %v7847, 3
  %vm7869 = vcmp.lt.s32.totalorder %v7847, 4
  %v7870 = vsel %vm7866, %v7850, %v7853
  %v7871 = vsel %vm7869, %v7859, 2102212464
  %v7872 = vsel %vm7868, %v7856, %v7871
  %v7873 = vsel %vm7867, %v7870, %v7872
  %v7874 = vsel %vm7866, %v7853, %v7856
  %v7875 = vsel %vm7869, %v7862, 920167782
  %v7876 = vsel %vm7868, %v7859, %v7875
  %v7877 = vsel %vm7867, %v7874, %v7876
  %v7878 = vsel %vm7866, %v7856, %v7859
  %v7879 = vsel %vm7869, %v7865, 1326507024
  %v7880 = vsel %vm7868, %v7862, %v7879
  %v7881 = vsel %vm7867, %v7878, %v7880
  %v7882 = vshll.u32 %v7842, 8
  %v7883 = vmul.u32.u64.compose %v7882, %v7881
  %v7884 = vextract.low.u32 %v7883
  %v7885 = vextract.high.u32 %v7883
  %v7886 = vmul.u32.u64.compose %v7882, %v7877
  %v7887 = vextract.low.u32 %v7886
  %v7888 = vextract.high.u32 %v7886
  %v7889 = vmul.u32 %v7882, %v7873
  %v7890 = vadd.s32 %v7885, %v7887
  %vm7891 = vc.u32 %v7885, %v7887
  %v7892 = vadd.s32 %v7888, 1
  %v7893 = vsel %vm7891, %v7892, %v7888
  %v7894 = vadd.s32 %v7889, %v7893
  %v7895 = vadd.s32 %v7894, 536870912
  %v7896 = vshrl.u32 %v7895, 30
  %v7897 = vshll.u32 %v7896, 30
  %v7898 = vsub.s32 %v7894, %v7897
  %vm7899 = vcmp.lt.s32.totalorder %v7898, 0
  %v7900 = vsub.s32 0, %v7898
  %v7901 = vsel %vm7899, %v7900, %v7898
  %v7902 = vclz %v7901
  %v7903 = vsub.s32 %v7902, 2
  %vm7904 = vcmp.gt.s32.totalorder 0, %v7903
  %v7905 = vsel %vm7904, 0, %v7903
  %v7906 = vsub.s32 32, %v7905
  %v7907 = vshll.u32 %v7898, %v7905
  %v7908 = vshrl.u32 %v7890, %v7906
  %v7909 = vor.u32 %v7907, %v7908
  %v7910 = vsub.s32 4294967266, %v7905
  %v7911 = vadd.s32 %v7910, 127
  %v7912 = vshll.u32 %v7911, 23
  %v7913 = vor.u32 4788187, %v7912
  %v7914 = vand.u32 2147483647, %v7913
  %v7916 = vcvt.s32.f32 %v7909
  %v7917 = vmul.f32 %v7916, %v7914
  %v7918 = vxor.u32 %v7917, 2147483648
  %v7919 = vsel %vm7836, %v7918, %v7917
  %v7920 = vsub.s32 4, %v7896
  %v7921 = vsel %vm7836, %v7920, %v7896
  %v7922 = vsel %vm7835, %v7802, %v7919
  %v7923 = vsel %vm7835, 0, %v7921
  %v7924 = vcosq.f32.pop %v7922
  %v7925 = vsinq.f32.pop %v7922
  %vm7926 = vweird.f32 %v7802
  %v7927 = vadd.s32 %v7923, 3
  %v7928 = vand.u32 %v7927, 3
  %vm7929 = vcmp.lt.s32.totalorder %v7928, 2
  %vm7930 = vcmp.eq.s32.totalorder %v7928, 0
  %v7931 = vxor.u32 %v7925, 2147483648
  %v7932 = vsel %vm7930, %v7924, %v7931
  %vm7933 = vcmp.eq.s32.totalorder %v7928, 2
  %v7934 = vxor.u32 %v7924, 2147483648
  %v7935 = vsel %vm7933, %v7934, %v7925
  %v7936 = vsel %vm7929, %v7932, %v7935
  %v7937 = vsel %vm7926, nan, %v7936
  %v7938 = vand.u32 2147483647, %v7803
  %vm7939 = vcmp.le.f32.partialorder %v7938, 0.7853982
  %vm7940 = vcmp.lt.s32.totalorder %v7803, 0
  %v7941 = vand.u32 %v7803, 2139095040
  %v7942 = vshrl.u32 %v7941, 23
  %v7943 = vsub.s32 %v7942, 127
  %v7944 = vand.u32 2147483647, %v7803
  %v7945 = vand.u32 %v7944, 8388607
  %v7946 = vor.u32 %v7945, 8388608
  %v7947 = vsub.s32 0, %v7946
  %v7948 = vadd.s32 %v7943, 1
  %vm7949 = vcmp.gt.s32.totalorder %v7948, 0
  %v7950 = vsel %vm7949, %v7948, 0
  %v7951 = vshrl.u32 %v7950, 5
  %v7952 = vand.u32 %v7950, 31
  %v7953 = vsub.s32 32, %v7952
  %v7954 = vshrl.u32 683565275, %v7953
  %v7955 = vshll.u32 683565275, %v7952
  %v7956 = vshrl.u32 2475754826, %v7953
  %v7957 = vor.u32 %v7955, %v7956
  %v7958 = vshll.u32 2475754826, %v7952
  %v7959 = vshrl.u32 2131351028, %v7953
  %v7960 = vor.u32 %v7958, %v7959
  %v7961 = vshll.u32 2131351028, %v7952
  %v7962 = vshrl.u32 2102212464, %v7953
  %v7963 = vor.u32 %v7961, %v7962
  %v7964 = vshll.u32 2102212464, %v7952
  %v7965 = vshrl.u32 920167782, %v7953
  %v7966 = vor.u32 %v7964, %v7965
  %v7967 = vshll.u32 920167782, %v7952
  %v7968 = vshrl.u32 1326507024, %v7953
  %v7969 = vor.u32 %v7967, %v7968
  %vm7970 = vcmp.lt.s32.totalorder %v7951, 1
  %vm7971 = vcmp.lt.s32.totalorder %v7951, 2
  %vm7972 = vcmp.lt.s32.totalorder %v7951, 3
  %vm7973 = vcmp.lt.s32.totalorder %v7951, 4
  %v7974 = vsel %vm7970, %v7954, %v7957
  %v7975 = vsel %vm7973, %v7963, 2102212464
  %v7976 = vsel %vm7972, %v7960, %v7975
  %v7977 = vsel %vm7971, %v7974, %v7976
  %v7978 = vsel %vm7970, %v7957, %v7960
  %v7979 = vsel %vm7973, %v7966, 920167782
  %v7980 = vsel %vm7972, %v7963, %v7979
  %v7981 = vsel %vm7971, %v7978, %v7980
  %v7982 = vsel %vm7970, %v7960, %v7963
  %v7983 = vsel %vm7973, %v7969, 1326507024
  %v7984 = vsel %vm7972, %v7966, %v7983
  %v7985 = vsel %vm7971, %v7982, %v7984
  %v7986 = vshll.u32 %v7946, 8
  %v7987 = vmul.u32.u64.compose %v7986, %v7985
  %v7988 = vextract.low.u32 %v7987
  %v7989 = vextract.high.u32 %v7987
  %v7990 = vmul.u32.u64.compose %v7986, %v7981
  %v7991 = vextract.low.u32 %v7990
  %v7992 = vextract.high.u32 %v7990
  %v7993 = vmul.u32 %v7986, %v7977
  %v7994 = vadd.s32 %v7989, %v7991
  %vm7995 = vc.u32 %v7989, %v7991
  %v7996 = vadd.s32 %v7992, 1
  %v7997 = vsel %vm7995, %v7996, %v7992
  %v7998 = vadd.s32 %v7993, %v7997
  %v7999 = vadd.s32 %v7998, 536870912
  %v8000 = vshrl.u32 %v7999, 30
  %v8001 = vshll.u32 %v8000, 30
  %v8002 = vsub.s32 %v7998, %v8001
  %vm8003 = vcmp.lt.s32.totalorder %v8002, 0
  %v8004 = vsub.s32 0, %v8002
  %v8005 = vsel %vm8003, %v8004, %v8002
  %v8006 = vclz %v8005
  %v8007 = vsub.s32 %v8006, 2
  %vm8008 = vcmp.gt.s32.totalorder 0, %v8007
  %v8009 = vsel %vm8008, 0, %v8007
  %v8010 = vsub.s32 32, %v8009
  %v8011 = vshll.u32 %v8002, %v8009
  %v8012 = vshrl.u32 %v7994, %v8010
  %v8013 = vor.u32 %v8011, %v8012
  %v8014 = vsub.s32 4294967266, %v8009
  %v8015 = vadd.s32 %v8014, 127
  %v8016 = vshll.u32 %v8015, 23
  %v8017 = vor.u32 4788187, %v8016
  %v8018 = vand.u32 2147483647, %v8017
  %v8020 = vcvt.s32.f32 %v8013
  %v8021 = vmul.f32 %v8020, %v8018
  %v8022 = vxor.u32 %v8021, 2147483648
  %v8023 = vsel %vm7940, %v8022, %v8021
  %v8024 = vsub.s32 4, %v8000
  %v8025 = vsel %vm7940, %v8024, %v8000
  %v8026 = vsel %vm7939, %v7803, %v8023
  %v8027 = vsel %vm7939, 0, %v8025
  %v8028 = vcosq.f32.pop %v8026
  %v8029 = vsinq.f32.pop %v8026
  %vm8030 = vweird.f32 %v7803
  %v8031 = vadd.s32 %v8027, 3
  %v8032 = vand.u32 %v8031, 3
  %vm8033 = vcmp.lt.s32.totalorder %v8032, 2
  %vm8034 = vcmp.eq.s32.totalorder %v8032, 0
  %v8035 = vxor.u32 %v8029, 2147483648
  %v8036 = vsel %vm8034, %v8028, %v8035
  %vm8037 = vcmp.eq.s32.totalorder %v8032, 2
  %v8038 = vxor.u32 %v8028, 2147483648
  %v8039 = vsel %vm8037, %v8038, %v8029
  %v8040 = vsel %vm8033, %v8036, %v8039
  %v8041 = vsel %vm8030, nan, %v8040
  %v8042 = vand.u32 2147483647, %v7804
  %vm8043 = vcmp.le.f32.partialorder %v8042, 0.7853982
  %vm8044 = vcmp.lt.s32.totalorder %v7804, 0
  %v8045 = vand.u32 %v7804, 2139095040
  %v8046 = vshrl.u32 %v8045, 23
  %v8047 = vsub.s32 %v8046, 127
  %v8048 = vand.u32 2147483647, %v7804
  %v8049 = vand.u32 %v8048, 8388607
  %v8050 = vor.u32 %v8049, 8388608
  %v8051 = vsub.s32 0, %v8050
  %v8052 = vadd.s32 %v8047, 1
  %vm8053 = vcmp.gt.s32.totalorder %v8052, 0
  %v8054 = vsel %vm8053, %v8052, 0
  %v8055 = vshrl.u32 %v8054, 5
  %v8056 = vand.u32 %v8054, 31
  %v8057 = vsub.s32 32, %v8056
  %v8058 = vshrl.u32 683565275, %v8057
  %v8059 = vshll.u32 683565275, %v8056
  %v8060 = vshrl.u32 2475754826, %v8057
  %v8061 = vor.u32 %v8059, %v8060
  %v8062 = vshll.u32 2475754826, %v8056
  %v8063 = vshrl.u32 2131351028, %v8057
  %v8064 = vor.u32 %v8062, %v8063
  %v8065 = vshll.u32 2131351028, %v8056
  %v8066 = vshrl.u32 2102212464, %v8057
  %v8067 = vor.u32 %v8065, %v8066
  %v8068 = vshll.u32 2102212464, %v8056
  %v8069 = vshrl.u32 920167782, %v8057
  %v8070 = vor.u32 %v8068, %v8069
  %v8071 = vshll.u32 920167782, %v8056
  %v8072 = vshrl.u32 1326507024, %v8057
  %v8073 = vor.u32 %v8071, %v8072
  %vm8074 = vcmp.lt.s32.totalorder %v8055, 1
  %vm8075 = vcmp.lt.s32.totalorder %v8055, 2
  %vm8076 = vcmp.lt.s32.totalorder %v8055, 3
  %vm8077 = vcmp.lt.s32.totalorder %v8055, 4
  %v8078 = vsel %vm8074, %v8058, %v8061
  %v8079 = vsel %vm8077, %v8067, 2102212464
  %v8080 = vsel %vm8076, %v8064, %v8079
  %v8081 = vsel %vm8075, %v8078, %v8080
  %v8082 = vsel %vm8074, %v8061, %v8064
  %v8083 = vsel %vm8077, %v8070, 920167782
  %v8084 = vsel %vm8076, %v8067, %v8083
  %v8085 = vsel %vm8075, %v8082, %v8084
  %v8086 = vsel %vm8074, %v8064, %v8067
  %v8087 = vsel %vm8077, %v8073, 1326507024
  %v8088 = vsel %vm8076, %v8070, %v8087
  %v8089 = vsel %vm8075, %v8086, %v8088
  %v8090 = vshll.u32 %v8050, 8
  %v8091 = vmul.u32.u64.compose %v8090, %v8089
  %v8092 = vextract.low.u32 %v8091
  %v8093 = vextract.high.u32 %v8091
  %v8094 = vmul.u32.u64.compose %v8090, %v8085
  %v8095 = vextract.low.u32 %v8094
  %v8096 = vextract.high.u32 %v8094
  %v8097 = vmul.u32 %v8090, %v8081
  %v8098 = vadd.s32 %v8093, %v8095
  %vm8099 = vc.u32 %v8093, %v8095
  %v8100 = vadd.s32 %v8096, 1
  %v8101 = vsel %vm8099, %v8100, %v8096
  %v8102 = vadd.s32 %v8097, %v8101
  %v8103 = vadd.s32 %v8102, 536870912
  %v8104 = vshrl.u32 %v8103, 30
  %v8105 = vshll.u32 %v8104, 30
  %v8106 = vsub.s32 %v8102, %v8105
  %vm8107 = vcmp.lt.s32.totalorder %v8106, 0
  %v8108 = vsub.s32 0, %v8106
  %v8109 = vsel %vm8107, %v8108, %v8106
  %v8110 = vclz %v8109
  %v8111 = vsub.s32 %v8110, 2
  %vm8112 = vcmp.gt.s32.totalorder 0, %v8111
  %v8113 = vsel %vm8112, 0, %v8111
  %v8114 = vsub.s32 32, %v8113
  %v8115 = vshll.u32 %v8106, %v8113
  %v8116 = vshrl.u32 %v8098, %v8114
  %v8117 = vor.u32 %v8115, %v8116
  %v8118 = vsub.s32 4294967266, %v8113
  %v8119 = vadd.s32 %v8118, 127
  %v8120 = vshll.u32 %v8119, 23
  %v8121 = vor.u32 4788187, %v8120
  %v8122 = vand.u32 2147483647, %v8121
  %v8124 = vcvt.s32.f32 %v8117
  %v8125 = vmul.f32 %v8124, %v8122
  %v8126 = vxor.u32 %v8125, 2147483648
  %v8127 = vsel %vm8044, %v8126, %v8125
  %v8128 = vsub.s32 4, %v8104
  %v8129 = vsel %vm8044, %v8128, %v8104
  %v8130 = vsel %vm8043, %v7804, %v8127
  %v8131 = vsel %vm8043, 0, %v8129
  %v8132 = vcosq.f32.pop %v8130
  %v8133 = vsinq.f32.pop %v8130
  %vm8134 = vweird.f32 %v7804
  %v8135 = vadd.s32 %v8131, 3
  %v8136 = vand.u32 %v8135, 3
  %vm8137 = vcmp.lt.s32.totalorder %v8136, 2
  %vm8138 = vcmp.eq.s32.totalorder %v8136, 0
  %v8139 = vxor.u32 %v8133, 2147483648
  %v8140 = vsel %vm8138, %v8132, %v8139
  %vm8141 = vcmp.eq.s32.totalorder %v8136, 2
  %v8142 = vxor.u32 %v8132, 2147483648
  %v8143 = vsel %vm8141, %v8142, %v8133
  %v8144 = vsel %vm8137, %v8140, %v8143
  %v8145 = vsel %vm8134, nan, %v8144
  %v8146 = vand.u32 2147483647, %v7805
  %vm8147 = vcmp.le.f32.partialorder %v8146, 0.7853982
  %vm8148 = vcmp.lt.s32.totalorder %v7805, 0
  %v8149 = vand.u32 %v7805, 2139095040
  %v8150 = vshrl.u32 %v8149, 23
  %v8151 = vsub.s32 %v8150, 127
  %v8152 = vand.u32 2147483647, %v7805
  %v8153 = vand.u32 %v8152, 8388607
  %v8154 = vor.u32 %v8153, 8388608
  %v8155 = vsub.s32 0, %v8154
  %v8156 = vadd.s32 %v8151, 1
  %vm8157 = vcmp.gt.s32.totalorder %v8156, 0
  %v8158 = vsel %vm8157, %v8156, 0
  %v8159 = vshrl.u32 %v8158, 5
  %v8160 = vand.u32 %v8158, 31
  %v8161 = vsub.s32 32, %v8160
  %v8162 = vshrl.u32 683565275, %v8161
  %v8163 = vshll.u32 683565275, %v8160
  %v8164 = vshrl.u32 2475754826, %v8161
  %v8165 = vor.u32 %v8163, %v8164
  %v8166 = vshll.u32 2475754826, %v8160
  %v8167 = vshrl.u32 2131351028, %v8161
  %v8168 = vor.u32 %v8166, %v8167
  %v8169 = vshll.u32 2131351028, %v8160
  %v8170 = vshrl.u32 2102212464, %v8161
  %v8171 = vor.u32 %v8169, %v8170
  %v8172 = vshll.u32 2102212464, %v8160
  %v8173 = vshrl.u32 920167782, %v8161
  %v8174 = vor.u32 %v8172, %v8173
  %v8175 = vshll.u32 920167782, %v8160
  %v8176 = vshrl.u32 1326507024, %v8161
  %v8177 = vor.u32 %v8175, %v8176
  %vm8178 = vcmp.lt.s32.totalorder %v8159, 1
  %vm8179 = vcmp.lt.s32.totalorder %v8159, 2
  %vm8180 = vcmp.lt.s32.totalorder %v8159, 3
  %vm8181 = vcmp.lt.s32.totalorder %v8159, 4
  %v8182 = vsel %vm8178, %v8162, %v8165
  %v8183 = vsel %vm8181, %v8171, 2102212464
  %v8184 = vsel %vm8180, %v8168, %v8183
  %v8185 = vsel %vm8179, %v8182, %v8184
  %v8186 = vsel %vm8178, %v8165, %v8168
  %v8187 = vsel %vm8181, %v8174, 920167782
  %v8188 = vsel %vm8180, %v8171, %v8187
  %v8189 = vsel %vm8179, %v8186, %v8188
  %v8190 = vsel %vm8178, %v8168, %v8171
  %v8191 = vsel %vm8181, %v8177, 1326507024
  %v8192 = vsel %vm8180, %v8174, %v8191
  %v8193 = vsel %vm8179, %v8190, %v8192
  %v8194 = vshll.u32 %v8154, 8
  %v8195 = vmul.u32.u64.compose %v8194, %v8193
  %v8196 = vextract.low.u32 %v8195
  %v8197 = vextract.high.u32 %v8195
  %v8198 = vmul.u32.u64.compose %v8194, %v8189
  %v8199 = vextract.low.u32 %v8198
  %v8200 = vextract.high.u32 %v8198
  %v8201 = vmul.u32 %v8194, %v8185
  %v8202 = vadd.s32 %v8197, %v8199
  %vm8203 = vc.u32 %v8197, %v8199
  %v8204 = vadd.s32 %v8200, 1
  %v8205 = vsel %vm8203, %v8204, %v8200
  %v8206 = vadd.s32 %v8201, %v8205
  %v8207 = vadd.s32 %v8206, 536870912
  %v8208 = vshrl.u32 %v8207, 30
  %v8209 = vshll.u32 %v8208, 30
  %v8210 = vsub.s32 %v8206, %v8209
  %vm8211 = vcmp.lt.s32.totalorder %v8210, 0
  %v8212 = vsub.s32 0, %v8210
  %v8213 = vsel %vm8211, %v8212, %v8210
  %v8214 = vclz %v8213
  %v8215 = vsub.s32 %v8214, 2
  %vm8216 = vcmp.gt.s32.totalorder 0, %v8215
  %v8217 = vsel %vm8216, 0, %v8215
  %v8218 = vsub.s32 32, %v8217
  %v8219 = vshll.u32 %v8210, %v8217
  %v8220 = vshrl.u32 %v8202, %v8218
  %v8221 = vor.u32 %v8219, %v8220
  %v8222 = vsub.s32 4294967266, %v8217
  %v8223 = vadd.s32 %v8222, 127
  %v8224 = vshll.u32 %v8223, 23
  %v8225 = vor.u32 4788187, %v8224
  %v8226 = vand.u32 2147483647, %v8225
  %v8228 = vcvt.s32.f32 %v8221
  %v8229 = vmul.f32 %v8228, %v8226
  %v8230 = vxor.u32 %v8229, 2147483648
  %v8231 = vsel %vm8148, %v8230, %v8229
  %v8232 = vsub.s32 4, %v8208
  %v8233 = vsel %vm8148, %v8232, %v8208
  %v8234 = vsel %vm8147, %v7805, %v8231
  %v8235 = vsel %vm8147, 0, %v8233
  %v8236 = vcosq.f32.pop %v8234
  %v8237 = vsinq.f32.pop %v8234
  %vm8238 = vweird.f32 %v7805
  %v8239 = vadd.s32 %v8235, 3
  %v8240 = vand.u32 %v8239, 3
  %vm8241 = vcmp.lt.s32.totalorder %v8240, 2
  %vm8242 = vcmp.eq.s32.totalorder %v8240, 0
  %v8243 = vxor.u32 %v8237, 2147483648
  %v8244 = vsel %vm8242, %v8236, %v8243
  %vm8245 = vcmp.eq.s32.totalorder %v8240, 2
  %v8246 = vxor.u32 %v8236, 2147483648
  %v8247 = vsel %vm8245, %v8246, %v8237
  %v8248 = vsel %vm8241, %v8244, %v8247
  %v8249 = vsel %vm8238, nan, %v8248
  %v8250 = vand.u32 2147483647, %v7806
  %vm8251 = vcmp.le.f32.partialorder %v8250, 0.7853982
  %vm8252 = vcmp.lt.s32.totalorder %v7806, 0
  %v8253 = vand.u32 %v7806, 2139095040
  %v8254 = vshrl.u32 %v8253, 23
  %v8255 = vsub.s32 %v8254, 127
  %v8256 = vand.u32 2147483647, %v7806
  %v8257 = vand.u32 %v8256, 8388607
  %v8258 = vor.u32 %v8257, 8388608
  %v8259 = vsub.s32 0, %v8258
  %v8260 = vadd.s32 %v8255, 1
  %vm8261 = vcmp.gt.s32.totalorder %v8260, 0
  %v8262 = vsel %vm8261, %v8260, 0
  %v8263 = vshrl.u32 %v8262, 5
  %v8264 = vand.u32 %v8262, 31
  %v8265 = vsub.s32 32, %v8264
  %v8266 = vshrl.u32 683565275, %v8265
  %v8267 = vshll.u32 683565275, %v8264
  %v8268 = vshrl.u32 2475754826, %v8265
  %v8269 = vor.u32 %v8267, %v8268
  %v8270 = vshll.u32 2475754826, %v8264
  %v8271 = vshrl.u32 2131351028, %v8265
  %v8272 = vor.u32 %v8270, %v8271
  %v8273 = vshll.u32 2131351028, %v8264
  %v8274 = vshrl.u32 2102212464, %v8265
  %v8275 = vor.u32 %v8273, %v8274
  %v8276 = vshll.u32 2102212464, %v8264
  %v8277 = vshrl.u32 920167782, %v8265
  %v8278 = vor.u32 %v8276, %v8277
  %v8279 = vshll.u32 920167782, %v8264
  %v8280 = vshrl.u32 1326507024, %v8265
  %v8281 = vor.u32 %v8279, %v8280
  %vm8282 = vcmp.lt.s32.totalorder %v8263, 1
  %vm8283 = vcmp.lt.s32.totalorder %v8263, 2
  %vm8284 = vcmp.lt.s32.totalorder %v8263, 3
  %vm8285 = vcmp.lt.s32.totalorder %v8263, 4
  %v8286 = vsel %vm8282, %v8266, %v8269
  %v8287 = vsel %vm8285, %v8275, 2102212464
  %v8288 = vsel %vm8284, %v8272, %v8287
  %v8289 = vsel %vm8283, %v8286, %v8288
  %v8290 = vsel %vm8282, %v8269, %v8272
  %v8291 = vsel %vm8285, %v8278, 920167782
  %v8292 = vsel %vm8284, %v8275, %v8291
  %v8293 = vsel %vm8283, %v8290, %v8292
  %v8294 = vsel %vm8282, %v8272, %v8275
  %v8295 = vsel %vm8285, %v8281, 1326507024
  %v8296 = vsel %vm8284, %v8278, %v8295
  %v8297 = vsel %vm8283, %v8294, %v8296
  %v8298 = vshll.u32 %v8258, 8
  %v8299 = vmul.u32.u64.compose %v8298, %v8297
  %v8300 = vextract.low.u32 %v8299
  %v8301 = vextract.high.u32 %v8299
  %v8302 = vmul.u32.u64.compose %v8298, %v8293
  %v8303 = vextract.low.u32 %v8302
  %v8304 = vextract.high.u32 %v8302
  %v8305 = vmul.u32 %v8298, %v8289
  %v8306 = vadd.s32 %v8301, %v8303
  %vm8307 = vc.u32 %v8301, %v8303
  %v8308 = vadd.s32 %v8304, 1
  %v8309 = vsel %vm8307, %v8308, %v8304
  %v8310 = vadd.s32 %v8305, %v8309
  %v8311 = vadd.s32 %v8310, 536870912
  %v8312 = vshrl.u32 %v8311, 30
  %v8313 = vshll.u32 %v8312, 30
  %v8314 = vsub.s32 %v8310, %v8313
  %vm8315 = vcmp.lt.s32.totalorder %v8314, 0
  %v8316 = vsub.s32 0, %v8314
  %v8317 = vsel %vm8315, %v8316, %v8314
  %v8318 = vclz %v8317
  %v8319 = vsub.s32 %v8318, 2
  %vm8320 = vcmp.gt.s32.totalorder 0, %v8319
  %v8321 = vsel %vm8320, 0, %v8319
  %v8322 = vsub.s32 32, %v8321
  %v8323 = vshll.u32 %v8314, %v8321
  %v8324 = vshrl.u32 %v8306, %v8322
  %v8325 = vor.u32 %v8323, %v8324
  %v8326 = vsub.s32 4294967266, %v8321
  %v8327 = vadd.s32 %v8326, 127
  %v8328 = vshll.u32 %v8327, 23
  %v8329 = vor.u32 4788187, %v8328
  %v8330 = vand.u32 2147483647, %v8329
  %v8332 = vcvt.s32.f32 %v8325
  %v8333 = vmul.f32 %v8332, %v8330
  %v8334 = vxor.u32 %v8333, 2147483648
  %v8335 = vsel %vm8252, %v8334, %v8333
  %v8336 = vsub.s32 4, %v8312
  %v8337 = vsel %vm8252, %v8336, %v8312
  %v8338 = vsel %vm8251, %v7806, %v8335
  %v8339 = vsel %vm8251, 0, %v8337
  %v8340 = vcosq.f32.pop %v8338
  %v8341 = vsinq.f32.pop %v8338
  %vm8342 = vweird.f32 %v7806
  %v8343 = vadd.s32 %v8339, 3
  %v8344 = vand.u32 %v8343, 3
  %vm8345 = vcmp.lt.s32.totalorder %v8344, 2
  %vm8346 = vcmp.eq.s32.totalorder %v8344, 0
  %v8347 = vxor.u32 %v8341, 2147483648
  %v8348 = vsel %vm8346, %v8340, %v8347
  %vm8349 = vcmp.eq.s32.totalorder %v8344, 2
  %v8350 = vxor.u32 %v8340, 2147483648
  %v8351 = vsel %vm8349, %v8350, %v8341
  %v8352 = vsel %vm8345, %v8348, %v8351
  %v8353 = vsel %vm8342, nan, %v8352
  %v8354 = vand.u32 2147483647, %v7807
  %vm8355 = vcmp.le.f32.partialorder %v8354, 0.7853982
  %vm8356 = vcmp.lt.s32.totalorder %v7807, 0
  %v8357 = vand.u32 %v7807, 2139095040
  %v8358 = vshrl.u32 %v8357, 23
  %v8359 = vsub.s32 %v8358, 127
  %v8360 = vand.u32 2147483647, %v7807
  %v8361 = vand.u32 %v8360, 8388607
  %v8362 = vor.u32 %v8361, 8388608
  %v8363 = vsub.s32 0, %v8362
  %v8364 = vadd.s32 %v8359, 1
  %vm8365 = vcmp.gt.s32.totalorder %v8364, 0
  %v8366 = vsel %vm8365, %v8364, 0
  %v8367 = vshrl.u32 %v8366, 5
  %v8368 = vand.u32 %v8366, 31
  %v8369 = vsub.s32 32, %v8368
  %v8370 = vshrl.u32 683565275, %v8369
  %v8371 = vshll.u32 683565275, %v8368
  %v8372 = vshrl.u32 2475754826, %v8369
  %v8373 = vor.u32 %v8371, %v8372
  %v8374 = vshll.u32 2475754826, %v8368
  %v8375 = vshrl.u32 2131351028, %v8369
  %v8376 = vor.u32 %v8374, %v8375
  %v8377 = vshll.u32 2131351028, %v8368
  %v8378 = vshrl.u32 2102212464, %v8369
  %v8379 = vor.u32 %v8377, %v8378
  %v8380 = vshll.u32 2102212464, %v8368
  %v8381 = vshrl.u32 920167782, %v8369
  %v8382 = vor.u32 %v8380, %v8381
  %v8383 = vshll.u32 920167782, %v8368
  %v8384 = vshrl.u32 1326507024, %v8369
  %v8385 = vor.u32 %v8383, %v8384
  %vm8386 = vcmp.lt.s32.totalorder %v8367, 1
  %vm8387 = vcmp.lt.s32.totalorder %v8367, 2
  %vm8388 = vcmp.lt.s32.totalorder %v8367, 3
  %vm8389 = vcmp.lt.s32.totalorder %v8367, 4
  %v8390 = vsel %vm8386, %v8370, %v8373
  %v8391 = vsel %vm8389, %v8379, 2102212464
  %v8392 = vsel %vm8388, %v8376, %v8391
  %v8393 = vsel %vm8387, %v8390, %v8392
  %v8394 = vsel %vm8386, %v8373, %v8376
  %v8395 = vsel %vm8389, %v8382, 920167782
  %v8396 = vsel %vm8388, %v8379, %v8395
  %v8397 = vsel %vm8387, %v8394, %v8396
  %v8398 = vsel %vm8386, %v8376, %v8379
  %v8399 = vsel %vm8389, %v8385, 1326507024
  %v8400 = vsel %vm8388, %v8382, %v8399
  %v8401 = vsel %vm8387, %v8398, %v8400
  %v8402 = vshll.u32 %v8362, 8
  %v8403 = vmul.u32.u64.compose %v8402, %v8401
  %v8404 = vextract.low.u32 %v8403
  %v8405 = vextract.high.u32 %v8403
  %v8406 = vmul.u32.u64.compose %v8402, %v8397
  %v8407 = vextract.low.u32 %v8406
  %v8408 = vextract.high.u32 %v8406
  %v8409 = vmul.u32 %v8402, %v8393
  %v8410 = vadd.s32 %v8405, %v8407
  %vm8411 = vc.u32 %v8405, %v8407
  %v8412 = vadd.s32 %v8408, 1
  %v8413 = vsel %vm8411, %v8412, %v8408
  %v8414 = vadd.s32 %v8409, %v8413
  %v8415 = vadd.s32 %v8414, 536870912
  %v8416 = vshrl.u32 %v8415, 30
  %v8417 = vshll.u32 %v8416, 30
  %v8418 = vsub.s32 %v8414, %v8417
  %vm8419 = vcmp.lt.s32.totalorder %v8418, 0
  %v8420 = vsub.s32 0, %v8418
  %v8421 = vsel %vm8419, %v8420, %v8418
  %v8422 = vclz %v8421
  %v8423 = vsub.s32 %v8422, 2
  %vm8424 = vcmp.gt.s32.totalorder 0, %v8423
  %v8425 = vsel %vm8424, 0, %v8423
  %v8426 = vsub.s32 32, %v8425
  %v8427 = vshll.u32 %v8418, %v8425
  %v8428 = vshrl.u32 %v8410, %v8426
  %v8429 = vor.u32 %v8427, %v8428
  %v8430 = vsub.s32 4294967266, %v8425
  %v8431 = vadd.s32 %v8430, 127
  %v8432 = vshll.u32 %v8431, 23
  %v8433 = vor.u32 4788187, %v8432
  %v8434 = vand.u32 2147483647, %v8433
  %v8436 = vcvt.s32.f32 %v8429
  %v8437 = vmul.f32 %v8436, %v8434
  %v8438 = vxor.u32 %v8437, 2147483648
  %v8439 = vsel %vm8356, %v8438, %v8437
  %v8440 = vsub.s32 4, %v8416
  %v8441 = vsel %vm8356, %v8440, %v8416
  %v8442 = vsel %vm8355, %v7807, %v8439
  %v8443 = vsel %vm8355, 0, %v8441
  %v8444 = vcosq.f32.pop %v8442
  %v8445 = vsinq.f32.pop %v8442
  %vm8446 = vweird.f32 %v7807
  %v8447 = vadd.s32 %v8443, 3
  %v8448 = vand.u32 %v8447, 3
  %vm8449 = vcmp.lt.s32.totalorder %v8448, 2
  %vm8450 = vcmp.eq.s32.totalorder %v8448, 0
  %v8451 = vxor.u32 %v8445, 2147483648
  %v8452 = vsel %vm8450, %v8444, %v8451
  %vm8453 = vcmp.eq.s32.totalorder %v8448, 2
  %v8454 = vxor.u32 %v8444, 2147483648
  %v8455 = vsel %vm8453, %v8454, %v8445
  %v8456 = vsel %vm8449, %v8452, %v8455
  %v8457 = vsel %vm8446, nan, %v8456
  %v8458 = vand.u32 2147483647, %v7808
  %vm8459 = vcmp.le.f32.partialorder %v8458, 0.7853982
  %vm8460 = vcmp.lt.s32.totalorder %v7808, 0
  %v8461 = vand.u32 %v7808, 2139095040
  %v8462 = vshrl.u32 %v8461, 23
  %v8463 = vsub.s32 %v8462, 127
  %v8464 = vand.u32 2147483647, %v7808
  %v8465 = vand.u32 %v8464, 8388607
  %v8466 = vor.u32 %v8465, 8388608
  %v8467 = vsub.s32 0, %v8466
  %v8468 = vadd.s32 %v8463, 1
  %vm8469 = vcmp.gt.s32.totalorder %v8468, 0
  %v8470 = vsel %vm8469, %v8468, 0
  %v8471 = vshrl.u32 %v8470, 5
  %v8472 = vand.u32 %v8470, 31
  %v8473 = vsub.s32 32, %v8472
  %v8474 = vshrl.u32 683565275, %v8473
  %v8475 = vshll.u32 683565275, %v8472
  %v8476 = vshrl.u32 2475754826, %v8473
  %v8477 = vor.u32 %v8475, %v8476
  %v8478 = vshll.u32 2475754826, %v8472
  %v8479 = vshrl.u32 2131351028, %v8473
  %v8480 = vor.u32 %v8478, %v8479
  %v8481 = vshll.u32 2131351028, %v8472
  %v8482 = vshrl.u32 2102212464, %v8473
  %v8483 = vor.u32 %v8481, %v8482
  %v8484 = vshll.u32 2102212464, %v8472
  %v8485 = vshrl.u32 920167782, %v8473
  %v8486 = vor.u32 %v8484, %v8485
  %v8487 = vshll.u32 920167782, %v8472
  %v8488 = vshrl.u32 1326507024, %v8473
  %v8489 = vor.u32 %v8487, %v8488
  %vm8490 = vcmp.lt.s32.totalorder %v8471, 1
  %vm8491 = vcmp.lt.s32.totalorder %v8471, 2
  %vm8492 = vcmp.lt.s32.totalorder %v8471, 3
  %vm8493 = vcmp.lt.s32.totalorder %v8471, 4
  %v8494 = vsel %vm8490, %v8474, %v8477
  %v8495 = vsel %vm8493, %v8483, 2102212464
  %v8496 = vsel %vm8492, %v8480, %v8495
  %v8497 = vsel %vm8491, %v8494, %v8496
  %v8498 = vsel %vm8490, %v8477, %v8480
  %v8499 = vsel %vm8493, %v8486, 920167782
  %v8500 = vsel %vm8492, %v8483, %v8499
  %v8501 = vsel %vm8491, %v8498, %v8500
  %v8502 = vsel %vm8490, %v8480, %v8483
  %v8503 = vsel %vm8493, %v8489, 1326507024
  %v8504 = vsel %vm8492, %v8486, %v8503
  %v8505 = vsel %vm8491, %v8502, %v8504
  %v8506 = vshll.u32 %v8466, 8
  %v8507 = vmul.u32.u64.compose %v8506, %v8505
  %v8508 = vextract.low.u32 %v8507
  %v8509 = vextract.high.u32 %v8507
  %v8510 = vmul.u32.u64.compose %v8506, %v8501
  %v8511 = vextract.low.u32 %v8510
  %v8512 = vextract.high.u32 %v8510
  %v8513 = vmul.u32 %v8506, %v8497
  %v8514 = vadd.s32 %v8509, %v8511
  %vm8515 = vc.u32 %v8509, %v8511
  %v8516 = vadd.s32 %v8512, 1
  %v8517 = vsel %vm8515, %v8516, %v8512
  %v8518 = vadd.s32 %v8513, %v8517
  %v8519 = vadd.s32 %v8518, 536870912
  %v8520 = vshrl.u32 %v8519, 30
  %v8521 = vshll.u32 %v8520, 30
  %v8522 = vsub.s32 %v8518, %v8521
  %vm8523 = vcmp.lt.s32.totalorder %v8522, 0
  %v8524 = vsub.s32 0, %v8522
  %v8525 = vsel %vm8523, %v8524, %v8522
  %v8526 = vclz %v8525
  %v8527 = vsub.s32 %v8526, 2
  %vm8528 = vcmp.gt.s32.totalorder 0, %v8527
  %v8529 = vsel %vm8528, 0, %v8527
  %v8530 = vsub.s32 32, %v8529
  %v8531 = vshll.u32 %v8522, %v8529
  %v8532 = vshrl.u32 %v8514, %v8530
  %v8533 = vor.u32 %v8531, %v8532
  %v8534 = vsub.s32 4294967266, %v8529
  %v8535 = vadd.s32 %v8534, 127
  %v8536 = vshll.u32 %v8535, 23
  %v8537 = vor.u32 4788187, %v8536
  %v8538 = vand.u32 2147483647, %v8537
  %v8540 = vcvt.s32.f32 %v8533
  %v8541 = vmul.f32 %v8540, %v8538
  %v8542 = vxor.u32 %v8541, 2147483648
  %v8543 = vsel %vm8460, %v8542, %v8541
  %v8544 = vsub.s32 4, %v8520
  %v8545 = vsel %vm8460, %v8544, %v8520
  %v8546 = vsel %vm8459, %v7808, %v8543
  %v8547 = vsel %vm8459, 0, %v8545
  %v8548 = vcosq.f32.pop %v8546
  %v8549 = vsinq.f32.pop %v8546
  %vm8550 = vweird.f32 %v7808
  %v8551 = vadd.s32 %v8547, 3
  %v8552 = vand.u32 %v8551, 3
  %vm8553 = vcmp.lt.s32.totalorder %v8552, 2
  %vm8554 = vcmp.eq.s32.totalorder %v8552, 0
  %v8555 = vxor.u32 %v8549, 2147483648
  %v8556 = vsel %vm8554, %v8548, %v8555
  %vm8557 = vcmp.eq.s32.totalorder %v8552, 2
  %v8558 = vxor.u32 %v8548, 2147483648
  %v8559 = vsel %vm8557, %v8558, %v8549
  %v8560 = vsel %vm8553, %v8556, %v8559
  %v8561 = vsel %vm8550, nan, %v8560
  %v8562 = vand.u32 2147483647, %v7809
  %vm8563 = vcmp.le.f32.partialorder %v8562, 0.7853982
  %vm8564 = vcmp.lt.s32.totalorder %v7809, 0
  %v8565 = vand.u32 %v7809, 2139095040
  %v8566 = vshrl.u32 %v8565, 23
  %v8567 = vsub.s32 %v8566, 127
  %v8568 = vand.u32 2147483647, %v7809
  %v8569 = vand.u32 %v8568, 8388607
  %v8570 = vor.u32 %v8569, 8388608
  %v8571 = vsub.s32 0, %v8570
  %v8572 = vadd.s32 %v8567, 1
  %vm8573 = vcmp.gt.s32.totalorder %v8572, 0
  %v8574 = vsel %vm8573, %v8572, 0
  %v8575 = vshrl.u32 %v8574, 5
  %v8576 = vand.u32 %v8574, 31
  %v8577 = vsub.s32 32, %v8576
  %v8578 = vshrl.u32 683565275, %v8577
  %v8579 = vshll.u32 683565275, %v8576
  %v8580 = vshrl.u32 2475754826, %v8577
  %v8581 = vor.u32 %v8579, %v8580
  %v8582 = vshll.u32 2475754826, %v8576
  %v8583 = vshrl.u32 2131351028, %v8577
  %v8584 = vor.u32 %v8582, %v8583
  %v8585 = vshll.u32 2131351028, %v8576
  %v8586 = vshrl.u32 2102212464, %v8577
  %v8587 = vor.u32 %v8585, %v8586
  %v8588 = vshll.u32 2102212464, %v8576
  %v8589 = vshrl.u32 920167782, %v8577
  %v8590 = vor.u32 %v8588, %v8589
  %v8591 = vshll.u32 920167782, %v8576
  %v8592 = vshrl.u32 1326507024, %v8577
  %v8593 = vor.u32 %v8591, %v8592
  %vm8594 = vcmp.lt.s32.totalorder %v8575, 1
  %vm8595 = vcmp.lt.s32.totalorder %v8575, 2
  %vm8596 = vcmp.lt.s32.totalorder %v8575, 3
  %vm8597 = vcmp.lt.s32.totalorder %v8575, 4
  %v8598 = vsel %vm8594, %v8578, %v8581
  %v8599 = vsel %vm8597, %v8587, 2102212464
  %v8600 = vsel %vm8596, %v8584, %v8599
  %v8601 = vsel %vm8595, %v8598, %v8600
  %v8602 = vsel %vm8594, %v8581, %v8584
  %v8603 = vsel %vm8597, %v8590, 920167782
  %v8604 = vsel %vm8596, %v8587, %v8603
  %v8605 = vsel %vm8595, %v8602, %v8604
  %v8606 = vsel %vm8594, %v8584, %v8587
  %v8607 = vsel %vm8597, %v8593, 1326507024
  %v8608 = vsel %vm8596, %v8590, %v8607
  %v8609 = vsel %vm8595, %v8606, %v8608
  %v8610 = vshll.u32 %v8570, 8
  %v8611 = vmul.u32.u64.compose %v8610, %v8609
  %v8612 = vextract.low.u32 %v8611
  %v8613 = vextract.high.u32 %v8611
  %v8614 = vmul.u32.u64.compose %v8610, %v8605
  %v8615 = vextract.low.u32 %v8614
  %v8616 = vextract.high.u32 %v8614
  %v8617 = vmul.u32 %v8610, %v8601
  %v8618 = vadd.s32 %v8613, %v8615
  %vm8619 = vc.u32 %v8613, %v8615
  %v8620 = vadd.s32 %v8616, 1
  %v8621 = vsel %vm8619, %v8620, %v8616
  %v8622 = vadd.s32 %v8617, %v8621
  %v8623 = vadd.s32 %v8622, 536870912
  %v8624 = vshrl.u32 %v8623, 30
  %v8625 = vshll.u32 %v8624, 30
  %v8626 = vsub.s32 %v8622, %v8625
  %vm8627 = vcmp.lt.s32.totalorder %v8626, 0
  %v8628 = vsub.s32 0, %v8626
  %v8629 = vsel %vm8627, %v8628, %v8626
  %v8630 = vclz %v8629
  %v8631 = vsub.s32 %v8630, 2
  %vm8632 = vcmp.gt.s32.totalorder 0, %v8631
  %v8633 = vsel %vm8632, 0, %v8631
  %v8634 = vsub.s32 32, %v8633
  %v8635 = vshll.u32 %v8626, %v8633
  %v8636 = vshrl.u32 %v8618, %v8634
  %v8637 = vor.u32 %v8635, %v8636
  %v8638 = vsub.s32 4294967266, %v8633
  %v8639 = vadd.s32 %v8638, 127
  %v8640 = vshll.u32 %v8639, 23
  %v8641 = vor.u32 4788187, %v8640
  %v8642 = vand.u32 2147483647, %v8641
  %v8644 = vcvt.s32.f32 %v8637
  %v8645 = vmul.f32 %v8644, %v8642
  %v8646 = vxor.u32 %v8645, 2147483648
  %v8647 = vsel %vm8564, %v8646, %v8645
  %v8648 = vsub.s32 4, %v8624
  %v8649 = vsel %vm8564, %v8648, %v8624
  %v8650 = vsel %vm8563, %v7809, %v8647
  %v8651 = vsel %vm8563, 0, %v8649
  %v8652 = vcosq.f32.pop %v8650
  %v8653 = vsinq.f32.pop %v8650
  %vm8654 = vweird.f32 %v7809
  %v8655 = vadd.s32 %v8651, 3
  %v8656 = vand.u32 %v8655, 3
  %vm8657 = vcmp.lt.s32.totalorder %v8656, 2
  %vm8658 = vcmp.eq.s32.totalorder %v8656, 0
  %v8659 = vxor.u32 %v8653, 2147483648
  %v8660 = vsel %vm8658, %v8652, %v8659
  %vm8661 = vcmp.eq.s32.totalorder %v8656, 2
  %v8662 = vxor.u32 %v8652, 2147483648
  %v8663 = vsel %vm8661, %v8662, %v8653
  %v8664 = vsel %vm8657, %v8660, %v8663
  %v8665 = vsel %vm8654, nan, %v8664
  %v8666 = vand.u32 2147483647, %v7810
  %vm8667 = vcmp.le.f32.partialorder %v8666, 0.7853982
  %vm8668 = vcmp.lt.s32.totalorder %v7810, 0
  %v8669 = vand.u32 %v7810, 2139095040
  %v8670 = vshrl.u32 %v8669, 23
  %v8671 = vsub.s32 %v8670, 127
  %v8672 = vand.u32 2147483647, %v7810
  %v8673 = vand.u32 %v8672, 8388607
  %v8674 = vor.u32 %v8673, 8388608
  %v8675 = vsub.s32 0, %v8674
  %v8676 = vadd.s32 %v8671, 1
  %vm8677 = vcmp.gt.s32.totalorder %v8676, 0
  %v8678 = vsel %vm8677, %v8676, 0
  %v8679 = vshrl.u32 %v8678, 5
  %v8680 = vand.u32 %v8678, 31
  %v8681 = vsub.s32 32, %v8680
  %v8682 = vshrl.u32 683565275, %v8681
  %v8683 = vshll.u32 683565275, %v8680
  %v8684 = vshrl.u32 2475754826, %v8681
  %v8685 = vor.u32 %v8683, %v8684
  %v8686 = vshll.u32 2475754826, %v8680
  %v8687 = vshrl.u32 2131351028, %v8681
  %v8688 = vor.u32 %v8686, %v8687
  %v8689 = vshll.u32 2131351028, %v8680
  %v8690 = vshrl.u32 2102212464, %v8681
  %v8691 = vor.u32 %v8689, %v8690
  %v8692 = vshll.u32 2102212464, %v8680
  %v8693 = vshrl.u32 920167782, %v8681
  %v8694 = vor.u32 %v8692, %v8693
  %v8695 = vshll.u32 920167782, %v8680
  %v8696 = vshrl.u32 1326507024, %v8681
  %v8697 = vor.u32 %v8695, %v8696
  %vm8698 = vcmp.lt.s32.totalorder %v8679, 1
  %vm8699 = vcmp.lt.s32.totalorder %v8679, 2
  %vm8700 = vcmp.lt.s32.totalorder %v8679, 3
  %vm8701 = vcmp.lt.s32.totalorder %v8679, 4
  %v8702 = vsel %vm8698, %v8682, %v8685
  %v8703 = vsel %vm8701, %v8691, 2102212464
  %v8704 = vsel %vm8700, %v8688, %v8703
  %v8705 = vsel %vm8699, %v8702, %v8704
  %v8706 = vsel %vm8698, %v8685, %v8688
  %v8707 = vsel %vm8701, %v8694, 920167782
  %v8708 = vsel %vm8700, %v8691, %v8707
  %v8709 = vsel %vm8699, %v8706, %v8708
  %v8710 = vsel %vm8698, %v8688, %v8691
  %v8711 = vsel %vm8701, %v8697, 1326507024
  %v8712 = vsel %vm8700, %v8694, %v8711
  %v8713 = vsel %vm8699, %v8710, %v8712
  %v8714 = vshll.u32 %v8674, 8
  %v8715 = vmul.u32.u64.compose %v8714, %v8713
  %v8716 = vextract.low.u32 %v8715
  %v8717 = vextract.high.u32 %v8715
  %v8718 = vmul.u32.u64.compose %v8714, %v8709
  %v8719 = vextract.low.u32 %v8718
  %v8720 = vextract.high.u32 %v8718
  %v8721 = vmul.u32 %v8714, %v8705
  %v8722 = vadd.s32 %v8717, %v8719
  %vm8723 = vc.u32 %v8717, %v8719
  %v8724 = vadd.s32 %v8720, 1
  %v8725 = vsel %vm8723, %v8724, %v8720
  %v8726 = vadd.s32 %v8721, %v8725
  %v8727 = vadd.s32 %v8726, 536870912
  %v8728 = vshrl.u32 %v8727, 30
  %v8729 = vshll.u32 %v8728, 30
  %v8730 = vsub.s32 %v8726, %v8729
  %vm8731 = vcmp.lt.s32.totalorder %v8730, 0
  %v8732 = vsub.s32 0, %v8730
  %v8733 = vsel %vm8731, %v8732, %v8730
  %v8734 = vclz %v8733
  %v8735 = vsub.s32 %v8734, 2
  %vm8736 = vcmp.gt.s32.totalorder 0, %v8735
  %v8737 = vsel %vm8736, 0, %v8735
  %v8738 = vsub.s32 32, %v8737
  %v8739 = vshll.u32 %v8730, %v8737
  %v8740 = vshrl.u32 %v8722, %v8738
  %v8741 = vor.u32 %v8739, %v8740
  %v8742 = vsub.s32 4294967266, %v8737
  %v8743 = vadd.s32 %v8742, 127
  %v8744 = vshll.u32 %v8743, 23
  %v8745 = vor.u32 4788187, %v8744
  %v8746 = vand.u32 2147483647, %v8745
  %v8748 = vcvt.s32.f32 %v8741
  %v8749 = vmul.f32 %v8748, %v8746
  %v8750 = vxor.u32 %v8749, 2147483648
  %v8751 = vsel %vm8668, %v8750, %v8749
  %v8752 = vsub.s32 4, %v8728
  %v8753 = vsel %vm8668, %v8752, %v8728
  %v8754 = vsel %vm8667, %v7810, %v8751
  %v8755 = vsel %vm8667, 0, %v8753
  %v8756 = vcosq.f32.pop %v8754
  %v8757 = vsinq.f32.pop %v8754
  %vm8758 = vweird.f32 %v7810
  %v8759 = vadd.s32 %v8755, 3
  %v8760 = vand.u32 %v8759, 3
  %vm8761 = vcmp.lt.s32.totalorder %v8760, 2
  %vm8762 = vcmp.eq.s32.totalorder %v8760, 0
  %v8763 = vxor.u32 %v8757, 2147483648
  %v8764 = vsel %vm8762, %v8756, %v8763
  %vm8765 = vcmp.eq.s32.totalorder %v8760, 2
  %v8766 = vxor.u32 %v8756, 2147483648
  %v8767 = vsel %vm8765, %v8766, %v8757
  %v8768 = vsel %vm8761, %v8764, %v8767
  %v8769 = vsel %vm8758, nan, %v8768
  %v8770 = vand.u32 2147483647, %v7811
  %vm8771 = vcmp.le.f32.partialorder %v8770, 0.7853982
  %vm8772 = vcmp.lt.s32.totalorder %v7811, 0
  %v8773 = vand.u32 %v7811, 2139095040
  %v8774 = vshrl.u32 %v8773, 23
  %v8775 = vsub.s32 %v8774, 127
  %v8776 = vand.u32 2147483647, %v7811
  %v8777 = vand.u32 %v8776, 8388607
  %v8778 = vor.u32 %v8777, 8388608
  %v8779 = vsub.s32 0, %v8778
  %v8780 = vadd.s32 %v8775, 1
  %vm8781 = vcmp.gt.s32.totalorder %v8780, 0
  %v8782 = vsel %vm8781, %v8780, 0
  %v8783 = vshrl.u32 %v8782, 5
  %v8784 = vand.u32 %v8782, 31
  %v8785 = vsub.s32 32, %v8784
  %v8786 = vshrl.u32 683565275, %v8785
  %v8787 = vshll.u32 683565275, %v8784
  %v8788 = vshrl.u32 2475754826, %v8785
  %v8789 = vor.u32 %v8787, %v8788
  %v8790 = vshll.u32 2475754826, %v8784
  %v8791 = vshrl.u32 2131351028, %v8785
  %v8792 = vor.u32 %v8790, %v8791
  %v8793 = vshll.u32 2131351028, %v8784
  %v8794 = vshrl.u32 2102212464, %v8785
  %v8795 = vor.u32 %v8793, %v8794
  %v8796 = vshll.u32 2102212464, %v8784
  %v8797 = vshrl.u32 920167782, %v8785
  %v8798 = vor.u32 %v8796, %v8797
  %v8799 = vshll.u32 920167782, %v8784
  %v8800 = vshrl.u32 1326507024, %v8785
  %v8801 = vor.u32 %v8799, %v8800
  %vm8802 = vcmp.lt.s32.totalorder %v8783, 1
  %vm8803 = vcmp.lt.s32.totalorder %v8783, 2
  %vm8804 = vcmp.lt.s32.totalorder %v8783, 3
  %vm8805 = vcmp.lt.s32.totalorder %v8783, 4
  %v8806 = vsel %vm8802, %v8786, %v8789
  %v8807 = vsel %vm8805, %v8795, 2102212464
  %v8808 = vsel %vm8804, %v8792, %v8807
  %v8809 = vsel %vm8803, %v8806, %v8808
  %v8810 = vsel %vm8802, %v8789, %v8792
  %v8811 = vsel %vm8805, %v8798, 920167782
  %v8812 = vsel %vm8804, %v8795, %v8811
  %v8813 = vsel %vm8803, %v8810, %v8812
  %v8814 = vsel %vm8802, %v8792, %v8795
  %v8815 = vsel %vm8805, %v8801, 1326507024
  %v8816 = vsel %vm8804, %v8798, %v8815
  %v8817 = vsel %vm8803, %v8814, %v8816
  %v8818 = vshll.u32 %v8778, 8
  %v8819 = vmul.u32.u64.compose %v8818, %v8817
  %v8820 = vextract.low.u32 %v8819
  %v8821 = vextract.high.u32 %v8819
  %v8822 = vmul.u32.u64.compose %v8818, %v8813
  %v8823 = vextract.low.u32 %v8822
  %v8824 = vextract.high.u32 %v8822
  %v8825 = vmul.u32 %v8818, %v8809
  %v8826 = vadd.s32 %v8821, %v8823
  %vm8827 = vc.u32 %v8821, %v8823
  %v8828 = vadd.s32 %v8824, 1
  %v8829 = vsel %vm8827, %v8828, %v8824
  %v8830 = vadd.s32 %v8825, %v8829
  %v8831 = vadd.s32 %v8830, 536870912
  %v8832 = vshrl.u32 %v8831, 30
  %v8833 = vshll.u32 %v8832, 30
  %v8834 = vsub.s32 %v8830, %v8833
  %vm8835 = vcmp.lt.s32.totalorder %v8834, 0
  %v8836 = vsub.s32 0, %v8834
  %v8837 = vsel %vm8835, %v8836, %v8834
  %v8838 = vclz %v8837
  %v8839 = vsub.s32 %v8838, 2
  %vm8840 = vcmp.gt.s32.totalorder 0, %v8839
  %v8841 = vsel %vm8840, 0, %v8839
  %v8842 = vsub.s32 32, %v8841
  %v8843 = vshll.u32 %v8834, %v8841
  %v8844 = vshrl.u32 %v8826, %v8842
  %v8845 = vor.u32 %v8843, %v8844
  %v8846 = vsub.s32 4294967266, %v8841
  %v8847 = vadd.s32 %v8846, 127
  %v8848 = vshll.u32 %v8847, 23
  %v8849 = vor.u32 4788187, %v8848
  %v8850 = vand.u32 2147483647, %v8849
  %v8852 = vcvt.s32.f32 %v8845
  %v8853 = vmul.f32 %v8852, %v8850
  %v8854 = vxor.u32 %v8853, 2147483648
  %v8855 = vsel %vm8772, %v8854, %v8853
  %v8856 = vsub.s32 4, %v8832
  %v8857 = vsel %vm8772, %v8856, %v8832
  %v8858 = vsel %vm8771, %v7811, %v8855
  %v8859 = vsel %vm8771, 0, %v8857
  %v8860 = vcosq.f32.pop %v8858
  %v8861 = vsinq.f32.pop %v8858
  %vm8862 = vweird.f32 %v7811
  %v8863 = vadd.s32 %v8859, 3
  %v8864 = vand.u32 %v8863, 3
  %vm8865 = vcmp.lt.s32.totalorder %v8864, 2
  %vm8866 = vcmp.eq.s32.totalorder %v8864, 0
  %v8867 = vxor.u32 %v8861, 2147483648
  %v8868 = vsel %vm8866, %v8860, %v8867
  %vm8869 = vcmp.eq.s32.totalorder %v8864, 2
  %v8870 = vxor.u32 %v8860, 2147483648
  %v8871 = vsel %vm8869, %v8870, %v8861
  %v8872 = vsel %vm8865, %v8868, %v8871
  %v8873 = vsel %vm8862, nan, %v8872
  %v8874 = vand.u32 2147483647, %v7812
  %vm8875 = vcmp.le.f32.partialorder %v8874, 0.7853982
  %vm8876 = vcmp.lt.s32.totalorder %v7812, 0
  %v8877 = vand.u32 %v7812, 2139095040
  %v8878 = vshrl.u32 %v8877, 23
  %v8879 = vsub.s32 %v8878, 127
  %v8880 = vand.u32 2147483647, %v7812
  %v8881 = vand.u32 %v8880, 8388607
  %v8882 = vor.u32 %v8881, 8388608
  %v8883 = vsub.s32 0, %v8882
  %v8884 = vadd.s32 %v8879, 1
  %vm8885 = vcmp.gt.s32.totalorder %v8884, 0
  %v8886 = vsel %vm8885, %v8884, 0
  %v8887 = vshrl.u32 %v8886, 5
  %v8888 = vand.u32 %v8886, 31
  %v8889 = vsub.s32 32, %v8888
  %v8890 = vshrl.u32 683565275, %v8889
  %v8891 = vshll.u32 683565275, %v8888
  %v8892 = vshrl.u32 2475754826, %v8889
  %v8893 = vor.u32 %v8891, %v8892
  %v8894 = vshll.u32 2475754826, %v8888
  %v8895 = vshrl.u32 2131351028, %v8889
  %v8896 = vor.u32 %v8894, %v8895
  %v8897 = vshll.u32 2131351028, %v8888
  %v8898 = vshrl.u32 2102212464, %v8889
  %v8899 = vor.u32 %v8897, %v8898
  %v8900 = vshll.u32 2102212464, %v8888
  %v8901 = vshrl.u32 920167782, %v8889
  %v8902 = vor.u32 %v8900, %v8901
  %v8903 = vshll.u32 920167782, %v8888
  %v8904 = vshrl.u32 1326507024, %v8889
  %v8905 = vor.u32 %v8903, %v8904
  %vm8906 = vcmp.lt.s32.totalorder %v8887, 1
  %vm8907 = vcmp.lt.s32.totalorder %v8887, 2
  %vm8908 = vcmp.lt.s32.totalorder %v8887, 3
  %vm8909 = vcmp.lt.s32.totalorder %v8887, 4
  %v8910 = vsel %vm8906, %v8890, %v8893
  %v8911 = vsel %vm8909, %v8899, 2102212464
  %v8912 = vsel %vm8908, %v8896, %v8911
  %v8913 = vsel %vm8907, %v8910, %v8912
  %v8914 = vsel %vm8906, %v8893, %v8896
  %v8915 = vsel %vm8909, %v8902, 920167782
  %v8916 = vsel %vm8908, %v8899, %v8915
  %v8917 = vsel %vm8907, %v8914, %v8916
  %v8918 = vsel %vm8906, %v8896, %v8899
  %v8919 = vsel %vm8909, %v8905, 1326507024
  %v8920 = vsel %vm8908, %v8902, %v8919
  %v8921 = vsel %vm8907, %v8918, %v8920
  %v8922 = vshll.u32 %v8882, 8
  %v8923 = vmul.u32.u64.compose %v8922, %v8921
  %v8924 = vextract.low.u32 %v8923
  %v8925 = vextract.high.u32 %v8923
  %v8926 = vmul.u32.u64.compose %v8922, %v8917
  %v8927 = vextract.low.u32 %v8926
  %v8928 = vextract.high.u32 %v8926
  %v8929 = vmul.u32 %v8922, %v8913
  %v8930 = vadd.s32 %v8925, %v8927
  %vm8931 = vc.u32 %v8925, %v8927
  %v8932 = vadd.s32 %v8928, 1
  %v8933 = vsel %vm8931, %v8932, %v8928
  %v8934 = vadd.s32 %v8929, %v8933
  %v8935 = vadd.s32 %v8934, 536870912
  %v8936 = vshrl.u32 %v8935, 30
  %v8937 = vshll.u32 %v8936, 30
  %v8938 = vsub.s32 %v8934, %v8937
  %vm8939 = vcmp.lt.s32.totalorder %v8938, 0
  %v8940 = vsub.s32 0, %v8938
  %v8941 = vsel %vm8939, %v8940, %v8938
  %v8942 = vclz %v8941
  %v8943 = vsub.s32 %v8942, 2
  %vm8944 = vcmp.gt.s32.totalorder 0, %v8943
  %v8945 = vsel %vm8944, 0, %v8943
  %v8946 = vsub.s32 32, %v8945
  %v8947 = vshll.u32 %v8938, %v8945
  %v8948 = vshrl.u32 %v8930, %v8946
  %v8949 = vor.u32 %v8947, %v8948
  %v8950 = vsub.s32 4294967266, %v8945
  %v8951 = vadd.s32 %v8950, 127
  %v8952 = vshll.u32 %v8951, 23
  %v8953 = vor.u32 4788187, %v8952
  %v8954 = vand.u32 2147483647, %v8953
  %v8956 = vcvt.s32.f32 %v8949
  %v8957 = vmul.f32 %v8956, %v8954
  %v8958 = vxor.u32 %v8957, 2147483648
  %v8959 = vsel %vm8876, %v8958, %v8957
  %v8960 = vsub.s32 4, %v8936
  %v8961 = vsel %vm8876, %v8960, %v8936
  %v8962 = vsel %vm8875, %v7812, %v8959
  %v8963 = vsel %vm8875, 0, %v8961
  %v8964 = vcosq.f32.pop %v8962
  %v8965 = vsinq.f32.pop %v8962
  %vm8966 = vweird.f32 %v7812
  %v8967 = vadd.s32 %v8963, 3
  %v8968 = vand.u32 %v8967, 3
  %vm8969 = vcmp.lt.s32.totalorder %v8968, 2
  %vm8970 = vcmp.eq.s32.totalorder %v8968, 0
  %v8971 = vxor.u32 %v8965, 2147483648
  %v8972 = vsel %vm8970, %v8964, %v8971
  %vm8973 = vcmp.eq.s32.totalorder %v8968, 2
  %v8974 = vxor.u32 %v8964, 2147483648
  %v8975 = vsel %vm8973, %v8974, %v8965
  %v8976 = vsel %vm8969, %v8972, %v8975
  %v8977 = vsel %vm8966, nan, %v8976
  %v8978 = vand.u32 2147483647, %v7813
  %vm8979 = vcmp.le.f32.partialorder %v8978, 0.7853982
  %vm8980 = vcmp.lt.s32.totalorder %v7813, 0
  %v8981 = vand.u32 %v7813, 2139095040
  %v8982 = vshrl.u32 %v8981, 23
  %v8983 = vsub.s32 %v8982, 127
  %v8984 = vand.u32 2147483647, %v7813
  %v8985 = vand.u32 %v8984, 8388607
  %v8986 = vor.u32 %v8985, 8388608
  %v8987 = vsub.s32 0, %v8986
  %v8988 = vadd.s32 %v8983, 1
  %vm8989 = vcmp.gt.s32.totalorder %v8988, 0
  %v8990 = vsel %vm8989, %v8988, 0
  %v8991 = vshrl.u32 %v8990, 5
  %v8992 = vand.u32 %v8990, 31
  %v8993 = vsub.s32 32, %v8992
  %v8994 = vshrl.u32 683565275, %v8993
  %v8995 = vshll.u32 683565275, %v8992
  %v8996 = vshrl.u32 2475754826, %v8993
  %v8997 = vor.u32 %v8995, %v8996
  %v8998 = vshll.u32 2475754826, %v8992
  %v8999 = vshrl.u32 2131351028, %v8993
  %v9000 = vor.u32 %v8998, %v8999
  %v9001 = vshll.u32 2131351028, %v8992
  %v9002 = vshrl.u32 2102212464, %v8993
  %v9003 = vor.u32 %v9001, %v9002
  %v9004 = vshll.u32 2102212464, %v8992
  %v9005 = vshrl.u32 920167782, %v8993
  %v9006 = vor.u32 %v9004, %v9005
  %v9007 = vshll.u32 920167782, %v8992
  %v9008 = vshrl.u32 1326507024, %v8993
  %v9009 = vor.u32 %v9007, %v9008
  %vm9010 = vcmp.lt.s32.totalorder %v8991, 1
  %vm9011 = vcmp.lt.s32.totalorder %v8991, 2
  %vm9012 = vcmp.lt.s32.totalorder %v8991, 3
  %vm9013 = vcmp.lt.s32.totalorder %v8991, 4
  %v9014 = vsel %vm9010, %v8994, %v8997
  %v9015 = vsel %vm9013, %v9003, 2102212464
  %v9016 = vsel %vm9012, %v9000, %v9015
  %v9017 = vsel %vm9011, %v9014, %v9016
  %v9018 = vsel %vm9010, %v8997, %v9000
  %v9019 = vsel %vm9013, %v9006, 920167782
  %v9020 = vsel %vm9012, %v9003, %v9019
  %v9021 = vsel %vm9011, %v9018, %v9020
  %v9022 = vsel %vm9010, %v9000, %v9003
  %v9023 = vsel %vm9013, %v9009, 1326507024
  %v9024 = vsel %vm9012, %v9006, %v9023
  %v9025 = vsel %vm9011, %v9022, %v9024
  %v9026 = vshll.u32 %v8986, 8
  %v9027 = vmul.u32.u64.compose %v9026, %v9025
  %v9028 = vextract.low.u32 %v9027
  %v9029 = vextract.high.u32 %v9027
  %v9030 = vmul.u32.u64.compose %v9026, %v9021
  %v9031 = vextract.low.u32 %v9030
  %v9032 = vextract.high.u32 %v9030
  %v9033 = vmul.u32 %v9026, %v9017
  %v9034 = vadd.s32 %v9029, %v9031
  %vm9035 = vc.u32 %v9029, %v9031
  %v9036 = vadd.s32 %v9032, 1
  %v9037 = vsel %vm9035, %v9036, %v9032
  %v9038 = vadd.s32 %v9033, %v9037
  %v9039 = vadd.s32 %v9038, 536870912
  %v9040 = vshrl.u32 %v9039, 30
  %v9041 = vshll.u32 %v9040, 30
  %v9042 = vsub.s32 %v9038, %v9041
  %vm9043 = vcmp.lt.s32.totalorder %v9042, 0
  %v9044 = vsub.s32 0, %v9042
  %v9045 = vsel %vm9043, %v9044, %v9042
  %v9046 = vclz %v9045
  %v9047 = vsub.s32 %v9046, 2
  %vm9048 = vcmp.gt.s32.totalorder 0, %v9047
  %v9049 = vsel %vm9048, 0, %v9047
  %v9050 = vsub.s32 32, %v9049
  %v9051 = vshll.u32 %v9042, %v9049
  %v9052 = vshrl.u32 %v9034, %v9050
  %v9053 = vor.u32 %v9051, %v9052
  %v9054 = vsub.s32 4294967266, %v9049
  %v9055 = vadd.s32 %v9054, 127
  %v9056 = vshll.u32 %v9055, 23
  %v9057 = vor.u32 4788187, %v9056
  %v9058 = vand.u32 2147483647, %v9057
  %v9060 = vcvt.s32.f32 %v9053
  %v9061 = vmul.f32 %v9060, %v9058
  %v9062 = vxor.u32 %v9061, 2147483648
  %v9063 = vsel %vm8980, %v9062, %v9061
  %v9064 = vsub.s32 4, %v9040
  %v9065 = vsel %vm8980, %v9064, %v9040
  %v9066 = vsel %vm8979, %v7813, %v9063
  %v9067 = vsel %vm8979, 0, %v9065
  %v9068 = vcosq.f32.pop %v9066
  %v9069 = vsinq.f32.pop %v9066
  %vm9070 = vweird.f32 %v7813
  %v9071 = vadd.s32 %v9067, 3
  %v9072 = vand.u32 %v9071, 3
  %vm9073 = vcmp.lt.s32.totalorder %v9072, 2
  %vm9074 = vcmp.eq.s32.totalorder %v9072, 0
  %v9075 = vxor.u32 %v9069, 2147483648
  %v9076 = vsel %vm9074, %v9068, %v9075
  %vm9077 = vcmp.eq.s32.totalorder %v9072, 2
  %v9078 = vxor.u32 %v9068, 2147483648
  %v9079 = vsel %vm9077, %v9078, %v9069
  %v9080 = vsel %vm9073, %v9076, %v9079
  %v9081 = vsel %vm9070, nan, %v9080
  %v9082 = vand.u32 2147483647, %v7814
  %vm9083 = vcmp.le.f32.partialorder %v9082, 0.7853982
  %vm9084 = vcmp.lt.s32.totalorder %v7814, 0
  %v9085 = vand.u32 %v7814, 2139095040
  %v9086 = vshrl.u32 %v9085, 23
  %v9087 = vsub.s32 %v9086, 127
  %v9088 = vand.u32 2147483647, %v7814
  %v9089 = vand.u32 %v9088, 8388607
  %v9090 = vor.u32 %v9089, 8388608
  %v9091 = vsub.s32 0, %v9090
  %v9092 = vadd.s32 %v9087, 1
  %vm9093 = vcmp.gt.s32.totalorder %v9092, 0
  %v9094 = vsel %vm9093, %v9092, 0
  %v9095 = vshrl.u32 %v9094, 5
  %v9096 = vand.u32 %v9094, 31
  %v9097 = vsub.s32 32, %v9096
  %v9098 = vshrl.u32 683565275, %v9097
  %v9099 = vshll.u32 683565275, %v9096
  %v9100 = vshrl.u32 2475754826, %v9097
  %v9101 = vor.u32 %v9099, %v9100
  %v9102 = vshll.u32 2475754826, %v9096
  %v9103 = vshrl.u32 2131351028, %v9097
  %v9104 = vor.u32 %v9102, %v9103
  %v9105 = vshll.u32 2131351028, %v9096
  %v9106 = vshrl.u32 2102212464, %v9097
  %v9107 = vor.u32 %v9105, %v9106
  %v9108 = vshll.u32 2102212464, %v9096
  %v9109 = vshrl.u32 920167782, %v9097
  %v9110 = vor.u32 %v9108, %v9109
  %v9111 = vshll.u32 920167782, %v9096
  %v9112 = vshrl.u32 1326507024, %v9097
  %v9113 = vor.u32 %v9111, %v9112
  %vm9114 = vcmp.lt.s32.totalorder %v9095, 1
  %vm9115 = vcmp.lt.s32.totalorder %v9095, 2
  %vm9116 = vcmp.lt.s32.totalorder %v9095, 3
  %vm9117 = vcmp.lt.s32.totalorder %v9095, 4
  %v9118 = vsel %vm9114, %v9098, %v9101
  %v9119 = vsel %vm9117, %v9107, 2102212464
  %v9120 = vsel %vm9116, %v9104, %v9119
  %v9121 = vsel %vm9115, %v9118, %v9120
  %v9122 = vsel %vm9114, %v9101, %v9104
  %v9123 = vsel %vm9117, %v9110, 920167782
  %v9124 = vsel %vm9116, %v9107, %v9123
  %v9125 = vsel %vm9115, %v9122, %v9124
  %v9126 = vsel %vm9114, %v9104, %v9107
  %v9127 = vsel %vm9117, %v9113, 1326507024
  %v9128 = vsel %vm9116, %v9110, %v9127
  %v9129 = vsel %vm9115, %v9126, %v9128
  %v9130 = vshll.u32 %v9090, 8
  %v9131 = vmul.u32.u64.compose %v9130, %v9129
  %v9132 = vextract.low.u32 %v9131
  %v9133 = vextract.high.u32 %v9131
  %v9134 = vmul.u32.u64.compose %v9130, %v9125
  %v9135 = vextract.low.u32 %v9134
  %v9136 = vextract.high.u32 %v9134
  %v9137 = vmul.u32 %v9130, %v9121
  %v9138 = vadd.s32 %v9133, %v9135
  %vm9139 = vc.u32 %v9133, %v9135
  %v9140 = vadd.s32 %v9136, 1
  %v9141 = vsel %vm9139, %v9140, %v9136
  %v9142 = vadd.s32 %v9137, %v9141
  %v9143 = vadd.s32 %v9142, 536870912
  %v9144 = vshrl.u32 %v9143, 30
  %v9145 = vshll.u32 %v9144, 30
  %v9146 = vsub.s32 %v9142, %v9145
  %vm9147 = vcmp.lt.s32.totalorder %v9146, 0
  %v9148 = vsub.s32 0, %v9146
  %v9149 = vsel %vm9147, %v9148, %v9146
  %v9150 = vclz %v9149
  %v9151 = vsub.s32 %v9150, 2
  %vm9152 = vcmp.gt.s32.totalorder 0, %v9151
  %v9153 = vsel %vm9152, 0, %v9151
  %v9154 = vsub.s32 32, %v9153
  %v9155 = vshll.u32 %v9146, %v9153
  %v9156 = vshrl.u32 %v9138, %v9154
  %v9157 = vor.u32 %v9155, %v9156
  %v9158 = vsub.s32 4294967266, %v9153
  %v9159 = vadd.s32 %v9158, 127
  %v9160 = vshll.u32 %v9159, 23
  %v9161 = vor.u32 4788187, %v9160
  %v9162 = vand.u32 2147483647, %v9161
  %v9164 = vcvt.s32.f32 %v9157
  %v9165 = vmul.f32 %v9164, %v9162
  %v9166 = vxor.u32 %v9165, 2147483648
  %v9167 = vsel %vm9084, %v9166, %v9165
  %v9168 = vsub.s32 4, %v9144
  %v9169 = vsel %vm9084, %v9168, %v9144
  %v9170 = vsel %vm9083, %v7814, %v9167
  %v9171 = vsel %vm9083, 0, %v9169
  %v9172 = vcosq.f32.pop %v9170
  %v9173 = vsinq.f32.pop %v9170
  %vm9174 = vweird.f32 %v7814
  %v9175 = vadd.s32 %v9171, 3
  %v9176 = vand.u32 %v9175, 3
  %vm9177 = vcmp.lt.s32.totalorder %v9176, 2
  %vm9178 = vcmp.eq.s32.totalorder %v9176, 0
  %v9179 = vxor.u32 %v9173, 2147483648
  %v9180 = vsel %vm9178, %v9172, %v9179
  %vm9181 = vcmp.eq.s32.totalorder %v9176, 2
  %v9182 = vxor.u32 %v9172, 2147483648
  %v9183 = vsel %vm9181, %v9182, %v9173
  %v9184 = vsel %vm9177, %v9180, %v9183
  %v9185 = vsel %vm9174, nan, %v9184
  %v9186 = vand.u32 2147483647, %v7815
  %vm9187 = vcmp.le.f32.partialorder %v9186, 0.7853982
  %vm9188 = vcmp.lt.s32.totalorder %v7815, 0
  %v9189 = vand.u32 %v7815, 2139095040
  %v9190 = vshrl.u32 %v9189, 23
  %v9191 = vsub.s32 %v9190, 127
  %v9192 = vand.u32 2147483647, %v7815
  %v9193 = vand.u32 %v9192, 8388607
  %v9194 = vor.u32 %v9193, 8388608
  %v9195 = vsub.s32 0, %v9194
  %v9196 = vadd.s32 %v9191, 1
  %vm9197 = vcmp.gt.s32.totalorder %v9196, 0
  %v9198 = vsel %vm9197, %v9196, 0
  %v9199 = vshrl.u32 %v9198, 5
  %v9200 = vand.u32 %v9198, 31
  %v9201 = vsub.s32 32, %v9200
  %v9202 = vshrl.u32 683565275, %v9201
  %v9203 = vshll.u32 683565275, %v9200
  %v9204 = vshrl.u32 2475754826, %v9201
  %v9205 = vor.u32 %v9203, %v9204
  %v9206 = vshll.u32 2475754826, %v9200
  %v9207 = vshrl.u32 2131351028, %v9201
  %v9208 = vor.u32 %v9206, %v9207
  %v9209 = vshll.u32 2131351028, %v9200
  %v9210 = vshrl.u32 2102212464, %v9201
  %v9211 = vor.u32 %v9209, %v9210
  %v9212 = vshll.u32 2102212464, %v9200
  %v9213 = vshrl.u32 920167782, %v9201
  %v9214 = vor.u32 %v9212, %v9213
  %v9215 = vshll.u32 920167782, %v9200
  %v9216 = vshrl.u32 1326507024, %v9201
  %v9217 = vor.u32 %v9215, %v9216
  %vm9218 = vcmp.lt.s32.totalorder %v9199, 1
  %vm9219 = vcmp.lt.s32.totalorder %v9199, 2
  %vm9220 = vcmp.lt.s32.totalorder %v9199, 3
  %vm9221 = vcmp.lt.s32.totalorder %v9199, 4
  %v9222 = vsel %vm9218, %v9202, %v9205
  %v9223 = vsel %vm9221, %v9211, 2102212464
  %v9224 = vsel %vm9220, %v9208, %v9223
  %v9225 = vsel %vm9219, %v9222, %v9224
  %v9226 = vsel %vm9218, %v9205, %v9208
  %v9227 = vsel %vm9221, %v9214, 920167782
  %v9228 = vsel %vm9220, %v9211, %v9227
  %v9229 = vsel %vm9219, %v9226, %v9228
  %v9230 = vsel %vm9218, %v9208, %v9211
  %v9231 = vsel %vm9221, %v9217, 1326507024
  %v9232 = vsel %vm9220, %v9214, %v9231
  %v9233 = vsel %vm9219, %v9230, %v9232
  %v9234 = vshll.u32 %v9194, 8
  %v9235 = vmul.u32.u64.compose %v9234, %v9233
  %v9236 = vextract.low.u32 %v9235
  %v9237 = vextract.high.u32 %v9235
  %v9238 = vmul.u32.u64.compose %v9234, %v9229
  %v9239 = vextract.low.u32 %v9238
  %v9240 = vextract.high.u32 %v9238
  %v9241 = vmul.u32 %v9234, %v9225
  %v9242 = vadd.s32 %v9237, %v9239
  %vm9243 = vc.u32 %v9237, %v9239
  %v9244 = vadd.s32 %v9240, 1
  %v9245 = vsel %vm9243, %v9244, %v9240
  %v9246 = vadd.s32 %v9241, %v9245
  %v9247 = vadd.s32 %v9246, 536870912
  %v9248 = vshrl.u32 %v9247, 30
  %v9249 = vshll.u32 %v9248, 30
  %v9250 = vsub.s32 %v9246, %v9249
  %vm9251 = vcmp.lt.s32.totalorder %v9250, 0
  %v9252 = vsub.s32 0, %v9250
  %v9253 = vsel %vm9251, %v9252, %v9250
  %v9254 = vclz %v9253
  %v9255 = vsub.s32 %v9254, 2
  %vm9256 = vcmp.gt.s32.totalorder 0, %v9255
  %v9257 = vsel %vm9256, 0, %v9255
  %v9258 = vsub.s32 32, %v9257
  %v9259 = vshll.u32 %v9250, %v9257
  %v9260 = vshrl.u32 %v9242, %v9258
  %v9261 = vor.u32 %v9259, %v9260
  %v9262 = vsub.s32 4294967266, %v9257
  %v9263 = vadd.s32 %v9262, 127
  %v9264 = vshll.u32 %v9263, 23
  %v9265 = vor.u32 4788187, %v9264
  %v9266 = vand.u32 2147483647, %v9265
  %v9268 = vcvt.s32.f32 %v9261
  %v9269 = vmul.f32 %v9268, %v9266
  %v9270 = vxor.u32 %v9269, 2147483648
  %v9271 = vsel %vm9188, %v9270, %v9269
  %v9272 = vsub.s32 4, %v9248
  %v9273 = vsel %vm9188, %v9272, %v9248
  %v9274 = vsel %vm9187, %v7815, %v9271
  %v9275 = vsel %vm9187, 0, %v9273
  %v9276 = vcosq.f32.pop %v9274
  %v9277 = vsinq.f32.pop %v9274
  %vm9278 = vweird.f32 %v7815
  %v9279 = vadd.s32 %v9275, 3
  %v9280 = vand.u32 %v9279, 3
  %vm9281 = vcmp.lt.s32.totalorder %v9280, 2
  %vm9282 = vcmp.eq.s32.totalorder %v9280, 0
  %v9283 = vxor.u32 %v9277, 2147483648
  %v9284 = vsel %vm9282, %v9276, %v9283
  %vm9285 = vcmp.eq.s32.totalorder %v9280, 2
  %v9286 = vxor.u32 %v9276, 2147483648
  %v9287 = vsel %vm9285, %v9286, %v9277
  %v9288 = vsel %vm9281, %v9284, %v9287
  %v9289 = vsel %vm9278, nan, %v9288
  %v9290 = vand.u32 2147483647, %v7816
  %vm9291 = vcmp.le.f32.partialorder %v9290, 0.7853982
  %vm9292 = vcmp.lt.s32.totalorder %v7816, 0
  %v9293 = vand.u32 %v7816, 2139095040
  %v9294 = vshrl.u32 %v9293, 23
  %v9295 = vsub.s32 %v9294, 127
  %v9296 = vand.u32 2147483647, %v7816
  %v9297 = vand.u32 %v9296, 8388607
  %v9298 = vor.u32 %v9297, 8388608
  %v9299 = vsub.s32 0, %v9298
  %v9300 = vadd.s32 %v9295, 1
  %vm9301 = vcmp.gt.s32.totalorder %v9300, 0
  %v9302 = vsel %vm9301, %v9300, 0
  %v9303 = vshrl.u32 %v9302, 5
  %v9304 = vand.u32 %v9302, 31
  %v9305 = vsub.s32 32, %v9304
  %v9306 = vshrl.u32 683565275, %v9305
  %v9307 = vshll.u32 683565275, %v9304
  %v9308 = vshrl.u32 2475754826, %v9305
  %v9309 = vor.u32 %v9307, %v9308
  %v9310 = vshll.u32 2475754826, %v9304
  %v9311 = vshrl.u32 2131351028, %v9305
  %v9312 = vor.u32 %v9310, %v9311
  %v9313 = vshll.u32 2131351028, %v9304
  %v9314 = vshrl.u32 2102212464, %v9305
  %v9315 = vor.u32 %v9313, %v9314
  %v9316 = vshll.u32 2102212464, %v9304
  %v9317 = vshrl.u32 920167782, %v9305
  %v9318 = vor.u32 %v9316, %v9317
  %v9319 = vshll.u32 920167782, %v9304
  %v9320 = vshrl.u32 1326507024, %v9305
  %v9321 = vor.u32 %v9319, %v9320
  %vm9322 = vcmp.lt.s32.totalorder %v9303, 1
  %vm9323 = vcmp.lt.s32.totalorder %v9303, 2
  %vm9324 = vcmp.lt.s32.totalorder %v9303, 3
  %vm9325 = vcmp.lt.s32.totalorder %v9303, 4
  %v9326 = vsel %vm9322, %v9306, %v9309
  %v9327 = vsel %vm9325, %v9315, 2102212464
  %v9328 = vsel %vm9324, %v9312, %v9327
  %v9329 = vsel %vm9323, %v9326, %v9328
  %v9330 = vsel %vm9322, %v9309, %v9312
  %v9331 = vsel %vm9325, %v9318, 920167782
  %v9332 = vsel %vm9324, %v9315, %v9331
  %v9333 = vsel %vm9323, %v9330, %v9332
  %v9334 = vsel %vm9322, %v9312, %v9315
  %v9335 = vsel %vm9325, %v9321, 1326507024
  %v9336 = vsel %vm9324, %v9318, %v9335
  %v9337 = vsel %vm9323, %v9334, %v9336
  %v9338 = vshll.u32 %v9298, 8
  %v9339 = vmul.u32.u64.compose %v9338, %v9337
  %v9340 = vextract.low.u32 %v9339
  %v9341 = vextract.high.u32 %v9339
  %v9342 = vmul.u32.u64.compose %v9338, %v9333
  %v9343 = vextract.low.u32 %v9342
  %v9344 = vextract.high.u32 %v9342
  %v9345 = vmul.u32 %v9338, %v9329
  %v9346 = vadd.s32 %v9341, %v9343
  %vm9347 = vc.u32 %v9341, %v9343
  %v9348 = vadd.s32 %v9344, 1
  %v9349 = vsel %vm9347, %v9348, %v9344
  %v9350 = vadd.s32 %v9345, %v9349
  %v9351 = vadd.s32 %v9350, 536870912
  %v9352 = vshrl.u32 %v9351, 30
  %v9353 = vshll.u32 %v9352, 30
  %v9354 = vsub.s32 %v9350, %v9353
  %vm9355 = vcmp.lt.s32.totalorder %v9354, 0
  %v9356 = vsub.s32 0, %v9354
  %v9357 = vsel %vm9355, %v9356, %v9354
  %v9358 = vclz %v9357
  %v9359 = vsub.s32 %v9358, 2
  %vm9360 = vcmp.gt.s32.totalorder 0, %v9359
  %v9361 = vsel %vm9360, 0, %v9359
  %v9362 = vsub.s32 32, %v9361
  %v9363 = vshll.u32 %v9354, %v9361
  %v9364 = vshrl.u32 %v9346, %v9362
  %v9365 = vor.u32 %v9363, %v9364
  %v9366 = vsub.s32 4294967266, %v9361
  %v9367 = vadd.s32 %v9366, 127
  %v9368 = vshll.u32 %v9367, 23
  %v9369 = vor.u32 4788187, %v9368
  %v9370 = vand.u32 2147483647, %v9369
  %v9372 = vcvt.s32.f32 %v9365
  %v9373 = vmul.f32 %v9372, %v9370
  %v9374 = vxor.u32 %v9373, 2147483648
  %v9375 = vsel %vm9292, %v9374, %v9373
  %v9376 = vsub.s32 4, %v9352
  %v9377 = vsel %vm9292, %v9376, %v9352
  %v9378 = vsel %vm9291, %v7816, %v9375
  %v9379 = vsel %vm9291, 0, %v9377
  %v9380 = vcosq.f32.pop %v9378
  %v9381 = vsinq.f32.pop %v9378
  %vm9382 = vweird.f32 %v7816
  %v9383 = vadd.s32 %v9379, 3
  %v9384 = vand.u32 %v9383, 3
  %vm9385 = vcmp.lt.s32.totalorder %v9384, 2
  %vm9386 = vcmp.eq.s32.totalorder %v9384, 0
  %v9387 = vxor.u32 %v9381, 2147483648
  %v9388 = vsel %vm9386, %v9380, %v9387
  %vm9389 = vcmp.eq.s32.totalorder %v9384, 2
  %v9390 = vxor.u32 %v9380, 2147483648
  %v9391 = vsel %vm9389, %v9390, %v9381
  %v9392 = vsel %vm9385, %v9388, %v9391
  %v9393 = vsel %vm9382, nan, %v9392
  %v9394 = vand.u32 2147483647, %v7817
  %vm9395 = vcmp.le.f32.partialorder %v9394, 0.7853982
  %vm9396 = vcmp.lt.s32.totalorder %v7817, 0
  %v9397 = vand.u32 %v7817, 2139095040
  %v9398 = vshrl.u32 %v9397, 23
  %v9399 = vsub.s32 %v9398, 127
  %v9400 = vand.u32 2147483647, %v7817
  %v9401 = vand.u32 %v9400, 8388607
  %v9402 = vor.u32 %v9401, 8388608
  %v9403 = vsub.s32 0, %v9402
  %v9404 = vadd.s32 %v9399, 1
  %vm9405 = vcmp.gt.s32.totalorder %v9404, 0
  %v9406 = vsel %vm9405, %v9404, 0
  %v9407 = vshrl.u32 %v9406, 5
  %v9408 = vand.u32 %v9406, 31
  %v9409 = vsub.s32 32, %v9408
  %v9410 = vshrl.u32 683565275, %v9409
  %v9411 = vshll.u32 683565275, %v9408
  %v9412 = vshrl.u32 2475754826, %v9409
  %v9413 = vor.u32 %v9411, %v9412
  %v9414 = vshll.u32 2475754826, %v9408
  %v9415 = vshrl.u32 2131351028, %v9409
  %v9416 = vor.u32 %v9414, %v9415
  %v9417 = vshll.u32 2131351028, %v9408
  %v9418 = vshrl.u32 2102212464, %v9409
  %v9419 = vor.u32 %v9417, %v9418
  %v9420 = vshll.u32 2102212464, %v9408
  %v9421 = vshrl.u32 920167782, %v9409
  %v9422 = vor.u32 %v9420, %v9421
  %v9423 = vshll.u32 920167782, %v9408
  %v9424 = vshrl.u32 1326507024, %v9409
  %v9425 = vor.u32 %v9423, %v9424
  %vm9426 = vcmp.lt.s32.totalorder %v9407, 1
  %vm9427 = vcmp.lt.s32.totalorder %v9407, 2
  %vm9428 = vcmp.lt.s32.totalorder %v9407, 3
  %vm9429 = vcmp.lt.s32.totalorder %v9407, 4
  %v9430 = vsel %vm9426, %v9410, %v9413
  %v9431 = vsel %vm9429, %v9419, 2102212464
  %v9432 = vsel %vm9428, %v9416, %v9431
  %v9433 = vsel %vm9427, %v9430, %v9432
  %v9434 = vsel %vm9426, %v9413, %v9416
  %v9435 = vsel %vm9429, %v9422, 920167782
  %v9436 = vsel %vm9428, %v9419, %v9435
  %v9437 = vsel %vm9427, %v9434, %v9436
  %v9438 = vsel %vm9426, %v9416, %v9419
  %v9439 = vsel %vm9429, %v9425, 1326507024
  %v9440 = vsel %vm9428, %v9422, %v9439
  %v9441 = vsel %vm9427, %v9438, %v9440
  %v9442 = vshll.u32 %v9402, 8
  %v9443 = vmul.u32.u64.compose %v9442, %v9441
  %v9444 = vextract.low.u32 %v9443
  %v9445 = vextract.high.u32 %v9443
  %v9446 = vmul.u32.u64.compose %v9442, %v9437
  %v9447 = vextract.low.u32 %v9446
  %v9448 = vextract.high.u32 %v9446
  %v9449 = vmul.u32 %v9442, %v9433
  %v9450 = vadd.s32 %v9445, %v9447
  %vm9451 = vc.u32 %v9445, %v9447
  %v9452 = vadd.s32 %v9448, 1
  %v9453 = vsel %vm9451, %v9452, %v9448
  %v9454 = vadd.s32 %v9449, %v9453
  %v9455 = vadd.s32 %v9454, 536870912
  %v9456 = vshrl.u32 %v9455, 30
  %v9457 = vshll.u32 %v9456, 30
  %v9458 = vsub.s32 %v9454, %v9457
  %vm9459 = vcmp.lt.s32.totalorder %v9458, 0
  %v9460 = vsub.s32 0, %v9458
  %v9461 = vsel %vm9459, %v9460, %v9458
  %v9462 = vclz %v9461
  %v9463 = vsub.s32 %v9462, 2
  %vm9464 = vcmp.gt.s32.totalorder 0, %v9463
  %v9465 = vsel %vm9464, 0, %v9463
  %v9466 = vsub.s32 32, %v9465
  %v9467 = vshll.u32 %v9458, %v9465
  %v9468 = vshrl.u32 %v9450, %v9466
  %v9469 = vor.u32 %v9467, %v9468
  %v9470 = vsub.s32 4294967266, %v9465
  %v9471 = vadd.s32 %v9470, 127
  %v9472 = vshll.u32 %v9471, 23
  %v9473 = vor.u32 4788187, %v9472
  %v9474 = vand.u32 2147483647, %v9473
  %v9476 = vcvt.s32.f32 %v9469
  %v9477 = vmul.f32 %v9476, %v9474
  %v9478 = vxor.u32 %v9477, 2147483648
  %v9479 = vsel %vm9396, %v9478, %v9477
  %v9480 = vsub.s32 4, %v9456
  %v9481 = vsel %vm9396, %v9480, %v9456
  %v9482 = vsel %vm9395, %v7817, %v9479
  %v9483 = vsel %vm9395, 0, %v9481
  %v9484 = vcosq.f32.pop %v9482
  %v9485 = vsinq.f32.pop %v9482
  %vm9486 = vweird.f32 %v7817
  %v9487 = vadd.s32 %v9483, 3
  %v9488 = vand.u32 %v9487, 3
  %vm9489 = vcmp.lt.s32.totalorder %v9488, 2
  %vm9490 = vcmp.eq.s32.totalorder %v9488, 0
  %v9491 = vxor.u32 %v9485, 2147483648
  %v9492 = vsel %vm9490, %v9484, %v9491
  %vm9493 = vcmp.eq.s32.totalorder %v9488, 2
  %v9494 = vxor.u32 %v9484, 2147483648
  %v9495 = vsel %vm9493, %v9494, %v9485
  %v9496 = vsel %vm9489, %v9492, %v9495
  %v9497 = vsel %vm9486, nan, %v9496
  %v9498 = vand.u32 2147483647, %v7818
  %vm9499 = vcmp.le.f32.partialorder %v9498, 0.7853982
  %vm9500 = vcmp.lt.s32.totalorder %v7818, 0
  %v9501 = vand.u32 %v7818, 2139095040
  %v9502 = vshrl.u32 %v9501, 23
  %v9503 = vsub.s32 %v9502, 127
  %v9504 = vand.u32 2147483647, %v7818
  %v9505 = vand.u32 %v9504, 8388607
  %v9506 = vor.u32 %v9505, 8388608
  %v9507 = vsub.s32 0, %v9506
  %v9508 = vadd.s32 %v9503, 1
  %vm9509 = vcmp.gt.s32.totalorder %v9508, 0
  %v9510 = vsel %vm9509, %v9508, 0
  %v9511 = vshrl.u32 %v9510, 5
  %v9512 = vand.u32 %v9510, 31
  %v9513 = vsub.s32 32, %v9512
  %v9514 = vshrl.u32 683565275, %v9513
  %v9515 = vshll.u32 683565275, %v9512
  %v9516 = vshrl.u32 2475754826, %v9513
  %v9517 = vor.u32 %v9515, %v9516
  %v9518 = vshll.u32 2475754826, %v9512
  %v9519 = vshrl.u32 2131351028, %v9513
  %v9520 = vor.u32 %v9518, %v9519
  %v9521 = vshll.u32 2131351028, %v9512
  %v9522 = vshrl.u32 2102212464, %v9513
  %v9523 = vor.u32 %v9521, %v9522
  %v9524 = vshll.u32 2102212464, %v9512
  %v9525 = vshrl.u32 920167782, %v9513
  %v9526 = vor.u32 %v9524, %v9525
  %v9527 = vshll.u32 920167782, %v9512
  %v9528 = vshrl.u32 1326507024, %v9513
  %v9529 = vor.u32 %v9527, %v9528
  %vm9530 = vcmp.lt.s32.totalorder %v9511, 1
  %vm9531 = vcmp.lt.s32.totalorder %v9511, 2
  %vm9532 = vcmp.lt.s32.totalorder %v9511, 3
  %vm9533 = vcmp.lt.s32.totalorder %v9511, 4
  %v9534 = vsel %vm9530, %v9514, %v9517
  %v9535 = vsel %vm9533, %v9523, 2102212464
  %v9536 = vsel %vm9532, %v9520, %v9535
  %v9537 = vsel %vm9531, %v9534, %v9536
  %v9538 = vsel %vm9530, %v9517, %v9520
  %v9539 = vsel %vm9533, %v9526, 920167782
  %v9540 = vsel %vm9532, %v9523, %v9539
  %v9541 = vsel %vm9531, %v9538, %v9540
  %v9542 = vsel %vm9530, %v9520, %v9523
  %v9543 = vsel %vm9533, %v9529, 1326507024
  %v9544 = vsel %vm9532, %v9526, %v9543
  %v9545 = vsel %vm9531, %v9542, %v9544
  %v9546 = vshll.u32 %v9506, 8
  %v9547 = vmul.u32.u64.compose %v9546, %v9545
  %v9548 = vextract.low.u32 %v9547
  %v9549 = vextract.high.u32 %v9547
  %v9550 = vmul.u32.u64.compose %v9546, %v9541
  %v9551 = vextract.low.u32 %v9550
  %v9552 = vextract.high.u32 %v9550
  %v9553 = vmul.u32 %v9546, %v9537
  %v9554 = vadd.s32 %v9549, %v9551
  %vm9555 = vc.u32 %v9549, %v9551
  %v9556 = vadd.s32 %v9552, 1
  %v9557 = vsel %vm9555, %v9556, %v9552
  %v9558 = vadd.s32 %v9553, %v9557
  %v9559 = vadd.s32 %v9558, 536870912
  %v9560 = vshrl.u32 %v9559, 30
  %v9561 = vshll.u32 %v9560, 30
  %v9562 = vsub.s32 %v9558, %v9561
  %vm9563 = vcmp.lt.s32.totalorder %v9562, 0
  %v9564 = vsub.s32 0, %v9562
  %v9565 = vsel %vm9563, %v9564, %v9562
  %v9566 = vclz %v9565
  %v9567 = vsub.s32 %v9566, 2
  %vm9568 = vcmp.gt.s32.totalorder 0, %v9567
  %v9569 = vsel %vm9568, 0, %v9567
  %v9570 = vsub.s32 32, %v9569
  %v9571 = vshll.u32 %v9562, %v9569
  %v9572 = vshrl.u32 %v9554, %v9570
  %v9573 = vor.u32 %v9571, %v9572
  %v9574 = vsub.s32 4294967266, %v9569
  %v9575 = vadd.s32 %v9574, 127
  %v9576 = vshll.u32 %v9575, 23
  %v9577 = vor.u32 4788187, %v9576
  %v9578 = vand.u32 2147483647, %v9577
  %v9580 = vcvt.s32.f32 %v9573
  %v9581 = vmul.f32 %v9580, %v9578
  %v9582 = vxor.u32 %v9581, 2147483648
  %v9583 = vsel %vm9500, %v9582, %v9581
  %v9584 = vsub.s32 4, %v9560
  %v9585 = vsel %vm9500, %v9584, %v9560
  %v9586 = vsel %vm9499, %v7818, %v9583
  %v9587 = vsel %vm9499, 0, %v9585
  %v9588 = vcosq.f32.pop %v9586
  %v9589 = vsinq.f32.pop %v9586
  %vm9590 = vweird.f32 %v7818
  %v9591 = vadd.s32 %v9587, 3
  %v9592 = vand.u32 %v9591, 3
  %vm9593 = vcmp.lt.s32.totalorder %v9592, 2
  %vm9594 = vcmp.eq.s32.totalorder %v9592, 0
  %v9595 = vxor.u32 %v9589, 2147483648
  %v9596 = vsel %vm9594, %v9588, %v9595
  %vm9597 = vcmp.eq.s32.totalorder %v9592, 2
  %v9598 = vxor.u32 %v9588, 2147483648
  %v9599 = vsel %vm9597, %v9598, %v9589
  %v9600 = vsel %vm9593, %v9596, %v9599
  %v9601 = vsel %vm9590, nan, %v9600
  %v9602 = vand.u32 2147483647, %v7819
  %vm9603 = vcmp.le.f32.partialorder %v9602, 0.7853982
  %vm9604 = vcmp.lt.s32.totalorder %v7819, 0
  %v9605 = vand.u32 %v7819, 2139095040
  %v9606 = vshrl.u32 %v9605, 23
  %v9607 = vsub.s32 %v9606, 127
  %v9608 = vand.u32 2147483647, %v7819
  %v9609 = vand.u32 %v9608, 8388607
  %v9610 = vor.u32 %v9609, 8388608
  %v9611 = vsub.s32 0, %v9610
  %v9612 = vadd.s32 %v9607, 1
  %vm9613 = vcmp.gt.s32.totalorder %v9612, 0
  %v9614 = vsel %vm9613, %v9612, 0
  %v9615 = vshrl.u32 %v9614, 5
  %v9616 = vand.u32 %v9614, 31
  %v9617 = vsub.s32 32, %v9616
  %v9618 = vshrl.u32 683565275, %v9617
  %v9619 = vshll.u32 683565275, %v9616
  %v9620 = vshrl.u32 2475754826, %v9617
  %v9621 = vor.u32 %v9619, %v9620
  %v9622 = vshll.u32 2475754826, %v9616
  %v9623 = vshrl.u32 2131351028, %v9617
  %v9624 = vor.u32 %v9622, %v9623
  %v9625 = vshll.u32 2131351028, %v9616
  %v9626 = vshrl.u32 2102212464, %v9617
  %v9627 = vor.u32 %v9625, %v9626
  %v9628 = vshll.u32 2102212464, %v9616
  %v9629 = vshrl.u32 920167782, %v9617
  %v9630 = vor.u32 %v9628, %v9629
  %v9631 = vshll.u32 920167782, %v9616
  %v9632 = vshrl.u32 1326507024, %v9617
  %v9633 = vor.u32 %v9631, %v9632
  %vm9634 = vcmp.lt.s32.totalorder %v9615, 1
  %vm9635 = vcmp.lt.s32.totalorder %v9615, 2
  %vm9636 = vcmp.lt.s32.totalorder %v9615, 3
  %vm9637 = vcmp.lt.s32.totalorder %v9615, 4
  %v9638 = vsel %vm9634, %v9618, %v9621
  %v9639 = vsel %vm9637, %v9627, 2102212464
  %v9640 = vsel %vm9636, %v9624, %v9639
  %v9641 = vsel %vm9635, %v9638, %v9640
  %v9642 = vsel %vm9634, %v9621, %v9624
  %v9643 = vsel %vm9637, %v9630, 920167782
  %v9644 = vsel %vm9636, %v9627, %v9643
  %v9645 = vsel %vm9635, %v9642, %v9644
  %v9646 = vsel %vm9634, %v9624, %v9627
  %v9647 = vsel %vm9637, %v9633, 1326507024
  %v9648 = vsel %vm9636, %v9630, %v9647
  %v9649 = vsel %vm9635, %v9646, %v9648
  %v9650 = vshll.u32 %v9610, 8
  %v9651 = vmul.u32.u64.compose %v9650, %v9649
  %v9652 = vextract.low.u32 %v9651
  %v9653 = vextract.high.u32 %v9651
  %v9654 = vmul.u32.u64.compose %v9650, %v9645
  %v9655 = vextract.low.u32 %v9654
  %v9656 = vextract.high.u32 %v9654
  %v9657 = vmul.u32 %v9650, %v9641
  %v9658 = vadd.s32 %v9653, %v9655
  %vm9659 = vc.u32 %v9653, %v9655
  %v9660 = vadd.s32 %v9656, 1
  %v9661 = vsel %vm9659, %v9660, %v9656
  %v9662 = vadd.s32 %v9657, %v9661
  %v9663 = vadd.s32 %v9662, 536870912
  %v9664 = vshrl.u32 %v9663, 30
  %v9665 = vshll.u32 %v9664, 30
  %v9666 = vsub.s32 %v9662, %v9665
  %vm9667 = vcmp.lt.s32.totalorder %v9666, 0
  %v9668 = vsub.s32 0, %v9666
  %v9669 = vsel %vm9667, %v9668, %v9666
  %v9670 = vclz %v9669
  %v9671 = vsub.s32 %v9670, 2
  %vm9672 = vcmp.gt.s32.totalorder 0, %v9671
  %v9673 = vsel %vm9672, 0, %v9671
  %v9674 = vsub.s32 32, %v9673
  %v9675 = vshll.u32 %v9666, %v9673
  %v9676 = vshrl.u32 %v9658, %v9674
  %v9677 = vor.u32 %v9675, %v9676
  %v9678 = vsub.s32 4294967266, %v9673
  %v9679 = vadd.s32 %v9678, 127
  %v9680 = vshll.u32 %v9679, 23
  %v9681 = vor.u32 4788187, %v9680
  %v9682 = vand.u32 2147483647, %v9681
  %v9684 = vcvt.s32.f32 %v9677
  %v9685 = vmul.f32 %v9684, %v9682
  %v9686 = vxor.u32 %v9685, 2147483648
  %v9687 = vsel %vm9604, %v9686, %v9685
  %v9688 = vsub.s32 4, %v9664
  %v9689 = vsel %vm9604, %v9688, %v9664
  %v9690 = vsel %vm9603, %v7819, %v9687
  %v9691 = vsel %vm9603, 0, %v9689
  %v9692 = vcosq.f32.pop %v9690
  %v9693 = vsinq.f32.pop %v9690
  %vm9694 = vweird.f32 %v7819
  %v9695 = vadd.s32 %v9691, 3
  %v9696 = vand.u32 %v9695, 3
  %vm9697 = vcmp.lt.s32.totalorder %v9696, 2
  %vm9698 = vcmp.eq.s32.totalorder %v9696, 0
  %v9699 = vxor.u32 %v9693, 2147483648
  %v9700 = vsel %vm9698, %v9692, %v9699
  %vm9701 = vcmp.eq.s32.totalorder %v9696, 2
  %v9702 = vxor.u32 %v9692, 2147483648
  %v9703 = vsel %vm9701, %v9702, %v9693
  %v9704 = vsel %vm9697, %v9700, %v9703
  %v9705 = vsel %vm9694, nan, %v9704
  %v9706 = vand.u32 2147483647, %v7820
  %vm9707 = vcmp.le.f32.partialorder %v9706, 0.7853982
  %vm9708 = vcmp.lt.s32.totalorder %v7820, 0
  %v9709 = vand.u32 %v7820, 2139095040
  %v9710 = vshrl.u32 %v9709, 23
  %v9711 = vsub.s32 %v9710, 127
  %v9712 = vand.u32 2147483647, %v7820
  %v9713 = vand.u32 %v9712, 8388607
  %v9714 = vor.u32 %v9713, 8388608
  %v9715 = vsub.s32 0, %v9714
  %v9716 = vadd.s32 %v9711, 1
  %vm9717 = vcmp.gt.s32.totalorder %v9716, 0
  %v9718 = vsel %vm9717, %v9716, 0
  %v9719 = vshrl.u32 %v9718, 5
  %v9720 = vand.u32 %v9718, 31
  %v9721 = vsub.s32 32, %v9720
  %v9722 = vshrl.u32 683565275, %v9721
  %v9723 = vshll.u32 683565275, %v9720
  %v9724 = vshrl.u32 2475754826, %v9721
  %v9725 = vor.u32 %v9723, %v9724
  %v9726 = vshll.u32 2475754826, %v9720
  %v9727 = vshrl.u32 2131351028, %v9721
  %v9728 = vor.u32 %v9726, %v9727
  %v9729 = vshll.u32 2131351028, %v9720
  %v9730 = vshrl.u32 2102212464, %v9721
  %v9731 = vor.u32 %v9729, %v9730
  %v9732 = vshll.u32 2102212464, %v9720
  %v9733 = vshrl.u32 920167782, %v9721
  %v9734 = vor.u32 %v9732, %v9733
  %v9735 = vshll.u32 920167782, %v9720
  %v9736 = vshrl.u32 1326507024, %v9721
  %v9737 = vor.u32 %v9735, %v9736
  %vm9738 = vcmp.lt.s32.totalorder %v9719, 1
  %vm9739 = vcmp.lt.s32.totalorder %v9719, 2
  %vm9740 = vcmp.lt.s32.totalorder %v9719, 3
  %vm9741 = vcmp.lt.s32.totalorder %v9719, 4
  %v9742 = vsel %vm9738, %v9722, %v9725
  %v9743 = vsel %vm9741, %v9731, 2102212464
  %v9744 = vsel %vm9740, %v9728, %v9743
  %v9745 = vsel %vm9739, %v9742, %v9744
  %v9746 = vsel %vm9738, %v9725, %v9728
  %v9747 = vsel %vm9741, %v9734, 920167782
  %v9748 = vsel %vm9740, %v9731, %v9747
  %v9749 = vsel %vm9739, %v9746, %v9748
  %v9750 = vsel %vm9738, %v9728, %v9731
  %v9751 = vsel %vm9741, %v9737, 1326507024
  %v9752 = vsel %vm9740, %v9734, %v9751
  %v9753 = vsel %vm9739, %v9750, %v9752
  %v9754 = vshll.u32 %v9714, 8
  %v9755 = vmul.u32.u64.compose %v9754, %v9753
  %v9756 = vextract.low.u32 %v9755
  %v9757 = vextract.high.u32 %v9755
  %v9758 = vmul.u32.u64.compose %v9754, %v9749
  %v9759 = vextract.low.u32 %v9758
  %v9760 = vextract.high.u32 %v9758
  %v9761 = vmul.u32 %v9754, %v9745
  %v9762 = vadd.s32 %v9757, %v9759
  %vm9763 = vc.u32 %v9757, %v9759
  %v9764 = vadd.s32 %v9760, 1
  %v9765 = vsel %vm9763, %v9764, %v9760
  %v9766 = vadd.s32 %v9761, %v9765
  %v9767 = vadd.s32 %v9766, 536870912
  %v9768 = vshrl.u32 %v9767, 30
  %v9769 = vshll.u32 %v9768, 30
  %v9770 = vsub.s32 %v9766, %v9769
  %vm9771 = vcmp.lt.s32.totalorder %v9770, 0
  %v9772 = vsub.s32 0, %v9770
  %v9773 = vsel %vm9771, %v9772, %v9770
  %v9774 = vclz %v9773
  %v9775 = vsub.s32 %v9774, 2
  %vm9776 = vcmp.gt.s32.totalorder 0, %v9775
  %v9777 = vsel %vm9776, 0, %v9775
  %v9778 = vsub.s32 32, %v9777
  %v9779 = vshll.u32 %v9770, %v9777
  %v9780 = vshrl.u32 %v9762, %v9778
  %v9781 = vor.u32 %v9779, %v9780
  %v9782 = vsub.s32 4294967266, %v9777
  %v9783 = vadd.s32 %v9782, 127
  %v9784 = vshll.u32 %v9783, 23
  %v9785 = vor.u32 4788187, %v9784
  %v9786 = vand.u32 2147483647, %v9785
  %v9788 = vcvt.s32.f32 %v9781
  %v9789 = vmul.f32 %v9788, %v9786
  %v9790 = vxor.u32 %v9789, 2147483648
  %v9791 = vsel %vm9708, %v9790, %v9789
  %v9792 = vsub.s32 4, %v9768
  %v9793 = vsel %vm9708, %v9792, %v9768
  %v9794 = vsel %vm9707, %v7820, %v9791
  %v9795 = vsel %vm9707, 0, %v9793
  %v9796 = vcosq.f32.pop %v9794
  %v9797 = vsinq.f32.pop %v9794
  %vm9798 = vweird.f32 %v7820
  %v9799 = vadd.s32 %v9795, 3
  %v9800 = vand.u32 %v9799, 3
  %vm9801 = vcmp.lt.s32.totalorder %v9800, 2
  %vm9802 = vcmp.eq.s32.totalorder %v9800, 0
  %v9803 = vxor.u32 %v9797, 2147483648
  %v9804 = vsel %vm9802, %v9796, %v9803
  %vm9805 = vcmp.eq.s32.totalorder %v9800, 2
  %v9806 = vxor.u32 %v9796, 2147483648
  %v9807 = vsel %vm9805, %v9806, %v9797
  %v9808 = vsel %vm9801, %v9804, %v9807
  %v9809 = vsel %vm9798, nan, %v9808
  %v9810 = vand.u32 2147483647, %v7821
  %vm9811 = vcmp.le.f32.partialorder %v9810, 0.7853982
  %vm9812 = vcmp.lt.s32.totalorder %v7821, 0
  %v9813 = vand.u32 %v7821, 2139095040
  %v9814 = vshrl.u32 %v9813, 23
  %v9815 = vsub.s32 %v9814, 127
  %v9816 = vand.u32 2147483647, %v7821
  %v9817 = vand.u32 %v9816, 8388607
  %v9818 = vor.u32 %v9817, 8388608
  %v9819 = vsub.s32 0, %v9818
  %v9820 = vadd.s32 %v9815, 1
  %vm9821 = vcmp.gt.s32.totalorder %v9820, 0
  %v9822 = vsel %vm9821, %v9820, 0
  %v9823 = vshrl.u32 %v9822, 5
  %v9824 = vand.u32 %v9822, 31
  %v9825 = vsub.s32 32, %v9824
  %v9826 = vshrl.u32 683565275, %v9825
  %v9827 = vshll.u32 683565275, %v9824
  %v9828 = vshrl.u32 2475754826, %v9825
  %v9829 = vor.u32 %v9827, %v9828
  %v9830 = vshll.u32 2475754826, %v9824
  %v9831 = vshrl.u32 2131351028, %v9825
  %v9832 = vor.u32 %v9830, %v9831
  %v9833 = vshll.u32 2131351028, %v9824
  %v9834 = vshrl.u32 2102212464, %v9825
  %v9835 = vor.u32 %v9833, %v9834
  %v9836 = vshll.u32 2102212464, %v9824
  %v9837 = vshrl.u32 920167782, %v9825
  %v9838 = vor.u32 %v9836, %v9837
  %v9839 = vshll.u32 920167782, %v9824
  %v9840 = vshrl.u32 1326507024, %v9825
  %v9841 = vor.u32 %v9839, %v9840
  %vm9842 = vcmp.lt.s32.totalorder %v9823, 1
  %vm9843 = vcmp.lt.s32.totalorder %v9823, 2
  %vm9844 = vcmp.lt.s32.totalorder %v9823, 3
  %vm9845 = vcmp.lt.s32.totalorder %v9823, 4
  %v9846 = vsel %vm9842, %v9826, %v9829
  %v9847 = vsel %vm9845, %v9835, 2102212464
  %v9848 = vsel %vm9844, %v9832, %v9847
  %v9849 = vsel %vm9843, %v9846, %v9848
  %v9850 = vsel %vm9842, %v9829, %v9832
  %v9851 = vsel %vm9845, %v9838, 920167782
  %v9852 = vsel %vm9844, %v9835, %v9851
  %v9853 = vsel %vm9843, %v9850, %v9852
  %v9854 = vsel %vm9842, %v9832, %v9835
  %v9855 = vsel %vm9845, %v9841, 1326507024
  %v9856 = vsel %vm9844, %v9838, %v9855
  %v9857 = vsel %vm9843, %v9854, %v9856
  %v9858 = vshll.u32 %v9818, 8
  %v9859 = vmul.u32.u64.compose %v9858, %v9857
  %v9860 = vextract.low.u32 %v9859
  %v9861 = vextract.high.u32 %v9859
  %v9862 = vmul.u32.u64.compose %v9858, %v9853
  %v9863 = vextract.low.u32 %v9862
  %v9864 = vextract.high.u32 %v9862
  %v9865 = vmul.u32 %v9858, %v9849
  %v9866 = vadd.s32 %v9861, %v9863
  %vm9867 = vc.u32 %v9861, %v9863
  %v9868 = vadd.s32 %v9864, 1
  %v9869 = vsel %vm9867, %v9868, %v9864
  %v9870 = vadd.s32 %v9865, %v9869
  %v9871 = vadd.s32 %v9870, 536870912
  %v9872 = vshrl.u32 %v9871, 30
  %v9873 = vshll.u32 %v9872, 30
  %v9874 = vsub.s32 %v9870, %v9873
  %vm9875 = vcmp.lt.s32.totalorder %v9874, 0
  %v9876 = vsub.s32 0, %v9874
  %v9877 = vsel %vm9875, %v9876, %v9874
  %v9878 = vclz %v9877
  %v9879 = vsub.s32 %v9878, 2
  %vm9880 = vcmp.gt.s32.totalorder 0, %v9879
  %v9881 = vsel %vm9880, 0, %v9879
  %v9882 = vsub.s32 32, %v9881
  %v9883 = vshll.u32 %v9874, %v9881
  %v9884 = vshrl.u32 %v9866, %v9882
  %v9885 = vor.u32 %v9883, %v9884
  %v9886 = vsub.s32 4294967266, %v9881
  %v9887 = vadd.s32 %v9886, 127
  %v9888 = vshll.u32 %v9887, 23
  %v9889 = vor.u32 4788187, %v9888
  %v9890 = vand.u32 2147483647, %v9889
  %v9892 = vcvt.s32.f32 %v9885
  %v9893 = vmul.f32 %v9892, %v9890
  %v9894 = vxor.u32 %v9893, 2147483648
  %v9895 = vsel %vm9812, %v9894, %v9893
  %v9896 = vsub.s32 4, %v9872
  %v9897 = vsel %vm9812, %v9896, %v9872
  %v9898 = vsel %vm9811, %v7821, %v9895
  %v9899 = vsel %vm9811, 0, %v9897
  %v9900 = vcosq.f32.pop %v9898
  %v9901 = vsinq.f32.pop %v9898
  %vm9902 = vweird.f32 %v7821
  %v9903 = vadd.s32 %v9899, 3
  %v9904 = vand.u32 %v9903, 3
  %vm9905 = vcmp.lt.s32.totalorder %v9904, 2
  %vm9906 = vcmp.eq.s32.totalorder %v9904, 0
  %v9907 = vxor.u32 %v9901, 2147483648
  %v9908 = vsel %vm9906, %v9900, %v9907
  %vm9909 = vcmp.eq.s32.totalorder %v9904, 2
  %v9910 = vxor.u32 %v9900, 2147483648
  %v9911 = vsel %vm9909, %v9910, %v9901
  %v9912 = vsel %vm9905, %v9908, %v9911
  %v9913 = vsel %vm9902, nan, %v9912
  %v9914 = vand.u32 2147483647, %v7822
  %vm9915 = vcmp.le.f32.partialorder %v9914, 0.7853982
  %vm9916 = vcmp.lt.s32.totalorder %v7822, 0
  %v9917 = vand.u32 %v7822, 2139095040
  %v9918 = vshrl.u32 %v9917, 23
  %v9919 = vsub.s32 %v9918, 127
  %v9920 = vand.u32 2147483647, %v7822
  %v9921 = vand.u32 %v9920, 8388607
  %v9922 = vor.u32 %v9921, 8388608
  %v9923 = vsub.s32 0, %v9922
  %v9924 = vadd.s32 %v9919, 1
  %vm9925 = vcmp.gt.s32.totalorder %v9924, 0
  %v9926 = vsel %vm9925, %v9924, 0
  %v9927 = vshrl.u32 %v9926, 5
  %v9928 = vand.u32 %v9926, 31
  %v9929 = vsub.s32 32, %v9928
  %v9930 = vshrl.u32 683565275, %v9929
  %v9931 = vshll.u32 683565275, %v9928
  %v9932 = vshrl.u32 2475754826, %v9929
  %v9933 = vor.u32 %v9931, %v9932
  %v9934 = vshll.u32 2475754826, %v9928
  %v9935 = vshrl.u32 2131351028, %v9929
  %v9936 = vor.u32 %v9934, %v9935
  %v9937 = vshll.u32 2131351028, %v9928
  %v9938 = vshrl.u32 2102212464, %v9929
  %v9939 = vor.u32 %v9937, %v9938
  %v9940 = vshll.u32 2102212464, %v9928
  %v9941 = vshrl.u32 920167782, %v9929
  %v9942 = vor.u32 %v9940, %v9941
  %v9943 = vshll.u32 920167782, %v9928
  %v9944 = vshrl.u32 1326507024, %v9929
  %v9945 = vor.u32 %v9943, %v9944
  %vm9946 = vcmp.lt.s32.totalorder %v9927, 1
  %vm9947 = vcmp.lt.s32.totalorder %v9927, 2
  %vm9948 = vcmp.lt.s32.totalorder %v9927, 3
  %vm9949 = vcmp.lt.s32.totalorder %v9927, 4
  %v9950 = vsel %vm9946, %v9930, %v9933
  %v9951 = vsel %vm9949, %v9939, 2102212464
  %v9952 = vsel %vm9948, %v9936, %v9951
  %v9953 = vsel %vm9947, %v9950, %v9952
  %v9954 = vsel %vm9946, %v9933, %v9936
  %v9955 = vsel %vm9949, %v9942, 920167782
  %v9956 = vsel %vm9948, %v9939, %v9955
  %v9957 = vsel %vm9947, %v9954, %v9956
  %v9958 = vsel %vm9946, %v9936, %v9939
  %v9959 = vsel %vm9949, %v9945, 1326507024
  %v9960 = vsel %vm9948, %v9942, %v9959
  %v9961 = vsel %vm9947, %v9958, %v9960
  %v9962 = vshll.u32 %v9922, 8
  %v9963 = vmul.u32.u64.compose %v9962, %v9961
  %v9964 = vextract.low.u32 %v9963
  %v9965 = vextract.high.u32 %v9963
  %v9966 = vmul.u32.u64.compose %v9962, %v9957
  %v9967 = vextract.low.u32 %v9966
  %v9968 = vextract.high.u32 %v9966
  %v9969 = vmul.u32 %v9962, %v9953
  %v9970 = vadd.s32 %v9965, %v9967
  %vm9971 = vc.u32 %v9965, %v9967
  %v9972 = vadd.s32 %v9968, 1
  %v9973 = vsel %vm9971, %v9972, %v9968
  %v9974 = vadd.s32 %v9969, %v9973
  %v9975 = vadd.s32 %v9974, 536870912
  %v9976 = vshrl.u32 %v9975, 30
  %v9977 = vshll.u32 %v9976, 30
  %v9978 = vsub.s32 %v9974, %v9977
  %vm9979 = vcmp.lt.s32.totalorder %v9978, 0
  %v9980 = vsub.s32 0, %v9978
  %v9981 = vsel %vm9979, %v9980, %v9978
  %v9982 = vclz %v9981
  %v9983 = vsub.s32 %v9982, 2
  %vm9984 = vcmp.gt.s32.totalorder 0, %v9983
  %v9985 = vsel %vm9984, 0, %v9983
  %v9986 = vsub.s32 32, %v9985
  %v9987 = vshll.u32 %v9978, %v9985
  %v9988 = vshrl.u32 %v9970, %v9986
  %v9989 = vor.u32 %v9987, %v9988
  %v9990 = vsub.s32 4294967266, %v9985
  %v9991 = vadd.s32 %v9990, 127
  %v9992 = vshll.u32 %v9991, 23
  %v9993 = vor.u32 4788187, %v9992
  %v9994 = vand.u32 2147483647, %v9993
  %v9996 = vcvt.s32.f32 %v9989
  %v9997 = vmul.f32 %v9996, %v9994
  %v9998 = vxor.u32 %v9997, 2147483648
  %v9999 = vsel %vm9916, %v9998, %v9997
  %v10000 = vsub.s32 4, %v9976
  %v10001 = vsel %vm9916, %v10000, %v9976
  %v10002 = vsel %vm9915, %v7822, %v9999
  %v10003 = vsel %vm9915, 0, %v10001
  %v10004 = vcosq.f32.pop %v10002
  %v10005 = vsinq.f32.pop %v10002
  %vm10006 = vweird.f32 %v7822
  %v10007 = vadd.s32 %v10003, 3
  %v10008 = vand.u32 %v10007, 3
  %vm10009 = vcmp.lt.s32.totalorder %v10008, 2
  %vm10010 = vcmp.eq.s32.totalorder %v10008, 0
  %v10011 = vxor.u32 %v10005, 2147483648
  %v10012 = vsel %vm10010, %v10004, %v10011
  %vm10013 = vcmp.eq.s32.totalorder %v10008, 2
  %v10014 = vxor.u32 %v10004, 2147483648
  %v10015 = vsel %vm10013, %v10014, %v10005
  %v10016 = vsel %vm10009, %v10012, %v10015
  %v10017 = vsel %vm10006, nan, %v10016
  %v10018 = vand.u32 2147483647, %v7823
  %vm10019 = vcmp.le.f32.partialorder %v10018, 0.7853982
  %vm10020 = vcmp.lt.s32.totalorder %v7823, 0
  %v10021 = vand.u32 %v7823, 2139095040
  %v10022 = vshrl.u32 %v10021, 23
  %v10023 = vsub.s32 %v10022, 127
  %v10024 = vand.u32 2147483647, %v7823
  %v10025 = vand.u32 %v10024, 8388607
  %v10026 = vor.u32 %v10025, 8388608
  %v10027 = vsub.s32 0, %v10026
  %v10028 = vadd.s32 %v10023, 1
  %vm10029 = vcmp.gt.s32.totalorder %v10028, 0
  %v10030 = vsel %vm10029, %v10028, 0
  %v10031 = vshrl.u32 %v10030, 5
  %v10032 = vand.u32 %v10030, 31
  %v10033 = vsub.s32 32, %v10032
  %v10034 = vshrl.u32 683565275, %v10033
  %v10035 = vshll.u32 683565275, %v10032
  %v10036 = vshrl.u32 2475754826, %v10033
  %v10037 = vor.u32 %v10035, %v10036
  %v10038 = vshll.u32 2475754826, %v10032
  %v10039 = vshrl.u32 2131351028, %v10033
  %v10040 = vor.u32 %v10038, %v10039
  %v10041 = vshll.u32 2131351028, %v10032
  %v10042 = vshrl.u32 2102212464, %v10033
  %v10043 = vor.u32 %v10041, %v10042
  %v10044 = vshll.u32 2102212464, %v10032
  %v10045 = vshrl.u32 920167782, %v10033
  %v10046 = vor.u32 %v10044, %v10045
  %v10047 = vshll.u32 920167782, %v10032
  %v10048 = vshrl.u32 1326507024, %v10033
  %v10049 = vor.u32 %v10047, %v10048
  %vm10050 = vcmp.lt.s32.totalorder %v10031, 1
  %vm10051 = vcmp.lt.s32.totalorder %v10031, 2
  %vm10052 = vcmp.lt.s32.totalorder %v10031, 3
  %vm10053 = vcmp.lt.s32.totalorder %v10031, 4
  %v10054 = vsel %vm10050, %v10034, %v10037
  %v10055 = vsel %vm10053, %v10043, 2102212464
  %v10056 = vsel %vm10052, %v10040, %v10055
  %v10057 = vsel %vm10051, %v10054, %v10056
  %v10058 = vsel %vm10050, %v10037, %v10040
  %v10059 = vsel %vm10053, %v10046, 920167782
  %v10060 = vsel %vm10052, %v10043, %v10059
  %v10061 = vsel %vm10051, %v10058, %v10060
  %v10062 = vsel %vm10050, %v10040, %v10043
  %v10063 = vsel %vm10053, %v10049, 1326507024
  %v10064 = vsel %vm10052, %v10046, %v10063
  %v10065 = vsel %vm10051, %v10062, %v10064
  %v10066 = vshll.u32 %v10026, 8
  %v10067 = vmul.u32.u64.compose %v10066, %v10065
  %v10068 = vextract.low.u32 %v10067
  %v10069 = vextract.high.u32 %v10067
  %v10070 = vmul.u32.u64.compose %v10066, %v10061
  %v10071 = vextract.low.u32 %v10070
  %v10072 = vextract.high.u32 %v10070
  %v10073 = vmul.u32 %v10066, %v10057
  %v10074 = vadd.s32 %v10069, %v10071
  %vm10075 = vc.u32 %v10069, %v10071
  %v10076 = vadd.s32 %v10072, 1
  %v10077 = vsel %vm10075, %v10076, %v10072
  %v10078 = vadd.s32 %v10073, %v10077
  %v10079 = vadd.s32 %v10078, 536870912
  %v10080 = vshrl.u32 %v10079, 30
  %v10081 = vshll.u32 %v10080, 30
  %v10082 = vsub.s32 %v10078, %v10081
  %vm10083 = vcmp.lt.s32.totalorder %v10082, 0
  %v10084 = vsub.s32 0, %v10082
  %v10085 = vsel %vm10083, %v10084, %v10082
  %v10086 = vclz %v10085
  %v10087 = vsub.s32 %v10086, 2
  %vm10088 = vcmp.gt.s32.totalorder 0, %v10087
  %v10089 = vsel %vm10088, 0, %v10087
  %v10090 = vsub.s32 32, %v10089
  %v10091 = vshll.u32 %v10082, %v10089
  %v10092 = vshrl.u32 %v10074, %v10090
  %v10093 = vor.u32 %v10091, %v10092
  %v10094 = vsub.s32 4294967266, %v10089
  %v10095 = vadd.s32 %v10094, 127
  %v10096 = vshll.u32 %v10095, 23
  %v10097 = vor.u32 4788187, %v10096
  %v10098 = vand.u32 2147483647, %v10097
  %v10100 = vcvt.s32.f32 %v10093
  %v10101 = vmul.f32 %v10100, %v10098
  %v10102 = vxor.u32 %v10101, 2147483648
  %v10103 = vsel %vm10020, %v10102, %v10101
  %v10104 = vsub.s32 4, %v10080
  %v10105 = vsel %vm10020, %v10104, %v10080
  %v10106 = vsel %vm10019, %v7823, %v10103
  %v10107 = vsel %vm10019, 0, %v10105
  %v10108 = vcosq.f32.pop %v10106
  %v10109 = vsinq.f32.pop %v10106
  %vm10110 = vweird.f32 %v7823
  %v10111 = vadd.s32 %v10107, 3
  %v10112 = vand.u32 %v10111, 3
  %vm10113 = vcmp.lt.s32.totalorder %v10112, 2
  %vm10114 = vcmp.eq.s32.totalorder %v10112, 0
  %v10115 = vxor.u32 %v10109, 2147483648
  %v10116 = vsel %vm10114, %v10108, %v10115
  %vm10117 = vcmp.eq.s32.totalorder %v10112, 2
  %v10118 = vxor.u32 %v10108, 2147483648
  %v10119 = vsel %vm10117, %v10118, %v10109
  %v10120 = vsel %vm10113, %v10116, %v10119
  %v10121 = vsel %vm10110, nan, %v10120
  %v10122 = vand.u32 2147483647, %v7824
  %vm10123 = vcmp.le.f32.partialorder %v10122, 0.7853982
  %vm10124 = vcmp.lt.s32.totalorder %v7824, 0
  %v10125 = vand.u32 %v7824, 2139095040
  %v10126 = vshrl.u32 %v10125, 23
  %v10127 = vsub.s32 %v10126, 127
  %v10128 = vand.u32 2147483647, %v7824
  %v10129 = vand.u32 %v10128, 8388607
  %v10130 = vor.u32 %v10129, 8388608
  %v10131 = vsub.s32 0, %v10130
  %v10132 = vadd.s32 %v10127, 1
  %vm10133 = vcmp.gt.s32.totalorder %v10132, 0
  %v10134 = vsel %vm10133, %v10132, 0
  %v10135 = vshrl.u32 %v10134, 5
  %v10136 = vand.u32 %v10134, 31
  %v10137 = vsub.s32 32, %v10136
  %v10138 = vshrl.u32 683565275, %v10137
  %v10139 = vshll.u32 683565275, %v10136
  %v10140 = vshrl.u32 2475754826, %v10137
  %v10141 = vor.u32 %v10139, %v10140
  %v10142 = vshll.u32 2475754826, %v10136
  %v10143 = vshrl.u32 2131351028, %v10137
  %v10144 = vor.u32 %v10142, %v10143
  %v10145 = vshll.u32 2131351028, %v10136
  %v10146 = vshrl.u32 2102212464, %v10137
  %v10147 = vor.u32 %v10145, %v10146
  %v10148 = vshll.u32 2102212464, %v10136
  %v10149 = vshrl.u32 920167782, %v10137
  %v10150 = vor.u32 %v10148, %v10149
  %v10151 = vshll.u32 920167782, %v10136
  %v10152 = vshrl.u32 1326507024, %v10137
  %v10153 = vor.u32 %v10151, %v10152
  %vm10154 = vcmp.lt.s32.totalorder %v10135, 1
  %vm10155 = vcmp.lt.s32.totalorder %v10135, 2
  %vm10156 = vcmp.lt.s32.totalorder %v10135, 3
  %vm10157 = vcmp.lt.s32.totalorder %v10135, 4
  %v10158 = vsel %vm10154, %v10138, %v10141
  %v10159 = vsel %vm10157, %v10147, 2102212464
  %v10160 = vsel %vm10156, %v10144, %v10159
  %v10161 = vsel %vm10155, %v10158, %v10160
  %v10162 = vsel %vm10154, %v10141, %v10144
  %v10163 = vsel %vm10157, %v10150, 920167782
  %v10164 = vsel %vm10156, %v10147, %v10163
  %v10165 = vsel %vm10155, %v10162, %v10164
  %v10166 = vsel %vm10154, %v10144, %v10147
  %v10167 = vsel %vm10157, %v10153, 1326507024
  %v10168 = vsel %vm10156, %v10150, %v10167
  %v10169 = vsel %vm10155, %v10166, %v10168
  %v10170 = vshll.u32 %v10130, 8
  %v10171 = vmul.u32.u64.compose %v10170, %v10169
  %v10172 = vextract.low.u32 %v10171
  %v10173 = vextract.high.u32 %v10171
  %v10174 = vmul.u32.u64.compose %v10170, %v10165
  %v10175 = vextract.low.u32 %v10174
  %v10176 = vextract.high.u32 %v10174
  %v10177 = vmul.u32 %v10170, %v10161
  %v10178 = vadd.s32 %v10173, %v10175
  %vm10179 = vc.u32 %v10173, %v10175
  %v10180 = vadd.s32 %v10176, 1
  %v10181 = vsel %vm10179, %v10180, %v10176
  %v10182 = vadd.s32 %v10177, %v10181
  %v10183 = vadd.s32 %v10182, 536870912
  %v10184 = vshrl.u32 %v10183, 30
  %v10185 = vshll.u32 %v10184, 30
  %v10186 = vsub.s32 %v10182, %v10185
  %vm10187 = vcmp.lt.s32.totalorder %v10186, 0
  %v10188 = vsub.s32 0, %v10186
  %v10189 = vsel %vm10187, %v10188, %v10186
  %v10190 = vclz %v10189
  %v10191 = vsub.s32 %v10190, 2
  %vm10192 = vcmp.gt.s32.totalorder 0, %v10191
  %v10193 = vsel %vm10192, 0, %v10191
  %v10194 = vsub.s32 32, %v10193
  %v10195 = vshll.u32 %v10186, %v10193
  %v10196 = vshrl.u32 %v10178, %v10194
  %v10197 = vor.u32 %v10195, %v10196
  %v10198 = vsub.s32 4294967266, %v10193
  %v10199 = vadd.s32 %v10198, 127
  %v10200 = vshll.u32 %v10199, 23
  %v10201 = vor.u32 4788187, %v10200
  %v10202 = vand.u32 2147483647, %v10201
  %v10204 = vcvt.s32.f32 %v10197
  %v10205 = vmul.f32 %v10204, %v10202
  %v10206 = vxor.u32 %v10205, 2147483648
  %v10207 = vsel %vm10124, %v10206, %v10205
  %v10208 = vsub.s32 4, %v10184
  %v10209 = vsel %vm10124, %v10208, %v10184
  %v10210 = vsel %vm10123, %v7824, %v10207
  %v10211 = vsel %vm10123, 0, %v10209
  %v10212 = vcosq.f32.pop %v10210
  %v10213 = vsinq.f32.pop %v10210
  %vm10214 = vweird.f32 %v7824
  %v10215 = vadd.s32 %v10211, 3
  %v10216 = vand.u32 %v10215, 3
  %vm10217 = vcmp.lt.s32.totalorder %v10216, 2
  %vm10218 = vcmp.eq.s32.totalorder %v10216, 0
  %v10219 = vxor.u32 %v10213, 2147483648
  %v10220 = vsel %vm10218, %v10212, %v10219
  %vm10221 = vcmp.eq.s32.totalorder %v10216, 2
  %v10222 = vxor.u32 %v10212, 2147483648
  %v10223 = vsel %vm10221, %v10222, %v10213
  %v10224 = vsel %vm10217, %v10220, %v10223
  %v10225 = vsel %vm10214, nan, %v10224
  %v10226 = vand.u32 2147483647, %v7825
  %vm10227 = vcmp.le.f32.partialorder %v10226, 0.7853982
  %vm10228 = vcmp.lt.s32.totalorder %v7825, 0
  %v10229 = vand.u32 %v7825, 2139095040
  %v10230 = vshrl.u32 %v10229, 23
  %v10231 = vsub.s32 %v10230, 127
  %v10232 = vand.u32 2147483647, %v7825
  %v10233 = vand.u32 %v10232, 8388607
  %v10234 = vor.u32 %v10233, 8388608
  %v10235 = vsub.s32 0, %v10234
  %v10236 = vadd.s32 %v10231, 1
  %vm10237 = vcmp.gt.s32.totalorder %v10236, 0
  %v10238 = vsel %vm10237, %v10236, 0
  %v10239 = vshrl.u32 %v10238, 5
  %v10240 = vand.u32 %v10238, 31
  %v10241 = vsub.s32 32, %v10240
  %v10242 = vshrl.u32 683565275, %v10241
  %v10243 = vshll.u32 683565275, %v10240
  %v10244 = vshrl.u32 2475754826, %v10241
  %v10245 = vor.u32 %v10243, %v10244
  %v10246 = vshll.u32 2475754826, %v10240
  %v10247 = vshrl.u32 2131351028, %v10241
  %v10248 = vor.u32 %v10246, %v10247
  %v10249 = vshll.u32 2131351028, %v10240
  %v10250 = vshrl.u32 2102212464, %v10241
  %v10251 = vor.u32 %v10249, %v10250
  %v10252 = vshll.u32 2102212464, %v10240
  %v10253 = vshrl.u32 920167782, %v10241
  %v10254 = vor.u32 %v10252, %v10253
  %v10255 = vshll.u32 920167782, %v10240
  %v10256 = vshrl.u32 1326507024, %v10241
  %v10257 = vor.u32 %v10255, %v10256
  %vm10258 = vcmp.lt.s32.totalorder %v10239, 1
  %vm10259 = vcmp.lt.s32.totalorder %v10239, 2
  %vm10260 = vcmp.lt.s32.totalorder %v10239, 3
  %vm10261 = vcmp.lt.s32.totalorder %v10239, 4
  %v10262 = vsel %vm10258, %v10242, %v10245
  %v10263 = vsel %vm10261, %v10251, 2102212464
  %v10264 = vsel %vm10260, %v10248, %v10263
  %v10265 = vsel %vm10259, %v10262, %v10264
  %v10266 = vsel %vm10258, %v10245, %v10248
  %v10267 = vsel %vm10261, %v10254, 920167782
  %v10268 = vsel %vm10260, %v10251, %v10267
  %v10269 = vsel %vm10259, %v10266, %v10268
  %v10270 = vsel %vm10258, %v10248, %v10251
  %v10271 = vsel %vm10261, %v10257, 1326507024
  %v10272 = vsel %vm10260, %v10254, %v10271
  %v10273 = vsel %vm10259, %v10270, %v10272
  %v10274 = vshll.u32 %v10234, 8
  %v10275 = vmul.u32.u64.compose %v10274, %v10273
  %v10276 = vextract.low.u32 %v10275
  %v10277 = vextract.high.u32 %v10275
  %v10278 = vmul.u32.u64.compose %v10274, %v10269
  %v10279 = vextract.low.u32 %v10278
  %v10280 = vextract.high.u32 %v10278
  %v10281 = vmul.u32 %v10274, %v10265
  %v10282 = vadd.s32 %v10277, %v10279
  %vm10283 = vc.u32 %v10277, %v10279
  %v10284 = vadd.s32 %v10280, 1
  %v10285 = vsel %vm10283, %v10284, %v10280
  %v10286 = vadd.s32 %v10281, %v10285
  %v10287 = vadd.s32 %v10286, 536870912
  %v10288 = vshrl.u32 %v10287, 30
  %v10289 = vshll.u32 %v10288, 30
  %v10290 = vsub.s32 %v10286, %v10289
  %vm10291 = vcmp.lt.s32.totalorder %v10290, 0
  %v10292 = vsub.s32 0, %v10290
  %v10293 = vsel %vm10291, %v10292, %v10290
  %v10294 = vclz %v10293
  %v10295 = vsub.s32 %v10294, 2
  %vm10296 = vcmp.gt.s32.totalorder 0, %v10295
  %v10297 = vsel %vm10296, 0, %v10295
  %v10298 = vsub.s32 32, %v10297
  %v10299 = vshll.u32 %v10290, %v10297
  %v10300 = vshrl.u32 %v10282, %v10298
  %v10301 = vor.u32 %v10299, %v10300
  %v10302 = vsub.s32 4294967266, %v10297
  %v10303 = vadd.s32 %v10302, 127
  %v10304 = vshll.u32 %v10303, 23
  %v10305 = vor.u32 4788187, %v10304
  %v10306 = vand.u32 2147483647, %v10305
  %v10308 = vcvt.s32.f32 %v10301
  %v10309 = vmul.f32 %v10308, %v10306
  %v10310 = vxor.u32 %v10309, 2147483648
  %v10311 = vsel %vm10228, %v10310, %v10309
  %v10312 = vsub.s32 4, %v10288
  %v10313 = vsel %vm10228, %v10312, %v10288
  %v10314 = vsel %vm10227, %v7825, %v10311
  %v10315 = vsel %vm10227, 0, %v10313
  %v10316 = vcosq.f32.pop %v10314
  %v10317 = vsinq.f32.pop %v10314
  %vm10318 = vweird.f32 %v7825
  %v10319 = vadd.s32 %v10315, 3
  %v10320 = vand.u32 %v10319, 3
  %vm10321 = vcmp.lt.s32.totalorder %v10320, 2
  %vm10322 = vcmp.eq.s32.totalorder %v10320, 0
  %v10323 = vxor.u32 %v10317, 2147483648
  %v10324 = vsel %vm10322, %v10316, %v10323
  %vm10325 = vcmp.eq.s32.totalorder %v10320, 2
  %v10326 = vxor.u32 %v10316, 2147483648
  %v10327 = vsel %vm10325, %v10326, %v10317
  %v10328 = vsel %vm10321, %v10324, %v10327
  %v10329 = vsel %vm10318, nan, %v10328
  %v10330 = vand.u32 2147483647, %v7826
  %vm10331 = vcmp.le.f32.partialorder %v10330, 0.7853982
  %vm10332 = vcmp.lt.s32.totalorder %v7826, 0
  %v10333 = vand.u32 %v7826, 2139095040
  %v10334 = vshrl.u32 %v10333, 23
  %v10335 = vsub.s32 %v10334, 127
  %v10336 = vand.u32 2147483647, %v7826
  %v10337 = vand.u32 %v10336, 8388607
  %v10338 = vor.u32 %v10337, 8388608
  %v10339 = vsub.s32 0, %v10338
  %v10340 = vadd.s32 %v10335, 1
  %vm10341 = vcmp.gt.s32.totalorder %v10340, 0
  %v10342 = vsel %vm10341, %v10340, 0
  %v10343 = vshrl.u32 %v10342, 5
  %v10344 = vand.u32 %v10342, 31
  %v10345 = vsub.s32 32, %v10344
  %v10346 = vshrl.u32 683565275, %v10345
  %v10347 = vshll.u32 683565275, %v10344
  %v10348 = vshrl.u32 2475754826, %v10345
  %v10349 = vor.u32 %v10347, %v10348
  %v10350 = vshll.u32 2475754826, %v10344
  %v10351 = vshrl.u32 2131351028, %v10345
  %v10352 = vor.u32 %v10350, %v10351
  %v10353 = vshll.u32 2131351028, %v10344
  %v10354 = vshrl.u32 2102212464, %v10345
  %v10355 = vor.u32 %v10353, %v10354
  %v10356 = vshll.u32 2102212464, %v10344
  %v10357 = vshrl.u32 920167782, %v10345
  %v10358 = vor.u32 %v10356, %v10357
  %v10359 = vshll.u32 920167782, %v10344
  %v10360 = vshrl.u32 1326507024, %v10345
  %v10361 = vor.u32 %v10359, %v10360
  %vm10362 = vcmp.lt.s32.totalorder %v10343, 1
  %vm10363 = vcmp.lt.s32.totalorder %v10343, 2
  %vm10364 = vcmp.lt.s32.totalorder %v10343, 3
  %vm10365 = vcmp.lt.s32.totalorder %v10343, 4
  %v10366 = vsel %vm10362, %v10346, %v10349
  %v10367 = vsel %vm10365, %v10355, 2102212464
  %v10368 = vsel %vm10364, %v10352, %v10367
  %v10369 = vsel %vm10363, %v10366, %v10368
  %v10370 = vsel %vm10362, %v10349, %v10352
  %v10371 = vsel %vm10365, %v10358, 920167782
  %v10372 = vsel %vm10364, %v10355, %v10371
  %v10373 = vsel %vm10363, %v10370, %v10372
  %v10374 = vsel %vm10362, %v10352, %v10355
  %v10375 = vsel %vm10365, %v10361, 1326507024
  %v10376 = vsel %vm10364, %v10358, %v10375
  %v10377 = vsel %vm10363, %v10374, %v10376
  %v10378 = vshll.u32 %v10338, 8
  %v10379 = vmul.u32.u64.compose %v10378, %v10377
  %v10380 = vextract.low.u32 %v10379
  %v10381 = vextract.high.u32 %v10379
  %v10382 = vmul.u32.u64.compose %v10378, %v10373
  %v10383 = vextract.low.u32 %v10382
  %v10384 = vextract.high.u32 %v10382
  %v10385 = vmul.u32 %v10378, %v10369
  %v10386 = vadd.s32 %v10381, %v10383
  %vm10387 = vc.u32 %v10381, %v10383
  %v10388 = vadd.s32 %v10384, 1
  %v10389 = vsel %vm10387, %v10388, %v10384
  %v10390 = vadd.s32 %v10385, %v10389
  %v10391 = vadd.s32 %v10390, 536870912
  %v10392 = vshrl.u32 %v10391, 30
  %v10393 = vshll.u32 %v10392, 30
  %v10394 = vsub.s32 %v10390, %v10393
  %vm10395 = vcmp.lt.s32.totalorder %v10394, 0
  %v10396 = vsub.s32 0, %v10394
  %v10397 = vsel %vm10395, %v10396, %v10394
  %v10398 = vclz %v10397
  %v10399 = vsub.s32 %v10398, 2
  %vm10400 = vcmp.gt.s32.totalorder 0, %v10399
  %v10401 = vsel %vm10400, 0, %v10399
  %v10402 = vsub.s32 32, %v10401
  %v10403 = vshll.u32 %v10394, %v10401
  %v10404 = vshrl.u32 %v10386, %v10402
  %v10405 = vor.u32 %v10403, %v10404
  %v10406 = vsub.s32 4294967266, %v10401
  %v10407 = vadd.s32 %v10406, 127
  %v10408 = vshll.u32 %v10407, 23
  %v10409 = vor.u32 4788187, %v10408
  %v10410 = vand.u32 2147483647, %v10409
  %v10412 = vcvt.s32.f32 %v10405
  %v10413 = vmul.f32 %v10412, %v10410
  %v10414 = vxor.u32 %v10413, 2147483648
  %v10415 = vsel %vm10332, %v10414, %v10413
  %v10416 = vsub.s32 4, %v10392
  %v10417 = vsel %vm10332, %v10416, %v10392
  %v10418 = vsel %vm10331, %v7826, %v10415
  %v10419 = vsel %vm10331, 0, %v10417
  %v10420 = vcosq.f32.pop %v10418
  %v10421 = vsinq.f32.pop %v10418
  %vm10422 = vweird.f32 %v7826
  %v10423 = vadd.s32 %v10419, 3
  %v10424 = vand.u32 %v10423, 3
  %vm10425 = vcmp.lt.s32.totalorder %v10424, 2
  %vm10426 = vcmp.eq.s32.totalorder %v10424, 0
  %v10427 = vxor.u32 %v10421, 2147483648
  %v10428 = vsel %vm10426, %v10420, %v10427
  %vm10429 = vcmp.eq.s32.totalorder %v10424, 2
  %v10430 = vxor.u32 %v10420, 2147483648
  %v10431 = vsel %vm10429, %v10430, %v10421
  %v10432 = vsel %vm10425, %v10428, %v10431
  %v10433 = vsel %vm10422, nan, %v10432
  %v10434 = vand.u32 2147483647, %v7827
  %vm10435 = vcmp.le.f32.partialorder %v10434, 0.7853982
  %vm10436 = vcmp.lt.s32.totalorder %v7827, 0
  %v10437 = vand.u32 %v7827, 2139095040
  %v10438 = vshrl.u32 %v10437, 23
  %v10439 = vsub.s32 %v10438, 127
  %v10440 = vand.u32 2147483647, %v7827
  %v10441 = vand.u32 %v10440, 8388607
  %v10442 = vor.u32 %v10441, 8388608
  %v10443 = vsub.s32 0, %v10442
  %v10444 = vadd.s32 %v10439, 1
  %vm10445 = vcmp.gt.s32.totalorder %v10444, 0
  %v10446 = vsel %vm10445, %v10444, 0
  %v10447 = vshrl.u32 %v10446, 5
  %v10448 = vand.u32 %v10446, 31
  %v10449 = vsub.s32 32, %v10448
  %v10450 = vshrl.u32 683565275, %v10449
  %v10451 = vshll.u32 683565275, %v10448
  %v10452 = vshrl.u32 2475754826, %v10449
  %v10453 = vor.u32 %v10451, %v10452
  %v10454 = vshll.u32 2475754826, %v10448
  %v10455 = vshrl.u32 2131351028, %v10449
  %v10456 = vor.u32 %v10454, %v10455
  %v10457 = vshll.u32 2131351028, %v10448
  %v10458 = vshrl.u32 2102212464, %v10449
  %v10459 = vor.u32 %v10457, %v10458
  %v10460 = vshll.u32 2102212464, %v10448
  %v10461 = vshrl.u32 920167782, %v10449
  %v10462 = vor.u32 %v10460, %v10461
  %v10463 = vshll.u32 920167782, %v10448
  %v10464 = vshrl.u32 1326507024, %v10449
  %v10465 = vor.u32 %v10463, %v10464
  %vm10466 = vcmp.lt.s32.totalorder %v10447, 1
  %vm10467 = vcmp.lt.s32.totalorder %v10447, 2
  %vm10468 = vcmp.lt.s32.totalorder %v10447, 3
  %vm10469 = vcmp.lt.s32.totalorder %v10447, 4
  %v10470 = vsel %vm10466, %v10450, %v10453
  %v10471 = vsel %vm10469, %v10459, 2102212464
  %v10472 = vsel %vm10468, %v10456, %v10471
  %v10473 = vsel %vm10467, %v10470, %v10472
  %v10474 = vsel %vm10466, %v10453, %v10456
  %v10475 = vsel %vm10469, %v10462, 920167782
  %v10476 = vsel %vm10468, %v10459, %v10475
  %v10477 = vsel %vm10467, %v10474, %v10476
  %v10478 = vsel %vm10466, %v10456, %v10459
  %v10479 = vsel %vm10469, %v10465, 1326507024
  %v10480 = vsel %vm10468, %v10462, %v10479
  %v10481 = vsel %vm10467, %v10478, %v10480
  %v10482 = vshll.u32 %v10442, 8
  %v10483 = vmul.u32.u64.compose %v10482, %v10481
  %v10484 = vextract.low.u32 %v10483
  %v10485 = vextract.high.u32 %v10483
  %v10486 = vmul.u32.u64.compose %v10482, %v10477
  %v10487 = vextract.low.u32 %v10486
  %v10488 = vextract.high.u32 %v10486
  %v10489 = vmul.u32 %v10482, %v10473
  %v10490 = vadd.s32 %v10485, %v10487
  %vm10491 = vc.u32 %v10485, %v10487
  %v10492 = vadd.s32 %v10488, 1
  %v10493 = vsel %vm10491, %v10492, %v10488
  %v10494 = vadd.s32 %v10489, %v10493
  %v10495 = vadd.s32 %v10494, 536870912
  %v10496 = vshrl.u32 %v10495, 30
  %v10497 = vshll.u32 %v10496, 30
  %v10498 = vsub.s32 %v10494, %v10497
  %vm10499 = vcmp.lt.s32.totalorder %v10498, 0
  %v10500 = vsub.s32 0, %v10498
  %v10501 = vsel %vm10499, %v10500, %v10498
  %v10502 = vclz %v10501
  %v10503 = vsub.s32 %v10502, 2
  %vm10504 = vcmp.gt.s32.totalorder 0, %v10503
  %v10505 = vsel %vm10504, 0, %v10503
  %v10506 = vsub.s32 32, %v10505
  %v10507 = vshll.u32 %v10498, %v10505
  %v10508 = vshrl.u32 %v10490, %v10506
  %v10509 = vor.u32 %v10507, %v10508
  %v10510 = vsub.s32 4294967266, %v10505
  %v10511 = vadd.s32 %v10510, 127
  %v10512 = vshll.u32 %v10511, 23
  %v10513 = vor.u32 4788187, %v10512
  %v10514 = vand.u32 2147483647, %v10513
  %v10516 = vcvt.s32.f32 %v10509
  %v10517 = vmul.f32 %v10516, %v10514
  %v10518 = vxor.u32 %v10517, 2147483648
  %v10519 = vsel %vm10436, %v10518, %v10517
  %v10520 = vsub.s32 4, %v10496
  %v10521 = vsel %vm10436, %v10520, %v10496
  %v10522 = vsel %vm10435, %v7827, %v10519
  %v10523 = vsel %vm10435, 0, %v10521
  %v10524 = vcosq.f32.pop %v10522
  %v10525 = vsinq.f32.pop %v10522
  %vm10526 = vweird.f32 %v7827
  %v10527 = vadd.s32 %v10523, 3
  %v10528 = vand.u32 %v10527, 3
  %vm10529 = vcmp.lt.s32.totalorder %v10528, 2
  %vm10530 = vcmp.eq.s32.totalorder %v10528, 0
  %v10531 = vxor.u32 %v10525, 2147483648
  %v10532 = vsel %vm10530, %v10524, %v10531
  %vm10533 = vcmp.eq.s32.totalorder %v10528, 2
  %v10534 = vxor.u32 %v10524, 2147483648
  %v10535 = vsel %vm10533, %v10534, %v10525
  %v10536 = vsel %vm10529, %v10532, %v10535
  %v10537 = vsel %vm10526, nan, %v10536
  %v10538 = vand.u32 2147483647, %v7828
  %vm10539 = vcmp.le.f32.partialorder %v10538, 0.7853982
  %vm10540 = vcmp.lt.s32.totalorder %v7828, 0
  %v10541 = vand.u32 %v7828, 2139095040
  %v10542 = vshrl.u32 %v10541, 23
  %v10543 = vsub.s32 %v10542, 127
  %v10544 = vand.u32 2147483647, %v7828
  %v10545 = vand.u32 %v10544, 8388607
  %v10546 = vor.u32 %v10545, 8388608
  %v10547 = vsub.s32 0, %v10546
  %v10548 = vadd.s32 %v10543, 1
  %vm10549 = vcmp.gt.s32.totalorder %v10548, 0
  %v10550 = vsel %vm10549, %v10548, 0
  %v10551 = vshrl.u32 %v10550, 5
  %v10552 = vand.u32 %v10550, 31
  %v10553 = vsub.s32 32, %v10552
  %v10554 = vshrl.u32 683565275, %v10553
  %v10555 = vshll.u32 683565275, %v10552
  %v10556 = vshrl.u32 2475754826, %v10553
  %v10557 = vor.u32 %v10555, %v10556
  %v10558 = vshll.u32 2475754826, %v10552
  %v10559 = vshrl.u32 2131351028, %v10553
  %v10560 = vor.u32 %v10558, %v10559
  %v10561 = vshll.u32 2131351028, %v10552
  %v10562 = vshrl.u32 2102212464, %v10553
  %v10563 = vor.u32 %v10561, %v10562
  %v10564 = vshll.u32 2102212464, %v10552
  %v10565 = vshrl.u32 920167782, %v10553
  %v10566 = vor.u32 %v10564, %v10565
  %v10567 = vshll.u32 920167782, %v10552
  %v10568 = vshrl.u32 1326507024, %v10553
  %v10569 = vor.u32 %v10567, %v10568
  %vm10570 = vcmp.lt.s32.totalorder %v10551, 1
  %vm10571 = vcmp.lt.s32.totalorder %v10551, 2
  %vm10572 = vcmp.lt.s32.totalorder %v10551, 3
  %vm10573 = vcmp.lt.s32.totalorder %v10551, 4
  %v10574 = vsel %vm10570, %v10554, %v10557
  %v10575 = vsel %vm10573, %v10563, 2102212464
  %v10576 = vsel %vm10572, %v10560, %v10575
  %v10577 = vsel %vm10571, %v10574, %v10576
  %v10578 = vsel %vm10570, %v10557, %v10560
  %v10579 = vsel %vm10573, %v10566, 920167782
  %v10580 = vsel %vm10572, %v10563, %v10579
  %v10581 = vsel %vm10571, %v10578, %v10580
  %v10582 = vsel %vm10570, %v10560, %v10563
  %v10583 = vsel %vm10573, %v10569, 1326507024
  %v10584 = vsel %vm10572, %v10566, %v10583
  %v10585 = vsel %vm10571, %v10582, %v10584
  %v10586 = vshll.u32 %v10546, 8
  %v10587 = vmul.u32.u64.compose %v10586, %v10585
  %v10588 = vextract.low.u32 %v10587
  %v10589 = vextract.high.u32 %v10587
  %v10590 = vmul.u32.u64.compose %v10586, %v10581
  %v10591 = vextract.low.u32 %v10590
  %v10592 = vextract.high.u32 %v10590
  %v10593 = vmul.u32 %v10586, %v10577
  %v10594 = vadd.s32 %v10589, %v10591
  %vm10595 = vc.u32 %v10589, %v10591
  %v10596 = vadd.s32 %v10592, 1
  %v10597 = vsel %vm10595, %v10596, %v10592
  %v10598 = vadd.s32 %v10593, %v10597
  %v10599 = vadd.s32 %v10598, 536870912
  %v10600 = vshrl.u32 %v10599, 30
  %v10601 = vshll.u32 %v10600, 30
  %v10602 = vsub.s32 %v10598, %v10601
  %vm10603 = vcmp.lt.s32.totalorder %v10602, 0
  %v10604 = vsub.s32 0, %v10602
  %v10605 = vsel %vm10603, %v10604, %v10602
  %v10606 = vclz %v10605
  %v10607 = vsub.s32 %v10606, 2
  %vm10608 = vcmp.gt.s32.totalorder 0, %v10607
  %v10609 = vsel %vm10608, 0, %v10607
  %v10610 = vsub.s32 32, %v10609
  %v10611 = vshll.u32 %v10602, %v10609
  %v10612 = vshrl.u32 %v10594, %v10610
  %v10613 = vor.u32 %v10611, %v10612
  %v10614 = vsub.s32 4294967266, %v10609
  %v10615 = vadd.s32 %v10614, 127
  %v10616 = vshll.u32 %v10615, 23
  %v10617 = vor.u32 4788187, %v10616
  %v10618 = vand.u32 2147483647, %v10617
  %v10620 = vcvt.s32.f32 %v10613
  %v10621 = vmul.f32 %v10620, %v10618
  %v10622 = vxor.u32 %v10621, 2147483648
  %v10623 = vsel %vm10540, %v10622, %v10621
  %v10624 = vsub.s32 4, %v10600
  %v10625 = vsel %vm10540, %v10624, %v10600
  %v10626 = vsel %vm10539, %v7828, %v10623
  %v10627 = vsel %vm10539, 0, %v10625
  %v10628 = vcosq.f32.pop %v10626
  %v10629 = vsinq.f32.pop %v10626
  %vm10630 = vweird.f32 %v7828
  %v10631 = vadd.s32 %v10627, 3
  %v10632 = vand.u32 %v10631, 3
  %vm10633 = vcmp.lt.s32.totalorder %v10632, 2
  %vm10634 = vcmp.eq.s32.totalorder %v10632, 0
  %v10635 = vxor.u32 %v10629, 2147483648
  %v10636 = vsel %vm10634, %v10628, %v10635
  %vm10637 = vcmp.eq.s32.totalorder %v10632, 2
  %v10638 = vxor.u32 %v10628, 2147483648
  %v10639 = vsel %vm10637, %v10638, %v10629
  %v10640 = vsel %vm10633, %v10636, %v10639
  %v10641 = vsel %vm10630, nan, %v10640
  %v10642 = vand.u32 2147483647, %v7829
  %vm10643 = vcmp.le.f32.partialorder %v10642, 0.7853982
  %vm10644 = vcmp.lt.s32.totalorder %v7829, 0
  %v10645 = vand.u32 %v7829, 2139095040
  %v10646 = vshrl.u32 %v10645, 23
  %v10647 = vsub.s32 %v10646, 127
  %v10648 = vand.u32 2147483647, %v7829
  %v10649 = vand.u32 %v10648, 8388607
  %v10650 = vor.u32 %v10649, 8388608
  %v10651 = vsub.s32 0, %v10650
  %v10652 = vadd.s32 %v10647, 1
  %vm10653 = vcmp.gt.s32.totalorder %v10652, 0
  %v10654 = vsel %vm10653, %v10652, 0
  %v10655 = vshrl.u32 %v10654, 5
  %v10656 = vand.u32 %v10654, 31
  %v10657 = vsub.s32 32, %v10656
  %v10658 = vshrl.u32 683565275, %v10657
  %v10659 = vshll.u32 683565275, %v10656
  %v10660 = vshrl.u32 2475754826, %v10657
  %v10661 = vor.u32 %v10659, %v10660
  %v10662 = vshll.u32 2475754826, %v10656
  %v10663 = vshrl.u32 2131351028, %v10657
  %v10664 = vor.u32 %v10662, %v10663
  %v10665 = vshll.u32 2131351028, %v10656
  %v10666 = vshrl.u32 2102212464, %v10657
  %v10667 = vor.u32 %v10665, %v10666
  %v10668 = vshll.u32 2102212464, %v10656
  %v10669 = vshrl.u32 920167782, %v10657
  %v10670 = vor.u32 %v10668, %v10669
  %v10671 = vshll.u32 920167782, %v10656
  %v10672 = vshrl.u32 1326507024, %v10657
  %v10673 = vor.u32 %v10671, %v10672
  %vm10674 = vcmp.lt.s32.totalorder %v10655, 1
  %vm10675 = vcmp.lt.s32.totalorder %v10655, 2
  %vm10676 = vcmp.lt.s32.totalorder %v10655, 3
  %vm10677 = vcmp.lt.s32.totalorder %v10655, 4
  %v10678 = vsel %vm10674, %v10658, %v10661
  %v10679 = vsel %vm10677, %v10667, 2102212464
  %v10680 = vsel %vm10676, %v10664, %v10679
  %v10681 = vsel %vm10675, %v10678, %v10680
  %v10682 = vsel %vm10674, %v10661, %v10664
  %v10683 = vsel %vm10677, %v10670, 920167782
  %v10684 = vsel %vm10676, %v10667, %v10683
  %v10685 = vsel %vm10675, %v10682, %v10684
  %v10686 = vsel %vm10674, %v10664, %v10667
  %v10687 = vsel %vm10677, %v10673, 1326507024
  %v10688 = vsel %vm10676, %v10670, %v10687
  %v10689 = vsel %vm10675, %v10686, %v10688
  %v10690 = vshll.u32 %v10650, 8
  %v10691 = vmul.u32.u64.compose %v10690, %v10689
  %v10692 = vextract.low.u32 %v10691
  %v10693 = vextract.high.u32 %v10691
  %v10694 = vmul.u32.u64.compose %v10690, %v10685
  %v10695 = vextract.low.u32 %v10694
  %v10696 = vextract.high.u32 %v10694
  %v10697 = vmul.u32 %v10690, %v10681
  %v10698 = vadd.s32 %v10693, %v10695
  %vm10699 = vc.u32 %v10693, %v10695
  %v10700 = vadd.s32 %v10696, 1
  %v10701 = vsel %vm10699, %v10700, %v10696
  %v10702 = vadd.s32 %v10697, %v10701
  %v10703 = vadd.s32 %v10702, 536870912
  %v10704 = vshrl.u32 %v10703, 30
  %v10705 = vshll.u32 %v10704, 30
  %v10706 = vsub.s32 %v10702, %v10705
  %vm10707 = vcmp.lt.s32.totalorder %v10706, 0
  %v10708 = vsub.s32 0, %v10706
  %v10709 = vsel %vm10707, %v10708, %v10706
  %v10710 = vclz %v10709
  %v10711 = vsub.s32 %v10710, 2
  %vm10712 = vcmp.gt.s32.totalorder 0, %v10711
  %v10713 = vsel %vm10712, 0, %v10711
  %v10714 = vsub.s32 32, %v10713
  %v10715 = vshll.u32 %v10706, %v10713
  %v10716 = vshrl.u32 %v10698, %v10714
  %v10717 = vor.u32 %v10715, %v10716
  %v10718 = vsub.s32 4294967266, %v10713
  %v10719 = vadd.s32 %v10718, 127
  %v10720 = vshll.u32 %v10719, 23
  %v10721 = vor.u32 4788187, %v10720
  %v10722 = vand.u32 2147483647, %v10721
  %v10724 = vcvt.s32.f32 %v10717
  %v10725 = vmul.f32 %v10724, %v10722
  %v10726 = vxor.u32 %v10725, 2147483648
  %v10727 = vsel %vm10644, %v10726, %v10725
  %v10728 = vsub.s32 4, %v10704
  %v10729 = vsel %vm10644, %v10728, %v10704
  %v10730 = vsel %vm10643, %v7829, %v10727
  %v10731 = vsel %vm10643, 0, %v10729
  %v10732 = vcosq.f32.pop %v10730
  %v10733 = vsinq.f32.pop %v10730
  %vm10734 = vweird.f32 %v7829
  %v10735 = vadd.s32 %v10731, 3
  %v10736 = vand.u32 %v10735, 3
  %vm10737 = vcmp.lt.s32.totalorder %v10736, 2
  %vm10738 = vcmp.eq.s32.totalorder %v10736, 0
  %v10739 = vxor.u32 %v10733, 2147483648
  %v10740 = vsel %vm10738, %v10732, %v10739
  %vm10741 = vcmp.eq.s32.totalorder %v10736, 2
  %v10742 = vxor.u32 %v10732, 2147483648
  %v10743 = vsel %vm10741, %v10742, %v10733
  %v10744 = vsel %vm10737, %v10740, %v10743
  %v10745 = vsel %vm10734, nan, %v10744
  %v10746 = vand.u32 2147483647, %v7830
  %vm10747 = vcmp.le.f32.partialorder %v10746, 0.7853982
  %vm10748 = vcmp.lt.s32.totalorder %v7830, 0
  %v10749 = vand.u32 %v7830, 2139095040
  %v10750 = vshrl.u32 %v10749, 23
  %v10751 = vsub.s32 %v10750, 127
  %v10752 = vand.u32 2147483647, %v7830
  %v10753 = vand.u32 %v10752, 8388607
  %v10754 = vor.u32 %v10753, 8388608
  %v10755 = vsub.s32 0, %v10754
  %v10756 = vadd.s32 %v10751, 1
  %vm10757 = vcmp.gt.s32.totalorder %v10756, 0
  %v10758 = vsel %vm10757, %v10756, 0
  %v10759 = vshrl.u32 %v10758, 5
  %v10760 = vand.u32 %v10758, 31
  %v10761 = vsub.s32 32, %v10760
  %v10762 = vshrl.u32 683565275, %v10761
  %v10763 = vshll.u32 683565275, %v10760
  %v10764 = vshrl.u32 2475754826, %v10761
  %v10765 = vor.u32 %v10763, %v10764
  %v10766 = vshll.u32 2475754826, %v10760
  %v10767 = vshrl.u32 2131351028, %v10761
  %v10768 = vor.u32 %v10766, %v10767
  %v10769 = vshll.u32 2131351028, %v10760
  %v10770 = vshrl.u32 2102212464, %v10761
  %v10771 = vor.u32 %v10769, %v10770
  %v10772 = vshll.u32 2102212464, %v10760
  %v10773 = vshrl.u32 920167782, %v10761
  %v10774 = vor.u32 %v10772, %v10773
  %v10775 = vshll.u32 920167782, %v10760
  %v10776 = vshrl.u32 1326507024, %v10761
  %v10777 = vor.u32 %v10775, %v10776
  %vm10778 = vcmp.lt.s32.totalorder %v10759, 1
  %vm10779 = vcmp.lt.s32.totalorder %v10759, 2
  %vm10780 = vcmp.lt.s32.totalorder %v10759, 3
  %vm10781 = vcmp.lt.s32.totalorder %v10759, 4
  %v10782 = vsel %vm10778, %v10762, %v10765
  %v10783 = vsel %vm10781, %v10771, 2102212464
  %v10784 = vsel %vm10780, %v10768, %v10783
  %v10785 = vsel %vm10779, %v10782, %v10784
  %v10786 = vsel %vm10778, %v10765, %v10768
  %v10787 = vsel %vm10781, %v10774, 920167782
  %v10788 = vsel %vm10780, %v10771, %v10787
  %v10789 = vsel %vm10779, %v10786, %v10788
  %v10790 = vsel %vm10778, %v10768, %v10771
  %v10791 = vsel %vm10781, %v10777, 1326507024
  %v10792 = vsel %vm10780, %v10774, %v10791
  %v10793 = vsel %vm10779, %v10790, %v10792
  %v10794 = vshll.u32 %v10754, 8
  %v10795 = vmul.u32.u64.compose %v10794, %v10793
  %v10796 = vextract.low.u32 %v10795
  %v10797 = vextract.high.u32 %v10795
  %v10798 = vmul.u32.u64.compose %v10794, %v10789
  %v10799 = vextract.low.u32 %v10798
  %v10800 = vextract.high.u32 %v10798
  %v10801 = vmul.u32 %v10794, %v10785
  %v10802 = vadd.s32 %v10797, %v10799
  %vm10803 = vc.u32 %v10797, %v10799
  %v10804 = vadd.s32 %v10800, 1
  %v10805 = vsel %vm10803, %v10804, %v10800
  %v10806 = vadd.s32 %v10801, %v10805
  %v10807 = vadd.s32 %v10806, 536870912
  %v10808 = vshrl.u32 %v10807, 30
  %v10809 = vshll.u32 %v10808, 30
  %v10810 = vsub.s32 %v10806, %v10809
  %vm10811 = vcmp.lt.s32.totalorder %v10810, 0
  %v10812 = vsub.s32 0, %v10810
  %v10813 = vsel %vm10811, %v10812, %v10810
  %v10814 = vclz %v10813
  %v10815 = vsub.s32 %v10814, 2
  %vm10816 = vcmp.gt.s32.totalorder 0, %v10815
  %v10817 = vsel %vm10816, 0, %v10815
  %v10818 = vsub.s32 32, %v10817
  %v10819 = vshll.u32 %v10810, %v10817
  %v10820 = vshrl.u32 %v10802, %v10818
  %v10821 = vor.u32 %v10819, %v10820
  %v10822 = vsub.s32 4294967266, %v10817
  %v10823 = vadd.s32 %v10822, 127
  %v10824 = vshll.u32 %v10823, 23
  %v10825 = vor.u32 4788187, %v10824
  %v10826 = vand.u32 2147483647, %v10825
  %v10828 = vcvt.s32.f32 %v10821
  %v10829 = vmul.f32 %v10828, %v10826
  %v10830 = vxor.u32 %v10829, 2147483648
  %v10831 = vsel %vm10748, %v10830, %v10829
  %v10832 = vsub.s32 4, %v10808
  %v10833 = vsel %vm10748, %v10832, %v10808
  %v10834 = vsel %vm10747, %v7830, %v10831
  %v10835 = vsel %vm10747, 0, %v10833
  %v10836 = vcosq.f32.pop %v10834
  %v10837 = vsinq.f32.pop %v10834
  %vm10838 = vweird.f32 %v7830
  %v10839 = vadd.s32 %v10835, 3
  %v10840 = vand.u32 %v10839, 3
  %vm10841 = vcmp.lt.s32.totalorder %v10840, 2
  %vm10842 = vcmp.eq.s32.totalorder %v10840, 0
  %v10843 = vxor.u32 %v10837, 2147483648
  %v10844 = vsel %vm10842, %v10836, %v10843
  %vm10845 = vcmp.eq.s32.totalorder %v10840, 2
  %v10846 = vxor.u32 %v10836, 2147483648
  %v10847 = vsel %vm10845, %v10846, %v10837
  %v10848 = vsel %vm10841, %v10844, %v10847
  %v10849 = vsel %vm10838, nan, %v10848
  %v10850 = vand.u32 2147483647, %v7831
  %vm10851 = vcmp.le.f32.partialorder %v10850, 0.7853982
  %vm10852 = vcmp.lt.s32.totalorder %v7831, 0
  %v10853 = vand.u32 %v7831, 2139095040
  %v10854 = vshrl.u32 %v10853, 23
  %v10855 = vsub.s32 %v10854, 127
  %v10856 = vand.u32 2147483647, %v7831
  %v10857 = vand.u32 %v10856, 8388607
  %v10858 = vor.u32 %v10857, 8388608
  %v10859 = vsub.s32 0, %v10858
  %v10860 = vadd.s32 %v10855, 1
  %vm10861 = vcmp.gt.s32.totalorder %v10860, 0
  %v10862 = vsel %vm10861, %v10860, 0
  %v10863 = vshrl.u32 %v10862, 5
  %v10864 = vand.u32 %v10862, 31
  %v10865 = vsub.s32 32, %v10864
  %v10866 = vshrl.u32 683565275, %v10865
  %v10867 = vshll.u32 683565275, %v10864
  %v10868 = vshrl.u32 2475754826, %v10865
  %v10869 = vor.u32 %v10867, %v10868
  %v10870 = vshll.u32 2475754826, %v10864
  %v10871 = vshrl.u32 2131351028, %v10865
  %v10872 = vor.u32 %v10870, %v10871
  %v10873 = vshll.u32 2131351028, %v10864
  %v10874 = vshrl.u32 2102212464, %v10865
  %v10875 = vor.u32 %v10873, %v10874
  %v10876 = vshll.u32 2102212464, %v10864
  %v10877 = vshrl.u32 920167782, %v10865
  %v10878 = vor.u32 %v10876, %v10877
  %v10879 = vshll.u32 920167782, %v10864
  %v10880 = vshrl.u32 1326507024, %v10865
  %v10881 = vor.u32 %v10879, %v10880
  %vm10882 = vcmp.lt.s32.totalorder %v10863, 1
  %vm10883 = vcmp.lt.s32.totalorder %v10863, 2
  %vm10884 = vcmp.lt.s32.totalorder %v10863, 3
  %vm10885 = vcmp.lt.s32.totalorder %v10863, 4
  %v10886 = vsel %vm10882, %v10866, %v10869
  %v10887 = vsel %vm10885, %v10875, 2102212464
  %v10888 = vsel %vm10884, %v10872, %v10887
  %v10889 = vsel %vm10883, %v10886, %v10888
  %v10890 = vsel %vm10882, %v10869, %v10872
  %v10891 = vsel %vm10885, %v10878, 920167782
  %v10892 = vsel %vm10884, %v10875, %v10891
  %v10893 = vsel %vm10883, %v10890, %v10892
  %v10894 = vsel %vm10882, %v10872, %v10875
  %v10895 = vsel %vm10885, %v10881, 1326507024
  %v10896 = vsel %vm10884, %v10878, %v10895
  %v10897 = vsel %vm10883, %v10894, %v10896
  %v10898 = vshll.u32 %v10858, 8
  %v10899 = vmul.u32.u64.compose %v10898, %v10897
  %v10900 = vextract.low.u32 %v10899
  %v10901 = vextract.high.u32 %v10899
  %v10902 = vmul.u32.u64.compose %v10898, %v10893
  %v10903 = vextract.low.u32 %v10902
  %v10904 = vextract.high.u32 %v10902
  %v10905 = vmul.u32 %v10898, %v10889
  %v10906 = vadd.s32 %v10901, %v10903
  %vm10907 = vc.u32 %v10901, %v10903
  %v10908 = vadd.s32 %v10904, 1
  %v10909 = vsel %vm10907, %v10908, %v10904
  %v10910 = vadd.s32 %v10905, %v10909
  %v10911 = vadd.s32 %v10910, 536870912
  %v10912 = vshrl.u32 %v10911, 30
  %v10913 = vshll.u32 %v10912, 30
  %v10914 = vsub.s32 %v10910, %v10913
  %vm10915 = vcmp.lt.s32.totalorder %v10914, 0
  %v10916 = vsub.s32 0, %v10914
  %v10917 = vsel %vm10915, %v10916, %v10914
  %v10918 = vclz %v10917
  %v10919 = vsub.s32 %v10918, 2
  %vm10920 = vcmp.gt.s32.totalorder 0, %v10919
  %v10921 = vsel %vm10920, 0, %v10919
  %v10922 = vsub.s32 32, %v10921
  %v10923 = vshll.u32 %v10914, %v10921
  %v10924 = vshrl.u32 %v10906, %v10922
  %v10925 = vor.u32 %v10923, %v10924
  %v10926 = vsub.s32 4294967266, %v10921
  %v10927 = vadd.s32 %v10926, 127
  %v10928 = vshll.u32 %v10927, 23
  %v10929 = vor.u32 4788187, %v10928
  %v10930 = vand.u32 2147483647, %v10929
  %v10932 = vcvt.s32.f32 %v10925
  %v10933 = vmul.f32 %v10932, %v10930
  %v10934 = vxor.u32 %v10933, 2147483648
  %v10935 = vsel %vm10852, %v10934, %v10933
  %v10936 = vsub.s32 4, %v10912
  %v10937 = vsel %vm10852, %v10936, %v10912
  %v10938 = vsel %vm10851, %v7831, %v10935
  %v10939 = vsel %vm10851, 0, %v10937
  %v10940 = vcosq.f32.pop %v10938
  %v10941 = vsinq.f32.pop %v10938
  %vm10942 = vweird.f32 %v7831
  %v10943 = vadd.s32 %v10939, 3
  %v10944 = vand.u32 %v10943, 3
  %vm10945 = vcmp.lt.s32.totalorder %v10944, 2
  %vm10946 = vcmp.eq.s32.totalorder %v10944, 0
  %v10947 = vxor.u32 %v10941, 2147483648
  %v10948 = vsel %vm10946, %v10940, %v10947
  %vm10949 = vcmp.eq.s32.totalorder %v10944, 2
  %v10950 = vxor.u32 %v10940, 2147483648
  %v10951 = vsel %vm10949, %v10950, %v10941
  %v10952 = vsel %vm10945, %v10948, %v10951
  %v10953 = vsel %vm10942, nan, %v10952
  %v10954 = vand.u32 2147483647, %v7832
  %vm10955 = vcmp.le.f32.partialorder %v10954, 0.7853982
  %vm10956 = vcmp.lt.s32.totalorder %v7832, 0
  %v10957 = vand.u32 %v7832, 2139095040
  %v10958 = vshrl.u32 %v10957, 23
  %v10959 = vsub.s32 %v10958, 127
  %v10960 = vand.u32 2147483647, %v7832
  %v10961 = vand.u32 %v10960, 8388607
  %v10962 = vor.u32 %v10961, 8388608
  %v10963 = vsub.s32 0, %v10962
  %v10964 = vadd.s32 %v10959, 1
  %vm10965 = vcmp.gt.s32.totalorder %v10964, 0
  %v10966 = vsel %vm10965, %v10964, 0
  %v10967 = vshrl.u32 %v10966, 5
  %v10968 = vand.u32 %v10966, 31
  %v10969 = vsub.s32 32, %v10968
  %v10970 = vshrl.u32 683565275, %v10969
  %v10971 = vshll.u32 683565275, %v10968
  %v10972 = vshrl.u32 2475754826, %v10969
  %v10973 = vor.u32 %v10971, %v10972
  %v10974 = vshll.u32 2475754826, %v10968
  %v10975 = vshrl.u32 2131351028, %v10969
  %v10976 = vor.u32 %v10974, %v10975
  %v10977 = vshll.u32 2131351028, %v10968
  %v10978 = vshrl.u32 2102212464, %v10969
  %v10979 = vor.u32 %v10977, %v10978
  %v10980 = vshll.u32 2102212464, %v10968
  %v10981 = vshrl.u32 920167782, %v10969
  %v10982 = vor.u32 %v10980, %v10981
  %v10983 = vshll.u32 920167782, %v10968
  %v10984 = vshrl.u32 1326507024, %v10969
  %v10985 = vor.u32 %v10983, %v10984
  %vm10986 = vcmp.lt.s32.totalorder %v10967, 1
  %vm10987 = vcmp.lt.s32.totalorder %v10967, 2
  %vm10988 = vcmp.lt.s32.totalorder %v10967, 3
  %vm10989 = vcmp.lt.s32.totalorder %v10967, 4
  %v10990 = vsel %vm10986, %v10970, %v10973
  %v10991 = vsel %vm10989, %v10979, 2102212464
  %v10992 = vsel %vm10988, %v10976, %v10991
  %v10993 = vsel %vm10987, %v10990, %v10992
  %v10994 = vsel %vm10986, %v10973, %v10976
  %v10995 = vsel %vm10989, %v10982, 920167782
  %v10996 = vsel %vm10988, %v10979, %v10995
  %v10997 = vsel %vm10987, %v10994, %v10996
  %v10998 = vsel %vm10986, %v10976, %v10979
  %v10999 = vsel %vm10989, %v10985, 1326507024
  %v11000 = vsel %vm10988, %v10982, %v10999
  %v11001 = vsel %vm10987, %v10998, %v11000
  %v11002 = vshll.u32 %v10962, 8
  %v11003 = vmul.u32.u64.compose %v11002, %v11001
  %v11004 = vextract.low.u32 %v11003
  %v11005 = vextract.high.u32 %v11003
  %v11006 = vmul.u32.u64.compose %v11002, %v10997
  %v11007 = vextract.low.u32 %v11006
  %v11008 = vextract.high.u32 %v11006
  %v11009 = vmul.u32 %v11002, %v10993
  %v11010 = vadd.s32 %v11005, %v11007
  %vm11011 = vc.u32 %v11005, %v11007
  %v11012 = vadd.s32 %v11008, 1
  %v11013 = vsel %vm11011, %v11012, %v11008
  %v11014 = vadd.s32 %v11009, %v11013
  %v11015 = vadd.s32 %v11014, 536870912
  %v11016 = vshrl.u32 %v11015, 30
  %v11017 = vshll.u32 %v11016, 30
  %v11018 = vsub.s32 %v11014, %v11017
  %vm11019 = vcmp.lt.s32.totalorder %v11018, 0
  %v11020 = vsub.s32 0, %v11018
  %v11021 = vsel %vm11019, %v11020, %v11018
  %v11022 = vclz %v11021
  %v11023 = vsub.s32 %v11022, 2
  %vm11024 = vcmp.gt.s32.totalorder 0, %v11023
  %v11025 = vsel %vm11024, 0, %v11023
  %v11026 = vsub.s32 32, %v11025
  %v11027 = vshll.u32 %v11018, %v11025
  %v11028 = vshrl.u32 %v11010, %v11026
  %v11029 = vor.u32 %v11027, %v11028
  %v11030 = vsub.s32 4294967266, %v11025
  %v11031 = vadd.s32 %v11030, 127
  %v11032 = vshll.u32 %v11031, 23
  %v11033 = vor.u32 4788187, %v11032
  %v11034 = vand.u32 2147483647, %v11033
  %v11036 = vcvt.s32.f32 %v11029
  %v11037 = vmul.f32 %v11036, %v11034
  %v11038 = vxor.u32 %v11037, 2147483648
  %v11039 = vsel %vm10956, %v11038, %v11037
  %v11040 = vsub.s32 4, %v11016
  %v11041 = vsel %vm10956, %v11040, %v11016
  %v11042 = vsel %vm10955, %v7832, %v11039
  %v11043 = vsel %vm10955, 0, %v11041
  %v11044 = vcosq.f32.pop %v11042
  %v11045 = vsinq.f32.pop %v11042
  %vm11046 = vweird.f32 %v7832
  %v11047 = vadd.s32 %v11043, 3
  %v11048 = vand.u32 %v11047, 3
  %vm11049 = vcmp.lt.s32.totalorder %v11048, 2
  %vm11050 = vcmp.eq.s32.totalorder %v11048, 0
  %v11051 = vxor.u32 %v11045, 2147483648
  %v11052 = vsel %vm11050, %v11044, %v11051
  %vm11053 = vcmp.eq.s32.totalorder %v11048, 2
  %v11054 = vxor.u32 %v11044, 2147483648
  %v11055 = vsel %vm11053, %v11054, %v11045
  %v11056 = vsel %vm11049, %v11052, %v11055
  %v11057 = vsel %vm11046, nan, %v11056
  %v11058 = vand.u32 2147483647, %v7833
  %vm11059 = vcmp.le.f32.partialorder %v11058, 0.7853982
  %vm11060 = vcmp.lt.s32.totalorder %v7833, 0
  %v11061 = vand.u32 %v7833, 2139095040
  %v11062 = vshrl.u32 %v11061, 23
  %v11063 = vsub.s32 %v11062, 127
  %v11064 = vand.u32 2147483647, %v7833
  %v11065 = vand.u32 %v11064, 8388607
  %v11066 = vor.u32 %v11065, 8388608
  %v11067 = vsub.s32 0, %v11066
  %v11068 = vadd.s32 %v11063, 1
  %vm11069 = vcmp.gt.s32.totalorder %v11068, 0
  %v11070 = vsel %vm11069, %v11068, 0
  %v11071 = vshrl.u32 %v11070, 5
  %v11072 = vand.u32 %v11070, 31
  %v11073 = vsub.s32 32, %v11072
  %v11074 = vshrl.u32 683565275, %v11073
  %v11075 = vshll.u32 683565275, %v11072
  %v11076 = vshrl.u32 2475754826, %v11073
  %v11077 = vor.u32 %v11075, %v11076
  %v11078 = vshll.u32 2475754826, %v11072
  %v11079 = vshrl.u32 2131351028, %v11073
  %v11080 = vor.u32 %v11078, %v11079
  %v11081 = vshll.u32 2131351028, %v11072
  %v11082 = vshrl.u32 2102212464, %v11073
  %v11083 = vor.u32 %v11081, %v11082
  %v11084 = vshll.u32 2102212464, %v11072
  %v11085 = vshrl.u32 920167782, %v11073
  %v11086 = vor.u32 %v11084, %v11085
  %v11087 = vshll.u32 920167782, %v11072
  %v11088 = vshrl.u32 1326507024, %v11073
  %v11089 = vor.u32 %v11087, %v11088
  %vm11090 = vcmp.lt.s32.totalorder %v11071, 1
  %vm11091 = vcmp.lt.s32.totalorder %v11071, 2
  %vm11092 = vcmp.lt.s32.totalorder %v11071, 3
  %vm11093 = vcmp.lt.s32.totalorder %v11071, 4
  %v11094 = vsel %vm11090, %v11074, %v11077
  %v11095 = vsel %vm11093, %v11083, 2102212464
  %v11096 = vsel %vm11092, %v11080, %v11095
  %v11097 = vsel %vm11091, %v11094, %v11096
  %v11098 = vsel %vm11090, %v11077, %v11080
  %v11099 = vsel %vm11093, %v11086, 920167782
  %v11100 = vsel %vm11092, %v11083, %v11099
  %v11101 = vsel %vm11091, %v11098, %v11100
  %v11102 = vsel %vm11090, %v11080, %v11083
  %v11103 = vsel %vm11093, %v11089, 1326507024
  %v11104 = vsel %vm11092, %v11086, %v11103
  %v11105 = vsel %vm11091, %v11102, %v11104
  %v11106 = vshll.u32 %v11066, 8
  %v11107 = vmul.u32.u64.compose %v11106, %v11105
  %v11108 = vextract.low.u32 %v11107
  %v11109 = vextract.high.u32 %v11107
  %v11110 = vmul.u32.u64.compose %v11106, %v11101
  %v11111 = vextract.low.u32 %v11110
  %v11112 = vextract.high.u32 %v11110
  %v11113 = vmul.u32 %v11106, %v11097
  %v11114 = vadd.s32 %v11109, %v11111
  %vm11115 = vc.u32 %v11109, %v11111
  %v11116 = vadd.s32 %v11112, 1
  %v11117 = vsel %vm11115, %v11116, %v11112
  %v11118 = vadd.s32 %v11113, %v11117
  %v11119 = vadd.s32 %v11118, 536870912
  %v11120 = vshrl.u32 %v11119, 30
  %v11121 = vshll.u32 %v11120, 30
  %v11122 = vsub.s32 %v11118, %v11121
  %vm11123 = vcmp.lt.s32.totalorder %v11122, 0
  %v11124 = vsub.s32 0, %v11122
  %v11125 = vsel %vm11123, %v11124, %v11122
  %v11126 = vclz %v11125
  %v11127 = vsub.s32 %v11126, 2
  %vm11128 = vcmp.gt.s32.totalorder 0, %v11127
  %v11129 = vsel %vm11128, 0, %v11127
  %v11130 = vsub.s32 32, %v11129
  %v11131 = vshll.u32 %v11122, %v11129
  %v11132 = vshrl.u32 %v11114, %v11130
  %v11133 = vor.u32 %v11131, %v11132
  %v11134 = vsub.s32 4294967266, %v11129
  %v11135 = vadd.s32 %v11134, 127
  %v11136 = vshll.u32 %v11135, 23
  %v11137 = vor.u32 4788187, %v11136
  %v11138 = vand.u32 2147483647, %v11137
  %v11140 = vcvt.s32.f32 %v11133
  %v11141 = vmul.f32 %v11140, %v11138
  %v11142 = vxor.u32 %v11141, 2147483648
  %v11143 = vsel %vm11060, %v11142, %v11141
  %v11144 = vsub.s32 4, %v11120
  %v11145 = vsel %vm11060, %v11144, %v11120
  %v11146 = vsel %vm11059, %v7833, %v11143
  %v11147 = vsel %vm11059, 0, %v11145
  %v11148 = vcosq.f32.pop %v11146
  %v11149 = vsinq.f32.pop %v11146
  %vm11150 = vweird.f32 %v7833
  %v11151 = vadd.s32 %v11147, 3
  %v11152 = vand.u32 %v11151, 3
  %vm11153 = vcmp.lt.s32.totalorder %v11152, 2
  %vm11154 = vcmp.eq.s32.totalorder %v11152, 0
  %v11155 = vxor.u32 %v11149, 2147483648
  %v11156 = vsel %vm11154, %v11148, %v11155
  %vm11157 = vcmp.eq.s32.totalorder %v11152, 2
  %v11158 = vxor.u32 %v11148, 2147483648
  %v11159 = vsel %vm11157, %v11158, %v11149
  %v11160 = vsel %vm11153, %v11156, %v11159
  %v11161 = vsel %vm11150, nan, %v11160
  %11163 = vset.pattern.permute.xlu0 0
  %11164 = vperm.xlu0 %11163, %v705
  %v11165 = vpop.permute.xlu0 %11164
  %11168 = vset.pattern.permute.xlu0 0
  %11169 = vperm.xlu0 %11168, %v809
  %v11170 = vpop.permute.xlu0 %11169
  %11173 = vset.pattern.permute.xlu0 0
  %11174 = vperm.xlu0 %11173, %v913
  %v11175 = vpop.permute.xlu0 %11174
  %11178 = vset.pattern.permute.xlu0 0
  %11179 = vperm.xlu0 %11178, %v1017
  %v11180 = vpop.permute.xlu0 %11179
  %11183 = vset.pattern.permute.xlu0 0
  %11184 = vperm.xlu0 %11183, %v1121
  %v11185 = vpop.permute.xlu0 %11184
  %11188 = vset.pattern.permute.xlu0 0
  %11189 = vperm.xlu0 %11188, %v1225
  %v11190 = vpop.permute.xlu0 %11189
  %11193 = vset.pattern.permute.xlu0 0
  %11194 = vperm.xlu0 %11193, %v1329
  %v11195 = vpop.permute.xlu0 %11194
  %11198 = vset.pattern.permute.xlu0 0
  %11199 = vperm.xlu0 %11198, %v1433
  %v11200 = vpop.permute.xlu0 %11199
  %11203 = vset.pattern.permute.xlu0 0
  %11204 = vperm.xlu0 %11203, %v1537
  %v11205 = vpop.permute.xlu0 %11204
  %11208 = vset.pattern.permute.xlu0 0
  %11209 = vperm.xlu0 %11208, %v1641
  %v11210 = vpop.permute.xlu0 %11209
  %11213 = vset.pattern.permute.xlu0 0
  %11214 = vperm.xlu0 %11213, %v1745
  %v11215 = vpop.permute.xlu0 %11214
  %11218 = vset.pattern.permute.xlu0 0
  %11219 = vperm.xlu0 %11218, %v1849
  %v11220 = vpop.permute.xlu0 %11219
  %11223 = vset.pattern.permute.xlu0 0
  %11224 = vperm.xlu0 %11223, %v1953
  %v11225 = vpop.permute.xlu0 %11224
  %11228 = vset.pattern.permute.xlu0 0
  %11229 = vperm.xlu0 %11228, %v2057
  %v11230 = vpop.permute.xlu0 %11229
  %11233 = vset.pattern.permute.xlu0 0
  %11234 = vperm.xlu0 %11233, %v2161
  %v11235 = vpop.permute.xlu0 %11234
  %11238 = vset.pattern.permute.xlu0 0
  %11239 = vperm.xlu0 %11238, %v2265
  %v11240 = vpop.permute.xlu0 %11239
  %11243 = vset.pattern.permute.xlu0 0
  %11244 = vperm.xlu0 %11243, %v2369
  %v11245 = vpop.permute.xlu0 %11244
  %11248 = vset.pattern.permute.xlu0 0
  %11249 = vperm.xlu0 %11248, %v2473
  %v11250 = vpop.permute.xlu0 %11249
  %11253 = vset.pattern.permute.xlu0 0
  %11254 = vperm.xlu0 %11253, %v2577
  %v11255 = vpop.permute.xlu0 %11254
  %11258 = vset.pattern.permute.xlu0 0
  %11259 = vperm.xlu0 %11258, %v2681
  %v11260 = vpop.permute.xlu0 %11259
  %11263 = vset.pattern.permute.xlu0 0
  %11264 = vperm.xlu0 %11263, %v2785
  %v11265 = vpop.permute.xlu0 %11264
  %11268 = vset.pattern.permute.xlu0 0
  %11269 = vperm.xlu0 %11268, %v2889
  %v11270 = vpop.permute.xlu0 %11269
  %11273 = vset.pattern.permute.xlu0 0
  %11274 = vperm.xlu0 %11273, %v2993
  %v11275 = vpop.permute.xlu0 %11274
  %11278 = vset.pattern.permute.xlu0 0
  %11279 = vperm.xlu0 %11278, %v3097
  %v11280 = vpop.permute.xlu0 %11279
  %11283 = vset.pattern.permute.xlu0 0
  %11284 = vperm.xlu0 %11283, %v3201
  %v11285 = vpop.permute.xlu0 %11284
  %11288 = vset.pattern.permute.xlu0 0
  %11289 = vperm.xlu0 %11288, %v3305
  %v11290 = vpop.permute.xlu0 %11289
  %11293 = vset.pattern.permute.xlu0 0
  %11294 = vperm.xlu0 %11293, %v3409
  %v11295 = vpop.permute.xlu0 %11294
  %11298 = vset.pattern.permute.xlu0 0
  %11299 = vperm.xlu0 %11298, %v3513
  %v11300 = vpop.permute.xlu0 %11299
  %11303 = vset.pattern.permute.xlu0 0
  %11304 = vperm.xlu0 %11303, %v3617
  %v11305 = vpop.permute.xlu0 %11304
  %11308 = vset.pattern.permute.xlu0 0
  %11309 = vperm.xlu0 %11308, %v3721
  %v11310 = vpop.permute.xlu0 %11309
  %11313 = vset.pattern.permute.xlu0 0
  %11314 = vperm.xlu0 %11313, %v3825
  %v11315 = vpop.permute.xlu0 %11314
  %11318 = vset.pattern.permute.xlu0 0
  %11319 = vperm.xlu0 %11318, %v3929
  %v11320 = vpop.permute.xlu0 %11319
  %11323 = vset.pattern.permute.xlu0 0
  %11324 = vperm.xlu0 %11323, %v4033
  %v11325 = vpop.permute.xlu0 %11324
  %11328 = vset.pattern.permute.xlu0 0
  %11329 = vperm.xlu0 %11328, %v4137
  %v11330 = vpop.permute.xlu0 %11329
  %11333 = vset.pattern.permute.xlu0 0
  %11334 = vperm.xlu0 %11333, %v4241
  %v11335 = vpop.permute.xlu0 %11334
  %11338 = vset.pattern.permute.xlu0 0
  %11339 = vperm.xlu0 %11338, %v4345
  %v11340 = vpop.permute.xlu0 %11339
  %11343 = vset.pattern.permute.xlu0 0
  %11344 = vperm.xlu0 %11343, %v4449
  %v11345 = vpop.permute.xlu0 %11344
  %11348 = vset.pattern.permute.xlu0 0
  %11349 = vperm.xlu0 %11348, %v4553
  %v11350 = vpop.permute.xlu0 %11349
  %11353 = vset.pattern.permute.xlu0 0
  %11354 = vperm.xlu0 %11353, %v4657
  %v11355 = vpop.permute.xlu0 %11354
  %11358 = vset.pattern.permute.xlu0 0
  %11359 = vperm.xlu0 %11358, %v4761
  %v11360 = vpop.permute.xlu0 %11359
  %11363 = vset.pattern.permute.xlu0 0
  %11364 = vperm.xlu0 %11363, %v4865
  %v11365 = vpop.permute.xlu0 %11364
  %11368 = vset.pattern.permute.xlu0 0
  %11369 = vperm.xlu0 %11368, %v4969
  %v11370 = vpop.permute.xlu0 %11369
  %11373 = vset.pattern.permute.xlu0 0
  %11374 = vperm.xlu0 %11373, %v5073
  %v11375 = vpop.permute.xlu0 %11374
  %11378 = vset.pattern.permute.xlu0 0
  %11379 = vperm.xlu0 %11378, %v5177
  %v11380 = vpop.permute.xlu0 %11379
  %11383 = vset.pattern.permute.xlu0 0
  %11384 = vperm.xlu0 %11383, %v5281
  %v11385 = vpop.permute.xlu0 %11384
  %11388 = vset.pattern.permute.xlu0 0
  %11389 = vperm.xlu0 %11388, %v5385
  %v11390 = vpop.permute.xlu0 %11389
  %11393 = vset.pattern.permute.xlu0 0
  %11394 = vperm.xlu0 %11393, %v5489
  %v11395 = vpop.permute.xlu0 %11394
  %11398 = vset.pattern.permute.xlu0 0
  %11399 = vperm.xlu0 %11398, %v5593
  %v11400 = vpop.permute.xlu0 %11399
  %11403 = vset.pattern.permute.xlu0 0
  %11404 = vperm.xlu0 %11403, %v5697
  %v11405 = vpop.permute.xlu0 %11404
  %11408 = vset.pattern.permute.xlu0 0
  %11409 = vperm.xlu0 %11408, %v5801
  %v11410 = vpop.permute.xlu0 %11409
  %11413 = vset.pattern.permute.xlu0 0
  %11414 = vperm.xlu0 %11413, %v5905
  %v11415 = vpop.permute.xlu0 %11414
  %11418 = vset.pattern.permute.xlu0 0
  %11419 = vperm.xlu0 %11418, %v6009
  %v11420 = vpop.permute.xlu0 %11419
  %11423 = vset.pattern.permute.xlu0 0
  %11424 = vperm.xlu0 %11423, %v6113
  %v11425 = vpop.permute.xlu0 %11424
  %11428 = vset.pattern.permute.xlu0 0
  %11429 = vperm.xlu0 %11428, %v6217
  %v11430 = vpop.permute.xlu0 %11429
  %11433 = vset.pattern.permute.xlu0 0
  %11434 = vperm.xlu0 %11433, %v6321
  %v11435 = vpop.permute.xlu0 %11434
  %11438 = vset.pattern.permute.xlu0 0
  %11439 = vperm.xlu0 %11438, %v6425
  %v11440 = vpop.permute.xlu0 %11439
  %11443 = vset.pattern.permute.xlu0 0
  %11444 = vperm.xlu0 %11443, %v6529
  %v11445 = vpop.permute.xlu0 %11444
  %11448 = vset.pattern.permute.xlu0 0
  %11449 = vperm.xlu0 %11448, %v6633
  %v11450 = vpop.permute.xlu0 %11449
  %11453 = vset.pattern.permute.xlu0 0
  %11454 = vperm.xlu0 %11453, %v6737
  %v11455 = vpop.permute.xlu0 %11454
  %11458 = vset.pattern.permute.xlu0 0
  %11459 = vperm.xlu0 %11458, %v6841
  %v11460 = vpop.permute.xlu0 %11459
  %11463 = vset.pattern.permute.xlu0 0
  %11464 = vperm.xlu0 %11463, %v6945
  %v11465 = vpop.permute.xlu0 %11464
  %11468 = vset.pattern.permute.xlu0 0
  %11469 = vperm.xlu0 %11468, %v7049
  %v11470 = vpop.permute.xlu0 %11469
  %11473 = vset.pattern.permute.xlu0 0
  %11474 = vperm.xlu0 %11473, %v7153
  %v11475 = vpop.permute.xlu0 %11474
  %11478 = vset.pattern.permute.xlu0 0
  %11479 = vperm.xlu0 %11478, %v7257
  %v11480 = vpop.permute.xlu0 %11479
  %vm11482 = vcmask 130048
  %11483 = vst.msk [vmem:[%s2] sm:$0xff] %vm11482, %v11165
  %11484 = vst.msk [vmem:[%s2 + $0x8] sm:$0xff] %vm11482, %v11170
  %11485 = vst.msk [vmem:[%s2 + $0x10] sm:$0xff] %vm11482, %v11175
  %11486 = vst.msk [vmem:[%s2 + $0x18] sm:$0xff] %vm11482, %v11180
  %11487 = vst.msk [vmem:[%s2 + $0x20] sm:$0xff] %vm11482, %v11185
  %11488 = vst.msk [vmem:[%s2 + $0x28] sm:$0xff] %vm11482, %v11190
  %11489 = vst.msk [vmem:[%s2 + $0x30] sm:$0xff] %vm11482, %v11195
  %11490 = vst.msk [vmem:[%s2 + $0x38] sm:$0xff] %vm11482, %v11200
  %11491 = vst.msk [vmem:[%s2 + $0x40] sm:$0xff] %vm11482, %v11205
  %11492 = vst.msk [vmem:[%s2 + $0x48] sm:$0xff] %vm11482, %v11210
  %11493 = vst.msk [vmem:[%s2 + $0x50] sm:$0xff] %vm11482, %v11215
  %11494 = vst.msk [vmem:[%s2 + $0x58] sm:$0xff] %vm11482, %v11220
  %11495 = vst.msk [vmem:[%s2 + $0x60] sm:$0xff] %vm11482, %v11225
  %11496 = vst.msk [vmem:[%s2 + $0x68] sm:$0xff] %vm11482, %v11230
  %11497 = vst.msk [vmem:[%s2 + $0x70] sm:$0xff] %vm11482, %v11235
  %11498 = vst.msk [vmem:[%s2 + $0x78] sm:$0xff] %vm11482, %v11240
  %11499 = vst.msk [vmem:[%s2 + $0x80] sm:$0xff] %vm11482, %v11245
  %11500 = vst.msk [vmem:[%s2 + $0x88] sm:$0xff] %vm11482, %v11250
  %11501 = vst.msk [vmem:[%s2 + $0x90] sm:$0xff] %vm11482, %v11255
  %11502 = vst.msk [vmem:[%s2 + $0x98] sm:$0xff] %vm11482, %v11260
  %11503 = vst.msk [vmem:[%s2 + $0xa0] sm:$0xff] %vm11482, %v11265
  %11504 = vst.msk [vmem:[%s2 + $0xa8] sm:$0xff] %vm11482, %v11270
  %11505 = vst.msk [vmem:[%s2 + $0xb0] sm:$0xff] %vm11482, %v11275
  %11506 = vst.msk [vmem:[%s2 + $0xb8] sm:$0xff] %vm11482, %v11280
  %11507 = vst.msk [vmem:[%s2 + $0xc0] sm:$0xff] %vm11482, %v11285
  %11508 = vst.msk [vmem:[%s2 + $0xc8] sm:$0xff] %vm11482, %v11290
  %11509 = vst.msk [vmem:[%s2 + $0xd0] sm:$0xff] %vm11482, %v11295
  %11510 = vst.msk [vmem:[%s2 + $0xd8] sm:$0xff] %vm11482, %v11300
  %11511 = vst.msk [vmem:[%s2 + $0xe0] sm:$0xff] %vm11482, %v11305
  %11512 = vst.msk [vmem:[%s2 + $0xe8] sm:$0xff] %vm11482, %v11310
  %11513 = vst.msk [vmem:[%s2 + $0xf0] sm:$0xff] %vm11482, %v11315
  %11514 = vst.msk [vmem:[%s2 + $0xf8] sm:$0xff] %vm11482, %v11320
  %11515 = vst.msk [vmem:[%s2 + $0x100] sm:$0xff] %vm11482, %v11325
  %11516 = vst.msk [vmem:[%s2 + $0x108] sm:$0xff] %vm11482, %v11330
  %11517 = vst.msk [vmem:[%s2 + $0x110] sm:$0xff] %vm11482, %v11335
  %11518 = vst.msk [vmem:[%s2 + $0x118] sm:$0xff] %vm11482, %v11340
  %11519 = vst.msk [vmem:[%s2 + $0x120] sm:$0xff] %vm11482, %v11345
  %11520 = vst.msk [vmem:[%s2 + $0x128] sm:$0xff] %vm11482, %v11350
  %11521 = vst.msk [vmem:[%s2 + $0x130] sm:$0xff] %vm11482, %v11355
  %11522 = vst.msk [vmem:[%s2 + $0x138] sm:$0xff] %vm11482, %v11360
  %11523 = vst.msk [vmem:[%s2 + $0x140] sm:$0xff] %vm11482, %v11365
  %11524 = vst.msk [vmem:[%s2 + $0x148] sm:$0xff] %vm11482, %v11370
  %11525 = vst.msk [vmem:[%s2 + $0x150] sm:$0xff] %vm11482, %v11375
  %11526 = vst.msk [vmem:[%s2 + $0x158] sm:$0xff] %vm11482, %v11380
  %11527 = vst.msk [vmem:[%s2 + $0x160] sm:$0xff] %vm11482, %v11385
  %11528 = vst.msk [vmem:[%s2 + $0x168] sm:$0xff] %vm11482, %v11390
  %11529 = vst.msk [vmem:[%s2 + $0x170] sm:$0xff] %vm11482, %v11395
  %11530 = vst.msk [vmem:[%s2 + $0x178] sm:$0xff] %vm11482, %v11400
  %11531 = vst.msk [vmem:[%s2 + $0x180] sm:$0xff] %vm11482, %v11405
  %11532 = vst.msk [vmem:[%s2 + $0x188] sm:$0xff] %vm11482, %v11410
  %11533 = vst.msk [vmem:[%s2 + $0x190] sm:$0xff] %vm11482, %v11415
  %11534 = vst.msk [vmem:[%s2 + $0x198] sm:$0xff] %vm11482, %v11420
  %11535 = vst.msk [vmem:[%s2 + $0x1a0] sm:$0xff] %vm11482, %v11425
  %11536 = vst.msk [vmem:[%s2 + $0x1a8] sm:$0xff] %vm11482, %v11430
  %11537 = vst.msk [vmem:[%s2 + $0x1b0] sm:$0xff] %vm11482, %v11435
  %11538 = vst.msk [vmem:[%s2 + $0x1b8] sm:$0xff] %vm11482, %v11440
  %11539 = vst.msk [vmem:[%s2 + $0x1c0] sm:$0xff] %vm11482, %v11445
  %11540 = vst.msk [vmem:[%s2 + $0x1c8] sm:$0xff] %vm11482, %v11450
  %11541 = vst.msk [vmem:[%s2 + $0x1d0] sm:$0xff] %vm11482, %v11455
  %11542 = vst.msk [vmem:[%s2 + $0x1d8] sm:$0xff] %vm11482, %v11460
  %11543 = vst.msk [vmem:[%s2 + $0x1e0] sm:$0xff] %vm11482, %v11465
  %11544 = vst.msk [vmem:[%s2 + $0x1e8] sm:$0xff] %vm11482, %v11470
  %11545 = vst.msk [vmem:[%s2 + $0x1f0] sm:$0xff] %vm11482, %v11475
  %11546 = vst.msk [vmem:[%s2 + $0x1f8] sm:$0xff] %vm11482, %v11480
  %s11547 = scalar_lea.vmem %s2, 512
  %11548 = vst.msk [vmem:[%s11547] sm:$0xff] %vm11482, %v7937
  %11549 = vst.msk [vmem:[%s11547 + $0x8] sm:$0xff] %vm11482, %v7937
  %11550 = vst.msk [vmem:[%s11547 + $0x10] sm:$0xff] %vm11482, %v8041
  %11551 = vst.msk [vmem:[%s11547 + $0x18] sm:$0xff] %vm11482, %v8041
  %11552 = vst.msk [vmem:[%s11547 + $0x20] sm:$0xff] %vm11482, %v8145
  %11553 = vst.msk [vmem:[%s11547 + $0x28] sm:$0xff] %vm11482, %v8145
  %11554 = vst.msk [vmem:[%s11547 + $0x30] sm:$0xff] %vm11482, %v8249
  %11555 = vst.msk [vmem:[%s11547 + $0x38] sm:$0xff] %vm11482, %v8249
  %11556 = vst.msk [vmem:[%s11547 + $0x40] sm:$0xff] %vm11482, %v8353
  %11557 = vst.msk [vmem:[%s11547 + $0x48] sm:$0xff] %vm11482, %v8353
  %11558 = vst.msk [vmem:[%s11547 + $0x50] sm:$0xff] %vm11482, %v8457
  %11559 = vst.msk [vmem:[%s11547 + $0x58] sm:$0xff] %vm11482, %v8457
  %11560 = vst.msk [vmem:[%s11547 + $0x60] sm:$0xff] %vm11482, %v8561
  %11561 = vst.msk [vmem:[%s11547 + $0x68] sm:$0xff] %vm11482, %v8561
  %11562 = vst.msk [vmem:[%s11547 + $0x70] sm:$0xff] %vm11482, %v8665
  %11563 = vst.msk [vmem:[%s11547 + $0x78] sm:$0xff] %vm11482, %v8665
  %11564 = vst.msk [vmem:[%s11547 + $0x80] sm:$0xff] %vm11482, %v8769
  %11565 = vst.msk [vmem:[%s11547 + $0x88] sm:$0xff] %vm11482, %v8769
  %11566 = vst.msk [vmem:[%s11547 + $0x90] sm:$0xff] %vm11482, %v8873
  %11567 = vst.msk [vmem:[%s11547 + $0x98] sm:$0xff] %vm11482, %v8873
  %11568 = vst.msk [vmem:[%s11547 + $0xa0] sm:$0xff] %vm11482, %v8977
  %11569 = vst.msk [vmem:[%s11547 + $0xa8] sm:$0xff] %vm11482, %v8977
  %11570 = vst.msk [vmem:[%s11547 + $0xb0] sm:$0xff] %vm11482, %v9081
  %11571 = vst.msk [vmem:[%s11547 + $0xb8] sm:$0xff] %vm11482, %v9081
  %11572 = vst.msk [vmem:[%s11547 + $0xc0] sm:$0xff] %vm11482, %v9185
  %11573 = vst.msk [vmem:[%s11547 + $0xc8] sm:$0xff] %vm11482, %v9185
  %11574 = vst.msk [vmem:[%s11547 + $0xd0] sm:$0xff] %vm11482, %v9289
  %11575 = vst.msk [vmem:[%s11547 + $0xd8] sm:$0xff] %vm11482, %v9289
  %11576 = vst.msk [vmem:[%s11547 + $0xe0] sm:$0xff] %vm11482, %v9393
  %11577 = vst.msk [vmem:[%s11547 + $0xe8] sm:$0xff] %vm11482, %v9393
  %11578 = vst.msk [vmem:[%s11547 + $0xf0] sm:$0xff] %vm11482, %v9497
  %11579 = vst.msk [vmem:[%s11547 + $0xf8] sm:$0xff] %vm11482, %v9497
  %11580 = vst.msk [vmem:[%s11547 + $0x100] sm:$0xff] %vm11482, %v9601
  %11581 = vst.msk [vmem:[%s11547 + $0x108] sm:$0xff] %vm11482, %v9601
  %11582 = vst.msk [vmem:[%s11547 + $0x110] sm:$0xff] %vm11482, %v9705
  %11583 = vst.msk [vmem:[%s11547 + $0x118] sm:$0xff] %vm11482, %v9705
  %11584 = vst.msk [vmem:[%s11547 + $0x120] sm:$0xff] %vm11482, %v9809
  %11585 = vst.msk [vmem:[%s11547 + $0x128] sm:$0xff] %vm11482, %v9809
  %11586 = vst.msk [vmem:[%s11547 + $0x130] sm:$0xff] %vm11482, %v9913
  %11587 = vst.msk [vmem:[%s11547 + $0x138] sm:$0xff] %vm11482, %v9913
  %11588 = vst.msk [vmem:[%s11547 + $0x140] sm:$0xff] %vm11482, %v10017
  %11589 = vst.msk [vmem:[%s11547 + $0x148] sm:$0xff] %vm11482, %v10017
  %11590 = vst.msk [vmem:[%s11547 + $0x150] sm:$0xff] %vm11482, %v10121
  %11591 = vst.msk [vmem:[%s11547 + $0x158] sm:$0xff] %vm11482, %v10121
  %11592 = vst.msk [vmem:[%s11547 + $0x160] sm:$0xff] %vm11482, %v10225
  %11593 = vst.msk [vmem:[%s11547 + $0x168] sm:$0xff] %vm11482, %v10225
  %11594 = vst.msk [vmem:[%s11547 + $0x170] sm:$0xff] %vm11482, %v10329
  %11595 = vst.msk [vmem:[%s11547 + $0x178] sm:$0xff] %vm11482, %v10329
  %11596 = vst.msk [vmem:[%s11547 + $0x180] sm:$0xff] %vm11482, %v10433
  %11597 = vst.msk [vmem:[%s11547 + $0x188] sm:$0xff] %vm11482, %v10433
  %11598 = vst.msk [vmem:[%s11547 + $0x190] sm:$0xff] %vm11482, %v10537
  %11599 = vst.msk [vmem:[%s11547 + $0x198] sm:$0xff] %vm11482, %v10537
  %11600 = vst.msk [vmem:[%s11547 + $0x1a0] sm:$0xff] %vm11482, %v10641
  %11601 = vst.msk [vmem:[%s11547 + $0x1a8] sm:$0xff] %vm11482, %v10641
  %11602 = vst.msk [vmem:[%s11547 + $0x1b0] sm:$0xff] %vm11482, %v10745
  %11603 = vst.msk [vmem:[%s11547 + $0x1b8] sm:$0xff] %vm11482, %v10745
  %11604 = vst.msk [vmem:[%s11547 + $0x1c0] sm:$0xff] %vm11482, %v10849
  %11605 = vst.msk [vmem:[%s11547 + $0x1c8] sm:$0xff] %vm11482, %v10849
  %11606 = vst.msk [vmem:[%s11547 + $0x1d0] sm:$0xff] %vm11482, %v10953
  %11607 = vst.msk [vmem:[%s11547 + $0x1d8] sm:$0xff] %vm11482, %v10953
  %11608 = vst.msk [vmem:[%s11547 + $0x1e0] sm:$0xff] %vm11482, %v11057
  %11609 = vst.msk [vmem:[%s11547 + $0x1e8] sm:$0xff] %vm11482, %v11057
  %11610 = vst.msk [vmem:[%s11547 + $0x1f0] sm:$0xff] %vm11482, %v11161
  %11611 = vst.msk [vmem:[%s11547 + $0x1f8] sm:$0xff] %vm11482, %v11161
  // Predicated region
  $region10: #{tpu_custom_call.1} parent=0 // pred_check
    _
  $region11: #{tpu_custom_call.1} parent=0 // pred_check_branch
    %11613 = sbr.rel (0) target = $region13
  $region12: #{tpu_custom_call.1} parent=0 // pred_region
    _
  $region13: #{tpu_custom_call.1} parent=0 // pred_fallthru
    _
  // Predicated region
  $region14: #{tpu_custom_call.1} parent=0 // pred_check
    _
  $region15: #{tpu_custom_call.1} parent=0 // pred_check_branch
    %11615 = sbr.rel (0) target = $region17
  $region16: #{tpu_custom_call.1} parent=0 // pred_region
    _
  $region17: #{tpu_custom_call.1} parent=0 // pred_fallthru
    _

</llo_original>
